<compile_context>
chip_gen: v7x
topology: tpu7x:2x2x1
jax: 0.10.0
libtpu: 0.0.40
codegen_flags: <defaults>
</compile_context>

<pallas_src>
import math

import jax
import jax.numpy as jnp
from jax.experimental import pallas as pl
from jax.experimental.pallas import tpu as pltpu


# ----------------------------------------------------------------------------
# Small helpers
# ----------------------------------------------------------------------------
def _round_up(x, m):
    return ((x + m - 1) // m) * m


def _vmem_limit(block_bytes):
    """Explicit scoped-VMEM budget: ~2x block bytes (double buffering) plus
    headroom, clamped so tile choices stay portable across v5e/v6e/v7x."""
    return int(min(max(2 * block_bytes + (4 << 20), 16 << 20), 40 << 20))


# ----------------------------------------------------------------------------
# Pallas kernels
# ----------------------------------------------------------------------------
def _mm_bias_relu_kernel(a_ref, w_ref, b_ref, o_ref):
    """o = relu(a @ w + b), single full-K block.

    a_ref: (tm, Kp) bf16, w_ref: (Kp, tn) bf16, b_ref: (1, tn) f32,
    o_ref: (tm, tn) f32.  Grid = (M tiles, N tiles), both parallel.
    """
    acc = jnp.dot(a_ref[...], w_ref[...], preferred_element_type=jnp.float32)
    o_ref[...] = jnp.maximum(acc + b_ref[...], 0.0)


def _maxpool_3x3_s2_kernel(x_ref, o_ref):
    """MaxPool2d(kernel=3, stride=2, ceil_mode=True) over one image.

    x_ref: (1, Hp, Wo+1, 2*C) -- padded image with adjacent column pairs
    interleaved on the channel axis (free wrapper reshape): column 2*wo+d
    lives at x[:, wo, d*C:(d+1)*C].  o_ref: (1, Ho, Wo, C).
    Only contiguous slices and a leading-dim reshape are used (no strided
    ref reads).
    """
    Ho, Wo, C = o_ref.shape[1], o_ref.shape[2], o_ref.shape[3]
    x = x_ref[0]                                           # (Hp, Wo+1, 2C)
    # W-direction 3-tap max: taps are columns 2wo, 2wo+1, 2wo+2.
    mw = jnp.maximum(jnp.maximum(x[:, :Wo, :C], x[:, :Wo, C:]),
                     x[:, 1:, :C])                         # (Hp, Wo, C)
    # H-direction 3-tap max: split rows into pairs (leading-dim reshape only).
    mh = mw.reshape(Ho + 1, 2, Wo, C)
    o_ref[0] = jnp.maximum(jnp.maximum(mh[:Ho, 0], mh[:Ho, 1]), mh[1:, 0])


# ----------------------------------------------------------------------------
# Wrappers around pallas_call
# ----------------------------------------------------------------------------
def matmul_bias_relu(a, w, b):
    """relu(a @ w + b) with a fused Pallas epilogue.

    a: (M, K) bf16 activations / im2col patches,
    w: (Kp, N) pre-padded bf16 weights, b: (1, N) f32 bias -> (M, N) f32.
    K is a single full block (K <= 576 for every layer of this net);
    M and N are tiled ("parallel", "parallel")."""
    M, K = a.shape
    Kp, N = w.shape
    assert Kp >= K and b.shape == (1, N)

    tm = 128 if M > 128 else M                 # full-dim block when M is small
    Mp = _round_up(M, tm)
    tn = 128 if N >= 128 else N                # expand N is a multiple of 128
    assert N % tn == 0

    if (Mp, Kp) != (M, K):
        a = jnp.pad(a, ((0, Mp - M), (0, Kp - K)))

    block_bytes = (tm * Kp + Kp * tn) * 2 + (tn + tm * tn) * 4
    out = pl.pallas_call(
        _mm_bias_relu_kernel,
        out_shape=jax.ShapeDtypeStruct((Mp, N), jnp.float32),
        grid=(Mp // tm, N // tn),
        in_specs=[
            pl.BlockSpec((tm, Kp), lambda i, j: (i, 0)),
            pl.BlockSpec((Kp, tn), lambda i, j: (0, j)),
            pl.BlockSpec((1, tn), lambda i, j: (0, j)),
        ],
        out_specs=pl.BlockSpec((tm, tn), lambda i, j: (i, j)),
        compiler_params=pltpu.CompilerParams(
            dimension_semantics=("parallel", "parallel"),
            vmem_limit_bytes=_vmem_limit(block_bytes)),
    )(a, w, b)
    return out[:M] if Mp != M else out


def maxpool_3x3_s2_ceil(x):
    """x: NHWC f32. MaxPool2d(kernel=3, stride=2, padding=0, ceil_mode=True)."""
    N, H, W, C = x.shape
    Ho = math.ceil((H - 3) / 2) + 1
    Wo = math.ceil((W - 3) / 2) + 1
    Hp, Wp = 2 * Ho + 2, 2 * Wo + 2            # room for last window + pair split
    neg = jnp.finfo(x.dtype).min
    xp = jnp.pad(x, ((0, 0), (0, Hp - H), (0, Wp - W), (0, 0)),
                 constant_values=neg)
    xr = xp.reshape(N, Hp, Wo + 1, 2 * C)      # free reshape: col pairs -> channels

    block_bytes = (Hp * (Wo + 1) * 2 * C + Ho * Wo * C) * 4
    return pl.pallas_call(
        _maxpool_3x3_s2_kernel,
        out_shape=jax.ShapeDtypeStruct((N, Ho, Wo, C), x.dtype),
        grid=(N,),
        in_specs=[pl.BlockSpec((1, Hp, Wo + 1, 2 * C), lambda n: (n, 0, 0, 0))],
        out_specs=pl.BlockSpec((1, Ho, Wo, C), lambda n: (n, 0, 0, 0)),
        compiler_params=pltpu.CompilerParams(
            dimension_semantics=("parallel",),
            vmem_limit_bytes=_vmem_limit(block_bytes)),
    )(xr)


# ----------------------------------------------------------------------------
# Convolution helpers (im2col glue + Pallas matmul)
# ----------------------------------------------------------------------------
def _im2col(x, kh, kw, stride, pad):
    """x: NHWC -> (N*Ho*Wo, kh*kw*C) patches (kh-major, kw, C-minor)."""
    if pad:
        x = jnp.pad(x, ((0, 0), (pad, pad), (pad, pad), (0, 0)))
    N, H, W, C = x.shape
    Ho = (H - kh) // stride + 1
    Wo = (W - kw) // stride + 1
    cols = []
    for i in range(kh):
        for j in range(kw):
            cols.append(x[:, i:i + stride * (Ho - 1) + 1:stride,
                          j:j + stride * (Wo - 1) + 1:stride, :])
    patches = jnp.concatenate(cols, axis=-1)   # (N, Ho, Wo, kh*kw*C)
    return patches.reshape(N * Ho * Wo, kh * kw * C), (N, Ho, Wo)


def conv2d_relu(x, w_flat, b, kh, kw, stride, pad):
    """x: NHWC f32, w_flat: (Kp, Cout) bf16 pre-padded, b: (1, Cout) f32."""
    xb = x.astype(jnp.bfloat16)                # halve im2col / pad HBM traffic
    if kh == 1 and kw == 1 and stride == 1 and pad == 0:
        N, H, W, C = x.shape
        out = matmul_bias_relu(xb.reshape(N * H * W, C), w_flat, b)
        return out.reshape(N, H, W, -1)
    patches, (N, Ho, Wo) = _im2col(xb, kh, kw, stride, pad)
    out = matmul_bias_relu(patches, w_flat, b)
    return out.reshape(N, Ho, Wo, -1)


# ----------------------------------------------------------------------------
# SqueezeNet 1.0 features
# ----------------------------------------------------------------------------
_FIRE_CFG = [  # (cin, squeeze, expand1x1, expand3x3)
    (96, 16, 64, 64),     # features[3]
    (128, 16, 64, 64),    # features[4]
    (128, 32, 128, 128),  # features[5]
    (256, 32, 128, 128),  # features[7]
    (256, 48, 192, 192),  # features[8]
    (384, 48, 192, 192),  # features[9]
    (384, 64, 256, 256),  # features[10]
    (512, 64, 256, 256),  # features[12] (output discarded by the reference)
]


def init_params(key):
    """Deterministic init (pretrained weights unavailable).  Weights are
    pre-folded (expand1x1 embedded in the 3x3 center tap), pre-padded on K to
    a multiple of 16 and pre-cast to bf16; biases are (1, Cout) f32."""
    def conv_w(k, kh, kw, cin, cout):
        std = math.sqrt(2.0 / (kh * kw * cin))
        return jax.random.normal(k, (kh, kw, cin, cout), jnp.float32) * std

    def bias(k, cout):
        return (jax.random.normal(k, (cout,), jnp.float32) * 0.01).reshape(1, cout)

    def flat_bf16(w):
        kh, kw, cin, cout = w.shape
        wf = w.reshape(kh * kw * cin, cout)
        kp = _round_up(wf.shape[0], 16)
        wf = jnp.pad(wf, ((0, kp - wf.shape[0]), (0, 0)))
        return wf.astype(jnp.bfloat16)

    params = {}
    keys = jax.random.split(key, 2 + 6 * len(_FIRE_CFG))
    params["conv1"] = (flat_bf16(conv_w(keys[0], 7, 7, 3, 96)), bias(keys[1], 96))
    for i, (cin, s, e1, e3) in enumerate(_FIRE_CFG):
        k = keys[2 + 6 * i: 2 + 6 * (i + 1)]
        ws = conv_w(k[0], 1, 1, cin, s)
        w1 = conv_w(k[1], 1, 1, s, e1)
        w3 = conv_w(k[2], 3, 3, s, e3)
        # Fold expand1x1 into the center tap of a combined 3x3 expand so each
        # fire needs one expand matmul and no channel concat.
        wc = jnp.zeros((3, 3, s, e1 + e3), jnp.float32)
        wc = wc.at[1, 1, :, :e1].set(w1[0, 0])
        wc = wc.at[:, :, :, e1:].set(w3)
        params[f"fire{i}_s"] = (flat_bf16(ws), bias(k[3], s))
        params[f"fire{i}_e"] = (flat_bf16(wc),
                                jnp.concatenate([bias(k[4], e1), bias(k[5], e3)],
                                                axis=1))
    return params


def fire(x, params, idx):
    ws, bs = params[f"fire{idx}_s"]
    s = conv2d_relu(x, ws, bs, 1, 1, 1, 0)              # squeeze 1x1
    we, be = params[f"fire{idx}_e"]
    return conv2d_relu(s, we, be, 3, 3, 1, 1)           # [expand1x1 | expand3x3]


def squeeze_forward(x_nchw, params):
    """Mirrors Squeeze.forward: returns [feature map after features[11]]."""
    x = jnp.transpose(x_nchw, (0, 2, 3, 1))             # NCHW -> NHWC

    w, b = params["conv1"]
    x = conv2d_relu(x, w, b, 7, 7, 2, 0)                # features[0], [1]
    x = maxpool_3x3_s2_ceil(x)                          # features[2]
    x = fire(x, params, 0)                              # features[3]
    x = fire(x, params, 1)                              # features[4]
    x = fire(x, params, 2)                              # features[5]
    x = maxpool_3x3_s2_ceil(x)                          # features[6]
    x = fire(x, params, 3)                              # features[7]
    x = fire(x, params, 4)                              # features[8]
    x = fire(x, params, 5)                              # features[9]
    x = fire(x, params, 6)                              # features[10]
    x = maxpool_3x3_s2_ceil(x)                          # features[11]  <- captured
    # features[12] (fire7) is computed-and-discarded in the reference forward;
    # it cannot affect the returned feature map and would be DCE'd under jit,
    # so it is skipped here.
    return [jnp.transpose(x, (0, 3, 1, 2))]             # back to NCHW


# ----------------------------------------------------------------------------
if __name__ == "__main__":
    key = jax.random.PRNGKey(0)
    k_params, k_x = jax.random.split(key)

    params = init_params(k_params)
    # Small-but-valid spatial size: 47 -> conv1 -> 21 -> pool -> 10 -> pool
    # -> 5 -> pool(features[11]) -> 2.
    x = jax.random.normal(k_x, (2, 3, 47, 47), jnp.float32)

    forward = jax.jit(squeeze_forward)
    feature_maps = forward(x, params)
    out = jax.block_until_ready(feature_maps[0])
    assert out.shape == (2, 512, 2, 2), out.shape
    assert bool(jnp.all(jnp.isfinite(out)))
    print("KERNEL_OK")
</pallas_src>

<mosaic_0001>
module attributes {stable_mosaic.version = 11 : i64} {
  func.func @_mm_bias_relu_kernel(%arg0: i32, %arg1: i32, %arg2: memref<128x160xbf16, #tpu.memory_space<vmem>>, %arg3: memref<160x96xbf16, #tpu.memory_space<vmem>>, %arg4: memref<1x96xf32, #tpu.memory_space<vmem>>, %arg5: memref<128x96xf32, #tpu.memory_space<vmem>>) attributes {dimension_semantics = [#tpu.dimension_semantics<parallel>, #tpu.dimension_semantics<parallel>], iteration_bounds = array<i64: 7, 1>, scalar_prefetch = 0 : i64, scratch_operands = 0 : i64, tpu.core_type = #tpu.core_type<tc>, window_params = [{transform_indices = @transform_0, window_bounds = array<i64: 128, 160>}, {transform_indices = @transform_1, window_bounds = array<i64: 160, 96>}, {transform_indices = @transform_2, window_bounds = array<i64: 1, 96>}, {transform_indices = @transform_3, window_bounds = array<i64: 128, 96>}]} {
    %c0 = arith.constant 0 : index
    %c0_0 = arith.constant 0 : index
    %0 = vector.load %arg2[%c0, %c0_0] : memref<128x160xbf16, #tpu.memory_space<vmem>>, vector<128x160xbf16>
    %c0_1 = arith.constant 0 : index
    %c0_2 = arith.constant 0 : index
    %1 = vector.load %arg3[%c0_1, %c0_2] : memref<160x96xbf16, #tpu.memory_space<vmem>>, vector<160x96xbf16>
    %cst = arith.constant dense<0.000000e+00> : vector<128x96xf32>
    %2 = tpu.matmul %0, %1, %cst {dimension_numbers = #tpu.dot_dimension_numbers<[1], [0], [0], [1], [0, 0, 1, 1], [], []>} : vector<128x160xbf16>, vector<160x96xbf16>, vector<128x96xf32> -> vector<128x96xf32>
    %c0_3 = arith.constant 0 : index
    %c0_4 = arith.constant 0 : index
    %3 = vector.load %arg4[%c0_3, %c0_4] : memref<1x96xf32, #tpu.memory_space<vmem>>, vector<1x96xf32>
    %4 = vector.broadcast %3 : vector<1x96xf32> to vector<128x96xf32>
    %5 = arith.addf %2, %4 : vector<128x96xf32>
    %cst_5 = arith.constant 0.000000e+00 : f32
    %6 = vector.broadcast %cst_5 : f32 to vector<128x96xf32>
    %7 = arith.maximumf %5, %6 : vector<128x96xf32>
    %c0_6 = arith.constant 0 : index
    %c0_7 = arith.constant 0 : index
    %8 = vector.load %arg5[%c0_6, %c0_7] : memref<128x96xf32, #tpu.memory_space<vmem>>, vector<128x96xf32>
    tpu.vector_store %arg5[%c0_6, %c0_7], %7 {strides = array<i32>} : memref<128x96xf32, #tpu.memory_space<vmem>>, vector<128x96xf32>,
    return
  }
  func.func @transform_0(%arg0: i32, %arg1: i32) -> (i32, i32) {
    %c0_i32 = arith.constant 0 : i32
    %c0_i32_0 = arith.constant 0 : i32
    return %arg0, %c0_i32 : i32, i32
  }
  func.func @transform_1(%arg0: i32, %arg1: i32) -> (i32, i32) {
    %c0_i32 = arith.constant 0 : i32
    %c0_i32_0 = arith.constant 0 : i32
    return %c0_i32, %arg1 : i32, i32
  }
  func.func @transform_2(%arg0: i32, %arg1: i32) -> (i32, i32) {
    %c0_i32 = arith.constant 0 : i32
    %c0_i32_0 = arith.constant 0 : i32
    return %c0_i32, %arg1 : i32, i32
  }
  func.func @transform_3(%arg0: i32, %arg1: i32) -> (i32, i32) {
    %c0_i32 = arith.constant 0 : i32
    return %arg0, %arg1 : i32, i32
  }
}

module attributes {stable_mosaic.version = 11 : i64} {
  func.func @_maxpool_3x3_s2_kernel(%arg0: i32, %arg1: memref<1x22x11x192xf32, #tpu.memory_space<vmem>>, %arg2: memref<1x10x10x96xf32, #tpu.memory_space<vmem>>) attributes {dimension_semantics = [#tpu.dimension_semantics<parallel>], iteration_bounds = array<i64: 2>, scalar_prefetch = 0 : i64, scratch_operands = 0 : i64, tpu.core_type = #tpu.core_type<tc>, window_params = [{transform_indices = @transform_0, window_bounds = array<i64: 1, 22, 11, 192>}, {transform_indices = @transform_1, window_bounds = array<i64: 1, 10, 10, 96>}]} {
    %c0 = arith.constant 0 : index
    %c0_0 = arith.constant 0 : index
    %c0_1 = arith.constant 0 : index
    %c0_2 = arith.constant 0 : index
    %0 = vector.load %arg1[%c0, %c0_0, %c0_1, %c0_2] : memref<1x22x11x192xf32, #tpu.memory_space<vmem>>, vector<1x22x11x192xf32>
    %1 = vector.shape_cast %0 : vector<1x22x11x192xf32> to vector<22x11x192xf32>
    %2 = vector.extract_strided_slice %1 {offsets = [0, 0, 0], sizes = [22, 10, 96], strides = [1, 1, 1]} : vector<22x11x192xf32> to vector<22x10x96xf32>
    %3 = vector.extract_strided_slice %1 {offsets = [0, 0, 96], sizes = [22, 10, 96], strides = [1, 1, 1]} : vector<22x11x192xf32> to vector<22x10x96xf32>
    %4 = arith.maximumf %2, %3 : vector<22x10x96xf32>
    %5 = vector.extract_strided_slice %1 {offsets = [0, 1, 0], sizes = [22, 10, 96], strides = [1, 1, 1]} : vector<22x11x192xf32> to vector<22x10x96xf32>
    %6 = arith.maximumf %4, %5 : vector<22x10x96xf32>
    %7 = vector.shape_cast %6 : vector<22x10x96xf32> to vector<11x2x10x96xf32>
    %8 = vector.extract_strided_slice %7 {offsets = [0, 0, 0, 0], sizes = [10, 1, 10, 96], strides = [1, 1, 1, 1]} : vector<11x2x10x96xf32> to vector<10x1x10x96xf32>
    %9 = vector.shape_cast %8 : vector<10x1x10x96xf32> to vector<10x10x96xf32>
    %10 = vector.extract_strided_slice %7 {offsets = [0, 1, 0, 0], sizes = [10, 1, 10, 96], strides = [1, 1, 1, 1]} : vector<11x2x10x96xf32> to vector<10x1x10x96xf32>
    %11 = vector.shape_cast %10 : vector<10x1x10x96xf32> to vector<10x10x96xf32>
    %12 = arith.maximumf %9, %11 : vector<10x10x96xf32>
    %13 = vector.extract_strided_slice %7 {offsets = [1, 0, 0, 0], sizes = [10, 1, 10, 96], strides = [1, 1, 1, 1]} : vector<11x2x10x96xf32> to vector<10x1x10x96xf32>
    %14 = vector.shape_cast %13 : vector<10x1x10x96xf32> to vector<10x10x96xf32>
    %15 = arith.maximumf %12, %14 : vector<10x10x96xf32>
    %c0_3 = arith.constant 0 : index
    %c0_4 = arith.constant 0 : index
    %c0_5 = arith.constant 0 : index
    %c0_6 = arith.constant 0 : index
    %16 = vector.load %arg2[%c0_3, %c0_4, %c0_5, %c0_6] : memref<1x10x10x96xf32, #tpu.memory_space<vmem>>, vector<1x10x10x96xf32>
    %17 = vector.shape_cast %16 : vector<1x10x10x96xf32> to vector<10x10x96xf32>
    %18 = vector.shape_cast %15 : vector<10x10x96xf32> to vector<1x10x10x96xf32>
    tpu.vector_store %arg2[%c0_3, %c0_4, %c0_5, %c0_6], %18 {strides = array<i32>} : memref<1x10x10x96xf32, #tpu.memory_space<vmem>>, vector<1x10x10x96xf32>,
    return
  }
  func.func @transform_0(%arg0: i32) -> (i32, i32, i32, i32) {
    %c0_i32 = arith.constant 0 : i32
    %c0_i32_0 = arith.constant 0 : i32
    %c0_i32_1 = arith.constant 0 : i32
    %c0_i32_2 = arith.constant 0 : i32
    return %arg0, %c0_i32, %c0_i32_0, %c0_i32_1 : i32, i32, i32, i32
  }
  func.func @transform_1(%arg0: i32) -> (i32, i32, i32, i32) {
    %c0_i32 = arith.constant 0 : i32
    %c0_i32_0 = arith.constant 0 : i32
    %c0_i32_1 = arith.constant 0 : i32
    %c0_i32_2 = arith.constant 0 : i32
    return %arg0, %c0_i32, %c0_i32_0, %c0_i32_1 : i32, i32, i32, i32
  }
}

module attributes {stable_mosaic.version = 11 : i64} {
  func.func @_mm_bias_relu_kernel(%arg0: i32, %arg1: i32, %arg2: memref<128x96xbf16, #tpu.memory_space<vmem>>, %arg3: memref<96x16xbf16, #tpu.memory_space<vmem>>, %arg4: memref<1x16xf32, #tpu.memory_space<vmem>>, %arg5: memref<128x16xf32, #tpu.memory_space<vmem>>) attributes {dimension_semantics = [#tpu.dimension_semantics<parallel>, #tpu.dimension_semantics<parallel>], iteration_bounds = array<i64: 2, 1>, scalar_prefetch = 0 : i64, scratch_operands = 0 : i64, tpu.core_type = #tpu.core_type<tc>, window_params = [{transform_indices = @transform_0, window_bounds = array<i64: 128, 96>}, {transform_indices = @transform_1, window_bounds = array<i64: 96, 16>}, {transform_indices = @transform_2, window_bounds = array<i64: 1, 16>}, {transform_indices = @transform_3, window_bounds = array<i64: 128, 16>}]} {
    %c0 = arith.constant 0 : index
    %c0_0 = arith.constant 0 : index
    %0 = vector.load %arg2[%c0, %c0_0] : memref<128x96xbf16, #tpu.memory_space<vmem>>, vector<128x96xbf16>
    %c0_1 = arith.constant 0 : index
    %c0_2 = arith.constant 0 : index
    %1 = vector.load %arg3[%c0_1, %c0_2] : memref<96x16xbf16, #tpu.memory_space<vmem>>, vector<96x16xbf16>
    %cst = arith.constant dense<0.000000e+00> : vector<128x16xf32>
    %2 = tpu.matmul %0, %1, %cst {dimension_numbers = #tpu.dot_dimension_numbers<[1], [0], [0], [1], [0, 0, 1, 1], [], []>} : vector<128x96xbf16>, vector<96x16xbf16>, vector<128x16xf32> -> vector<128x16xf32>
    %c0_3 = arith.constant 0 : index
    %c0_4 = arith.constant 0 : index
    %3 = vector.load %arg4[%c0_3, %c0_4] : memref<1x16xf32, #tpu.memory_space<vmem>>, vector<1x16xf32>
    %4 = vector.broadcast %3 : vector<1x16xf32> to vector<128x16xf32>
    %5 = arith.addf %2, %4 : vector<128x16xf32>
    %cst_5 = arith.constant 0.000000e+00 : f32
    %6 = vector.broadcast %cst_5 : f32 to vector<128x16xf32>
    %7 = arith.maximumf %5, %6 : vector<128x16xf32>
    %c0_6 = arith.constant 0 : index
    %c0_7 = arith.constant 0 : index
    %8 = vector.load %arg5[%c0_6, %c0_7] : memref<128x16xf32, #tpu.memory_space<vmem>>, vector<128x16xf32>
    tpu.vector_store %arg5[%c0_6, %c0_7], %7 {strides = array<i32>} : memref<128x16xf32, #tpu.memory_space<vmem>>, vector<128x16xf32>,
    return
  }
  func.func @transform_0(%arg0: i32, %arg1: i32) -> (i32, i32) {
    %c0_i32 = arith.constant 0 : i32
    %c0_i32_0 = arith.constant 0 : i32
    return %arg0, %c0_i32 : i32, i32
  }
  func.func @transform_1(%arg0: i32, %arg1: i32) -> (i32, i32) {
    %c0_i32 = arith.constant 0 : i32
    %c0_i32_0 = arith.constant 0 : i32
    return %c0_i32, %arg1 : i32, i32
  }
  func.func @transform_2(%arg0: i32, %arg1: i32) -> (i32, i32) {
    %c0_i32 = arith.constant 0 : i32
    %c0_i32_0 = arith.constant 0 : i32
    return %c0_i32, %arg1 : i32, i32
  }
  func.func @transform_3(%arg0: i32, %arg1: i32) -> (i32, i32) {
    %c0_i32 = arith.constant 0 : i32
    return %arg0, %arg1 : i32, i32
  }
}

module attributes {stable_mosaic.version = 11 : i64} {
  func.func @_mm_bias_relu_kernel(%arg0: i32, %arg1: i32, %arg2: memref<128x144xbf16, #tpu.memory_space<vmem>>, %arg3: memref<144x128xbf16, #tpu.memory_space<vmem>>, %arg4: memref<1x128xf32, #tpu.memory_space<vmem>>, %arg5: memref<128x128xf32, #tpu.memory_space<vmem>>) attributes {dimension_semantics = [#tpu.dimension_semantics<parallel>, #tpu.dimension_semantics<parallel>], iteration_bounds = array<i64: 2, 1>, scalar_prefetch = 0 : i64, scratch_operands = 0 : i64, tpu.core_type = #tpu.core_type<tc>, window_params = [{transform_indices = @transform_0, window_bounds = array<i64: 128, 144>}, {transform_indices = @transform_1, window_bounds = array<i64: 144, 128>}, {transform_indices = @transform_2, window_bounds = array<i64: 1, 128>}, {transform_indices = @transform_3, window_bounds = array<i64: 128, 128>}]} {
    %c0 = arith.constant 0 : index
    %c0_0 = arith.constant 0 : index
    %0 = vector.load %arg2[%c0, %c0_0] : memref<128x144xbf16, #tpu.memory_space<vmem>>, vector<128x144xbf16>
    %c0_1 = arith.constant 0 : index
    %c0_2 = arith.constant 0 : index
    %1 = vector.load %arg3[%c0_1, %c0_2] : memref<144x128xbf16, #tpu.memory_space<vmem>>, vector<144x128xbf16>
    %cst = arith.constant dense<0.000000e+00> : vector<128x128xf32>
    %2 = tpu.matmul %0, %1, %cst {dimension_numbers = #tpu.dot_dimension_numbers<[1], [0], [0], [1], [0, 0, 1, 1], [], []>} : vector<128x144xbf16>, vector<144x128xbf16>, vector<128x128xf32> -> vector<128x128xf32>
    %c0_3 = arith.constant 0 : index
    %c0_4 = arith.constant 0 : index
    %3 = vector.load %arg4[%c0_3, %c0_4] : memref<1x128xf32, #tpu.memory_space<vmem>>, vector<1x128xf32>
    %4 = vector.broadcast %3 : vector<1x128xf32> to vector<128x128xf32>
    %5 = arith.addf %2, %4 : vector<128x128xf32>
    %cst_5 = arith.constant 0.000000e+00 : f32
    %6 = vector.broadcast %cst_5 : f32 to vector<128x128xf32>
    %7 = arith.maximumf %5, %6 : vector<128x128xf32>
    %c0_6 = arith.constant 0 : index
    %c0_7 = arith.constant 0 : index
    %8 = vector.load %arg5[%c0_6, %c0_7] : memref<128x128xf32, #tpu.memory_space<vmem>>, vector<128x128xf32>
    tpu.vector_store %arg5[%c0_6, %c0_7], %7 {strides = array<i32>} : memref<128x128xf32, #tpu.memory_space<vmem>>, vector<128x128xf32>,
    return
  }
  func.func @transform_0(%arg0: i32, %arg1: i32) -> (i32, i32) {
    %c0_i32 = arith.constant 0 : i32
    %c0_i32_0 = arith.constant 0 : i32
    return %arg0, %c0_i32 : i32, i32
  }
  func.func @transform_1(%arg0: i32, %arg1: i32) -> (i32, i32) {
    %c0_i32 = arith.constant 0 : i32
    %c0_i32_0 = arith.constant 0 : i32
    return %c0_i32, %arg1 : i32, i32
  }
  func.func @transform_2(%arg0: i32, %arg1: i32) -> (i32, i32) {
    %c0_i32 = arith.constant 0 : i32
    %c0_i32_0 = arith.constant 0 : i32
    return %c0_i32, %arg1 : i32, i32
  }
  func.func @transform_3(%arg0: i32, %arg1: i32) -> (i32, i32) {
    %c0_i32 = arith.constant 0 : i32
    return %arg0, %arg1 : i32, i32
  }
}

module attributes {stable_mosaic.version = 11 : i64} {
  func.func @_mm_bias_relu_kernel(%arg0: i32, %arg1: i32, %arg2: memref<128x128xbf16, #tpu.memory_space<vmem>>, %arg3: memref<128x16xbf16, #tpu.memory_space<vmem>>, %arg4: memref<1x16xf32, #tpu.memory_space<vmem>>, %arg5: memref<128x16xf32, #tpu.memory_space<vmem>>) attributes {dimension_semantics = [#tpu.dimension_semantics<parallel>, #tpu.dimension_semantics<parallel>], iteration_bounds = array<i64: 2, 1>, scalar_prefetch = 0 : i64, scratch_operands = 0 : i64, tpu.core_type = #tpu.core_type<tc>, window_params = [{transform_indices = @transform_0, window_bounds = array<i64: 128, 128>}, {transform_indices = @transform_1, window_bounds = array<i64: 128, 16>}, {transform_indices = @transform_2, window_bounds = array<i64: 1, 16>}, {transform_indices = @transform_3, window_bounds = array<i64: 128, 16>}]} {
    %c0 = arith.constant 0 : index
    %c0_0 = arith.constant 0 : index
    %0 = vector.load %arg2[%c0, %c0_0] : memref<128x128xbf16, #tpu.memory_space<vmem>>, vector<128x128xbf16>
    %c0_1 = arith.constant 0 : index
    %c0_2 = arith.constant 0 : index
    %1 = vector.load %arg3[%c0_1, %c0_2] : memref<128x16xbf16, #tpu.memory_space<vmem>>, vector<128x16xbf16>
    %cst = arith.constant dense<0.000000e+00> : vector<128x16xf32>
    %2 = tpu.matmul %0, %1, %cst {dimension_numbers = #tpu.dot_dimension_numbers<[1], [0], [0], [1], [0, 0, 1, 1], [], []>} : vector<128x128xbf16>, vector<128x16xbf16>, vector<128x16xf32> -> vector<128x16xf32>
    %c0_3 = arith.constant 0 : index
    %c0_4 = arith.constant 0 : index
    %3 = vector.load %arg4[%c0_3, %c0_4] : memref<1x16xf32, #tpu.memory_space<vmem>>, vector<1x16xf32>
    %4 = vector.broadcast %3 : vector<1x16xf32> to vector<128x16xf32>
    %5 = arith.addf %2, %4 : vector<128x16xf32>
    %cst_5 = arith.constant 0.000000e+00 : f32
    %6 = vector.broadcast %cst_5 : f32 to vector<128x16xf32>
    %7 = arith.maximumf %5, %6 : vector<128x16xf32>
    %c0_6 = arith.constant 0 : index
    %c0_7 = arith.constant 0 : index
    %8 = vector.load %arg5[%c0_6, %c0_7] : memref<128x16xf32, #tpu.memory_space<vmem>>, vector<128x16xf32>
    tpu.vector_store %arg5[%c0_6, %c0_7], %7 {strides = array<i32>} : memref<128x16xf32, #tpu.memory_space<vmem>>, vector<128x16xf32>,
    return
  }
  func.func @transform_0(%arg0: i32, %arg1: i32) -> (i32, i32) {
    %c0_i32 = arith.constant 0 : i32
    %c0_i32_0 = arith.constant 0 : i32
    return %arg0, %c0_i32 : i32, i32
  }
  func.func @transform_1(%arg0: i32, %arg1: i32) -> (i32, i32) {
    %c0_i32 = arith.constant 0 : i32
    %c0_i32_0 = arith.constant 0 : i32
    return %c0_i32, %arg1 : i32, i32
  }
  func.func @transform_2(%arg0: i32, %arg1: i32) -> (i32, i32) {
    %c0_i32 = arith.constant 0 : i32
    %c0_i32_0 = arith.constant 0 : i32
    return %c0_i32, %arg1 : i32, i32
  }
  func.func @transform_3(%arg0: i32, %arg1: i32) -> (i32, i32) {
    %c0_i32 = arith.constant 0 : i32
    return %arg0, %arg1 : i32, i32
  }
}

module attributes {stable_mosaic.version = 11 : i64} {
  func.func @_mm_bias_relu_kernel(%arg0: i32, %arg1: i32, %arg2: memref<128x128xbf16, #tpu.memory_space<vmem>>, %arg3: memref<128x32xbf16, #tpu.memory_space<vmem>>, %arg4: memref<1x32xf32, #tpu.memory_space<vmem>>, %arg5: memref<128x32xf32, #tpu.memory_space<vmem>>) attributes {dimension_semantics = [#tpu.dimension_semantics<parallel>, #tpu.dimension_semantics<parallel>], iteration_bounds = array<i64: 2, 1>, scalar_prefetch = 0 : i64, scratch_operands = 0 : i64, tpu.core_type = #tpu.core_type<tc>, window_params = [{transform_indices = @transform_0, window_bounds = array<i64: 128, 128>}, {transform_indices = @transform_1, window_bounds = array<i64: 128, 32>}, {transform_indices = @transform_2, window_bounds = array<i64: 1, 32>}, {transform_indices = @transform_3, window_bounds = array<i64: 128, 32>}]} {
    %c0 = arith.constant 0 : index
    %c0_0 = arith.constant 0 : index
    %0 = vector.load %arg2[%c0, %c0_0] : memref<128x128xbf16, #tpu.memory_space<vmem>>, vector<128x128xbf16>
    %c0_1 = arith.constant 0 : index
    %c0_2 = arith.constant 0 : index
    %1 = vector.load %arg3[%c0_1, %c0_2] : memref<128x32xbf16, #tpu.memory_space<vmem>>, vector<128x32xbf16>
    %cst = arith.constant dense<0.000000e+00> : vector<128x32xf32>
    %2 = tpu.matmul %0, %1, %cst {dimension_numbers = #tpu.dot_dimension_numbers<[1], [0], [0], [1], [0, 0, 1, 1], [], []>} : vector<128x128xbf16>, vector<128x32xbf16>, vector<128x32xf32> -> vector<128x32xf32>
    %c0_3 = arith.constant 0 : index
    %c0_4 = arith.constant 0 : index
    %3 = vector.load %arg4[%c0_3, %c0_4] : memref<1x32xf32, #tpu.memory_space<vmem>>, vector<1x32xf32>
    %4 = vector.broadcast %3 : vector<1x32xf32> to vector<128x32xf32>
    %5 = arith.addf %2, %4 : vector<128x32xf32>
    %cst_5 = arith.constant 0.000000e+00 : f32
    %6 = vector.broadcast %cst_5 : f32 to vector<128x32xf32>
    %7 = arith.maximumf %5, %6 : vector<128x32xf32>
    %c0_6 = arith.constant 0 : index
    %c0_7 = arith.constant 0 : index
    %8 = vector.load %arg5[%c0_6, %c0_7] : memref<128x32xf32, #tpu.memory_space<vmem>>, vector<128x32xf32>
    tpu.vector_store %arg5[%c0_6, %c0_7], %7 {strides = array<i32>} : memref<128x32xf32, #tpu.memory_space<vmem>>, vector<128x32xf32>,
    return
  }
  func.func @transform_0(%arg0: i32, %arg1: i32) -> (i32, i32) {
    %c0_i32 = arith.constant 0 : i32
    %c0_i32_0 = arith.constant 0 : i32
    return %arg0, %c0_i32 : i32, i32
  }
  func.func @transform_1(%arg0: i32, %arg1: i32) -> (i32, i32) {
    %c0_i32 = arith.constant 0 : i32
    %c0_i32_0 = arith.constant 0 : i32
    return %c0_i32, %arg1 : i32, i32
  }
  func.func @transform_2(%arg0: i32, %arg1: i32) -> (i32, i32) {
    %c0_i32 = arith.constant 0 : i32
    %c0_i32_0 = arith.constant 0 : i32
    return %c0_i32, %arg1 : i32, i32
  }
  func.func @transform_3(%arg0: i32, %arg1: i32) -> (i32, i32) {
    %c0_i32 = arith.constant 0 : i32
    return %arg0, %arg1 : i32, i32
  }
}

module attributes {stable_mosaic.version = 11 : i64} {
  func.func @_mm_bias_relu_kernel(%arg0: i32, %arg1: i32, %arg2: memref<128x288xbf16, #tpu.memory_space<vmem>>, %arg3: memref<288x128xbf16, #tpu.memory_space<vmem>>, %arg4: memref<1x128xf32, #tpu.memory_space<vmem>>, %arg5: memref<128x128xf32, #tpu.memory_space<vmem>>) attributes {dimension_semantics = [#tpu.dimension_semantics<parallel>, #tpu.dimension_semantics<parallel>], iteration_bounds = array<i64: 2, 2>, scalar_prefetch = 0 : i64, scratch_operands = 0 : i64, tpu.core_type = #tpu.core_type<tc>, window_params = [{transform_indices = @transform_0, window_bounds = array<i64: 128, 288>}, {transform_indices = @transform_1, window_bounds = array<i64: 288, 128>}, {transform_indices = @transform_2, window_bounds = array<i64: 1, 128>}, {transform_indices = @transform_3, window_bounds = array<i64: 128, 128>}]} {
    %c0 = arith.constant 0 : index
    %c0_0 = arith.constant 0 : index
    %0 = vector.load %arg2[%c0, %c0_0] : memref<128x288xbf16, #tpu.memory_space<vmem>>, vector<128x288xbf16>
    %c0_1 = arith.constant 0 : index
    %c0_2 = arith.constant 0 : index
    %1 = vector.load %arg3[%c0_1, %c0_2] : memref<288x128xbf16, #tpu.memory_space<vmem>>, vector<288x128xbf16>
    %cst = arith.constant dense<0.000000e+00> : vector<128x128xf32>
    %2 = tpu.matmul %0, %1, %cst {dimension_numbers = #tpu.dot_dimension_numbers<[1], [0], [0], [1], [0, 0, 1, 1], [], []>} : vector<128x288xbf16>, vector<288x128xbf16>, vector<128x128xf32> -> vector<128x128xf32>
    %c0_3 = arith.constant 0 : index
    %c0_4 = arith.constant 0 : index
    %3 = vector.load %arg4[%c0_3, %c0_4] : memref<1x128xf32, #tpu.memory_space<vmem>>, vector<1x128xf32>
    %4 = vector.broadcast %3 : vector<1x128xf32> to vector<128x128xf32>
    %5 = arith.addf %2, %4 : vector<128x128xf32>
    %cst_5 = arith.constant 0.000000e+00 : f32
    %6 = vector.broadcast %cst_5 : f32 to vector<128x128xf32>
    %7 = arith.maximumf %5, %6 : vector<128x128xf32>
    %c0_6 = arith.constant 0 : index
    %c0_7 = arith.constant 0 : index
    %8 = vector.load %arg5[%c0_6, %c0_7] : memref<128x128xf32, #tpu.memory_space<vmem>>, vector<128x128xf32>
    tpu.vector_store %arg5[%c0_6, %c0_7], %7 {strides = array<i32>} : memref<128x128xf32, #tpu.memory_space<vmem>>, vector<128x128xf32>,
    return
  }
  func.func @transform_0(%arg0: i32, %arg1: i32) -> (i32, i32) {
    %c0_i32 = arith.constant 0 : i32
    %c0_i32_0 = arith.constant 0 : i32
    return %arg0, %c0_i32 : i32, i32
  }
  func.func @transform_1(%arg0: i32, %arg1: i32) -> (i32, i32) {
    %c0_i32 = arith.constant 0 : i32
    %c0_i32_0 = arith.constant 0 : i32
    return %c0_i32, %arg1 : i32, i32
  }
  func.func @transform_2(%arg0: i32, %arg1: i32) -> (i32, i32) {
    %c0_i32 = arith.constant 0 : i32
    %c0_i32_0 = arith.constant 0 : i32
    return %c0_i32, %arg1 : i32, i32
  }
  func.func @transform_3(%arg0: i32, %arg1: i32) -> (i32, i32) {
    %c0_i32 = arith.constant 0 : i32
    return %arg0, %arg1 : i32, i32
  }
}

module attributes {stable_mosaic.version = 11 : i64} {
  func.func @_maxpool_3x3_s2_kernel(%arg0: i32, %arg1: memref<1x12x6x512xf32, #tpu.memory_space<vmem>>, %arg2: memref<1x5x5x256xf32, #tpu.memory_space<vmem>>) attributes {dimension_semantics = [#tpu.dimension_semantics<parallel>], iteration_bounds = array<i64: 2>, scalar_prefetch = 0 : i64, scratch_operands = 0 : i64, tpu.core_type = #tpu.core_type<tc>, window_params = [{transform_indices = @transform_0, window_bounds = array<i64: 1, 12, 6, 512>}, {transform_indices = @transform_1, window_bounds = array<i64: 1, 5, 5, 256>}]} {
    %c0 = arith.constant 0 : index
    %c0_0 = arith.constant 0 : index
    %c0_1 = arith.constant 0 : index
    %c0_2 = arith.constant 0 : index
    %0 = vector.load %arg1[%c0, %c0_0, %c0_1, %c0_2] : memref<1x12x6x512xf32, #tpu.memory_space<vmem>>, vector<1x12x6x512xf32>
    %1 = vector.shape_cast %0 : vector<1x12x6x512xf32> to vector<12x6x512xf32>
    %2 = vector.extract_strided_slice %1 {offsets = [0, 0, 0], sizes = [12, 5, 256], strides = [1, 1, 1]} : vector<12x6x512xf32> to vector<12x5x256xf32>
    %3 = vector.extract_strided_slice %1 {offsets = [0, 0, 256], sizes = [12, 5, 256], strides = [1, 1, 1]} : vector<12x6x512xf32> to vector<12x5x256xf32>
    %4 = arith.maximumf %2, %3 : vector<12x5x256xf32>
    %5 = vector.extract_strided_slice %1 {offsets = [0, 1, 0], sizes = [12, 5, 256], strides = [1, 1, 1]} : vector<12x6x512xf32> to vector<12x5x256xf32>
    %6 = arith.maximumf %4, %5 : vector<12x5x256xf32>
    %7 = vector.shape_cast %6 : vector<12x5x256xf32> to vector<6x2x5x256xf32>
    %8 = vector.extract_strided_slice %7 {offsets = [0, 0, 0, 0], sizes = [5, 1, 5, 256], strides = [1, 1, 1, 1]} : vector<6x2x5x256xf32> to vector<5x1x5x256xf32>
    %9 = vector.shape_cast %8 : vector<5x1x5x256xf32> to vector<5x5x256xf32>
    %10 = vector.extract_strided_slice %7 {offsets = [0, 1, 0, 0], sizes = [5, 1, 5, 256], strides = [1, 1, 1, 1]} : vector<6x2x5x256xf32> to vector<5x1x5x256xf32>
    %11 = vector.shape_cast %10 : vector<5x1x5x256xf32> to vector<5x5x256xf32>
    %12 = arith.maximumf %9, %11 : vector<5x5x256xf32>
    %13 = vector.extract_strided_slice %7 {offsets = [1, 0, 0, 0], sizes = [5, 1, 5, 256], strides = [1, 1, 1, 1]} : vector<6x2x5x256xf32> to vector<5x1x5x256xf32>
    %14 = vector.shape_cast %13 : vector<5x1x5x256xf32> to vector<5x5x256xf32>
    %15 = arith.maximumf %12, %14 : vector<5x5x256xf32>
    %c0_3 = arith.constant 0 : index
    %c0_4 = arith.constant 0 : index
    %c0_5 = arith.constant 0 : index
    %c0_6 = arith.constant 0 : index
    %16 = vector.load %arg2[%c0_3, %c0_4, %c0_5, %c0_6] : memref<1x5x5x256xf32, #tpu.memory_space<vmem>>, vector<1x5x5x256xf32>
    %17 = vector.shape_cast %16 : vector<1x5x5x256xf32> to vector<5x5x256xf32>
    %18 = vector.shape_cast %15 : vector<5x5x256xf32> to vector<1x5x5x256xf32>
    tpu.vector_store %arg2[%c0_3, %c0_4, %c0_5, %c0_6], %18 {strides = array<i32>} : memref<1x5x5x256xf32, #tpu.memory_space<vmem>>, vector<1x5x5x256xf32>,
    return
  }
  func.func @transform_0(%arg0: i32) -> (i32, i32, i32, i32) {
    %c0_i32 = arith.constant 0 : i32
    %c0_i32_0 = arith.constant 0 : i32
    %c0_i32_1 = arith.constant 0 : i32
    %c0_i32_2 = arith.constant 0 : i32
    return %arg0, %c0_i32, %c0_i32_0, %c0_i32_1 : i32, i32, i32, i32
  }
  func.func @transform_1(%arg0: i32) -> (i32, i32, i32, i32) {
    %c0_i32 = arith.constant 0 : i32
    %c0_i32_0 = arith.constant 0 : i32
    %c0_i32_1 = arith.constant 0 : i32
    %c0_i32_2 = arith.constant 0 : i32
    return %arg0, %c0_i32, %c0_i32_0, %c0_i32_1 : i32, i32, i32, i32
  }
}

module attributes {stable_mosaic.version = 11 : i64} {
  func.func @_mm_bias_relu_kernel(%arg0: i32, %arg1: i32, %arg2: memref<50x256xbf16, #tpu.memory_space<vmem>>, %arg3: memref<256x32xbf16, #tpu.memory_space<vmem>>, %arg4: memref<1x32xf32, #tpu.memory_space<vmem>>, %arg5: memref<50x32xf32, #tpu.memory_space<vmem>>) attributes {dimension_semantics = [#tpu.dimension_semantics<parallel>, #tpu.dimension_semantics<parallel>], iteration_bounds = array<i64: 1, 1>, scalar_prefetch = 0 : i64, scratch_operands = 0 : i64, tpu.core_type = #tpu.core_type<tc>, window_params = [{transform_indices = @transform_0, window_bounds = array<i64: 50, 256>}, {transform_indices = @transform_1, window_bounds = array<i64: 256, 32>}, {transform_indices = @transform_2, window_bounds = array<i64: 1, 32>}, {transform_indices = @transform_3, window_bounds = array<i64: 50, 32>}]} {
    %c0 = arith.constant 0 : index
    %c0_0 = arith.constant 0 : index
    %0 = vector.load %arg2[%c0, %c0_0] : memref<50x256xbf16, #tpu.memory_space<vmem>>, vector<50x256xbf16>
    %c0_1 = arith.constant 0 : index
    %c0_2 = arith.constant 0 : index
    %1 = vector.load %arg3[%c0_1, %c0_2] : memref<256x32xbf16, #tpu.memory_space<vmem>>, vector<256x32xbf16>
    %cst = arith.constant dense<0.000000e+00> : vector<50x32xf32>
    %2 = tpu.matmul %0, %1, %cst {dimension_numbers = #tpu.dot_dimension_numbers<[1], [0], [0], [1], [0, 0, 1, 1], [], []>} : vector<50x256xbf16>, vector<256x32xbf16>, vector<50x32xf32> -> vector<50x32xf32>
    %c0_3 = arith.constant 0 : index
    %c0_4 = arith.constant 0 : index
    %3 = vector.load %arg4[%c0_3, %c0_4] : memref<1x32xf32, #tpu.memory_space<vmem>>, vector<1x32xf32>
    %4 = vector.broadcast %3 : vector<1x32xf32> to vector<50x32xf32>
    %5 = arith.addf %2, %4 : vector<50x32xf32>
    %cst_5 = arith.constant 0.000000e+00 : f32
    %6 = vector.broadcast %cst_5 : f32 to vector<50x32xf32>
    %7 = arith.maximumf %5, %6 : vector<50x32xf32>
    %c0_6 = arith.constant 0 : index
    %c0_7 = arith.constant 0 : index
    %8 = vector.load %arg5[%c0_6, %c0_7] : memref<50x32xf32, #tpu.memory_space<vmem>>, vector<50x32xf32>
    tpu.vector_store %arg5[%c0_6, %c0_7], %7 {strides = array<i32>} : memref<50x32xf32, #tpu.memory_space<vmem>>, vector<50x32xf32>,
    return
  }
  func.func @transform_0(%arg0: i32, %arg1: i32) -> (i32, i32) {
    %c0_i32 = arith.constant 0 : i32
    %c0_i32_0 = arith.constant 0 : i32
    return %arg0, %c0_i32 : i32, i32
  }
  func.func @transform_1(%arg0: i32, %arg1: i32) -> (i32, i32) {
    %c0_i32 = arith.constant 0 : i32
    %c0_i32_0 = arith.constant 0 : i32
    return %c0_i32, %arg1 : i32, i32
  }
  func.func @transform_2(%arg0: i32, %arg1: i32) -> (i32, i32) {
    %c0_i32 = arith.constant 0 : i32
    %c0_i32_0 = arith.constant 0 : i32
    return %c0_i32, %arg1 : i32, i32
  }
  func.func @transform_3(%arg0: i32, %arg1: i32) -> (i32, i32) {
    %c0_i32 = arith.constant 0 : i32
    return %arg0, %arg1 : i32, i32
  }
}

module attributes {stable_mosaic.version = 11 : i64} {
  func.func @_mm_bias_relu_kernel(%arg0: i32, %arg1: i32, %arg2: memref<50x288xbf16, #tpu.memory_space<vmem>>, %arg3: memref<288x128xbf16, #tpu.memory_space<vmem>>, %arg4: memref<1x128xf32, #tpu.memory_space<vmem>>, %arg5: memref<50x128xf32, #tpu.memory_space<vmem>>) attributes {dimension_semantics = [#tpu.dimension_semantics<parallel>, #tpu.dimension_semantics<parallel>], iteration_bounds = array<i64: 1, 2>, scalar_prefetch = 0 : i64, scratch_operands = 0 : i64, tpu.core_type = #tpu.core_type<tc>, window_params = [{transform_indices = @transform_0, window_bounds = array<i64: 50, 288>}, {transform_indices = @transform_1, window_bounds = array<i64: 288, 128>}, {transform_indices = @transform_2, window_bounds = array<i64: 1, 128>}, {transform_indices = @transform_3, window_bounds = array<i64: 50, 128>}]} {
    %c0 = arith.constant 0 : index
    %c0_0 = arith.constant 0 : index
    %0 = vector.load %arg2[%c0, %c0_0] : memref<50x288xbf16, #tpu.memory_space<vmem>>, vector<50x288xbf16>
    %c0_1 = arith.constant 0 : index
    %c0_2 = arith.constant 0 : index
    %1 = vector.load %arg3[%c0_1, %c0_2] : memref<288x128xbf16, #tpu.memory_space<vmem>>, vector<288x128xbf16>
    %cst = arith.constant dense<0.000000e+00> : vector<50x128xf32>
    %2 = tpu.matmul %0, %1, %cst {dimension_numbers = #tpu.dot_dimension_numbers<[1], [0], [0], [1], [0, 0, 1, 1], [], []>} : vector<50x288xbf16>, vector<288x128xbf16>, vector<50x128xf32> -> vector<50x128xf32>
    %c0_3 = arith.constant 0 : index
    %c0_4 = arith.constant 0 : index
    %3 = vector.load %arg4[%c0_3, %c0_4] : memref<1x128xf32, #tpu.memory_space<vmem>>, vector<1x128xf32>
    %4 = vector.broadcast %3 : vector<1x128xf32> to vector<50x128xf32>
    %5 = arith.addf %2, %4 : vector<50x128xf32>
    %cst_5 = arith.constant 0.000000e+00 : f32
    %6 = vector.broadcast %cst_5 : f32 to vector<50x128xf32>
    %7 = arith.maximumf %5, %6 : vector<50x128xf32>
    %c0_6 = arith.constant 0 : index
    %c0_7 = arith.constant 0 : index
    %8 = vector.load %arg5[%c0_6, %c0_7] : memref<50x128xf32, #tpu.memory_space<vmem>>, vector<50x128xf32>
    tpu.vector_store %arg5[%c0_6, %c0_7], %7 {strides = array<i32>} : memref<50x128xf32, #tpu.memory_space<vmem>>, vector<50x128xf32>,
    return
  }
  func.func @transform_0(%arg0: i32, %arg1: i32) -> (i32, i32) {
    %c0_i32 = arith.constant 0 : i32
    %c0_i32_0 = arith.constant 0 : i32
    return %arg0, %c0_i32 : i32, i32
  }
  func.func @transform_1(%arg0: i32, %arg1: i32) -> (i32, i32) {
    %c0_i32 = arith.constant 0 : i32
    %c0_i32_0 = arith.constant 0 : i32
    return %c0_i32, %arg1 : i32, i32
  }
  func.func @transform_2(%arg0: i32, %arg1: i32) -> (i32, i32) {
    %c0_i32 = arith.constant 0 : i32
    %c0_i32_0 = arith.constant 0 : i32
    return %c0_i32, %arg1 : i32, i32
  }
  func.func @transform_3(%arg0: i32, %arg1: i32) -> (i32, i32) {
    %c0_i32 = arith.constant 0 : i32
    return %arg0, %arg1 : i32, i32
  }
}

module attributes {stable_mosaic.version = 11 : i64} {
  func.func @_mm_bias_relu_kernel(%arg0: i32, %arg1: i32, %arg2: memref<50x256xbf16, #tpu.memory_space<vmem>>, %arg3: memref<256x48xbf16, #tpu.memory_space<vmem>>, %arg4: memref<1x48xf32, #tpu.memory_space<vmem>>, %arg5: memref<50x48xf32, #tpu.memory_space<vmem>>) attributes {dimension_semantics = [#tpu.dimension_semantics<parallel>, #tpu.dimension_semantics<parallel>], iteration_bounds = array<i64: 1, 1>, scalar_prefetch = 0 : i64, scratch_operands = 0 : i64, tpu.core_type = #tpu.core_type<tc>, window_params = [{transform_indices = @transform_0, window_bounds = array<i64: 50, 256>}, {transform_indices = @transform_1, window_bounds = array<i64: 256, 48>}, {transform_indices = @transform_2, window_bounds = array<i64: 1, 48>}, {transform_indices = @transform_3, window_bounds = array<i64: 50, 48>}]} {
    %c0 = arith.constant 0 : index
    %c0_0 = arith.constant 0 : index
    %0 = vector.load %arg2[%c0, %c0_0] : memref<50x256xbf16, #tpu.memory_space<vmem>>, vector<50x256xbf16>
    %c0_1 = arith.constant 0 : index
    %c0_2 = arith.constant 0 : index
    %1 = vector.load %arg3[%c0_1, %c0_2] : memref<256x48xbf16, #tpu.memory_space<vmem>>, vector<256x48xbf16>
    %cst = arith.constant dense<0.000000e+00> : vector<50x48xf32>
    %2 = tpu.matmul %0, %1, %cst {dimension_numbers = #tpu.dot_dimension_numbers<[1], [0], [0], [1], [0, 0, 1, 1], [], []>} : vector<50x256xbf16>, vector<256x48xbf16>, vector<50x48xf32> -> vector<50x48xf32>
    %c0_3 = arith.constant 0 : index
    %c0_4 = arith.constant 0 : index
    %3 = vector.load %arg4[%c0_3, %c0_4] : memref<1x48xf32, #tpu.memory_space<vmem>>, vector<1x48xf32>
    %4 = vector.broadcast %3 : vector<1x48xf32> to vector<50x48xf32>
    %5 = arith.addf %2, %4 : vector<50x48xf32>
    %cst_5 = arith.constant 0.000000e+00 : f32
    %6 = vector.broadcast %cst_5 : f32 to vector<50x48xf32>
    %7 = arith.maximumf %5, %6 : vector<50x48xf32>
    %c0_6 = arith.constant 0 : index
    %c0_7 = arith.constant 0 : index
    %8 = vector.load %arg5[%c0_6, %c0_7] : memref<50x48xf32, #tpu.memory_space<vmem>>, vector<50x48xf32>
    tpu.vector_store %arg5[%c0_6, %c0_7], %7 {strides = array<i32>} : memref<50x48xf32, #tpu.memory_space<vmem>>, vector<50x48xf32>,
    return
  }
  func.func @transform_0(%arg0: i32, %arg1: i32) -> (i32, i32) {
    %c0_i32 = arith.constant 0 : i32
    %c0_i32_0 = arith.constant 0 : i32
    return %arg0, %c0_i32 : i32, i32
  }
  func.func @transform_1(%arg0: i32, %arg1: i32) -> (i32, i32) {
    %c0_i32 = arith.constant 0 : i32
    %c0_i32_0 = arith.constant 0 : i32
    return %c0_i32, %arg1 : i32, i32
  }
  func.func @transform_2(%arg0: i32, %arg1: i32) -> (i32, i32) {
    %c0_i32 = arith.constant 0 : i32
    %c0_i32_0 = arith.constant 0 : i32
    return %c0_i32, %arg1 : i32, i32
  }
  func.func @transform_3(%arg0: i32, %arg1: i32) -> (i32, i32) {
    %c0_i32 = arith.constant 0 : i32
    return %arg0, %arg1 : i32, i32
  }
}

module attributes {stable_mosaic.version = 11 : i64} {
  func.func @_mm_bias_relu_kernel(%arg0: i32, %arg1: i32, %arg2: memref<50x432xbf16, #tpu.memory_space<vmem>>, %arg3: memref<432x128xbf16, #tpu.memory_space<vmem>>, %arg4: memref<1x128xf32, #tpu.memory_space<vmem>>, %arg5: memref<50x128xf32, #tpu.memory_space<vmem>>) attributes {dimension_semantics = [#tpu.dimension_semantics<parallel>, #tpu.dimension_semantics<parallel>], iteration_bounds = array<i64: 1, 3>, scalar_prefetch = 0 : i64, scratch_operands = 0 : i64, tpu.core_type = #tpu.core_type<tc>, window_params = [{transform_indices = @transform_0, window_bounds = array<i64: 50, 432>}, {transform_indices = @transform_1, window_bounds = array<i64: 432, 128>}, {transform_indices = @transform_2, window_bounds = array<i64: 1, 128>}, {transform_indices = @transform_3, window_bounds = array<i64: 50, 128>}]} {
    %c0 = arith.constant 0 : index
    %c0_0 = arith.constant 0 : index
    %0 = vector.load %arg2[%c0, %c0_0] : memref<50x432xbf16, #tpu.memory_space<vmem>>, vector<50x432xbf16>
    %c0_1 = arith.constant 0 : index
    %c0_2 = arith.constant 0 : index
    %1 = vector.load %arg3[%c0_1, %c0_2] : memref<432x128xbf16, #tpu.memory_space<vmem>>, vector<432x128xbf16>
    %cst = arith.constant dense<0.000000e+00> : vector<50x128xf32>
    %2 = tpu.matmul %0, %1, %cst {dimension_numbers = #tpu.dot_dimension_numbers<[1], [0], [0], [1], [0, 0, 1, 1], [], []>} : vector<50x432xbf16>, vector<432x128xbf16>, vector<50x128xf32> -> vector<50x128xf32>
    %c0_3 = arith.constant 0 : index
    %c0_4 = arith.constant 0 : index
    %3 = vector.load %arg4[%c0_3, %c0_4] : memref<1x128xf32, #tpu.memory_space<vmem>>, vector<1x128xf32>
    %4 = vector.broadcast %3 : vector<1x128xf32> to vector<50x128xf32>
    %5 = arith.addf %2, %4 : vector<50x128xf32>
    %cst_5 = arith.constant 0.000000e+00 : f32
    %6 = vector.broadcast %cst_5 : f32 to vector<50x128xf32>
    %7 = arith.maximumf %5, %6 : vector<50x128xf32>
    %c0_6 = arith.constant 0 : index
    %c0_7 = arith.constant 0 : index
    %8 = vector.load %arg5[%c0_6, %c0_7] : memref<50x128xf32, #tpu.memory_space<vmem>>, vector<50x128xf32>
    tpu.vector_store %arg5[%c0_6, %c0_7], %7 {strides = array<i32>} : memref<50x128xf32, #tpu.memory_space<vmem>>, vector<50x128xf32>,
    return
  }
  func.func @transform_0(%arg0: i32, %arg1: i32) -> (i32, i32) {
    %c0_i32 = arith.constant 0 : i32
    %c0_i32_0 = arith.constant 0 : i32
    return %arg0, %c0_i32 : i32, i32
  }
  func.func @transform_1(%arg0: i32, %arg1: i32) -> (i32, i32) {
    %c0_i32 = arith.constant 0 : i32
    %c0_i32_0 = arith.constant 0 : i32
    return %c0_i32, %arg1 : i32, i32
  }
  func.func @transform_2(%arg0: i32, %arg1: i32) -> (i32, i32) {
    %c0_i32 = arith.constant 0 : i32
    %c0_i32_0 = arith.constant 0 : i32
    return %c0_i32, %arg1 : i32, i32
  }
  func.func @transform_3(%arg0: i32, %arg1: i32) -> (i32, i32) {
    %c0_i32 = arith.constant 0 : i32
    return %arg0, %arg1 : i32, i32
  }
}

module attributes {stable_mosaic.version = 11 : i64} {
  func.func @_mm_bias_relu_kernel(%arg0: i32, %arg1: i32, %arg2: memref<50x384xbf16, #tpu.memory_space<vmem>>, %arg3: memref<384x48xbf16, #tpu.memory_space<vmem>>, %arg4: memref<1x48xf32, #tpu.memory_space<vmem>>, %arg5: memref<50x48xf32, #tpu.memory_space<vmem>>) attributes {dimension_semantics = [#tpu.dimension_semantics<parallel>, #tpu.dimension_semantics<parallel>], iteration_bounds = array<i64: 1, 1>, scalar_prefetch = 0 : i64, scratch_operands = 0 : i64, tpu.core_type = #tpu.core_type<tc>, window_params = [{transform_indices = @transform_0, window_bounds = array<i64: 50, 384>}, {transform_indices = @transform_1, window_bounds = array<i64: 384, 48>}, {transform_indices = @transform_2, window_bounds = array<i64: 1, 48>}, {transform_indices = @transform_3, window_bounds = array<i64: 50, 48>}]} {
    %c0 = arith.constant 0 : index
    %c0_0 = arith.constant 0 : index
    %0 = vector.load %arg2[%c0, %c0_0] : memref<50x384xbf16, #tpu.memory_space<vmem>>, vector<50x384xbf16>
    %c0_1 = arith.constant 0 : index
    %c0_2 = arith.constant 0 : index
    %1 = vector.load %arg3[%c0_1, %c0_2] : memref<384x48xbf16, #tpu.memory_space<vmem>>, vector<384x48xbf16>
    %cst = arith.constant dense<0.000000e+00> : vector<50x48xf32>
    %2 = tpu.matmul %0, %1, %cst {dimension_numbers = #tpu.dot_dimension_numbers<[1], [0], [0], [1], [0, 0, 1, 1], [], []>} : vector<50x384xbf16>, vector<384x48xbf16>, vector<50x48xf32> -> vector<50x48xf32>
    %c0_3 = arith.constant 0 : index
    %c0_4 = arith.constant 0 : index
    %3 = vector.load %arg4[%c0_3, %c0_4] : memref<1x48xf32, #tpu.memory_space<vmem>>, vector<1x48xf32>
    %4 = vector.broadcast %3 : vector<1x48xf32> to vector<50x48xf32>
    %5 = arith.addf %2, %4 : vector<50x48xf32>
    %cst_5 = arith.constant 0.000000e+00 : f32
    %6 = vector.broadcast %cst_5 : f32 to vector<50x48xf32>
    %7 = arith.maximumf %5, %6 : vector<50x48xf32>
    %c0_6 = arith.constant 0 : index
    %c0_7 = arith.constant 0 : index
    %8 = vector.load %arg5[%c0_6, %c0_7] : memref<50x48xf32, #tpu.memory_space<vmem>>, vector<50x48xf32>
    tpu.vector_store %arg5[%c0_6, %c0_7], %7 {strides = array<i32>} : memref<50x48xf32, #tpu.memory_space<vmem>>, vector<50x48xf32>,
    return
  }
  func.func @transform_0(%arg0: i32, %arg1: i32) -> (i32, i32) {
    %c0_i32 = arith.constant 0 : i32
    %c0_i32_0 = arith.constant 0 : i32
    return %arg0, %c0_i32 : i32, i32
  }
  func.func @transform_1(%arg0: i32, %arg1: i32) -> (i32, i32) {
    %c0_i32 = arith.constant 0 : i32
    %c0_i32_0 = arith.constant 0 : i32
    return %c0_i32, %arg1 : i32, i32
  }
  func.func @transform_2(%arg0: i32, %arg1: i32) -> (i32, i32) {
    %c0_i32 = arith.constant 0 : i32
    %c0_i32_0 = arith.constant 0 : i32
    return %c0_i32, %arg1 : i32, i32
  }
  func.func @transform_3(%arg0: i32, %arg1: i32) -> (i32, i32) {
    %c0_i32 = arith.constant 0 : i32
    return %arg0, %arg1 : i32, i32
  }
}

module attributes {stable_mosaic.version = 11 : i64} {
  func.func @_mm_bias_relu_kernel(%arg0: i32, %arg1: i32, %arg2: memref<50x384xbf16, #tpu.memory_space<vmem>>, %arg3: memref<384x64xbf16, #tpu.memory_space<vmem>>, %arg4: memref<1x64xf32, #tpu.memory_space<vmem>>, %arg5: memref<50x64xf32, #tpu.memory_space<vmem>>) attributes {dimension_semantics = [#tpu.dimension_semantics<parallel>, #tpu.dimension_semantics<parallel>], iteration_bounds = array<i64: 1, 1>, scalar_prefetch = 0 : i64, scratch_operands = 0 : i64, tpu.core_type = #tpu.core_type<tc>, window_params = [{transform_indices = @transform_0, window_bounds = array<i64: 50, 384>}, {transform_indices = @transform_1, window_bounds = array<i64: 384, 64>}, {transform_indices = @transform_2, window_bounds = array<i64: 1, 64>}, {transform_indices = @transform_3, window_bounds = array<i64: 50, 64>}]} {
    %c0 = arith.constant 0 : index
    %c0_0 = arith.constant 0 : index
    %0 = vector.load %arg2[%c0, %c0_0] : memref<50x384xbf16, #tpu.memory_space<vmem>>, vector<50x384xbf16>
    %c0_1 = arith.constant 0 : index
    %c0_2 = arith.constant 0 : index
    %1 = vector.load %arg3[%c0_1, %c0_2] : memref<384x64xbf16, #tpu.memory_space<vmem>>, vector<384x64xbf16>
    %cst = arith.constant dense<0.000000e+00> : vector<50x64xf32>
    %2 = tpu.matmul %0, %1, %cst {dimension_numbers = #tpu.dot_dimension_numbers<[1], [0], [0], [1], [0, 0, 1, 1], [], []>} : vector<50x384xbf16>, vector<384x64xbf16>, vector<50x64xf32> -> vector<50x64xf32>
    %c0_3 = arith.constant 0 : index
    %c0_4 = arith.constant 0 : index
    %3 = vector.load %arg4[%c0_3, %c0_4] : memref<1x64xf32, #tpu.memory_space<vmem>>, vector<1x64xf32>
    %4 = vector.broadcast %3 : vector<1x64xf32> to vector<50x64xf32>
    %5 = arith.addf %2, %4 : vector<50x64xf32>
    %cst_5 = arith.constant 0.000000e+00 : f32
    %6 = vector.broadcast %cst_5 : f32 to vector<50x64xf32>
    %7 = arith.maximumf %5, %6 : vector<50x64xf32>
    %c0_6 = arith.constant 0 : index
    %c0_7 = arith.constant 0 : index
    %8 = vector.load %arg5[%c0_6, %c0_7] : memref<50x64xf32, #tpu.memory_space<vmem>>, vector<50x64xf32>
    tpu.vector_store %arg5[%c0_6, %c0_7], %7 {strides = array<i32>} : memref<50x64xf32, #tpu.memory_space<vmem>>, vector<50x64xf32>,
    return
  }
  func.func @transform_0(%arg0: i32, %arg1: i32) -> (i32, i32) {
    %c0_i32 = arith.constant 0 : i32
    %c0_i32_0 = arith.constant 0 : i32
    return %arg0, %c0_i32 : i32, i32
  }
  func.func @transform_1(%arg0: i32, %arg1: i32) -> (i32, i32) {
    %c0_i32 = arith.constant 0 : i32
    %c0_i32_0 = arith.constant 0 : i32
    return %c0_i32, %arg1 : i32, i32
  }
  func.func @transform_2(%arg0: i32, %arg1: i32) -> (i32, i32) {
    %c0_i32 = arith.constant 0 : i32
    %c0_i32_0 = arith.constant 0 : i32
    return %c0_i32, %arg1 : i32, i32
  }
  func.func @transform_3(%arg0: i32, %arg1: i32) -> (i32, i32) {
    %c0_i32 = arith.constant 0 : i32
    return %arg0, %arg1 : i32, i32
  }
}

module attributes {stable_mosaic.version = 11 : i64} {
  func.func @_mm_bias_relu_kernel(%arg0: i32, %arg1: i32, %arg2: memref<50x576xbf16, #tpu.memory_space<vmem>>, %arg3: memref<576x128xbf16, #tpu.memory_space<vmem>>, %arg4: memref<1x128xf32, #tpu.memory_space<vmem>>, %arg5: memref<50x128xf32, #tpu.memory_space<vmem>>) attributes {dimension_semantics = [#tpu.dimension_semantics<parallel>, #tpu.dimension_semantics<parallel>], iteration_bounds = array<i64: 1, 4>, scalar_prefetch = 0 : i64, scratch_operands = 0 : i64, tpu.core_type = #tpu.core_type<tc>, window_params = [{transform_indices = @transform_0, window_bounds = array<i64: 50, 576>}, {transform_indices = @transform_1, window_bounds = array<i64: 576, 128>}, {transform_indices = @transform_2, window_bounds = array<i64: 1, 128>}, {transform_indices = @transform_3, window_bounds = array<i64: 50, 128>}]} {
    %c0 = arith.constant 0 : index
    %c0_0 = arith.constant 0 : index
    %0 = vector.load %arg2[%c0, %c0_0] : memref<50x576xbf16, #tpu.memory_space<vmem>>, vector<50x576xbf16>
    %c0_1 = arith.constant 0 : index
    %c0_2 = arith.constant 0 : index
    %1 = vector.load %arg3[%c0_1, %c0_2] : memref<576x128xbf16, #tpu.memory_space<vmem>>, vector<576x128xbf16>
    %cst = arith.constant dense<0.000000e+00> : vector<50x128xf32>
    %2 = tpu.matmul %0, %1, %cst {dimension_numbers = #tpu.dot_dimension_numbers<[1], [0], [0], [1], [0, 0, 1, 1], [], []>} : vector<50x576xbf16>, vector<576x128xbf16>, vector<50x128xf32> -> vector<50x128xf32>
    %c0_3 = arith.constant 0 : index
    %c0_4 = arith.constant 0 : index
    %3 = vector.load %arg4[%c0_3, %c0_4] : memref<1x128xf32, #tpu.memory_space<vmem>>, vector<1x128xf32>
    %4 = vector.broadcast %3 : vector<1x128xf32> to vector<50x128xf32>
    %5 = arith.addf %2, %4 : vector<50x128xf32>
    %cst_5 = arith.constant 0.000000e+00 : f32
    %6 = vector.broadcast %cst_5 : f32 to vector<50x128xf32>
    %7 = arith.maximumf %5, %6 : vector<50x128xf32>
    %c0_6 = arith.constant 0 : index
    %c0_7 = arith.constant 0 : index
    %8 = vector.load %arg5[%c0_6, %c0_7] : memref<50x128xf32, #tpu.memory_space<vmem>>, vector<50x128xf32>
    tpu.vector_store %arg5[%c0_6, %c0_7], %7 {strides = array<i32>} : memref<50x128xf32, #tpu.memory_space<vmem>>, vector<50x128xf32>,
    return
  }
  func.func @transform_0(%arg0: i32, %arg1: i32) -> (i32, i32) {
    %c0_i32 = arith.constant 0 : i32
    %c0_i32_0 = arith.constant 0 : i32
    return %arg0, %c0_i32 : i32, i32
  }
  func.func @transform_1(%arg0: i32, %arg1: i32) -> (i32, i32) {
    %c0_i32 = arith.constant 0 : i32
    %c0_i32_0 = arith.constant 0 : i32
    return %c0_i32, %arg1 : i32, i32
  }
  func.func @transform_2(%arg0: i32, %arg1: i32) -> (i32, i32) {
    %c0_i32 = arith.constant 0 : i32
    %c0_i32_0 = arith.constant 0 : i32
    return %c0_i32, %arg1 : i32, i32
  }
  func.func @transform_3(%arg0: i32, %arg1: i32) -> (i32, i32) {
    %c0_i32 = arith.constant 0 : i32
    return %arg0, %arg1 : i32, i32
  }
}

module attributes {stable_mosaic.version = 11 : i64} {
  func.func @_maxpool_3x3_s2_kernel(%arg0: i32, %arg1: memref<1x6x3x1024xf32, #tpu.memory_space<vmem>>, %arg2: memref<1x2x2x512xf32, #tpu.memory_space<vmem>>) attributes {dimension_semantics = [#tpu.dimension_semantics<parallel>], iteration_bounds = array<i64: 2>, scalar_prefetch = 0 : i64, scratch_operands = 0 : i64, tpu.core_type = #tpu.core_type<tc>, window_params = [{transform_indices = @transform_0, window_bounds = array<i64: 1, 6, 3, 1024>}, {transform_indices = @transform_1, window_bounds = array<i64: 1, 2, 2, 512>}]} {
    %c0 = arith.constant 0 : index
    %c0_0 = arith.constant 0 : index
    %c0_1 = arith.constant 0 : index
    %c0_2 = arith.constant 0 : index
    %0 = vector.load %arg1[%c0, %c0_0, %c0_1, %c0_2] : memref<1x6x3x1024xf32, #tpu.memory_space<vmem>>, vector<1x6x3x1024xf32>
    %1 = vector.shape_cast %0 : vector<1x6x3x1024xf32> to vector<6x3x1024xf32>
    %2 = vector.extract_strided_slice %1 {offsets = [0, 0, 0], sizes = [6, 2, 512], strides = [1, 1, 1]} : vector<6x3x1024xf32> to vector<6x2x512xf32>
    %3 = vector.extract_strided_slice %1 {offsets = [0, 0, 512], sizes = [6, 2, 512], strides = [1, 1, 1]} : vector<6x3x1024xf32> to vector<6x2x512xf32>
    %4 = arith.maximumf %2, %3 : vector<6x2x512xf32>
    %5 = vector.extract_strided_slice %1 {offsets = [0, 1, 0], sizes = [6, 2, 512], strides = [1, 1, 1]} : vector<6x3x1024xf32> to vector<6x2x512xf32>
    %6 = arith.maximumf %4, %5 : vector<6x2x512xf32>
    %7 = vector.shape_cast %6 : vector<6x2x512xf32> to vector<3x2x2x512xf32>
    %8 = vector.extract_strided_slice %7 {offsets = [0, 0, 0, 0], sizes = [2, 1, 2, 512], strides = [1, 1, 1, 1]} : vector<3x2x2x512xf32> to vector<2x1x2x512xf32>
    %9 = vector.shape_cast %8 : vector<2x1x2x512xf32> to vector<2x2x512xf32>
    %10 = vector.extract_strided_slice %7 {offsets = [0, 1, 0, 0], sizes = [2, 1, 2, 512], strides = [1, 1, 1, 1]} : vector<3x2x2x512xf32> to vector<2x1x2x512xf32>
    %11 = vector.shape_cast %10 : vector<2x1x2x512xf32> to vector<2x2x512xf32>
    %12 = arith.maximumf %9, %11 : vector<2x2x512xf32>
    %13 = vector.extract_strided_slice %7 {offsets = [1, 0, 0, 0], sizes = [2, 1, 2, 512], strides = [1, 1, 1, 1]} : vector<3x2x2x512xf32> to vector<2x1x2x512xf32>
    %14 = vector.shape_cast %13 : vector<2x1x2x512xf32> to vector<2x2x512xf32>
    %15 = arith.maximumf %12, %14 : vector<2x2x512xf32>
    %c0_3 = arith.constant 0 : index
    %c0_4 = arith.constant 0 : index
    %c0_5 = arith.constant 0 : index
    %c0_6 = arith.constant 0 : index
    %16 = vector.load %arg2[%c0_3, %c0_4, %c0_5, %c0_6] : memref<1x2x2x512xf32, #tpu.memory_space<vmem>>, vector<1x2x2x512xf32>
    %17 = vector.shape_cast %16 : vector<1x2x2x512xf32> to vector<2x2x512xf32>
    %18 = vector.shape_cast %15 : vector<2x2x512xf32> to vector<1x2x2x512xf32>
    tpu.vector_store %arg2[%c0_3, %c0_4, %c0_5, %c0_6], %18 {strides = array<i32>} : memref<1x2x2x512xf32, #tpu.memory_space<vmem>>, vector<1x2x2x512xf32>,
    return
  }
  func.func @transform_0(%arg0: i32) -> (i32, i32, i32, i32) {
    %c0_i32 = arith.constant 0 : i32
    %c0_i32_0 = arith.constant 0 : i32
    %c0_i32_1 = arith.constant 0 : i32
    %c0_i32_2 = arith.constant 0 : i32
    return %arg0, %c0_i32, %c0_i32_0, %c0_i32_1 : i32, i32, i32, i32
  }
  func.func @transform_1(%arg0: i32) -> (i32, i32, i32, i32) {
    %c0_i32 = arith.constant 0 : i32
    %c0_i32_0 = arith.constant 0 : i32
    %c0_i32_1 = arith.constant 0 : i32
    %c0_i32_2 = arith.constant 0 : i32
    return %arg0, %c0_i32, %c0_i32_0, %c0_i32_1 : i32, i32, i32, i32
  }
}

</mosaic_0001>

<llo_original>
// kernel: squeeze_forward.18
$region0: #{squeeze_forward.18}
  #allocation0 [shape = 'u32[]', space=smem, size = 0x4, offset = 0x4, fixed_abs, tag = 'smem constant byte address 0x4 - core index']
  #allocation1 [shape = 'u32[144,128]{1,0:T(1,128)}', space=vmem, size = 0x12000, scoped, tag = 'internal scratch']
  %s0 = inlined_call_operand.vmem [shape: bf16[896,160], index: 0, kind: input, shape index: {}]
  %s1 = inlined_call_operand.vmem [shape: bf16[160,96], index: 1, kind: input, shape index: {}]
  %s2 = inlined_call_operand.vmem [shape: f32[1,96], index: 2, kind: input, shape index: {}]
  %s3 = inlined_call_operand.vmem [shape: f32[896,96], index: 3, kind: output, shape index: {}]
  %s4 = sld [smem:[#allocation0]]
  $region45: #{squeeze_forward.18} parent=0
    _
  %s6 = ssub.s32 1, %s4
  %s7 = scalar_select 0, %s6, %s4
  loop: start=0, step=1, limit=9
  $region2: #{squeeze_forward.18} parent=0 // loop_pre_header
    _
  $region3: #{squeeze_forward.18} parent=0 // loop_header
    %s9 = sphi 0, %s13
    %p10 = scmp.ge.s32.totalorder %s9, 9
    %s16 = sphi 0, %s28
    %s17 = sphi 0, %s24
    %s18 = sphi 0, %s16
    %s19 = sphi 0, %s17
    %s20 = sphi 0, %s18
    %s21 = sphi 0, %s19
    %s31 = sphi 0, %s33
    %s34 = sphi 0, %s31
    %s35 = sphi 0, %s34
    %s51 = sphi 0, %s35
    %s57 = sphi 0, %s59
    %s60 = sphi 0, %s57
    %s61 = sphi 0, %s60
    %s77 = sphi 0, %s61
    %s83 = sphi 0, %s85
    %s86 = sphi 0, %s83
    %s87 = sphi 0, %s86
    %s103 = sphi 0, %s87
    %s111 = sphi 0, %s113
    %s114 = sphi 0, %s111
    %s115 = sphi 0, %s114
    %s131 = sphi 0, %s115
  $region4: #{squeeze_forward.18} parent=0 // loop_header_branch
    %12 = sbr.rel (%p10) target = $region8
  $region5: #{squeeze_forward.18} parent=0 // loop_body
    %s14 = ssub.s32 %s9, 1
    %s15 = ssub.s32 %s9, 2
    %s22 = sadd.s32 1, %s17
    %p23 = scmp.ge.s32.totalorder %s22, 1
    %s24 = scalar_select %p23, 0, %s22
    %s25 = sadd.s32 1, %s16
    %s26 = scalar_select %p23, %s25, %s16
    %p27 = scmp.ge.s32.totalorder %s26, 7
    %s28 = scalar_select %p27, 0, %s26
    %s29 = ssub.s32 %s16, %s28
    %p30 = scmp.eq.s32.totalorder %s29, 0
    %s32 = sadd.s32 %s31, 1
    %s33 = scalar_select %p30, %s31, %s32
    %p36 = pneg %p30
    %p37 = scmp.eq.s32.totalorder %s9, 6
    %p38 = por %p36, %p37
    %p39 = scmp.ne.s32.totalorder %s31, %s34
    %p40 = scmp.eq.s32.totalorder %s9, 0
    %p41 = por %p39, %p40
    %p42 = scmp.ne.s32.totalorder %s31, %s34
    %p43 = scmp.eq.s32.totalorder %s14, 6
    %p44 = por %p42, %p43
    %p45 = scmp.ne.s32.totalorder %s34, %s35
    %p46 = scmp.eq.s32.totalorder %s14, 0
    %p47 = por %p45, %p46
    %p48 = scmp.ne.s32.totalorder %s34, %s35
    %p49 = scmp.eq.s32.totalorder %s15, 6
    %p50 = por %p48, %p49
    %p52 = scmp.ne.s32.totalorder %s35, %s51
    %p53 = scmp.eq.s32.totalorder %s15, 0
    %p54 = por %p52, %p53
    %s55 = ssub.s32 %s17, %s24
    %p56 = scmp.eq.s32.totalorder %s55, 0
    %s58 = sadd.s32 %s57, 1
    %s59 = scalar_select %p56, %s57, %s58
    %p62 = pneg %p56
    %p63 = scmp.eq.s32.totalorder %s9, 6
    %p64 = por %p62, %p63
    %p65 = scmp.ne.s32.totalorder %s57, %s60
    %p66 = scmp.eq.s32.totalorder %s9, 0
    %p67 = por %p65, %p66
    %p68 = scmp.ne.s32.totalorder %s57, %s60
    %p69 = scmp.eq.s32.totalorder %s14, 6
    %p70 = por %p68, %p69
    %p71 = scmp.ne.s32.totalorder %s60, %s61
    %p72 = scmp.eq.s32.totalorder %s14, 0
    %p73 = por %p71, %p72
    %p74 = scmp.ne.s32.totalorder %s60, %s61
    %p75 = scmp.eq.s32.totalorder %s15, 6
    %p76 = por %p74, %p75
    %p78 = scmp.ne.s32.totalorder %s61, %s77
    %p79 = scmp.eq.s32.totalorder %s15, 0
    %p80 = por %p78, %p79
    %s81 = ssub.s32 %s17, %s24
    %p82 = scmp.eq.s32.totalorder %s81, 0
    %s84 = sadd.s32 %s83, 1
    %s85 = scalar_select %p82, %s83, %s84
    %p88 = pneg %p82
    %p89 = scmp.eq.s32.totalorder %s9, 6
    %p90 = por %p88, %p89
    %p91 = scmp.ne.s32.totalorder %s83, %s86
    %p92 = scmp.eq.s32.totalorder %s9, 0
    %p93 = por %p91, %p92
    %p94 = scmp.ne.s32.totalorder %s83, %s86
    %p95 = scmp.eq.s32.totalorder %s14, 6
    %p96 = por %p94, %p95
    %p97 = scmp.ne.s32.totalorder %s86, %s87
    %p98 = scmp.eq.s32.totalorder %s14, 0
    %p99 = por %p97, %p98
    %p100 = scmp.ne.s32.totalorder %s86, %s87
    %p101 = scmp.eq.s32.totalorder %s15, 6
    %p102 = por %p100, %p101
    %p104 = scmp.ne.s32.totalorder %s87, %s103
    %p105 = scmp.eq.s32.totalorder %s15, 0
    %p106 = por %p104, %p105
    %s107 = ssub.s32 %s16, %s28
    %s108 = ssub.s32 %s17, %s24
    %s109 = sor.u32 %s107, %s108
    %p110 = scmp.eq.s32.totalorder %s109, 0
    %s112 = sadd.s32 %s111, 1
    %s113 = scalar_select %p110, %s111, %s112
    %p116 = pneg %p110
    %p117 = scmp.eq.s32.totalorder %s9, 6
    %p118 = por %p116, %p117
    %p119 = scmp.ne.s32.totalorder %s111, %s114
    %p120 = scmp.eq.s32.totalorder %s9, 0
    %p121 = por %p119, %p120
    %p122 = scmp.ne.s32.totalorder %s111, %s114
    %p123 = scmp.eq.s32.totalorder %s14, 6
    %p124 = por %p122, %p123
    %p125 = scmp.ne.s32.totalorder %s114, %s115
    %p126 = scmp.eq.s32.totalorder %s14, 0
    %p127 = por %p125, %p126
    %p128 = scmp.ne.s32.totalorder %s114, %s115
    %p129 = scmp.eq.s32.totalorder %s15, 6
    %p130 = por %p128, %p129
    %p132 = scmp.ne.s32.totalorder %s115, %s131
    %p133 = scmp.eq.s32.totalorder %s15, 0
    %p134 = por %p132, %p133
    %p135 = scmp.le.s32.totalorder 1, %s9
    %p136 = scmp.lt.s32.totalorder %s9, 8
    %p137 = pnand %p135, %p136
    %p138 = pneg %p137
    // Predicated region
    $region9: #{squeeze_forward.18} parent=5 // pred_check
      _
    $region10: #{squeeze_forward.18} parent=5 // pred_check_branch
      %140 = sbr.rel (%p137) target = $region12
    $region11: #{squeeze_forward.18} parent=5 // pred_region
      %s141 = ssub.s32 %s9, 1
      // Predicated region
      $region13: #{squeeze_forward.18} parent=11 // pred_check
        %p142 = pneg %p73
      $region14: #{squeeze_forward.18} parent=11 // pred_check_branch
        %144 = sbr.rel (%p142) target = $region16
      $region15: #{squeeze_forward.18} parent=11 // pred_region
        %p145 = scmp.lt.s32.totalorder %s19, 0
        %s146 = scalar_select %p145, %s19, 0
        %s147 = smul.addr %s146, 4
        %s148 = scalar_lea.vmem %s1, %s147
      $region16: #{squeeze_forward.18} parent=11 // pred_fallthru
        _
      // Predicated region
      $region17: #{squeeze_forward.18} parent=11 // pred_check
        %p149 = pneg %p99
      $region18: #{squeeze_forward.18} parent=11 // pred_check_branch
        %151 = sbr.rel (%p149) target = $region20
      $region19: #{squeeze_forward.18} parent=11 // pred_region
        %p152 = scmp.lt.s32.totalorder %s19, 0
        %s153 = scalar_select %p152, %s19, 0
        %s154 = scalar_lea.vmem %s2, %s153
      $region20: #{squeeze_forward.18} parent=11 // pred_fallthru
        _
    $region12: #{squeeze_forward.18} parent=5 // pred_fallthru
      _
    %p155 = scmp.lt.s32.totalorder %s9, 7
    // Predicated region
    $region21: #{squeeze_forward.18} parent=5 // pred_check
      %p156 = pneg %p155
    $region22: #{squeeze_forward.18} parent=5 // pred_check_branch
      %158 = sbr.rel (%p156) target = $region24
    $region23: #{squeeze_forward.18} parent=5 // pred_region
      // Predicated region
      $region25: #{squeeze_forward.18} parent=23 // pred_check
        %p159 = pneg %p41
      $region26: #{squeeze_forward.18} parent=23 // pred_check_branch
        %161 = sbr.rel (%p159) target = $region28
      $region27: #{squeeze_forward.18} parent=23 // pred_region
        %s162 = smul.u32 16, %s16
        %p163 = scmp.lt.s32.totalorder %s162, 111
        %s164 = scalar_select %p163, %s162, 111
        %s165 = smul.addr %s164, 2
        %s166 = smul.addr %s165, 4
        %s167 = scalar_lea.vmem %s0, %s166
        %s168 = smul.u32 16, %s16
      $region28: #{squeeze_forward.18} parent=23 // pred_fallthru
        _
    $region24: #{squeeze_forward.18} parent=5 // pred_fallthru
      _
    %p169 = scmp.le.s32.totalorder 1, %s9
    %p170 = scmp.lt.s32.totalorder %s9, 8
    %p171 = pnand %p169, %p170
    %p172 = pneg %p171
    // Predicated region
    $region29: #{squeeze_forward.18} parent=5 // pred_check
      _
    $region30: #{squeeze_forward.18} parent=5 // pred_check_branch
      %174 = sbr.rel (%p171) target = $region32
    $region31: #{squeeze_forward.18} parent=5 // pred_region
      %s175 = ssub.s32 %s9, 1
      %s176 = smul.u32 16, %s18
      %p177 = scmp.lt.s32.totalorder %s176, 111
      %s178 = scalar_select %p177, %s176, 111
      %s179 = smul.addr %s178, 2
      %s180 = smul.addr %s179, 4
      %s181 = scalar_lea.vmem %s0, %s180
      %p182 = pneg %p47
      %p183 = pneg %p44
      %p184 = scmp.lt.s32.totalorder %s19, 0
      %s185 = scalar_select %p184, %s19, 0
      %s186 = smul.addr %s185, 4
      %s187 = scalar_lea.vmem %s1, %s186
      %p188 = pneg %p73
      %p189 = pneg %p70
      %p190 = scmp.lt.s32.totalorder %s19, 0
      %s191 = scalar_select %p190, %s19, 0
      %s192 = scalar_lea.vmem %s2, %s191
      %p193 = pneg %p99
      %p194 = pneg %p96
      %p195 = pneg %p127
      %p196 = pneg %p124
      %s197 = smul.u32 16, %s18
      %p198 = scmp.lt.s32.totalorder %s197, 111
      %s199 = scalar_select %p198, %s197, 111
      %p200 = scmp.lt.s32.totalorder %s19, 0
      %s201 = scalar_select %p200, %s19, 0
      %s202 = sadd.s32 %s201, %s199
      %s203 = smul.addr %s202, 8
      %s204 = scalar_lea.vmem %s3, %s203
      %s205 = smul.u32 16, %s18
      %p206 = scmp.lt.s32.totalorder %s205, 111
      %s207 = scalar_select %p206, %s205, 111
      %s208 = smul.addr %s207, 2
      %s209 = smul.addr %s208, 4
      %s210 = scalar_lea.vmem %s0, %s209
      %s211 = smul.u32 16, %s18
      %p212 = scmp.lt.s32.totalorder %s19, 0
      %s213 = scalar_select %p212, %s19, 0
      %s214 = smul.addr %s213, 4
      %s215 = scalar_lea.vmem %s1, %s214
      %p216 = scmp.lt.s32.totalorder %s19, 0
      %s217 = scalar_select %p216, %s19, 0
      %s218 = scalar_lea.vmem %s2, %s217
      %s219 = smul.u32 16, %s18
      %p220 = scmp.lt.s32.totalorder %s219, 111
      %s221 = scalar_select %p220, %s219, 111
      %p222 = scmp.lt.s32.totalorder %s19, 0
      %s223 = scalar_select %p222, %s19, 0
      %s224 = sadd.s32 %s223, %s221
      %s225 = smul.addr %s224, 8
      %s226 = scalar_lea.vmem %s3, %s225
      %s227 = smul.u32 16, %s18
      %v229 = vld [vmem:[%s210] sm:$0xff]
      %v230 = vld [vmem:[%s210 + $0x8] sm:$0xff]
      %v231 = vld [vmem:[%s210 + $0x10] sm:$0xff]
      %v232 = vld [vmem:[%s210 + $0x18] sm:$0xff]
      %v233 = vld [vmem:[%s210 + $0x20] sm:$0xff]
      %v234 = vld [vmem:[%s210 + $0x28] sm:$0xff]
      %v235 = vld [vmem:[%s210 + $0x30] sm:$0xff]
      %v236 = vld [vmem:[%s210 + $0x38] sm:$0xff]
      %v237 = vld [vmem:[%s210 + $0x40] sm:$0xff]
      %v238 = vld [vmem:[%s210 + $0x48] sm:$0xff]
      %v239 = vld [vmem:[%s210 + $0x50] sm:$0xff]
      %v240 = vld [vmem:[%s210 + $0x58] sm:$0xff]
      %v241 = vld [vmem:[%s210 + $0x60] sm:$0xff]
      %v242 = vld [vmem:[%s210 + $0x68] sm:$0xff]
      %v243 = vld [vmem:[%s210 + $0x70] sm:$0xff]
      %v244 = vld [vmem:[%s210 + $0x78] sm:$0xff]
      %v245 = vld [vmem:[%s215] sm:$0xf]
      %v246 = vld [vmem:[%s215 + $0x4] sm:$0xf]
      %v247 = vld [vmem:[%s215 + $0x8] sm:$0xf]
      %v248 = vld [vmem:[%s215 + $0xc] sm:$0xf]
      %v249 = vld [vmem:[%s215 + $0x10] sm:$0xf]
      %v250 = vld [vmem:[%s215 + $0x14] sm:$0xf]
      %v251 = vld [vmem:[%s215 + $0x18] sm:$0xf]
      %v252 = vld [vmem:[%s215 + $0x1c] sm:$0xf]
      %v253 = vld [vmem:[%s215 + $0x20] sm:$0xf]
      %v254 = vld [vmem:[%s215 + $0x24] sm:$0xf]
      %v255 = vld [vmem:[%s215 + $0x28] sm:$0xf]
      %v256 = vld [vmem:[%s215 + $0x2c] sm:$0xf]
      %v257 = vld [vmem:[%s215 + $0x30] sm:$0xf]
      %v258 = vld [vmem:[%s215 + $0x34] sm:$0xf]
      %v259 = vld [vmem:[%s215 + $0x38] sm:$0xf]
      %v260 = vld [vmem:[%s215 + $0x3c] sm:$0xf]
      %v261 = vld [vmem:[%s215 + $0x40] sm:$0xf]
      %v262 = vld [vmem:[%s215 + $0x44] sm:$0xf]
      %v263 = vld [vmem:[%s215 + $0x48] sm:$0xf]
      %v264 = vld [vmem:[%s215 + $0x4c] sm:$0xf]
      %v265 = vld [vmem:[%s218] sm:$0x1]
      %v267 = vlaneseq
      %v268 = vshrl.u32 %v267, 7
      %v269 = vsub.s32 0, %v268
      %v270 = vrot.slane %v265, %v269
      %v288 = vunpack.c.l.b16 %v229
      %v289 = vunpack.c.h.b16 %v229
      %v290 = vunpack.c.l.b16 %v230
      %v291 = vunpack.c.h.b16 %v230
      %v292 = vunpack.c.l.b16 %v231
      %v293 = vunpack.c.h.b16 %v231
      %v294 = vunpack.c.l.b16 %v232
      %v295 = vunpack.c.h.b16 %v232
      %v296 = vunpack.c.l.b16 %v233
      %v297 = vunpack.c.h.b16 %v233
      %v298 = vunpack.c.l.b16 %v234
      %v299 = vunpack.c.h.b16 %v234
      %v300 = vunpack.c.l.b16 %v235
      %v301 = vunpack.c.h.b16 %v235
      %v302 = vunpack.c.l.b16 %v236
      %v303 = vunpack.c.h.b16 %v236
      %v304 = vunpack.c.l.b16 %v237
      %v305 = vunpack.c.h.b16 %v237
      %v306 = vunpack.c.l.b16 %v238
      %v307 = vunpack.c.h.b16 %v238
      %v308 = vunpack.c.l.b16 %v239
      %v309 = vunpack.c.h.b16 %v239
      %v310 = vunpack.c.l.b16 %v240
      %v311 = vunpack.c.h.b16 %v240
      %v312 = vunpack.c.l.b16 %v241
      %v313 = vunpack.c.h.b16 %v241
      %v314 = vunpack.c.l.b16 %v242
      %v315 = vunpack.c.h.b16 %v242
      %v316 = vunpack.c.l.b16 %v243
      %v317 = vunpack.c.h.b16 %v243
      %v318 = vunpack.c.l.b16 %v244
      %v319 = vunpack.c.h.b16 %v244
      %v320 = vpack.c.b16 %v290, %v288
      %v321 = vpack.c.b16 %v291, %v289
      %v322 = vpack.c.b16 %v294, %v292
      %v323 = vpack.c.b16 %v295, %v293
      %v324 = vpack.c.b16 %v298, %v296
      %v325 = vpack.c.b16 %v299, %v297
      %v326 = vpack.c.b16 %v302, %v300
      %v327 = vpack.c.b16 %v303, %v301
      %v328 = vpack.c.b16 %v306, %v304
      %v329 = vpack.c.b16 %v307, %v305
      %v330 = vpack.c.b16 %v310, %v308
      %v331 = vpack.c.b16 %v311, %v309
      %v332 = vpack.c.b16 %v314, %v312
      %v333 = vpack.c.b16 %v315, %v313
      %v334 = vpack.c.b16 %v318, %v316
      %v335 = vpack.c.b16 %v319, %v317
      %v364 = vunpack.c.l.b16 %v245
      %v365 = vunpack.c.l.b16 %v246
      %v366 = vunpack.c.l.b16 %v247
      %v367 = vunpack.c.l.b16 %v248
      %v368 = vunpack.c.l.b16 %v249
      %v369 = vunpack.c.l.b16 %v250
      %v370 = vunpack.c.l.b16 %v251
      %v371 = vunpack.c.l.b16 %v252
      %v372 = vunpack.c.l.b16 %v253
      %v373 = vunpack.c.l.b16 %v254
      %v374 = vunpack.c.l.b16 %v255
      %v375 = vunpack.c.l.b16 %v256
      %v376 = vunpack.c.l.b16 %v257
      %v377 = vunpack.c.l.b16 %v258
      %v378 = vunpack.c.l.b16 %v259
      %v379 = vunpack.c.l.b16 %v260
      %v380 = vunpack.c.l.b16 %v261
      %v381 = vunpack.c.l.b16 %v262
      %v382 = vunpack.c.l.b16 %v263
      %v383 = vunpack.c.l.b16 %v264
      %v384 = vpack.c.b16 %v365, %v364
      %v385 = vpack.c.b16 %v367, %v366
      %v386 = vpack.c.b16 %v369, %v368
      %v387 = vpack.c.b16 %v371, %v370
      %v388 = vpack.c.b16 %v373, %v372
      %v389 = vpack.c.b16 %v375, %v374
      %v390 = vpack.c.b16 %v377, %v376
      %v391 = vpack.c.b16 %v379, %v378
      %v392 = vpack.c.b16 %v381, %v380
      %v393 = vpack.c.b16 %v383, %v382
      %vm404 = vcmask 261120
      %v406 = vsel %vm404, %v321, 0
      %v409 = vsel %vm404, %v323, 0
      %v412 = vsel %vm404, %v325, 0
      %v415 = vsel %vm404, %v327, 0
      %v418 = vsel %vm404, %v329, 0
      %v421 = vsel %vm404, %v331, 0
      %v424 = vsel %vm404, %v333, 0
      %v427 = vsel %vm404, %v335, 0
      %429 = vmatprep.subr.bf16.mxu0 0
      %430 = vmatpush1.bf16.msra.mxu0 %v384
      %431 = vmatprep.subr.bf16.mxu0 0
      %432 = vmatpush1.bf16.msra.mxu0 %v385
      %433 = vmatprep.subr.bf16.mxu0 0
      %434 = vmatpush1.bf16.msra.mxu0 %v386
      %435 = vmatprep.subr.bf16.mxu0 0
      %436 = vmatpush1.bf16.msra.mxu0 %v387
      %437 = vmatprep.subr.bf16.mxu0 0
      %438 = vmatpush1.bf16.msra.mxu0 %v388
      %439 = vmatprep.subr.bf16.mxu0 0
      %440 = vmatpush1.bf16.msra.mxu0 %v389
      %441 = vmatprep.subr.bf16.mxu0 0
      %442 = vmatpush1.bf16.msra.mxu0 %v390
      %443 = vmatprep.subr.bf16.mxu0 0
      %444 = vmatpush1.bf16.msra.mxu0 %v391
      %445 = vmatprep.subr.bf16.mxu0 0
      %446 = vmatpush1.bf16.msra.mxu0 %v392
      %447 = vmatprep.subr.bf16.mxu0 0
      %448 = vmatpush1.bf16.msra.mxu0 %v393
      %449 = vmatprep.subr.bf16.mxu0 0
      %450 = vmatpush1.bf16.msra.mxu0 0
      %451 = vmatprep.subr.bf16.mxu0 0
      %452 = vmatpush1.bf16.msra.mxu0 0
      %453 = vmatprep.subr.bf16.mxu0 0
      %454 = vmatpush1.bf16.msra.mxu0 0
      %455 = vmatprep.subr.bf16.mxu0 0
      %456 = vmatpush1.bf16.msra.mxu0 0
      %457 = vmatprep.subr.bf16.mxu0 0
      %458 = vmatpush1.bf16.msra.mxu0 0
      %459 = vmatprep.subr.bf16.mxu0 0
      %460 = vmatpush1.bf16.msra.mxu0 0
      %461 = vmatprep.mubr.bf16.mxu0 %v406
      %462 = vmatmul.mubr.bf16.gmra.mrb[0].mxu0 %v320
      %v463 = vpop.f32.mrb[0].mxu0
      %v464 = vadd.f32 %v270, %v463
      %v465 = vpop.f32.mrb[0].mxu0
      %v466 = vpop.f32.mrb[0].mxu0
      %v467 = vadd.f32 %v270, %v466
      %v468 = vpop.f32.mrb[0].mxu0
      %469 = vmatprep.mubr.bf16.mxu0 %v409
      %470 = vmatmul.mubr.bf16.gmra.mrb[0].mxu0 %v322
      %v471 = vpop.f32.mrb[0].mxu0
      %v472 = vadd.f32 %v270, %v471
      %v473 = vpop.f32.mrb[0].mxu0
      %v474 = vpop.f32.mrb[0].mxu0
      %v475 = vadd.f32 %v270, %v474
      %v476 = vpop.f32.mrb[0].mxu0
      %477 = vmatprep.mubr.bf16.mxu0 %v412
      %478 = vmatmul.mubr.bf16.gmra.mrb[0].mxu0 %v324
      %v479 = vpop.f32.mrb[0].mxu0
      %v480 = vadd.f32 %v270, %v479
      %v481 = vpop.f32.mrb[0].mxu0
      %v482 = vpop.f32.mrb[0].mxu0
      %v483 = vadd.f32 %v270, %v482
      %v484 = vpop.f32.mrb[0].mxu0
      %485 = vmatprep.mubr.bf16.mxu0 %v415
      %486 = vmatmul.mubr.bf16.gmra.mrb[0].mxu0 %v326
      %v487 = vpop.f32.mrb[0].mxu0
      %v488 = vadd.f32 %v270, %v487
      %v489 = vpop.f32.mrb[0].mxu0
      %v490 = vpop.f32.mrb[0].mxu0
      %v491 = vadd.f32 %v270, %v490
      %v492 = vpop.f32.mrb[0].mxu0
      %493 = vmatprep.mubr.bf16.mxu0 %v418
      %494 = vmatmul.mubr.bf16.gmra.mrb[0].mxu0 %v328
      %v495 = vpop.f32.mrb[0].mxu0
      %v496 = vadd.f32 %v270, %v495
      %v497 = vpop.f32.mrb[0].mxu0
      %v498 = vpop.f32.mrb[0].mxu0
      %v499 = vadd.f32 %v270, %v498
      %v500 = vpop.f32.mrb[0].mxu0
      %501 = vmatprep.mubr.bf16.mxu0 %v421
      %502 = vmatmul.mubr.bf16.gmra.mrb[0].mxu0 %v330
      %v503 = vpop.f32.mrb[0].mxu0
      %v504 = vadd.f32 %v270, %v503
      %v505 = vpop.f32.mrb[0].mxu0
      %v506 = vpop.f32.mrb[0].mxu0
      %v507 = vadd.f32 %v270, %v506
      %v508 = vpop.f32.mrb[0].mxu0
      %509 = vmatprep.mubr.bf16.mxu0 %v424
      %510 = vmatmul.mubr.bf16.gmra.mrb[0].mxu0 %v332
      %v511 = vpop.f32.mrb[0].mxu0
      %v512 = vadd.f32 %v270, %v511
      %v513 = vpop.f32.mrb[0].mxu0
      %v514 = vpop.f32.mrb[0].mxu0
      %v515 = vadd.f32 %v270, %v514
      %v516 = vpop.f32.mrb[0].mxu0
      %517 = vmatprep.mubr.bf16.mxu0 %v427
      %518 = vmatmul.mubr.bf16.gmra.mrb[0].mxu0 %v334
      %v519 = vpop.f32.mrb[0].mxu0
      %v520 = vadd.f32 %v270, %v519
      %v521 = vpop.f32.mrb[0].mxu0
      %v522 = vpop.f32.mrb[0].mxu0
      %v523 = vadd.f32 %v270, %v522
      %v524 = vpop.f32.mrb[0].mxu0
      %525 = vdwg.mxu0
      %v526 = vmax.f32 %v464, 0.0
      %v527 = vmax.f32 %v467, 0.0
      %v528 = vmax.f32 %v472, 0.0
      %v529 = vmax.f32 %v475, 0.0
      %v530 = vmax.f32 %v480, 0.0
      %v531 = vmax.f32 %v483, 0.0
      %v532 = vmax.f32 %v488, 0.0
      %v533 = vmax.f32 %v491, 0.0
      %v534 = vmax.f32 %v496, 0.0
      %v535 = vmax.f32 %v499, 0.0
      %v536 = vmax.f32 %v504, 0.0
      %v537 = vmax.f32 %v507, 0.0
      %v538 = vmax.f32 %v512, 0.0
      %v539 = vmax.f32 %v515, 0.0
      %v540 = vmax.f32 %v520, 0.0
      %v541 = vmax.f32 %v523, 0.0
      %vm542 = vcmask 785408
      %543 = vst.msk [vmem:[%s226] sm:$0xff] %vm542, %v526
      %544 = vst.msk [vmem:[%s226 + $0x8] sm:$0xff] %vm542, %v527
      %545 = vst.msk [vmem:[%s226 + $0x10] sm:$0xff] %vm542, %v528
      %546 = vst.msk [vmem:[%s226 + $0x18] sm:$0xff] %vm542, %v529
      %547 = vst.msk [vmem:[%s226 + $0x20] sm:$0xff] %vm542, %v530
      %548 = vst.msk [vmem:[%s226 + $0x28] sm:$0xff] %vm542, %v531
      %549 = vst.msk [vmem:[%s226 + $0x30] sm:$0xff] %vm542, %v532
      %550 = vst.msk [vmem:[%s226 + $0x38] sm:$0xff] %vm542, %v533
      %551 = vst.msk [vmem:[%s226 + $0x40] sm:$0xff] %vm542, %v534
      %552 = vst.msk [vmem:[%s226 + $0x48] sm:$0xff] %vm542, %v535
      %553 = vst.msk [vmem:[%s226 + $0x50] sm:$0xff] %vm542, %v536
      %554 = vst.msk [vmem:[%s226 + $0x58] sm:$0xff] %vm542, %v537
      %555 = vst.msk [vmem:[%s226 + $0x60] sm:$0xff] %vm542, %v538
      %556 = vst.msk [vmem:[%s226 + $0x68] sm:$0xff] %vm542, %v539
      %557 = vst.msk [vmem:[%s226 + $0x70] sm:$0xff] %vm542, %v540
      %558 = vst.msk [vmem:[%s226 + $0x78] sm:$0xff] %vm542, %v541
      %s559 = smul.u32 16, %s18
      %p560 = scmp.lt.s32.totalorder %s559, 111
      %s561 = scalar_select %p560, %s559, 111
      %p562 = scmp.lt.s32.totalorder %s19, 0
      %s563 = scalar_select %p562, %s19, 0
      %s564 = sadd.s32 %s563, %s561
      %s565 = smul.addr %s564, 8
      %s566 = scalar_lea.vmem %s3, %s565
      // Predicated region
      $region33: #{squeeze_forward.18} parent=31 // pred_check
        %p567 = pneg %p124
      $region34: #{squeeze_forward.18} parent=31 // pred_check_branch
        %569 = sbr.rel (%p567) target = $region36
      $region35: #{squeeze_forward.18} parent=31 // pred_region
        %s570 = smul.u32 16, %s18
      $region36: #{squeeze_forward.18} parent=31 // pred_fallthru
        _
    $region32: #{squeeze_forward.18} parent=5 // pred_fallthru
      _
    %p571 = scmp.le.s32.totalorder 2, %s9
    // Predicated region
    $region37: #{squeeze_forward.18} parent=5 // pred_check
      %p572 = pneg %p571
    $region38: #{squeeze_forward.18} parent=5 // pred_check_branch
      %574 = sbr.rel (%p572) target = $region40
    $region39: #{squeeze_forward.18} parent=5 // pred_region
      %s575 = ssub.s32 %s9, 2
      // Predicated region
      $region41: #{squeeze_forward.18} parent=39 // pred_check
        %p576 = pneg %p130
      $region42: #{squeeze_forward.18} parent=39 // pred_check_branch
        %578 = sbr.rel (%p576) target = $region44
      $region43: #{squeeze_forward.18} parent=39 // pred_region
        %s579 = smul.u32 16, %s20
        %p580 = scmp.lt.s32.totalorder %s579, 111
        %s581 = scalar_select %p580, %s579, 111
        %p582 = scmp.lt.s32.totalorder %s21, 0
        %s583 = scalar_select %p582, %s21, 0
        %s584 = sadd.s32 %s583, %s581
        %s585 = smul.addr %s584, 8
        %s586 = scalar_lea.vmem %s3, %s585
      $region44: #{squeeze_forward.18} parent=39 // pred_fallthru
        _
    $region40: #{squeeze_forward.18} parent=5 // pred_fallthru
      _
  $region6: #{squeeze_forward.18} parent=0 // loop_footer
    %s13 = sadd.s32 1, %s9
  $region7: #{squeeze_forward.18} parent=0 // loop_footer_branch
    %8 = sbr.rel target = $region3
  $region8: #{squeeze_forward.18} parent=0 // loop_exit
    _

// kernel: squeeze_forward.20
$region0: #{squeeze_forward.20}
  #allocation0 [shape = 'u32[]', space=smem, size = 0x4, offset = 0x4, fixed_abs, tag = 'smem constant byte address 0x4 - core index']
  #allocation1 [shape = 'u32[144,128]{1,0:T(1,128)}', space=vmem, size = 0x12000, scoped, tag = 'internal scratch']
  %s0 = inlined_call_operand.vmem [shape: bf16[256,96], index: 0, kind: input, shape index: {}]
  %s1 = inlined_call_operand.vmem [shape: bf16[96,16], index: 1, kind: input, shape index: {}]
  %s2 = inlined_call_operand.vmem [shape: f32[1,16], index: 2, kind: input, shape index: {}]
  %s3 = inlined_call_operand.vmem [shape: f32[256,16], index: 3, kind: output, shape index: {}]
  %s4 = sld [smem:[#allocation0]]
  $region45: #{squeeze_forward.20} parent=0
    _
  %s6 = ssub.s32 1, %s4
  %s7 = scalar_select 0, %s6, %s4
  loop: start=0, step=1, limit=4
  $region2: #{squeeze_forward.20} parent=0 // loop_pre_header
    _
  $region3: #{squeeze_forward.20} parent=0 // loop_header
    %s9 = sphi 0, %s13
    %p10 = scmp.ge.s32.totalorder %s9, 4
    %s16 = sphi 0, %s28
    %s17 = sphi 0, %s24
    %s18 = sphi 0, %s16
    %s19 = sphi 0, %s17
    %s20 = sphi 0, %s18
    %s21 = sphi 0, %s19
    %s31 = sphi 0, %s33
    %s34 = sphi 0, %s31
    %s35 = sphi 0, %s34
    %s51 = sphi 0, %s35
    %s57 = sphi 0, %s59
    %s60 = sphi 0, %s57
    %s61 = sphi 0, %s60
    %s77 = sphi 0, %s61
    %s83 = sphi 0, %s85
    %s86 = sphi 0, %s83
    %s87 = sphi 0, %s86
    %s103 = sphi 0, %s87
    %s111 = sphi 0, %s113
    %s114 = sphi 0, %s111
    %s115 = sphi 0, %s114
    %s131 = sphi 0, %s115
  $region4: #{squeeze_forward.20} parent=0 // loop_header_branch
    %12 = sbr.rel (%p10) target = $region8
  $region5: #{squeeze_forward.20} parent=0 // loop_body
    %s14 = ssub.s32 %s9, 1
    %s15 = ssub.s32 %s9, 2
    %s22 = sadd.s32 1, %s17
    %p23 = scmp.ge.s32.totalorder %s22, 1
    %s24 = scalar_select %p23, 0, %s22
    %s25 = sadd.s32 1, %s16
    %s26 = scalar_select %p23, %s25, %s16
    %p27 = scmp.ge.s32.totalorder %s26, 2
    %s28 = scalar_select %p27, 0, %s26
    %s29 = ssub.s32 %s16, %s28
    %p30 = scmp.eq.s32.totalorder %s29, 0
    %s32 = sadd.s32 %s31, 1
    %s33 = scalar_select %p30, %s31, %s32
    %p36 = pneg %p30
    %p37 = scmp.eq.s32.totalorder %s9, 1
    %p38 = por %p36, %p37
    %p39 = scmp.ne.s32.totalorder %s31, %s34
    %p40 = scmp.eq.s32.totalorder %s9, 0
    %p41 = por %p39, %p40
    %p42 = scmp.ne.s32.totalorder %s31, %s34
    %p43 = scmp.eq.s32.totalorder %s14, 1
    %p44 = por %p42, %p43
    %p45 = scmp.ne.s32.totalorder %s34, %s35
    %p46 = scmp.eq.s32.totalorder %s14, 0
    %p47 = por %p45, %p46
    %p48 = scmp.ne.s32.totalorder %s34, %s35
    %p49 = scmp.eq.s32.totalorder %s15, 1
    %p50 = por %p48, %p49
    %p52 = scmp.ne.s32.totalorder %s35, %s51
    %p53 = scmp.eq.s32.totalorder %s15, 0
    %p54 = por %p52, %p53
    %s55 = ssub.s32 %s17, %s24
    %p56 = scmp.eq.s32.totalorder %s55, 0
    %s58 = sadd.s32 %s57, 1
    %s59 = scalar_select %p56, %s57, %s58
    %p62 = pneg %p56
    %p63 = scmp.eq.s32.totalorder %s9, 1
    %p64 = por %p62, %p63
    %p65 = scmp.ne.s32.totalorder %s57, %s60
    %p66 = scmp.eq.s32.totalorder %s9, 0
    %p67 = por %p65, %p66
    %p68 = scmp.ne.s32.totalorder %s57, %s60
    %p69 = scmp.eq.s32.totalorder %s14, 1
    %p70 = por %p68, %p69
    %p71 = scmp.ne.s32.totalorder %s60, %s61
    %p72 = scmp.eq.s32.totalorder %s14, 0
    %p73 = por %p71, %p72
    %p74 = scmp.ne.s32.totalorder %s60, %s61
    %p75 = scmp.eq.s32.totalorder %s15, 1
    %p76 = por %p74, %p75
    %p78 = scmp.ne.s32.totalorder %s61, %s77
    %p79 = scmp.eq.s32.totalorder %s15, 0
    %p80 = por %p78, %p79
    %s81 = ssub.s32 %s17, %s24
    %p82 = scmp.eq.s32.totalorder %s81, 0
    %s84 = sadd.s32 %s83, 1
    %s85 = scalar_select %p82, %s83, %s84
    %p88 = pneg %p82
    %p89 = scmp.eq.s32.totalorder %s9, 1
    %p90 = por %p88, %p89
    %p91 = scmp.ne.s32.totalorder %s83, %s86
    %p92 = scmp.eq.s32.totalorder %s9, 0
    %p93 = por %p91, %p92
    %p94 = scmp.ne.s32.totalorder %s83, %s86
    %p95 = scmp.eq.s32.totalorder %s14, 1
    %p96 = por %p94, %p95
    %p97 = scmp.ne.s32.totalorder %s86, %s87
    %p98 = scmp.eq.s32.totalorder %s14, 0
    %p99 = por %p97, %p98
    %p100 = scmp.ne.s32.totalorder %s86, %s87
    %p101 = scmp.eq.s32.totalorder %s15, 1
    %p102 = por %p100, %p101
    %p104 = scmp.ne.s32.totalorder %s87, %s103
    %p105 = scmp.eq.s32.totalorder %s15, 0
    %p106 = por %p104, %p105
    %s107 = ssub.s32 %s16, %s28
    %s108 = ssub.s32 %s17, %s24
    %s109 = sor.u32 %s107, %s108
    %p110 = scmp.eq.s32.totalorder %s109, 0
    %s112 = sadd.s32 %s111, 1
    %s113 = scalar_select %p110, %s111, %s112
    %p116 = pneg %p110
    %p117 = scmp.eq.s32.totalorder %s9, 1
    %p118 = por %p116, %p117
    %p119 = scmp.ne.s32.totalorder %s111, %s114
    %p120 = scmp.eq.s32.totalorder %s9, 0
    %p121 = por %p119, %p120
    %p122 = scmp.ne.s32.totalorder %s111, %s114
    %p123 = scmp.eq.s32.totalorder %s14, 1
    %p124 = por %p122, %p123
    %p125 = scmp.ne.s32.totalorder %s114, %s115
    %p126 = scmp.eq.s32.totalorder %s14, 0
    %p127 = por %p125, %p126
    %p128 = scmp.ne.s32.totalorder %s114, %s115
    %p129 = scmp.eq.s32.totalorder %s15, 1
    %p130 = por %p128, %p129
    %p132 = scmp.ne.s32.totalorder %s115, %s131
    %p133 = scmp.eq.s32.totalorder %s15, 0
    %p134 = por %p132, %p133
    %p135 = scmp.le.s32.totalorder 1, %s9
    %p136 = scmp.lt.s32.totalorder %s9, 3
    %p137 = pnand %p135, %p136
    %p138 = pneg %p137
    // Predicated region
    $region9: #{squeeze_forward.20} parent=5 // pred_check
      _
    $region10: #{squeeze_forward.20} parent=5 // pred_check_branch
      %140 = sbr.rel (%p137) target = $region12
    $region11: #{squeeze_forward.20} parent=5 // pred_region
      %s141 = ssub.s32 %s9, 1
      // Predicated region
      $region13: #{squeeze_forward.20} parent=11 // pred_check
        %p142 = pneg %p73
      $region14: #{squeeze_forward.20} parent=11 // pred_check_branch
        %144 = sbr.rel (%p142) target = $region16
      $region15: #{squeeze_forward.20} parent=11 // pred_region
        %p145 = scmp.lt.s32.totalorder %s19, 0
        %s146 = scalar_select %p145, %s19, 0
        %s147 = smul.addr %s146, 4
        %s148 = scalar_lea.vmem %s1, %s147
      $region16: #{squeeze_forward.20} parent=11 // pred_fallthru
        _
      // Predicated region
      $region17: #{squeeze_forward.20} parent=11 // pred_check
        %p149 = pneg %p99
      $region18: #{squeeze_forward.20} parent=11 // pred_check_branch
        %151 = sbr.rel (%p149) target = $region20
      $region19: #{squeeze_forward.20} parent=11 // pred_region
        %p152 = scmp.lt.s32.totalorder %s19, 0
        %s153 = scalar_select %p152, %s19, 0
        %s154 = scalar_lea.vmem %s2, %s153
      $region20: #{squeeze_forward.20} parent=11 // pred_fallthru
        _
    $region12: #{squeeze_forward.20} parent=5 // pred_fallthru
      _
    %p155 = scmp.lt.s32.totalorder %s9, 2
    // Predicated region
    $region21: #{squeeze_forward.20} parent=5 // pred_check
      %p156 = pneg %p155
    $region22: #{squeeze_forward.20} parent=5 // pred_check_branch
      %158 = sbr.rel (%p156) target = $region24
    $region23: #{squeeze_forward.20} parent=5 // pred_region
      // Predicated region
      $region25: #{squeeze_forward.20} parent=23 // pred_check
        %p159 = pneg %p41
      $region26: #{squeeze_forward.20} parent=23 // pred_check_branch
        %161 = sbr.rel (%p159) target = $region28
      $region27: #{squeeze_forward.20} parent=23 // pred_region
        %s162 = smul.u32 16, %s16
        %p163 = scmp.lt.s32.totalorder %s162, 31
        %s164 = scalar_select %p163, %s162, 31
        %s165 = smul.addr %s164, 4
        %s166 = scalar_lea.vmem %s0, %s165
        %s167 = smul.u32 16, %s16
      $region28: #{squeeze_forward.20} parent=23 // pred_fallthru
        _
    $region24: #{squeeze_forward.20} parent=5 // pred_fallthru
      _
    %p168 = scmp.le.s32.totalorder 1, %s9
    %p169 = scmp.lt.s32.totalorder %s9, 3
    %p170 = pnand %p168, %p169
    %p171 = pneg %p170
    // Predicated region
    $region29: #{squeeze_forward.20} parent=5 // pred_check
      _
    $region30: #{squeeze_forward.20} parent=5 // pred_check_branch
      %173 = sbr.rel (%p170) target = $region32
    $region31: #{squeeze_forward.20} parent=5 // pred_region
      %s174 = ssub.s32 %s9, 1
      %s175 = smul.u32 16, %s18
      %p176 = scmp.lt.s32.totalorder %s175, 31
      %s177 = scalar_select %p176, %s175, 31
      %s178 = smul.addr %s177, 4
      %s179 = scalar_lea.vmem %s0, %s178
      %p180 = pneg %p47
      %p181 = pneg %p44
      %p182 = scmp.lt.s32.totalorder %s19, 0
      %s183 = scalar_select %p182, %s19, 0
      %s184 = smul.addr %s183, 4
      %s185 = scalar_lea.vmem %s1, %s184
      %p186 = pneg %p73
      %p187 = pneg %p70
      %p188 = scmp.lt.s32.totalorder %s19, 0
      %s189 = scalar_select %p188, %s19, 0
      %s190 = scalar_lea.vmem %s2, %s189
      %p191 = pneg %p99
      %p192 = pneg %p96
      %p193 = pneg %p127
      %p194 = pneg %p124
      %s195 = smul.u32 16, %s18
      %p196 = scmp.lt.s32.totalorder %s195, 31
      %s197 = scalar_select %p196, %s195, 31
      %p198 = scmp.lt.s32.totalorder %s19, 0
      %s199 = scalar_select %p198, %s19, 0
      %s200 = sadd.s32 %s199, %s197
      %s201 = smul.addr %s200, 8
      %s202 = scalar_lea.vmem %s3, %s201
      %s203 = smul.u32 16, %s18
      %p204 = scmp.lt.s32.totalorder %s203, 31
      %s205 = scalar_select %p204, %s203, 31
      %s206 = smul.addr %s205, 4
      %s207 = scalar_lea.vmem %s0, %s206
      %s208 = smul.u32 16, %s18
      %p209 = scmp.lt.s32.totalorder %s19, 0
      %s210 = scalar_select %p209, %s19, 0
      %s211 = smul.addr %s210, 4
      %s212 = scalar_lea.vmem %s1, %s211
      %p213 = scmp.lt.s32.totalorder %s19, 0
      %s214 = scalar_select %p213, %s19, 0
      %s215 = scalar_lea.vmem %s2, %s214
      %s216 = smul.u32 16, %s18
      %p217 = scmp.lt.s32.totalorder %s216, 31
      %s218 = scalar_select %p217, %s216, 31
      %p219 = scmp.lt.s32.totalorder %s19, 0
      %s220 = scalar_select %p219, %s19, 0
      %s221 = sadd.s32 %s220, %s218
      %s222 = smul.addr %s221, 8
      %s223 = scalar_lea.vmem %s3, %s222
      %s224 = smul.u32 16, %s18
      %v226 = vld [vmem:[%s207] sm:$0xf]
      %v227 = vld [vmem:[%s207 + $0x4] sm:$0xf]
      %v228 = vld [vmem:[%s207 + $0x8] sm:$0xf]
      %v229 = vld [vmem:[%s207 + $0xc] sm:$0xf]
      %v230 = vld [vmem:[%s207 + $0x10] sm:$0xf]
      %v231 = vld [vmem:[%s207 + $0x14] sm:$0xf]
      %v232 = vld [vmem:[%s207 + $0x18] sm:$0xf]
      %v233 = vld [vmem:[%s207 + $0x1c] sm:$0xf]
      %v234 = vld [vmem:[%s207 + $0x20] sm:$0xf]
      %v235 = vld [vmem:[%s207 + $0x24] sm:$0xf]
      %v236 = vld [vmem:[%s207 + $0x28] sm:$0xf]
      %v237 = vld [vmem:[%s207 + $0x2c] sm:$0xf]
      %v238 = vld [vmem:[%s207 + $0x30] sm:$0xf]
      %v239 = vld [vmem:[%s207 + $0x34] sm:$0xf]
      %v240 = vld [vmem:[%s207 + $0x38] sm:$0xf]
      %v241 = vld [vmem:[%s207 + $0x3c] sm:$0xf]
      %v242 = vld [vmem:[%s212] sm:$0xf]
      %v243 = vld [vmem:[%s212 + $0x4] sm:$0xf]
      %v244 = vld [vmem:[%s212 + $0x8] sm:$0xf]
      %v245 = vld [vmem:[%s212 + $0xc] sm:$0xf]
      %v246 = vld [vmem:[%s212 + $0x10] sm:$0xf]
      %v247 = vld [vmem:[%s212 + $0x14] sm:$0xf]
      %v248 = vld [vmem:[%s212 + $0x18] sm:$0xf]
      %v249 = vld [vmem:[%s212 + $0x1c] sm:$0xf]
      %v250 = vld [vmem:[%s212 + $0x20] sm:$0xf]
      %v251 = vld [vmem:[%s212 + $0x24] sm:$0xf]
      %v252 = vld [vmem:[%s212 + $0x28] sm:$0xf]
      %v253 = vld [vmem:[%s212 + $0x2c] sm:$0xf]
      %v254 = vld [vmem:[%s215] sm:$0x1]
      %v256 = vlaneseq
      %v257 = vshrl.u32 %v256, 7
      %v258 = vsub.s32 0, %v257
      %v259 = vrot.slane %v254, %v258
      %v277 = vunpack.c.l.b16 %v226
      %v278 = vunpack.c.l.b16 %v227
      %v279 = vunpack.c.l.b16 %v228
      %v280 = vunpack.c.l.b16 %v229
      %v281 = vunpack.c.l.b16 %v230
      %v282 = vunpack.c.l.b16 %v231
      %v283 = vunpack.c.l.b16 %v232
      %v284 = vunpack.c.l.b16 %v233
      %v285 = vunpack.c.l.b16 %v234
      %v286 = vunpack.c.l.b16 %v235
      %v287 = vunpack.c.l.b16 %v236
      %v288 = vunpack.c.l.b16 %v237
      %v289 = vunpack.c.l.b16 %v238
      %v290 = vunpack.c.l.b16 %v239
      %v291 = vunpack.c.l.b16 %v240
      %v292 = vunpack.c.l.b16 %v241
      %v293 = vpack.c.b16 %v278, %v277
      %v294 = vpack.c.b16 %v280, %v279
      %v295 = vpack.c.b16 %v282, %v281
      %v296 = vpack.c.b16 %v284, %v283
      %v297 = vpack.c.b16 %v286, %v285
      %v298 = vpack.c.b16 %v288, %v287
      %v299 = vpack.c.b16 %v290, %v289
      %v300 = vpack.c.b16 %v292, %v291
      %v313 = vunpack.c.l.b16 %v242
      %v314 = vunpack.c.l.b16 %v243
      %v315 = vunpack.c.l.b16 %v244
      %v316 = vunpack.c.l.b16 %v245
      %v317 = vunpack.c.l.b16 %v246
      %v318 = vunpack.c.l.b16 %v247
      %v319 = vunpack.c.l.b16 %v248
      %v320 = vunpack.c.l.b16 %v249
      %v321 = vunpack.c.l.b16 %v250
      %v322 = vunpack.c.l.b16 %v251
      %v323 = vunpack.c.l.b16 %v252
      %v324 = vunpack.c.l.b16 %v253
      %v325 = vpack.c.b16 %v314, %v313
      %v326 = vpack.c.b16 %v316, %v315
      %v327 = vpack.c.b16 %v318, %v317
      %v328 = vpack.c.b16 %v320, %v319
      %v329 = vpack.c.b16 %v322, %v321
      %v330 = vpack.c.b16 %v324, %v323
      %vm337 = vcmask 785408
      %v339 = vsel %vm337, %v293, 0
      %v342 = vsel %vm337, %v294, 0
      %v345 = vsel %vm337, %v295, 0
      %v348 = vsel %vm337, %v296, 0
      %v351 = vsel %vm337, %v297, 0
      %v354 = vsel %vm337, %v298, 0
      %v357 = vsel %vm337, %v299, 0
      %v360 = vsel %vm337, %v300, 0
      %362 = vmatprep.subr.bf16.mxu0 0
      %363 = vmatpush1.bf16.msra.mxu0 %v325
      %364 = vmatprep.subr.bf16.mxu0 0
      %365 = vmatpush1.bf16.msra.mxu0 %v326
      %366 = vmatprep.subr.bf16.mxu0 0
      %367 = vmatpush1.bf16.msra.mxu0 %v327
      %368 = vmatprep.subr.bf16.mxu0 0
      %369 = vmatpush1.bf16.msra.mxu0 %v328
      %370 = vmatprep.subr.bf16.mxu0 0
      %371 = vmatpush1.bf16.msra.mxu0 %v329
      %372 = vmatprep.subr.bf16.mxu0 0
      %373 = vmatpush1.bf16.msra.mxu0 %v330
      %374 = vmatprep.subr.bf16.mxu0 0
      %375 = vmatpush1.bf16.msra.mxu0 0
      %376 = vmatprep.subr.bf16.mxu0 0
      %377 = vmatpush1.bf16.msra.mxu0 0
      %378 = vmatprep.subr.bf16.mxu0 0
      %379 = vmatpush1.bf16.msra.mxu0 0
      %380 = vmatprep.subr.bf16.mxu0 0
      %381 = vmatpush1.bf16.msra.mxu0 0
      %382 = vmatprep.subr.bf16.mxu0 0
      %383 = vmatpush1.bf16.msra.mxu0 0
      %384 = vmatprep.subr.bf16.mxu0 0
      %385 = vmatpush1.bf16.msra.mxu0 0
      %386 = vmatprep.subr.bf16.mxu0 0
      %387 = vmatpush1.bf16.msra.mxu0 0
      %388 = vmatprep.subr.bf16.mxu0 0
      %389 = vmatpush1.bf16.msra.mxu0 0
      %390 = vmatprep.subr.bf16.mxu0 0
      %391 = vmatpush1.bf16.msra.mxu0 0
      %392 = vmatprep.subr.bf16.mxu0 0
      %393 = vmatpush1.bf16.msra.mxu0 0
      %394 = vmatprep.mubr.bf16.mxu0 0
      %395 = vmatmul.mubr.bf16.gmra.mrb[0].mxu0 %v339
      %v396 = vpop.f32.mrb[0].mxu0
      %v397 = vadd.f32 %v259, %v396
      %v398 = vpop.f32.mrb[0].mxu0
      %v399 = vpop.f32.mrb[0].mxu0
      %v400 = vadd.f32 %v259, %v399
      %v401 = vpop.f32.mrb[0].mxu0
      %402 = vmatprep.mubr.bf16.mxu0 0
      %403 = vmatmul.mubr.bf16.gmra.mrb[0].mxu0 %v342
      %v404 = vpop.f32.mrb[0].mxu0
      %v405 = vadd.f32 %v259, %v404
      %v406 = vpop.f32.mrb[0].mxu0
      %v407 = vpop.f32.mrb[0].mxu0
      %v408 = vadd.f32 %v259, %v407
      %v409 = vpop.f32.mrb[0].mxu0
      %410 = vmatprep.mubr.bf16.mxu0 0
      %411 = vmatmul.mubr.bf16.gmra.mrb[0].mxu0 %v345
      %v412 = vpop.f32.mrb[0].mxu0
      %v413 = vadd.f32 %v259, %v412
      %v414 = vpop.f32.mrb[0].mxu0
      %v415 = vpop.f32.mrb[0].mxu0
      %v416 = vadd.f32 %v259, %v415
      %v417 = vpop.f32.mrb[0].mxu0
      %418 = vmatprep.mubr.bf16.mxu0 0
      %419 = vmatmul.mubr.bf16.gmra.mrb[0].mxu0 %v348
      %v420 = vpop.f32.mrb[0].mxu0
      %v421 = vadd.f32 %v259, %v420
      %v422 = vpop.f32.mrb[0].mxu0
      %v423 = vpop.f32.mrb[0].mxu0
      %v424 = vadd.f32 %v259, %v423
      %v425 = vpop.f32.mrb[0].mxu0
      %426 = vmatprep.mubr.bf16.mxu0 0
      %427 = vmatmul.mubr.bf16.gmra.mrb[0].mxu0 %v351
      %v428 = vpop.f32.mrb[0].mxu0
      %v429 = vadd.f32 %v259, %v428
      %v430 = vpop.f32.mrb[0].mxu0
      %v431 = vpop.f32.mrb[0].mxu0
      %v432 = vadd.f32 %v259, %v431
      %v433 = vpop.f32.mrb[0].mxu0
      %434 = vmatprep.mubr.bf16.mxu0 0
      %435 = vmatmul.mubr.bf16.gmra.mrb[0].mxu0 %v354
      %v436 = vpop.f32.mrb[0].mxu0
      %v437 = vadd.f32 %v259, %v436
      %v438 = vpop.f32.mrb[0].mxu0
      %v439 = vpop.f32.mrb[0].mxu0
      %v440 = vadd.f32 %v259, %v439
      %v441 = vpop.f32.mrb[0].mxu0
      %442 = vmatprep.mubr.bf16.mxu0 0
      %443 = vmatmul.mubr.bf16.gmra.mrb[0].mxu0 %v357
      %v444 = vpop.f32.mrb[0].mxu0
      %v445 = vadd.f32 %v259, %v444
      %v446 = vpop.f32.mrb[0].mxu0
      %v447 = vpop.f32.mrb[0].mxu0
      %v448 = vadd.f32 %v259, %v447
      %v449 = vpop.f32.mrb[0].mxu0
      %450 = vmatprep.mubr.bf16.mxu0 0
      %451 = vmatmul.mubr.bf16.gmra.mrb[0].mxu0 %v360
      %v452 = vpop.f32.mrb[0].mxu0
      %v453 = vadd.f32 %v259, %v452
      %v454 = vpop.f32.mrb[0].mxu0
      %v455 = vpop.f32.mrb[0].mxu0
      %v456 = vadd.f32 %v259, %v455
      %v457 = vpop.f32.mrb[0].mxu0
      %458 = vdwg.mxu0
      %v459 = vmax.f32 %v397, 0.0
      %v460 = vmax.f32 %v400, 0.0
      %v461 = vmax.f32 %v405, 0.0
      %v462 = vmax.f32 %v408, 0.0
      %v463 = vmax.f32 %v413, 0.0
      %v464 = vmax.f32 %v416, 0.0
      %v465 = vmax.f32 %v421, 0.0
      %v466 = vmax.f32 %v424, 0.0
      %v467 = vmax.f32 %v429, 0.0
      %v468 = vmax.f32 %v432, 0.0
      %v469 = vmax.f32 %v437, 0.0
      %v470 = vmax.f32 %v440, 0.0
      %v471 = vmax.f32 %v445, 0.0
      %v472 = vmax.f32 %v448, 0.0
      %v473 = vmax.f32 %v453, 0.0
      %v474 = vmax.f32 %v456, 0.0
      %vm475 = vcmask 130048
      %476 = vst.msk [vmem:[%s223] sm:$0xff] %vm475, %v459
      %477 = vst.msk [vmem:[%s223 + $0x8] sm:$0xff] %vm475, %v460
      %478 = vst.msk [vmem:[%s223 + $0x10] sm:$0xff] %vm475, %v461
      %479 = vst.msk [vmem:[%s223 + $0x18] sm:$0xff] %vm475, %v462
      %480 = vst.msk [vmem:[%s223 + $0x20] sm:$0xff] %vm475, %v463
      %481 = vst.msk [vmem:[%s223 + $0x28] sm:$0xff] %vm475, %v464
      %482 = vst.msk [vmem:[%s223 + $0x30] sm:$0xff] %vm475, %v465
      %483 = vst.msk [vmem:[%s223 + $0x38] sm:$0xff] %vm475, %v466
      %484 = vst.msk [vmem:[%s223 + $0x40] sm:$0xff] %vm475, %v467
      %485 = vst.msk [vmem:[%s223 + $0x48] sm:$0xff] %vm475, %v468
      %486 = vst.msk [vmem:[%s223 + $0x50] sm:$0xff] %vm475, %v469
      %487 = vst.msk [vmem:[%s223 + $0x58] sm:$0xff] %vm475, %v470
      %488 = vst.msk [vmem:[%s223 + $0x60] sm:$0xff] %vm475, %v471
      %489 = vst.msk [vmem:[%s223 + $0x68] sm:$0xff] %vm475, %v472
      %490 = vst.msk [vmem:[%s223 + $0x70] sm:$0xff] %vm475, %v473
      %491 = vst.msk [vmem:[%s223 + $0x78] sm:$0xff] %vm475, %v474
      %s492 = smul.u32 16, %s18
      %p493 = scmp.lt.s32.totalorder %s492, 31
      %s494 = scalar_select %p493, %s492, 31
      %p495 = scmp.lt.s32.totalorder %s19, 0
      %s496 = scalar_select %p495, %s19, 0
      %s497 = sadd.s32 %s496, %s494
      %s498 = smul.addr %s497, 8
      %s499 = scalar_lea.vmem %s3, %s498
      // Predicated region
      $region33: #{squeeze_forward.20} parent=31 // pred_check
        %p500 = pneg %p124
      $region34: #{squeeze_forward.20} parent=31 // pred_check_branch
        %502 = sbr.rel (%p500) target = $region36
      $region35: #{squeeze_forward.20} parent=31 // pred_region
        %s503 = smul.u32 16, %s18
      $region36: #{squeeze_forward.20} parent=31 // pred_fallthru
        _
    $region32: #{squeeze_forward.20} parent=5 // pred_fallthru
      _
    %p504 = scmp.le.s32.totalorder 2, %s9
    // Predicated region
    $region37: #{squeeze_forward.20} parent=5 // pred_check
      %p505 = pneg %p504
    $region38: #{squeeze_forward.20} parent=5 // pred_check_branch
      %507 = sbr.rel (%p505) target = $region40
    $region39: #{squeeze_forward.20} parent=5 // pred_region
      %s508 = ssub.s32 %s9, 2
      // Predicated region
      $region41: #{squeeze_forward.20} parent=39 // pred_check
        %p509 = pneg %p130
      $region42: #{squeeze_forward.20} parent=39 // pred_check_branch
        %511 = sbr.rel (%p509) target = $region44
      $region43: #{squeeze_forward.20} parent=39 // pred_region
        %s512 = smul.u32 16, %s20
        %p513 = scmp.lt.s32.totalorder %s512, 31
        %s514 = scalar_select %p513, %s512, 31
        %p515 = scmp.lt.s32.totalorder %s21, 0
        %s516 = scalar_select %p515, %s21, 0
        %s517 = sadd.s32 %s516, %s514
        %s518 = smul.addr %s517, 8
        %s519 = scalar_lea.vmem %s3, %s518
      $region44: #{squeeze_forward.20} parent=39 // pred_fallthru
        _
    $region40: #{squeeze_forward.20} parent=5 // pred_fallthru
      _
  $region6: #{squeeze_forward.20} parent=0 // loop_footer
    %s13 = sadd.s32 1, %s9
  $region7: #{squeeze_forward.20} parent=0 // loop_footer_branch
    %8 = sbr.rel target = $region3
  $region8: #{squeeze_forward.20} parent=0 // loop_exit
    _

// kernel: squeeze_forward.19
$region0: #{squeeze_forward.19}
  #allocation0 [shape = 'u32[]', space=smem, size = 0x4, offset = 0x4, fixed_abs, tag = 'smem constant byte address 0x4 - core index']
  #allocation1 [shape = 'u32[144,128]{1,0:T(1,128)}', space=vmem, size = 0x12000, scoped, tag = 'internal scratch']
  %s0 = inlined_call_operand.vmem [shape: f32[2,22,11,192], index: 0, kind: input, shape index: {}]
  %s1 = inlined_call_operand.vmem [shape: f32[2,10,10,96], index: 1, kind: output, shape index: {}]
  %s2 = sld [smem:[#allocation0]]
  $region37: #{squeeze_forward.19} parent=0
    _
  %s4 = ssub.s32 1, %s2
  %s5 = scalar_select 0, %s4, %s2
  loop: start=0, step=1, limit=4
  $region2: #{squeeze_forward.19} parent=0 // loop_pre_header
    _
  $region3: #{squeeze_forward.19} parent=0 // loop_header
    %s7 = sphi 0, %s11
    %p8 = scmp.ge.s32.totalorder %s7, 4
    %s17 = sphi 0, %s19
    %s20 = sphi 0, %s17
    %s21 = sphi 0, %s20
    %s37 = sphi 0, %s21
    %s43 = sphi 0, %s45
    %s46 = sphi 0, %s43
    %s47 = sphi 0, %s46
    %s63 = sphi 0, %s47
  $region4: #{squeeze_forward.19} parent=0 // loop_header_branch
    %10 = sbr.rel (%p8) target = $region8
  $region5: #{squeeze_forward.19} parent=0 // loop_body
    %s12 = ssub.s32 %s7, 1
    %s13 = ssub.s32 %s7, 2
    %s14 = sadd.s32 %s7, 1
    %s15 = ssub.s32 %s7, %s14
    %p16 = scmp.eq.s32.totalorder %s15, 0
    %s18 = sadd.s32 %s17, 1
    %s19 = scalar_select %p16, %s17, %s18
    %p22 = pneg %p16
    %p23 = scmp.eq.s32.totalorder %s7, 1
    %p24 = por %p22, %p23
    %p25 = scmp.ne.s32.totalorder %s17, %s20
    %p26 = scmp.eq.s32.totalorder %s7, 0
    %p27 = por %p25, %p26
    %p28 = scmp.ne.s32.totalorder %s17, %s20
    %p29 = scmp.eq.s32.totalorder %s12, 1
    %p30 = por %p28, %p29
    %p31 = scmp.ne.s32.totalorder %s20, %s21
    %p32 = scmp.eq.s32.totalorder %s12, 0
    %p33 = por %p31, %p32
    %p34 = scmp.ne.s32.totalorder %s20, %s21
    %p35 = scmp.eq.s32.totalorder %s13, 1
    %p36 = por %p34, %p35
    %p38 = scmp.ne.s32.totalorder %s21, %s37
    %p39 = scmp.eq.s32.totalorder %s13, 0
    %p40 = por %p38, %p39
    %s41 = ssub.s32 %s7, %s14
    %p42 = scmp.eq.s32.totalorder %s41, 0
    %s44 = sadd.s32 %s43, 1
    %s45 = scalar_select %p42, %s43, %s44
    %p48 = pneg %p42
    %p49 = scmp.eq.s32.totalorder %s7, 1
    %p50 = por %p48, %p49
    %p51 = scmp.ne.s32.totalorder %s43, %s46
    %p52 = scmp.eq.s32.totalorder %s7, 0
    %p53 = por %p51, %p52
    %p54 = scmp.ne.s32.totalorder %s43, %s46
    %p55 = scmp.eq.s32.totalorder %s12, 1
    %p56 = por %p54, %p55
    %p57 = scmp.ne.s32.totalorder %s46, %s47
    %p58 = scmp.eq.s32.totalorder %s12, 0
    %p59 = por %p57, %p58
    %p60 = scmp.ne.s32.totalorder %s46, %s47
    %p61 = scmp.eq.s32.totalorder %s13, 1
    %p62 = por %p60, %p61
    %p64 = scmp.ne.s32.totalorder %s47, %s63
    %p65 = scmp.eq.s32.totalorder %s13, 0
    %p66 = por %p64, %p65
    %p67 = scmp.le.s32.totalorder 1, %s7
    %p68 = scmp.lt.s32.totalorder %s7, 3
    %p69 = pnand %p67, %p68
    %p70 = pneg %p69
    // Predicated region
    $region9: #{squeeze_forward.19} parent=5 // pred_check
      _
    $region10: #{squeeze_forward.19} parent=5 // pred_check_branch
      %72 = sbr.rel (%p69) target = $region12
    $region11: #{squeeze_forward.19} parent=5 // pred_region
      %s73 = ssub.s32 %s7, 1
    $region12: #{squeeze_forward.19} parent=5 // pred_fallthru
      _
    %p74 = scmp.lt.s32.totalorder %s7, 2
    // Predicated region
    $region13: #{squeeze_forward.19} parent=5 // pred_check
      %p75 = pneg %p74
    $region14: #{squeeze_forward.19} parent=5 // pred_check_branch
      %77 = sbr.rel (%p75) target = $region16
    $region15: #{squeeze_forward.19} parent=5 // pred_region
      // Predicated region
      $region17: #{squeeze_forward.19} parent=15 // pred_check
        %p78 = pneg %p27
      $region18: #{squeeze_forward.19} parent=15 // pred_check_branch
        %80 = sbr.rel (%p78) target = $region20
      $region19: #{squeeze_forward.19} parent=15 // pred_region
        %p81 = scmp.lt.s32.totalorder %s7, 1
        %s82 = scalar_select %p81, %s7, 1
        %s83 = smul.addr %s82, 88
        %s84 = smul.addr %s83, 8
        %s85 = scalar_lea.vmem %s0, %s84
      $region20: #{squeeze_forward.19} parent=15 // pred_fallthru
        _
    $region16: #{squeeze_forward.19} parent=5 // pred_fallthru
      _
    %p86 = scmp.le.s32.totalorder 1, %s7
    %p87 = scmp.lt.s32.totalorder %s7, 3
    %p88 = pnand %p86, %p87
    %p89 = pneg %p88
    // Predicated region
    $region21: #{squeeze_forward.19} parent=5 // pred_check
      _
    $region22: #{squeeze_forward.19} parent=5 // pred_check_branch
      %91 = sbr.rel (%p88) target = $region24
    $region23: #{squeeze_forward.19} parent=5 // pred_region
      %s92 = ssub.s32 %s7, 1
      %p93 = scmp.lt.s32.totalorder %s12, 1
      %s94 = scalar_select %p93, %s12, 1
      %s95 = smul.addr %s94, 88
      %s96 = smul.addr %s95, 8
      %s97 = scalar_lea.vmem %s0, %s96
      %p98 = pneg %p33
      %p99 = pneg %p30
      %p100 = pneg %p59
      %p101 = pneg %p56
      %p102 = scmp.lt.s32.totalorder %s12, 1
      %s103 = scalar_select %p102, %s12, 1
      %s104 = smul.addr %s103, 20
      %s105 = smul.addr %s104, 8
      %s106 = scalar_lea.vmem %s1, %s105
      %p107 = scmp.lt.s32.totalorder %s12, 1
      %s108 = scalar_select %p107, %s12, 1
      %s109 = smul.addr %s108, 88
      %s110 = smul.addr %s109, 8
      %s111 = scalar_lea.vmem %s0, %s110
      %p112 = scmp.lt.s32.totalorder %s12, 1
      %s113 = scalar_select %p112, %s12, 1
      %s114 = smul.addr %s113, 20
      %s115 = smul.addr %s114, 8
      %s116 = scalar_lea.vmem %s1, %s115
      %v117 = vld [vmem:[%s111] sm:$0xff]
      %v118 = vld [vmem:[%s111 + $0x8] sm:$0xff]
      %v119 = vld [vmem:[%s111 + $0x10] sm:$0x7]
      %v120 = vld [vmem:[%s111 + $0x18] sm:$0x7]
      %v121 = vld [vmem:[%s111 + $0x20] sm:$0xff]
      %v122 = vld [vmem:[%s111 + $0x28] sm:$0xff]
      %v123 = vld [vmem:[%s111 + $0x30] sm:$0x7]
      %v124 = vld [vmem:[%s111 + $0x38] sm:$0x7]
      %v125 = vld [vmem:[%s111 + $0x40] sm:$0xff]
      %v126 = vld [vmem:[%s111 + $0x48] sm:$0xff]
      %v127 = vld [vmem:[%s111 + $0x50] sm:$0x7]
      %v128 = vld [vmem:[%s111 + $0x58] sm:$0x7]
      %v129 = vld [vmem:[%s111 + $0x60] sm:$0xff]
      %v130 = vld [vmem:[%s111 + $0x68] sm:$0xff]
      %v131 = vld [vmem:[%s111 + $0x70] sm:$0x7]
      %v132 = vld [vmem:[%s111 + $0x78] sm:$0x7]
      %v133 = vld [vmem:[%s111 + $0x80] sm:$0xff]
      %v134 = vld [vmem:[%s111 + $0x88] sm:$0xff]
      %v135 = vld [vmem:[%s111 + $0x90] sm:$0x7]
      %v136 = vld [vmem:[%s111 + $0x98] sm:$0x7]
      %v137 = vld [vmem:[%s111 + $0xa0] sm:$0xff]
      %v138 = vld [vmem:[%s111 + $0xa8] sm:$0xff]
      %v139 = vld [vmem:[%s111 + $0xb0] sm:$0x7]
      %v140 = vld [vmem:[%s111 + $0xb8] sm:$0x7]
      %v141 = vld [vmem:[%s111 + $0xc0] sm:$0xff]
      %v142 = vld [vmem:[%s111 + $0xc8] sm:$0xff]
      %v143 = vld [vmem:[%s111 + $0xd0] sm:$0x7]
      %v144 = vld [vmem:[%s111 + $0xd8] sm:$0x7]
      %v145 = vld [vmem:[%s111 + $0xe0] sm:$0xff]
      %v146 = vld [vmem:[%s111 + $0xe8] sm:$0xff]
      %v147 = vld [vmem:[%s111 + $0xf0] sm:$0x7]
      %v148 = vld [vmem:[%s111 + $0xf8] sm:$0x7]
      %v149 = vld [vmem:[%s111 + $0x100] sm:$0xff]
      %v150 = vld [vmem:[%s111 + $0x108] sm:$0xff]
      %v151 = vld [vmem:[%s111 + $0x110] sm:$0x7]
      %v152 = vld [vmem:[%s111 + $0x118] sm:$0x7]
      %v153 = vld [vmem:[%s111 + $0x120] sm:$0xff]
      %v154 = vld [vmem:[%s111 + $0x128] sm:$0xff]
      %v155 = vld [vmem:[%s111 + $0x130] sm:$0x7]
      %v156 = vld [vmem:[%s111 + $0x138] sm:$0x7]
      %v157 = vld [vmem:[%s111 + $0x140] sm:$0xff]
      %v158 = vld [vmem:[%s111 + $0x148] sm:$0xff]
      %v159 = vld [vmem:[%s111 + $0x150] sm:$0x7]
      %v160 = vld [vmem:[%s111 + $0x158] sm:$0x7]
      %v161 = vld [vmem:[%s111 + $0x160] sm:$0xff]
      %v162 = vld [vmem:[%s111 + $0x168] sm:$0xff]
      %v163 = vld [vmem:[%s111 + $0x170] sm:$0x7]
      %v164 = vld [vmem:[%s111 + $0x178] sm:$0x7]
      %v165 = vld [vmem:[%s111 + $0x180] sm:$0xff]
      %v166 = vld [vmem:[%s111 + $0x188] sm:$0xff]
      %v167 = vld [vmem:[%s111 + $0x190] sm:$0x7]
      %v168 = vld [vmem:[%s111 + $0x198] sm:$0x7]
      %v169 = vld [vmem:[%s111 + $0x1a0] sm:$0xff]
      %v170 = vld [vmem:[%s111 + $0x1a8] sm:$0xff]
      %v171 = vld [vmem:[%s111 + $0x1b0] sm:$0x7]
      %v172 = vld [vmem:[%s111 + $0x1b8] sm:$0x7]
      %v173 = vld [vmem:[%s111 + $0x1c0] sm:$0xff]
      %v174 = vld [vmem:[%s111 + $0x1c8] sm:$0xff]
      %v175 = vld [vmem:[%s111 + $0x1d0] sm:$0x7]
      %v176 = vld [vmem:[%s111 + $0x1d8] sm:$0x7]
      %v177 = vld [vmem:[%s111 + $0x1e0] sm:$0xff]
      %v178 = vld [vmem:[%s111 + $0x1e8] sm:$0xff]
      %v179 = vld [vmem:[%s111 + $0x1f0] sm:$0x7]
      %v180 = vld [vmem:[%s111 + $0x1f8] sm:$0x7]
      %v181 = vld [vmem:[%s111 + $0x200] sm:$0xff]
      %v182 = vld [vmem:[%s111 + $0x208] sm:$0xff]
      %v183 = vld [vmem:[%s111 + $0x210] sm:$0x7]
      %v184 = vld [vmem:[%s111 + $0x218] sm:$0x7]
      %v185 = vld [vmem:[%s111 + $0x220] sm:$0xff]
      %v186 = vld [vmem:[%s111 + $0x228] sm:$0xff]
      %v187 = vld [vmem:[%s111 + $0x230] sm:$0x7]
      %v188 = vld [vmem:[%s111 + $0x238] sm:$0x7]
      %v189 = vld [vmem:[%s111 + $0x240] sm:$0xff]
      %v190 = vld [vmem:[%s111 + $0x248] sm:$0xff]
      %v191 = vld [vmem:[%s111 + $0x250] sm:$0x7]
      %v192 = vld [vmem:[%s111 + $0x258] sm:$0x7]
      %v193 = vld [vmem:[%s111 + $0x260] sm:$0xff]
      %v194 = vld [vmem:[%s111 + $0x268] sm:$0xff]
      %v195 = vld [vmem:[%s111 + $0x270] sm:$0x7]
      %v196 = vld [vmem:[%s111 + $0x278] sm:$0x7]
      %v197 = vld [vmem:[%s111 + $0x280] sm:$0xff]
      %v198 = vld [vmem:[%s111 + $0x288] sm:$0xff]
      %v199 = vld [vmem:[%s111 + $0x290] sm:$0x7]
      %v200 = vld [vmem:[%s111 + $0x298] sm:$0x7]
      %285 = vrot.lane.b32.xlu0 %v117, 32
      %v286 = vpop.permute.xlu0 %285
      %287 = vrot.lane.b32.xlu0 %v118, 32
      %v288 = vpop.permute.xlu0 %287
      %289 = vrot.lane.b32.xlu0 %v119, 32
      %v290 = vpop.permute.xlu0 %289
      %291 = vrot.lane.b32.xlu0 %v120, 32
      %v292 = vpop.permute.xlu0 %291
      %293 = vrot.lane.b32.xlu0 %v121, 32
      %v294 = vpop.permute.xlu0 %293
      %295 = vrot.lane.b32.xlu0 %v122, 32
      %v296 = vpop.permute.xlu0 %295
      %297 = vrot.lane.b32.xlu0 %v123, 32
      %v298 = vpop.permute.xlu0 %297
      %299 = vrot.lane.b32.xlu0 %v124, 32
      %v300 = vpop.permute.xlu0 %299
      %301 = vrot.lane.b32.xlu0 %v125, 32
      %v302 = vpop.permute.xlu0 %301
      %303 = vrot.lane.b32.xlu0 %v126, 32
      %v304 = vpop.permute.xlu0 %303
      %305 = vrot.lane.b32.xlu0 %v127, 32
      %v306 = vpop.permute.xlu0 %305
      %307 = vrot.lane.b32.xlu0 %v128, 32
      %v308 = vpop.permute.xlu0 %307
      %309 = vrot.lane.b32.xlu0 %v129, 32
      %v310 = vpop.permute.xlu0 %309
      %311 = vrot.lane.b32.xlu0 %v130, 32
      %v312 = vpop.permute.xlu0 %311
      %313 = vrot.lane.b32.xlu0 %v131, 32
      %v314 = vpop.permute.xlu0 %313
      %315 = vrot.lane.b32.xlu0 %v132, 32
      %v316 = vpop.permute.xlu0 %315
      %317 = vrot.lane.b32.xlu0 %v133, 32
      %v318 = vpop.permute.xlu0 %317
      %319 = vrot.lane.b32.xlu0 %v134, 32
      %v320 = vpop.permute.xlu0 %319
      %321 = vrot.lane.b32.xlu0 %v135, 32
      %v322 = vpop.permute.xlu0 %321
      %323 = vrot.lane.b32.xlu0 %v136, 32
      %v324 = vpop.permute.xlu0 %323
      %325 = vrot.lane.b32.xlu0 %v137, 32
      %v326 = vpop.permute.xlu0 %325
      %327 = vrot.lane.b32.xlu0 %v138, 32
      %v328 = vpop.permute.xlu0 %327
      %329 = vrot.lane.b32.xlu0 %v139, 32
      %v330 = vpop.permute.xlu0 %329
      %331 = vrot.lane.b32.xlu0 %v140, 32
      %v332 = vpop.permute.xlu0 %331
      %333 = vrot.lane.b32.xlu0 %v141, 32
      %v334 = vpop.permute.xlu0 %333
      %335 = vrot.lane.b32.xlu0 %v142, 32
      %v336 = vpop.permute.xlu0 %335
      %337 = vrot.lane.b32.xlu0 %v143, 32
      %v338 = vpop.permute.xlu0 %337
      %339 = vrot.lane.b32.xlu0 %v144, 32
      %v340 = vpop.permute.xlu0 %339
      %341 = vrot.lane.b32.xlu0 %v145, 32
      %v342 = vpop.permute.xlu0 %341
      %343 = vrot.lane.b32.xlu0 %v146, 32
      %v344 = vpop.permute.xlu0 %343
      %345 = vrot.lane.b32.xlu0 %v147, 32
      %v346 = vpop.permute.xlu0 %345
      %347 = vrot.lane.b32.xlu0 %v148, 32
      %v348 = vpop.permute.xlu0 %347
      %349 = vrot.lane.b32.xlu0 %v149, 32
      %v350 = vpop.permute.xlu0 %349
      %351 = vrot.lane.b32.xlu0 %v150, 32
      %v352 = vpop.permute.xlu0 %351
      %353 = vrot.lane.b32.xlu0 %v151, 32
      %v354 = vpop.permute.xlu0 %353
      %355 = vrot.lane.b32.xlu0 %v152, 32
      %v356 = vpop.permute.xlu0 %355
      %357 = vrot.lane.b32.xlu0 %v153, 32
      %v358 = vpop.permute.xlu0 %357
      %359 = vrot.lane.b32.xlu0 %v154, 32
      %v360 = vpop.permute.xlu0 %359
      %361 = vrot.lane.b32.xlu0 %v155, 32
      %v362 = vpop.permute.xlu0 %361
      %363 = vrot.lane.b32.xlu0 %v156, 32
      %v364 = vpop.permute.xlu0 %363
      %365 = vrot.lane.b32.xlu0 %v157, 32
      %v366 = vpop.permute.xlu0 %365
      %367 = vrot.lane.b32.xlu0 %v158, 32
      %v368 = vpop.permute.xlu0 %367
      %369 = vrot.lane.b32.xlu0 %v159, 32
      %v370 = vpop.permute.xlu0 %369
      %371 = vrot.lane.b32.xlu0 %v160, 32
      %v372 = vpop.permute.xlu0 %371
      %373 = vrot.lane.b32.xlu0 %v161, 32
      %v374 = vpop.permute.xlu0 %373
      %375 = vrot.lane.b32.xlu0 %v162, 32
      %v376 = vpop.permute.xlu0 %375
      %377 = vrot.lane.b32.xlu0 %v163, 32
      %v378 = vpop.permute.xlu0 %377
      %379 = vrot.lane.b32.xlu0 %v164, 32
      %v380 = vpop.permute.xlu0 %379
      %381 = vrot.lane.b32.xlu0 %v165, 32
      %v382 = vpop.permute.xlu0 %381
      %383 = vrot.lane.b32.xlu0 %v166, 32
      %v384 = vpop.permute.xlu0 %383
      %385 = vrot.lane.b32.xlu0 %v167, 32
      %v386 = vpop.permute.xlu0 %385
      %387 = vrot.lane.b32.xlu0 %v168, 32
      %v388 = vpop.permute.xlu0 %387
      %389 = vrot.lane.b32.xlu0 %v169, 32
      %v390 = vpop.permute.xlu0 %389
      %391 = vrot.lane.b32.xlu0 %v170, 32
      %v392 = vpop.permute.xlu0 %391
      %393 = vrot.lane.b32.xlu0 %v171, 32
      %v394 = vpop.permute.xlu0 %393
      %395 = vrot.lane.b32.xlu0 %v172, 32
      %v396 = vpop.permute.xlu0 %395
      %397 = vrot.lane.b32.xlu0 %v173, 32
      %v398 = vpop.permute.xlu0 %397
      %399 = vrot.lane.b32.xlu0 %v174, 32
      %v400 = vpop.permute.xlu0 %399
      %401 = vrot.lane.b32.xlu0 %v175, 32
      %v402 = vpop.permute.xlu0 %401
      %403 = vrot.lane.b32.xlu0 %v176, 32
      %v404 = vpop.permute.xlu0 %403
      %405 = vrot.lane.b32.xlu0 %v177, 32
      %v406 = vpop.permute.xlu0 %405
      %407 = vrot.lane.b32.xlu0 %v178, 32
      %v408 = vpop.permute.xlu0 %407
      %409 = vrot.lane.b32.xlu0 %v179, 32
      %v410 = vpop.permute.xlu0 %409
      %411 = vrot.lane.b32.xlu0 %v180, 32
      %v412 = vpop.permute.xlu0 %411
      %413 = vrot.lane.b32.xlu0 %v181, 32
      %v414 = vpop.permute.xlu0 %413
      %415 = vrot.lane.b32.xlu0 %v182, 32
      %v416 = vpop.permute.xlu0 %415
      %417 = vrot.lane.b32.xlu0 %v183, 32
      %v418 = vpop.permute.xlu0 %417
      %419 = vrot.lane.b32.xlu0 %v184, 32
      %v420 = vpop.permute.xlu0 %419
      %421 = vrot.lane.b32.xlu0 %v185, 32
      %v422 = vpop.permute.xlu0 %421
      %423 = vrot.lane.b32.xlu0 %v186, 32
      %v424 = vpop.permute.xlu0 %423
      %425 = vrot.lane.b32.xlu0 %v187, 32
      %v426 = vpop.permute.xlu0 %425
      %427 = vrot.lane.b32.xlu0 %v188, 32
      %v428 = vpop.permute.xlu0 %427
      %429 = vrot.lane.b32.xlu0 %v189, 32
      %v430 = vpop.permute.xlu0 %429
      %431 = vrot.lane.b32.xlu0 %v190, 32
      %v432 = vpop.permute.xlu0 %431
      %433 = vrot.lane.b32.xlu0 %v191, 32
      %v434 = vpop.permute.xlu0 %433
      %435 = vrot.lane.b32.xlu0 %v192, 32
      %v436 = vpop.permute.xlu0 %435
      %437 = vrot.lane.b32.xlu0 %v193, 32
      %v438 = vpop.permute.xlu0 %437
      %439 = vrot.lane.b32.xlu0 %v194, 32
      %v440 = vpop.permute.xlu0 %439
      %441 = vrot.lane.b32.xlu0 %v195, 32
      %v442 = vpop.permute.xlu0 %441
      %443 = vrot.lane.b32.xlu0 %v196, 32
      %v444 = vpop.permute.xlu0 %443
      %445 = vrot.lane.b32.xlu0 %v197, 32
      %v446 = vpop.permute.xlu0 %445
      %447 = vrot.lane.b32.xlu0 %v198, 32
      %v448 = vpop.permute.xlu0 %447
      %449 = vrot.lane.b32.xlu0 %v199, 32
      %v450 = vpop.permute.xlu0 %449
      %451 = vrot.lane.b32.xlu0 %v200, 32
      %v452 = vpop.permute.xlu0 %451
      %vm453 = vcmask 261120
      %v454 = vsel %vm453, %v286, %v288
      %v455 = vsel %vm453, %v290, %v292
      %v456 = vsel %vm453, %v294, %v296
      %v457 = vsel %vm453, %v298, %v300
      %v458 = vsel %vm453, %v302, %v304
      %v459 = vsel %vm453, %v306, %v308
      %v460 = vsel %vm453, %v310, %v312
      %v461 = vsel %vm453, %v314, %v316
      %v462 = vsel %vm453, %v318, %v320
      %v463 = vsel %vm453, %v322, %v324
      %v464 = vsel %vm453, %v326, %v328
      %v465 = vsel %vm453, %v330, %v332
      %v466 = vsel %vm453, %v334, %v336
      %v467 = vsel %vm453, %v338, %v340
      %v468 = vsel %vm453, %v342, %v344
      %v469 = vsel %vm453, %v346, %v348
      %v470 = vsel %vm453, %v350, %v352
      %v471 = vsel %vm453, %v354, %v356
      %v472 = vsel %vm453, %v358, %v360
      %v473 = vsel %vm453, %v362, %v364
      %v474 = vsel %vm453, %v366, %v368
      %v475 = vsel %vm453, %v370, %v372
      %v476 = vsel %vm453, %v374, %v376
      %v477 = vsel %vm453, %v378, %v380
      %v478 = vsel %vm453, %v382, %v384
      %v479 = vsel %vm453, %v386, %v388
      %v480 = vsel %vm453, %v390, %v392
      %v481 = vsel %vm453, %v394, %v396
      %v482 = vsel %vm453, %v398, %v400
      %v483 = vsel %vm453, %v402, %v404
      %v484 = vsel %vm453, %v406, %v408
      %v485 = vsel %vm453, %v410, %v412
      %v486 = vsel %vm453, %v414, %v416
      %v487 = vsel %vm453, %v418, %v420
      %v488 = vsel %vm453, %v422, %v424
      %v489 = vsel %vm453, %v426, %v428
      %v490 = vsel %vm453, %v430, %v432
      %v491 = vsel %vm453, %v434, %v436
      %v492 = vsel %vm453, %v438, %v440
      %v493 = vsel %vm453, %v442, %v444
      %v494 = vsel %vm453, %v446, %v448
      %v495 = vsel %vm453, %v450, %v452
      %v538 = vmax.f32 %v117, %v454
      %v539 = vmax.f32 %v119, %v455
      %v540 = vmax.f32 %v121, %v456
      %v541 = vmax.f32 %v123, %v457
      %v542 = vmax.f32 %v125, %v458
      %v543 = vmax.f32 %v127, %v459
      %v544 = vmax.f32 %v129, %v460
      %v545 = vmax.f32 %v131, %v461
      %v546 = vmax.f32 %v133, %v462
      %v547 = vmax.f32 %v135, %v463
      %v548 = vmax.f32 %v137, %v464
      %v549 = vmax.f32 %v139, %v465
      %v550 = vmax.f32 %v141, %v466
      %v551 = vmax.f32 %v143, %v467
      %v552 = vmax.f32 %v145, %v468
      %v553 = vmax.f32 %v147, %v469
      %v554 = vmax.f32 %v149, %v470
      %v555 = vmax.f32 %v151, %v471
      %v556 = vmax.f32 %v153, %v472
      %v557 = vmax.f32 %v155, %v473
      %v558 = vmax.f32 %v157, %v474
      %v559 = vmax.f32 %v159, %v475
      %v560 = vmax.f32 %v161, %v476
      %v561 = vmax.f32 %v163, %v477
      %v562 = vmax.f32 %v165, %v478
      %v563 = vmax.f32 %v167, %v479
      %v564 = vmax.f32 %v169, %v480
      %v565 = vmax.f32 %v171, %v481
      %v566 = vmax.f32 %v173, %v482
      %v567 = vmax.f32 %v175, %v483
      %v568 = vmax.f32 %v177, %v484
      %v569 = vmax.f32 %v179, %v485
      %v570 = vmax.f32 %v181, %v486
      %v571 = vmax.f32 %v183, %v487
      %v572 = vmax.f32 %v185, %v488
      %v573 = vmax.f32 %v187, %v489
      %v574 = vmax.f32 %v189, %v490
      %v575 = vmax.f32 %v191, %v491
      %v576 = vmax.f32 %v193, %v492
      %v577 = vmax.f32 %v195, %v493
      %v578 = vmax.f32 %v197, %v494
      %v579 = vmax.f32 %v199, %v495
      %vm580 = vcmask 1046528
      %v581 = vrot.slane %v117, 1
      %v582 = vrot.slane %v119, 1
      %v583 = vsel %vm580, %v581, %v582
      %v584 = vrot.slane %v121, 1
      %v585 = vrot.slane %v123, 1
      %v586 = vsel %vm580, %v584, %v585
      %v587 = vrot.slane %v125, 1
      %v588 = vrot.slane %v127, 1
      %v589 = vsel %vm580, %v587, %v588
      %v590 = vrot.slane %v129, 1
      %v591 = vrot.slane %v131, 1
      %v592 = vsel %vm580, %v590, %v591
      %v593 = vrot.slane %v133, 1
      %v594 = vrot.slane %v135, 1
      %v595 = vsel %vm580, %v593, %v594
      %v596 = vrot.slane %v137, 1
      %v597 = vrot.slane %v139, 1
      %v598 = vsel %vm580, %v596, %v597
      %v599 = vrot.slane %v141, 1
      %v600 = vrot.slane %v143, 1
      %v601 = vsel %vm580, %v599, %v600
      %v602 = vrot.slane %v145, 1
      %v603 = vrot.slane %v147, 1
      %v604 = vsel %vm580, %v602, %v603
      %v605 = vrot.slane %v149, 1
      %v606 = vrot.slane %v151, 1
      %v607 = vsel %vm580, %v605, %v606
      %v608 = vrot.slane %v153, 1
      %v609 = vrot.slane %v155, 1
      %v610 = vsel %vm580, %v608, %v609
      %v611 = vrot.slane %v157, 1
      %v612 = vrot.slane %v159, 1
      %v613 = vsel %vm580, %v611, %v612
      %v614 = vrot.slane %v161, 1
      %v615 = vrot.slane %v163, 1
      %v616 = vsel %vm580, %v614, %v615
      %v617 = vrot.slane %v165, 1
      %v618 = vrot.slane %v167, 1
      %v619 = vsel %vm580, %v617, %v618
      %v620 = vrot.slane %v169, 1
      %v621 = vrot.slane %v171, 1
      %v622 = vsel %vm580, %v620, %v621
      %v623 = vrot.slane %v173, 1
      %v624 = vrot.slane %v175, 1
      %v625 = vsel %vm580, %v623, %v624
      %v626 = vrot.slane %v177, 1
      %v627 = vrot.slane %v179, 1
      %v628 = vsel %vm580, %v626, %v627
      %v629 = vrot.slane %v181, 1
      %v630 = vrot.slane %v183, 1
      %v631 = vsel %vm580, %v629, %v630
      %v632 = vrot.slane %v185, 1
      %v633 = vrot.slane %v187, 1
      %v634 = vsel %vm580, %v632, %v633
      %v635 = vrot.slane %v189, 1
      %v636 = vrot.slane %v191, 1
      %v637 = vsel %vm580, %v635, %v636
      %v638 = vrot.slane %v193, 1
      %v639 = vrot.slane %v195, 1
      %v640 = vsel %vm580, %v638, %v639
      %v641 = vrot.slane %v197, 1
      %v642 = vrot.slane %v199, 1
      %v643 = vsel %vm580, %v641, %v642
      %v686 = vmax.f32 %v538, %v583
      %v687 = vmax.f32 %v539, %v582
      %v688 = vmax.f32 %v540, %v586
      %v689 = vmax.f32 %v541, %v585
      %v690 = vmax.f32 %v542, %v589
      %v691 = vmax.f32 %v543, %v588
      %v692 = vmax.f32 %v544, %v592
      %v693 = vmax.f32 %v545, %v591
      %v694 = vmax.f32 %v546, %v595
      %v695 = vmax.f32 %v547, %v594
      %v696 = vmax.f32 %v548, %v598
      %v697 = vmax.f32 %v549, %v597
      %v698 = vmax.f32 %v550, %v601
      %v699 = vmax.f32 %v551, %v600
      %v700 = vmax.f32 %v552, %v604
      %v701 = vmax.f32 %v553, %v603
      %v702 = vmax.f32 %v554, %v607
      %v703 = vmax.f32 %v555, %v606
      %v704 = vmax.f32 %v556, %v610
      %v705 = vmax.f32 %v557, %v609
      %v706 = vmax.f32 %v558, %v613
      %v707 = vmax.f32 %v559, %v612
      %v708 = vmax.f32 %v560, %v616
      %v709 = vmax.f32 %v561, %v615
      %v710 = vmax.f32 %v562, %v619
      %v711 = vmax.f32 %v563, %v618
      %v712 = vmax.f32 %v564, %v622
      %v713 = vmax.f32 %v565, %v621
      %v714 = vmax.f32 %v566, %v625
      %v715 = vmax.f32 %v567, %v624
      %v716 = vmax.f32 %v568, %v628
      %v717 = vmax.f32 %v569, %v627
      %v718 = vmax.f32 %v570, %v631
      %v719 = vmax.f32 %v571, %v630
      %v720 = vmax.f32 %v572, %v634
      %v721 = vmax.f32 %v573, %v633
      %v722 = vmax.f32 %v574, %v637
      %v723 = vmax.f32 %v575, %v636
      %v724 = vmax.f32 %v576, %v640
      %v725 = vmax.f32 %v577, %v639
      %v726 = vmax.f32 %v578, %v643
      %v727 = vmax.f32 %v579, %v642
      %v728 = vmax.f32 %v686, %v688
      %v729 = vmax.f32 %v687, %v689
      %v730 = vmax.f32 %v690, %v692
      %v731 = vmax.f32 %v691, %v693
      %v732 = vmax.f32 %v694, %v696
      %v733 = vmax.f32 %v695, %v697
      %v734 = vmax.f32 %v698, %v700
      %v735 = vmax.f32 %v699, %v701
      %v736 = vmax.f32 %v702, %v704
      %v737 = vmax.f32 %v703, %v705
      %v738 = vmax.f32 %v706, %v708
      %v739 = vmax.f32 %v707, %v709
      %v740 = vmax.f32 %v710, %v712
      %v741 = vmax.f32 %v711, %v713
      %v742 = vmax.f32 %v714, %v716
      %v743 = vmax.f32 %v715, %v717
      %v744 = vmax.f32 %v718, %v720
      %v745 = vmax.f32 %v719, %v721
      %v746 = vmax.f32 %v722, %v724
      %v747 = vmax.f32 %v723, %v725
      %v748 = vmax.f32 %v728, %v690
      %v749 = vmax.f32 %v729, %v691
      %v750 = vmax.f32 %v730, %v694
      %v751 = vmax.f32 %v731, %v695
      %v752 = vmax.f32 %v732, %v698
      %v753 = vmax.f32 %v733, %v699
      %v754 = vmax.f32 %v734, %v702
      %v755 = vmax.f32 %v735, %v703
      %v756 = vmax.f32 %v736, %v706
      %v757 = vmax.f32 %v737, %v707
      %v758 = vmax.f32 %v738, %v710
      %v759 = vmax.f32 %v739, %v711
      %v760 = vmax.f32 %v740, %v714
      %v761 = vmax.f32 %v741, %v715
      %v762 = vmax.f32 %v742, %v718
      %v763 = vmax.f32 %v743, %v719
      %v764 = vmax.f32 %v744, %v722
      %v765 = vmax.f32 %v745, %v723
      %v766 = vmax.f32 %v746, %v726
      %v767 = vmax.f32 %v747, %v727
      %vm768 = vcmask 785408
      %769 = vst.msk [vmem:[%s116] sm:$0xff] %vm768, %v748
      %vm770 = vcmask 779264
      %771 = vst.msk [vmem:[%s116 + $0x8] sm:$0x3] %vm770, %v749
      %772 = vst.msk [vmem:[%s116 + $0x10] sm:$0xff] %vm768, %v750
      %773 = vst.msk [vmem:[%s116 + $0x18] sm:$0x3] %vm770, %v751
      %774 = vst.msk [vmem:[%s116 + $0x20] sm:$0xff] %vm768, %v752
      %775 = vst.msk [vmem:[%s116 + $0x28] sm:$0x3] %vm770, %v753
      %776 = vst.msk [vmem:[%s116 + $0x30] sm:$0xff] %vm768, %v754
      %777 = vst.msk [vmem:[%s116 + $0x38] sm:$0x3] %vm770, %v755
      %778 = vst.msk [vmem:[%s116 + $0x40] sm:$0xff] %vm768, %v756
      %779 = vst.msk [vmem:[%s116 + $0x48] sm:$0x3] %vm770, %v757
      %780 = vst.msk [vmem:[%s116 + $0x50] sm:$0xff] %vm768, %v758
      %781 = vst.msk [vmem:[%s116 + $0x58] sm:$0x3] %vm770, %v759
      %782 = vst.msk [vmem:[%s116 + $0x60] sm:$0xff] %vm768, %v760
      %783 = vst.msk [vmem:[%s116 + $0x68] sm:$0x3] %vm770, %v761
      %784 = vst.msk [vmem:[%s116 + $0x70] sm:$0xff] %vm768, %v762
      %785 = vst.msk [vmem:[%s116 + $0x78] sm:$0x3] %vm770, %v763
      %786 = vst.msk [vmem:[%s116 + $0x80] sm:$0xff] %vm768, %v764
      %787 = vst.msk [vmem:[%s116 + $0x88] sm:$0x3] %vm770, %v765
      %788 = vst.msk [vmem:[%s116 + $0x90] sm:$0xff] %vm768, %v766
      %789 = vst.msk [vmem:[%s116 + $0x98] sm:$0x3] %vm770, %v767
      %p790 = scmp.lt.s32.totalorder %s12, 1
      %s791 = scalar_select %p790, %s12, 1
      %s792 = smul.addr %s791, 20
      %s793 = smul.addr %s792, 8
      %s794 = scalar_lea.vmem %s1, %s793
      // Predicated region
      $region25: #{squeeze_forward.19} parent=23 // pred_check
        %p795 = pneg %p56
      $region26: #{squeeze_forward.19} parent=23 // pred_check_branch
        %797 = sbr.rel (%p795) target = $region28
      $region27: #{squeeze_forward.19} parent=23 // pred_region
        _
      $region28: #{squeeze_forward.19} parent=23 // pred_fallthru
        _
    $region24: #{squeeze_forward.19} parent=5 // pred_fallthru
      _
    %p798 = scmp.le.s32.totalorder 2, %s7
    // Predicated region
    $region29: #{squeeze_forward.19} parent=5 // pred_check
      %p799 = pneg %p798
    $region30: #{squeeze_forward.19} parent=5 // pred_check_branch
      %801 = sbr.rel (%p799) target = $region32
    $region31: #{squeeze_forward.19} parent=5 // pred_region
      %s802 = ssub.s32 %s7, 2
      // Predicated region
      $region33: #{squeeze_forward.19} parent=31 // pred_check
        %p803 = pneg %p62
      $region34: #{squeeze_forward.19} parent=31 // pred_check_branch
        %805 = sbr.rel (%p803) target = $region36
      $region35: #{squeeze_forward.19} parent=31 // pred_region
        %p806 = scmp.lt.s32.totalorder %s13, 1
        %s807 = scalar_select %p806, %s13, 1
        %s808 = smul.addr %s807, 20
        %s809 = smul.addr %s808, 8
        %s810 = scalar_lea.vmem %s1, %s809
      $region36: #{squeeze_forward.19} parent=31 // pred_fallthru
        _
    $region32: #{squeeze_forward.19} parent=5 // pred_fallthru
      _
  $region6: #{squeeze_forward.19} parent=0 // loop_footer
    %s11 = sadd.s32 1, %s7
  $region7: #{squeeze_forward.19} parent=0 // loop_footer_branch
    %6 = sbr.rel target = $region3
  $region8: #{squeeze_forward.19} parent=0 // loop_exit
    _

// kernel: squeeze_forward.21
$region0: #{squeeze_forward.21}
  #allocation0 [shape = 'u32[]', space=smem, size = 0x4, offset = 0x4, fixed_abs, tag = 'smem constant byte address 0x4 - core index']
  #allocation1 [shape = 'u32[144,128]{1,0:T(1,128)}', space=vmem, size = 0x12000, scoped, tag = 'internal scratch']
  %s0 = inlined_call_operand.vmem [shape: bf16[256,144], index: 0, kind: input, shape index: {}]
  %s1 = inlined_call_operand.vmem [shape: bf16[144,128], index: 1, kind: input, shape index: {}]
  %s2 = inlined_call_operand.vmem [shape: f32[1,128], index: 2, kind: input, shape index: {}]
  %s3 = inlined_call_operand.vmem [shape: f32[256,128], index: 3, kind: output, shape index: {}]
  %s4 = sld [smem:[#allocation0]]
  $region45: #{squeeze_forward.21} parent=0
    _
  %s6 = ssub.s32 1, %s4
  %s7 = scalar_select 0, %s6, %s4
  loop: start=0, step=1, limit=4
  $region2: #{squeeze_forward.21} parent=0 // loop_pre_header
    _
  $region3: #{squeeze_forward.21} parent=0 // loop_header
    %s9 = sphi 0, %s13
    %p10 = scmp.ge.s32.totalorder %s9, 4
    %s16 = sphi 0, %s28
    %s17 = sphi 0, %s24
    %s18 = sphi 0, %s16
    %s19 = sphi 0, %s17
    %s20 = sphi 0, %s18
    %s21 = sphi 0, %s19
    %s31 = sphi 0, %s33
    %s34 = sphi 0, %s31
    %s35 = sphi 0, %s34
    %s51 = sphi 0, %s35
    %s57 = sphi 0, %s59
    %s60 = sphi 0, %s57
    %s61 = sphi 0, %s60
    %s77 = sphi 0, %s61
    %s83 = sphi 0, %s85
    %s86 = sphi 0, %s83
    %s87 = sphi 0, %s86
    %s103 = sphi 0, %s87
    %s111 = sphi 0, %s113
    %s114 = sphi 0, %s111
    %s115 = sphi 0, %s114
    %s131 = sphi 0, %s115
  $region4: #{squeeze_forward.21} parent=0 // loop_header_branch
    %12 = sbr.rel (%p10) target = $region8
  $region5: #{squeeze_forward.21} parent=0 // loop_body
    %s14 = ssub.s32 %s9, 1
    %s15 = ssub.s32 %s9, 2
    %s22 = sadd.s32 1, %s17
    %p23 = scmp.ge.s32.totalorder %s22, 1
    %s24 = scalar_select %p23, 0, %s22
    %s25 = sadd.s32 1, %s16
    %s26 = scalar_select %p23, %s25, %s16
    %p27 = scmp.ge.s32.totalorder %s26, 2
    %s28 = scalar_select %p27, 0, %s26
    %s29 = ssub.s32 %s16, %s28
    %p30 = scmp.eq.s32.totalorder %s29, 0
    %s32 = sadd.s32 %s31, 1
    %s33 = scalar_select %p30, %s31, %s32
    %p36 = pneg %p30
    %p37 = scmp.eq.s32.totalorder %s9, 1
    %p38 = por %p36, %p37
    %p39 = scmp.ne.s32.totalorder %s31, %s34
    %p40 = scmp.eq.s32.totalorder %s9, 0
    %p41 = por %p39, %p40
    %p42 = scmp.ne.s32.totalorder %s31, %s34
    %p43 = scmp.eq.s32.totalorder %s14, 1
    %p44 = por %p42, %p43
    %p45 = scmp.ne.s32.totalorder %s34, %s35
    %p46 = scmp.eq.s32.totalorder %s14, 0
    %p47 = por %p45, %p46
    %p48 = scmp.ne.s32.totalorder %s34, %s35
    %p49 = scmp.eq.s32.totalorder %s15, 1
    %p50 = por %p48, %p49
    %p52 = scmp.ne.s32.totalorder %s35, %s51
    %p53 = scmp.eq.s32.totalorder %s15, 0
    %p54 = por %p52, %p53
    %s55 = ssub.s32 %s17, %s24
    %p56 = scmp.eq.s32.totalorder %s55, 0
    %s58 = sadd.s32 %s57, 1
    %s59 = scalar_select %p56, %s57, %s58
    %p62 = pneg %p56
    %p63 = scmp.eq.s32.totalorder %s9, 1
    %p64 = por %p62, %p63
    %p65 = scmp.ne.s32.totalorder %s57, %s60
    %p66 = scmp.eq.s32.totalorder %s9, 0
    %p67 = por %p65, %p66
    %p68 = scmp.ne.s32.totalorder %s57, %s60
    %p69 = scmp.eq.s32.totalorder %s14, 1
    %p70 = por %p68, %p69
    %p71 = scmp.ne.s32.totalorder %s60, %s61
    %p72 = scmp.eq.s32.totalorder %s14, 0
    %p73 = por %p71, %p72
    %p74 = scmp.ne.s32.totalorder %s60, %s61
    %p75 = scmp.eq.s32.totalorder %s15, 1
    %p76 = por %p74, %p75
    %p78 = scmp.ne.s32.totalorder %s61, %s77
    %p79 = scmp.eq.s32.totalorder %s15, 0
    %p80 = por %p78, %p79
    %s81 = ssub.s32 %s17, %s24
    %p82 = scmp.eq.s32.totalorder %s81, 0
    %s84 = sadd.s32 %s83, 1
    %s85 = scalar_select %p82, %s83, %s84
    %p88 = pneg %p82
    %p89 = scmp.eq.s32.totalorder %s9, 1
    %p90 = por %p88, %p89
    %p91 = scmp.ne.s32.totalorder %s83, %s86
    %p92 = scmp.eq.s32.totalorder %s9, 0
    %p93 = por %p91, %p92
    %p94 = scmp.ne.s32.totalorder %s83, %s86
    %p95 = scmp.eq.s32.totalorder %s14, 1
    %p96 = por %p94, %p95
    %p97 = scmp.ne.s32.totalorder %s86, %s87
    %p98 = scmp.eq.s32.totalorder %s14, 0
    %p99 = por %p97, %p98
    %p100 = scmp.ne.s32.totalorder %s86, %s87
    %p101 = scmp.eq.s32.totalorder %s15, 1
    %p102 = por %p100, %p101
    %p104 = scmp.ne.s32.totalorder %s87, %s103
    %p105 = scmp.eq.s32.totalorder %s15, 0
    %p106 = por %p104, %p105
    %s107 = ssub.s32 %s16, %s28
    %s108 = ssub.s32 %s17, %s24
    %s109 = sor.u32 %s107, %s108
    %p110 = scmp.eq.s32.totalorder %s109, 0
    %s112 = sadd.s32 %s111, 1
    %s113 = scalar_select %p110, %s111, %s112
    %p116 = pneg %p110
    %p117 = scmp.eq.s32.totalorder %s9, 1
    %p118 = por %p116, %p117
    %p119 = scmp.ne.s32.totalorder %s111, %s114
    %p120 = scmp.eq.s32.totalorder %s9, 0
    %p121 = por %p119, %p120
    %p122 = scmp.ne.s32.totalorder %s111, %s114
    %p123 = scmp.eq.s32.totalorder %s14, 1
    %p124 = por %p122, %p123
    %p125 = scmp.ne.s32.totalorder %s114, %s115
    %p126 = scmp.eq.s32.totalorder %s14, 0
    %p127 = por %p125, %p126
    %p128 = scmp.ne.s32.totalorder %s114, %s115
    %p129 = scmp.eq.s32.totalorder %s15, 1
    %p130 = por %p128, %p129
    %p132 = scmp.ne.s32.totalorder %s115, %s131
    %p133 = scmp.eq.s32.totalorder %s15, 0
    %p134 = por %p132, %p133
    %p135 = scmp.le.s32.totalorder 1, %s9
    %p136 = scmp.lt.s32.totalorder %s9, 3
    %p137 = pnand %p135, %p136
    %p138 = pneg %p137
    // Predicated region
    $region9: #{squeeze_forward.21} parent=5 // pred_check
      _
    $region10: #{squeeze_forward.21} parent=5 // pred_check_branch
      %140 = sbr.rel (%p137) target = $region12
    $region11: #{squeeze_forward.21} parent=5 // pred_region
      %s141 = ssub.s32 %s9, 1
      // Predicated region
      $region13: #{squeeze_forward.21} parent=11 // pred_check
        %p142 = pneg %p73
      $region14: #{squeeze_forward.21} parent=11 // pred_check_branch
        %144 = sbr.rel (%p142) target = $region16
      $region15: #{squeeze_forward.21} parent=11 // pred_region
        %p145 = scmp.lt.s32.totalorder %s19, 0
        %s146 = scalar_select %p145, %s19, 0
        %s147 = smul.addr %s146, 4
        %s148 = scalar_lea.vmem %s1, %s147
      $region16: #{squeeze_forward.21} parent=11 // pred_fallthru
        _
      // Predicated region
      $region17: #{squeeze_forward.21} parent=11 // pred_check
        %p149 = pneg %p99
      $region18: #{squeeze_forward.21} parent=11 // pred_check_branch
        %151 = sbr.rel (%p149) target = $region20
      $region19: #{squeeze_forward.21} parent=11 // pred_region
        %p152 = scmp.lt.s32.totalorder %s19, 0
        %s153 = scalar_select %p152, %s19, 0
        %s154 = scalar_lea.vmem %s2, %s153
      $region20: #{squeeze_forward.21} parent=11 // pred_fallthru
        _
    $region12: #{squeeze_forward.21} parent=5 // pred_fallthru
      _
    %p155 = scmp.lt.s32.totalorder %s9, 2
    // Predicated region
    $region21: #{squeeze_forward.21} parent=5 // pred_check
      %p156 = pneg %p155
    $region22: #{squeeze_forward.21} parent=5 // pred_check_branch
      %158 = sbr.rel (%p156) target = $region24
    $region23: #{squeeze_forward.21} parent=5 // pred_region
      // Predicated region
      $region25: #{squeeze_forward.21} parent=23 // pred_check
        %p159 = pneg %p41
      $region26: #{squeeze_forward.21} parent=23 // pred_check_branch
        %161 = sbr.rel (%p159) target = $region28
      $region27: #{squeeze_forward.21} parent=23 // pred_region
        %s162 = smul.u32 16, %s16
        %p163 = scmp.lt.s32.totalorder %s162, 31
        %s164 = scalar_select %p163, %s162, 31
        %s165 = smul.addr %s164, 2
        %s166 = smul.addr %s165, 4
        %s167 = scalar_lea.vmem %s0, %s166
        %s168 = smul.u32 16, %s16
      $region28: #{squeeze_forward.21} parent=23 // pred_fallthru
        _
    $region24: #{squeeze_forward.21} parent=5 // pred_fallthru
      _
    %p169 = scmp.le.s32.totalorder 1, %s9
    %p170 = scmp.lt.s32.totalorder %s9, 3
    %p171 = pnand %p169, %p170
    %p172 = pneg %p171
    // Predicated region
    $region29: #{squeeze_forward.21} parent=5 // pred_check
      _
    $region30: #{squeeze_forward.21} parent=5 // pred_check_branch
      %174 = sbr.rel (%p171) target = $region32
    $region31: #{squeeze_forward.21} parent=5 // pred_region
      %s175 = ssub.s32 %s9, 1
      %s176 = smul.u32 16, %s18
      %p177 = scmp.lt.s32.totalorder %s176, 31
      %s178 = scalar_select %p177, %s176, 31
      %s179 = smul.addr %s178, 2
      %s180 = smul.addr %s179, 4
      %s181 = scalar_lea.vmem %s0, %s180
      %p182 = pneg %p47
      %p183 = pneg %p44
      %p184 = scmp.lt.s32.totalorder %s19, 0
      %s185 = scalar_select %p184, %s19, 0
      %s186 = smul.addr %s185, 4
      %s187 = scalar_lea.vmem %s1, %s186
      %p188 = pneg %p73
      %p189 = pneg %p70
      %p190 = scmp.lt.s32.totalorder %s19, 0
      %s191 = scalar_select %p190, %s19, 0
      %s192 = scalar_lea.vmem %s2, %s191
      %p193 = pneg %p99
      %p194 = pneg %p96
      %p195 = pneg %p127
      %p196 = pneg %p124
      %s197 = smul.u32 16, %s18
      %p198 = scmp.lt.s32.totalorder %s197, 31
      %s199 = scalar_select %p198, %s197, 31
      %p200 = scmp.lt.s32.totalorder %s19, 0
      %s201 = scalar_select %p200, %s19, 0
      %s202 = sadd.s32 %s201, %s199
      %s203 = smul.addr %s202, 8
      %s204 = scalar_lea.vmem %s3, %s203
      %s205 = smul.u32 16, %s18
      %p206 = scmp.lt.s32.totalorder %s205, 31
      %s207 = scalar_select %p206, %s205, 31
      %s208 = smul.addr %s207, 2
      %s209 = smul.addr %s208, 4
      %s210 = scalar_lea.vmem %s0, %s209
      %s211 = smul.u32 16, %s18
      %p212 = scmp.lt.s32.totalorder %s19, 0
      %s213 = scalar_select %p212, %s19, 0
      %s214 = smul.addr %s213, 4
      %s215 = scalar_lea.vmem %s1, %s214
      %p216 = scmp.lt.s32.totalorder %s19, 0
      %s217 = scalar_select %p216, %s19, 0
      %s218 = scalar_lea.vmem %s2, %s217
      %s219 = smul.u32 16, %s18
      %p220 = scmp.lt.s32.totalorder %s219, 31
      %s221 = scalar_select %p220, %s219, 31
      %p222 = scmp.lt.s32.totalorder %s19, 0
      %s223 = scalar_select %p222, %s19, 0
      %s224 = sadd.s32 %s223, %s221
      %s225 = smul.addr %s224, 8
      %s226 = scalar_lea.vmem %s3, %s225
      %s227 = smul.u32 16, %s18
      %v229 = vld [vmem:[%s210] sm:$0xff]
      %v230 = vld [vmem:[%s210 + $0x8] sm:$0xff]
      %v231 = vld [vmem:[%s210 + $0x10] sm:$0xff]
      %v232 = vld [vmem:[%s210 + $0x18] sm:$0xff]
      %v233 = vld [vmem:[%s210 + $0x20] sm:$0xff]
      %v234 = vld [vmem:[%s210 + $0x28] sm:$0xff]
      %v235 = vld [vmem:[%s210 + $0x30] sm:$0xff]
      %v236 = vld [vmem:[%s210 + $0x38] sm:$0xff]
      %v237 = vld [vmem:[%s210 + $0x40] sm:$0xff]
      %v238 = vld [vmem:[%s210 + $0x48] sm:$0xff]
      %v239 = vld [vmem:[%s210 + $0x50] sm:$0xff]
      %v240 = vld [vmem:[%s210 + $0x58] sm:$0xff]
      %v241 = vld [vmem:[%s210 + $0x60] sm:$0xff]
      %v242 = vld [vmem:[%s210 + $0x68] sm:$0xff]
      %v243 = vld [vmem:[%s210 + $0x70] sm:$0xff]
      %v244 = vld [vmem:[%s210 + $0x78] sm:$0xff]
      %v245 = vld [vmem:[%s215] sm:$0xf]
      %v246 = vld [vmem:[%s215 + $0x4] sm:$0xf]
      %v247 = vld [vmem:[%s215 + $0x8] sm:$0xf]
      %v248 = vld [vmem:[%s215 + $0xc] sm:$0xf]
      %v249 = vld [vmem:[%s215 + $0x10] sm:$0xf]
      %v250 = vld [vmem:[%s215 + $0x14] sm:$0xf]
      %v251 = vld [vmem:[%s215 + $0x18] sm:$0xf]
      %v252 = vld [vmem:[%s215 + $0x1c] sm:$0xf]
      %v253 = vld [vmem:[%s215 + $0x20] sm:$0xf]
      %v254 = vld [vmem:[%s215 + $0x24] sm:$0xf]
      %v255 = vld [vmem:[%s215 + $0x28] sm:$0xf]
      %v256 = vld [vmem:[%s215 + $0x2c] sm:$0xf]
      %v257 = vld [vmem:[%s215 + $0x30] sm:$0xf]
      %v258 = vld [vmem:[%s215 + $0x34] sm:$0xf]
      %v259 = vld [vmem:[%s215 + $0x38] sm:$0xf]
      %v260 = vld [vmem:[%s215 + $0x3c] sm:$0xf]
      %v261 = vld [vmem:[%s215 + $0x40] sm:$0xf]
      %v262 = vld [vmem:[%s215 + $0x44] sm:$0xf]
      %v263 = vld [vmem:[%s218] sm:$0x1]
      %v265 = vlaneseq
      %v266 = vshrl.u32 %v265, 7
      %v267 = vsub.s32 0, %v266
      %v268 = vrot.slane %v263, %v267
      %v286 = vunpack.c.l.b16 %v229
      %v287 = vunpack.c.h.b16 %v229
      %v288 = vunpack.c.l.b16 %v230
      %v289 = vunpack.c.h.b16 %v230
      %v290 = vunpack.c.l.b16 %v231
      %v291 = vunpack.c.h.b16 %v231
      %v292 = vunpack.c.l.b16 %v232
      %v293 = vunpack.c.h.b16 %v232
      %v294 = vunpack.c.l.b16 %v233
      %v295 = vunpack.c.h.b16 %v233
      %v296 = vunpack.c.l.b16 %v234
      %v297 = vunpack.c.h.b16 %v234
      %v298 = vunpack.c.l.b16 %v235
      %v299 = vunpack.c.h.b16 %v235
      %v300 = vunpack.c.l.b16 %v236
      %v301 = vunpack.c.h.b16 %v236
      %v302 = vunpack.c.l.b16 %v237
      %v303 = vunpack.c.h.b16 %v237
      %v304 = vunpack.c.l.b16 %v238
      %v305 = vunpack.c.h.b16 %v238
      %v306 = vunpack.c.l.b16 %v239
      %v307 = vunpack.c.h.b16 %v239
      %v308 = vunpack.c.l.b16 %v240
      %v309 = vunpack.c.h.b16 %v240
      %v310 = vunpack.c.l.b16 %v241
      %v311 = vunpack.c.h.b16 %v241
      %v312 = vunpack.c.l.b16 %v242
      %v313 = vunpack.c.h.b16 %v242
      %v314 = vunpack.c.l.b16 %v243
      %v315 = vunpack.c.h.b16 %v243
      %v316 = vunpack.c.l.b16 %v244
      %v317 = vunpack.c.h.b16 %v244
      %v318 = vpack.c.b16 %v288, %v286
      %v319 = vpack.c.b16 %v289, %v287
      %v320 = vpack.c.b16 %v292, %v290
      %v321 = vpack.c.b16 %v293, %v291
      %v322 = vpack.c.b16 %v296, %v294
      %v323 = vpack.c.b16 %v297, %v295
      %v324 = vpack.c.b16 %v300, %v298
      %v325 = vpack.c.b16 %v301, %v299
      %v326 = vpack.c.b16 %v304, %v302
      %v327 = vpack.c.b16 %v305, %v303
      %v328 = vpack.c.b16 %v308, %v306
      %v329 = vpack.c.b16 %v309, %v307
      %v330 = vpack.c.b16 %v312, %v310
      %v331 = vpack.c.b16 %v313, %v311
      %v332 = vpack.c.b16 %v316, %v314
      %v333 = vpack.c.b16 %v317, %v315
      %v360 = vunpack.c.l.b16 %v245
      %v361 = vunpack.c.l.b16 %v246
      %v362 = vunpack.c.l.b16 %v247
      %v363 = vunpack.c.l.b16 %v248
      %v364 = vunpack.c.l.b16 %v249
      %v365 = vunpack.c.l.b16 %v250
      %v366 = vunpack.c.l.b16 %v251
      %v367 = vunpack.c.l.b16 %v252
      %v368 = vunpack.c.l.b16 %v253
      %v369 = vunpack.c.l.b16 %v254
      %v370 = vunpack.c.l.b16 %v255
      %v371 = vunpack.c.l.b16 %v256
      %v372 = vunpack.c.l.b16 %v257
      %v373 = vunpack.c.l.b16 %v258
      %v374 = vunpack.c.l.b16 %v259
      %v375 = vunpack.c.l.b16 %v260
      %v376 = vunpack.c.l.b16 %v261
      %v377 = vunpack.c.l.b16 %v262
      %v378 = vpack.c.b16 %v361, %v360
      %v379 = vpack.c.b16 %v363, %v362
      %v380 = vpack.c.b16 %v365, %v364
      %v381 = vpack.c.b16 %v367, %v366
      %v382 = vpack.c.b16 %v369, %v368
      %v383 = vpack.c.b16 %v371, %v370
      %v384 = vpack.c.b16 %v373, %v372
      %v385 = vpack.c.b16 %v375, %v374
      %v386 = vpack.c.b16 %v377, %v376
      %vm396 = vcmask 130048
      %v398 = vsel %vm396, %v319, 0
      %v401 = vsel %vm396, %v321, 0
      %v404 = vsel %vm396, %v323, 0
      %v407 = vsel %vm396, %v325, 0
      %v410 = vsel %vm396, %v327, 0
      %v413 = vsel %vm396, %v329, 0
      %v416 = vsel %vm396, %v331, 0
      %v419 = vsel %vm396, %v333, 0
      %421 = vmatprep.subr.bf16.mxu0 0
      %422 = vmatpush1.bf16.msra.mxu0 %v378
      %423 = vmatprep.subr.bf16.mxu0 0
      %424 = vmatpush1.bf16.msra.mxu0 %v379
      %425 = vmatprep.subr.bf16.mxu0 0
      %426 = vmatpush1.bf16.msra.mxu0 %v380
      %427 = vmatprep.subr.bf16.mxu0 0
      %428 = vmatpush1.bf16.msra.mxu0 %v381
      %429 = vmatprep.subr.bf16.mxu0 0
      %430 = vmatpush1.bf16.msra.mxu0 %v382
      %431 = vmatprep.subr.bf16.mxu0 0
      %432 = vmatpush1.bf16.msra.mxu0 %v383
      %433 = vmatprep.subr.bf16.mxu0 0
      %434 = vmatpush1.bf16.msra.mxu0 %v384
      %435 = vmatprep.subr.bf16.mxu0 0
      %436 = vmatpush1.bf16.msra.mxu0 %v385
      %437 = vmatprep.subr.bf16.mxu0 0
      %438 = vmatpush1.bf16.msra.mxu0 %v386
      %439 = vmatprep.subr.bf16.mxu0 0
      %440 = vmatpush1.bf16.msra.mxu0 0
      %441 = vmatprep.subr.bf16.mxu0 0
      %442 = vmatpush1.bf16.msra.mxu0 0
      %443 = vmatprep.subr.bf16.mxu0 0
      %444 = vmatpush1.bf16.msra.mxu0 0
      %445 = vmatprep.subr.bf16.mxu0 0
      %446 = vmatpush1.bf16.msra.mxu0 0
      %447 = vmatprep.subr.bf16.mxu0 0
      %448 = vmatpush1.bf16.msra.mxu0 0
      %449 = vmatprep.subr.bf16.mxu0 0
      %450 = vmatpush1.bf16.msra.mxu0 0
      %451 = vmatprep.subr.bf16.mxu0 0
      %452 = vmatpush1.bf16.msra.mxu0 0
      %453 = vmatprep.mubr.bf16.mxu0 %v398
      %454 = vmatmul.mubr.bf16.gmra.mrb[0].mxu0 %v318
      %v455 = vpop.f32.mrb[0].mxu0
      %v456 = vadd.f32 %v268, %v455
      %v457 = vpop.f32.mrb[0].mxu0
      %v458 = vpop.f32.mrb[0].mxu0
      %v459 = vadd.f32 %v268, %v458
      %v460 = vpop.f32.mrb[0].mxu0
      %461 = vmatprep.mubr.bf16.mxu0 %v401
      %462 = vmatmul.mubr.bf16.gmra.mrb[0].mxu0 %v320
      %v463 = vpop.f32.mrb[0].mxu0
      %v464 = vadd.f32 %v268, %v463
      %v465 = vpop.f32.mrb[0].mxu0
      %v466 = vpop.f32.mrb[0].mxu0
      %v467 = vadd.f32 %v268, %v466
      %v468 = vpop.f32.mrb[0].mxu0
      %469 = vmatprep.mubr.bf16.mxu0 %v404
      %470 = vmatmul.mubr.bf16.gmra.mrb[0].mxu0 %v322
      %v471 = vpop.f32.mrb[0].mxu0
      %v472 = vadd.f32 %v268, %v471
      %v473 = vpop.f32.mrb[0].mxu0
      %v474 = vpop.f32.mrb[0].mxu0
      %v475 = vadd.f32 %v268, %v474
      %v476 = vpop.f32.mrb[0].mxu0
      %477 = vmatprep.mubr.bf16.mxu0 %v407
      %478 = vmatmul.mubr.bf16.gmra.mrb[0].mxu0 %v324
      %v479 = vpop.f32.mrb[0].mxu0
      %v480 = vadd.f32 %v268, %v479
      %v481 = vpop.f32.mrb[0].mxu0
      %v482 = vpop.f32.mrb[0].mxu0
      %v483 = vadd.f32 %v268, %v482
      %v484 = vpop.f32.mrb[0].mxu0
      %485 = vmatprep.mubr.bf16.mxu0 %v410
      %486 = vmatmul.mubr.bf16.gmra.mrb[0].mxu0 %v326
      %v487 = vpop.f32.mrb[0].mxu0
      %v488 = vadd.f32 %v268, %v487
      %v489 = vpop.f32.mrb[0].mxu0
      %v490 = vpop.f32.mrb[0].mxu0
      %v491 = vadd.f32 %v268, %v490
      %v492 = vpop.f32.mrb[0].mxu0
      %493 = vmatprep.mubr.bf16.mxu0 %v413
      %494 = vmatmul.mubr.bf16.gmra.mrb[0].mxu0 %v328
      %v495 = vpop.f32.mrb[0].mxu0
      %v496 = vadd.f32 %v268, %v495
      %v497 = vpop.f32.mrb[0].mxu0
      %v498 = vpop.f32.mrb[0].mxu0
      %v499 = vadd.f32 %v268, %v498
      %v500 = vpop.f32.mrb[0].mxu0
      %501 = vmatprep.mubr.bf16.mxu0 %v416
      %502 = vmatmul.mubr.bf16.gmra.mrb[0].mxu0 %v330
      %v503 = vpop.f32.mrb[0].mxu0
      %v504 = vadd.f32 %v268, %v503
      %v505 = vpop.f32.mrb[0].mxu0
      %v506 = vpop.f32.mrb[0].mxu0
      %v507 = vadd.f32 %v268, %v506
      %v508 = vpop.f32.mrb[0].mxu0
      %509 = vmatprep.mubr.bf16.mxu0 %v419
      %510 = vmatmul.mubr.bf16.gmra.mrb[0].mxu0 %v332
      %v511 = vpop.f32.mrb[0].mxu0
      %v512 = vadd.f32 %v268, %v511
      %v513 = vpop.f32.mrb[0].mxu0
      %v514 = vpop.f32.mrb[0].mxu0
      %v515 = vadd.f32 %v268, %v514
      %v516 = vpop.f32.mrb[0].mxu0
      %517 = vdwg.mxu0
      %v518 = vmax.f32 %v456, 0.0
      %v519 = vmax.f32 %v459, 0.0
      %v520 = vmax.f32 %v464, 0.0
      %v521 = vmax.f32 %v467, 0.0
      %v522 = vmax.f32 %v472, 0.0
      %v523 = vmax.f32 %v475, 0.0
      %v524 = vmax.f32 %v480, 0.0
      %v525 = vmax.f32 %v483, 0.0
      %v526 = vmax.f32 %v488, 0.0
      %v527 = vmax.f32 %v491, 0.0
      %v528 = vmax.f32 %v496, 0.0
      %v529 = vmax.f32 %v499, 0.0
      %v530 = vmax.f32 %v504, 0.0
      %v531 = vmax.f32 %v507, 0.0
      %v532 = vmax.f32 %v512, 0.0
      %v533 = vmax.f32 %v515, 0.0
      %534 = vst [vmem:[%s226] sm:$0xff] %v518
      %535 = vst [vmem:[%s226 + $0x8] sm:$0xff] %v519
      %536 = vst [vmem:[%s226 + $0x10] sm:$0xff] %v520
      %537 = vst [vmem:[%s226 + $0x18] sm:$0xff] %v521
      %538 = vst [vmem:[%s226 + $0x20] sm:$0xff] %v522
      %539 = vst [vmem:[%s226 + $0x28] sm:$0xff] %v523
      %540 = vst [vmem:[%s226 + $0x30] sm:$0xff] %v524
      %541 = vst [vmem:[%s226 + $0x38] sm:$0xff] %v525
      %542 = vst [vmem:[%s226 + $0x40] sm:$0xff] %v526
      %543 = vst [vmem:[%s226 + $0x48] sm:$0xff] %v527
      %544 = vst [vmem:[%s226 + $0x50] sm:$0xff] %v528
      %545 = vst [vmem:[%s226 + $0x58] sm:$0xff] %v529
      %546 = vst [vmem:[%s226 + $0x60] sm:$0xff] %v530
      %547 = vst [vmem:[%s226 + $0x68] sm:$0xff] %v531
      %548 = vst [vmem:[%s226 + $0x70] sm:$0xff] %v532
      %549 = vst [vmem:[%s226 + $0x78] sm:$0xff] %v533
      %s550 = smul.u32 16, %s18
      %p551 = scmp.lt.s32.totalorder %s550, 31
      %s552 = scalar_select %p551, %s550, 31
      %p553 = scmp.lt.s32.totalorder %s19, 0
      %s554 = scalar_select %p553, %s19, 0
      %s555 = sadd.s32 %s554, %s552
      %s556 = smul.addr %s555, 8
      %s557 = scalar_lea.vmem %s3, %s556
      // Predicated region
      $region33: #{squeeze_forward.21} parent=31 // pred_check
        %p558 = pneg %p124
      $region34: #{squeeze_forward.21} parent=31 // pred_check_branch
        %560 = sbr.rel (%p558) target = $region36
      $region35: #{squeeze_forward.21} parent=31 // pred_region
        %s561 = smul.u32 16, %s18
      $region36: #{squeeze_forward.21} parent=31 // pred_fallthru
        _
    $region32: #{squeeze_forward.21} parent=5 // pred_fallthru
      _
    %p562 = scmp.le.s32.totalorder 2, %s9
    // Predicated region
    $region37: #{squeeze_forward.21} parent=5 // pred_check
      %p563 = pneg %p562
    $region38: #{squeeze_forward.21} parent=5 // pred_check_branch
      %565 = sbr.rel (%p563) target = $region40
    $region39: #{squeeze_forward.21} parent=5 // pred_region
      %s566 = ssub.s32 %s9, 2
      // Predicated region
      $region41: #{squeeze_forward.21} parent=39 // pred_check
        %p567 = pneg %p130
      $region42: #{squeeze_forward.21} parent=39 // pred_check_branch
        %569 = sbr.rel (%p567) target = $region44
      $region43: #{squeeze_forward.21} parent=39 // pred_region
        %s570 = smul.u32 16, %s20
        %p571 = scmp.lt.s32.totalorder %s570, 31
        %s572 = scalar_select %p571, %s570, 31
        %p573 = scmp.lt.s32.totalorder %s21, 0
        %s574 = scalar_select %p573, %s21, 0
        %s575 = sadd.s32 %s574, %s572
        %s576 = smul.addr %s575, 8
        %s577 = scalar_lea.vmem %s3, %s576
      $region44: #{squeeze_forward.21} parent=39 // pred_fallthru
        _
    $region40: #{squeeze_forward.21} parent=5 // pred_fallthru
      _
  $region6: #{squeeze_forward.21} parent=0 // loop_footer
    %s13 = sadd.s32 1, %s9
  $region7: #{squeeze_forward.21} parent=0 // loop_footer_branch
    %8 = sbr.rel target = $region3
  $region8: #{squeeze_forward.21} parent=0 // loop_exit
    _

// kernel: squeeze_forward.22
$region0: #{squeeze_forward.22}
  #allocation0 [shape = 'u32[]', space=smem, size = 0x4, offset = 0x4, fixed_abs, tag = 'smem constant byte address 0x4 - core index']
  #allocation1 [shape = 'u32[144,128]{1,0:T(1,128)}', space=vmem, size = 0x12000, scoped, tag = 'internal scratch']
  %s0 = inlined_call_operand.vmem [shape: bf16[256,128], index: 0, kind: input, shape index: {}]
  %s1 = inlined_call_operand.vmem [shape: bf16[128,16], index: 1, kind: input, shape index: {}]
  %s2 = inlined_call_operand.vmem [shape: f32[1,16], index: 2, kind: input, shape index: {}]
  %s3 = inlined_call_operand.vmem [shape: f32[256,16], index: 3, kind: output, shape index: {}]
  %s4 = sld [smem:[#allocation0]]
  $region45: #{squeeze_forward.22} parent=0
    _
  %s6 = ssub.s32 1, %s4
  %s7 = scalar_select 0, %s6, %s4
  loop: start=0, step=1, limit=4
  $region2: #{squeeze_forward.22} parent=0 // loop_pre_header
    _
  $region3: #{squeeze_forward.22} parent=0 // loop_header
    %s9 = sphi 0, %s13
    %p10 = scmp.ge.s32.totalorder %s9, 4
    %s16 = sphi 0, %s28
    %s17 = sphi 0, %s24
    %s18 = sphi 0, %s16
    %s19 = sphi 0, %s17
    %s20 = sphi 0, %s18
    %s21 = sphi 0, %s19
    %s31 = sphi 0, %s33
    %s34 = sphi 0, %s31
    %s35 = sphi 0, %s34
    %s51 = sphi 0, %s35
    %s57 = sphi 0, %s59
    %s60 = sphi 0, %s57
    %s61 = sphi 0, %s60
    %s77 = sphi 0, %s61
    %s83 = sphi 0, %s85
    %s86 = sphi 0, %s83
    %s87 = sphi 0, %s86
    %s103 = sphi 0, %s87
    %s111 = sphi 0, %s113
    %s114 = sphi 0, %s111
    %s115 = sphi 0, %s114
    %s131 = sphi 0, %s115
  $region4: #{squeeze_forward.22} parent=0 // loop_header_branch
    %12 = sbr.rel (%p10) target = $region8
  $region5: #{squeeze_forward.22} parent=0 // loop_body
    %s14 = ssub.s32 %s9, 1
    %s15 = ssub.s32 %s9, 2
    %s22 = sadd.s32 1, %s17
    %p23 = scmp.ge.s32.totalorder %s22, 1
    %s24 = scalar_select %p23, 0, %s22
    %s25 = sadd.s32 1, %s16
    %s26 = scalar_select %p23, %s25, %s16
    %p27 = scmp.ge.s32.totalorder %s26, 2
    %s28 = scalar_select %p27, 0, %s26
    %s29 = ssub.s32 %s16, %s28
    %p30 = scmp.eq.s32.totalorder %s29, 0
    %s32 = sadd.s32 %s31, 1
    %s33 = scalar_select %p30, %s31, %s32
    %p36 = pneg %p30
    %p37 = scmp.eq.s32.totalorder %s9, 1
    %p38 = por %p36, %p37
    %p39 = scmp.ne.s32.totalorder %s31, %s34
    %p40 = scmp.eq.s32.totalorder %s9, 0
    %p41 = por %p39, %p40
    %p42 = scmp.ne.s32.totalorder %s31, %s34
    %p43 = scmp.eq.s32.totalorder %s14, 1
    %p44 = por %p42, %p43
    %p45 = scmp.ne.s32.totalorder %s34, %s35
    %p46 = scmp.eq.s32.totalorder %s14, 0
    %p47 = por %p45, %p46
    %p48 = scmp.ne.s32.totalorder %s34, %s35
    %p49 = scmp.eq.s32.totalorder %s15, 1
    %p50 = por %p48, %p49
    %p52 = scmp.ne.s32.totalorder %s35, %s51
    %p53 = scmp.eq.s32.totalorder %s15, 0
    %p54 = por %p52, %p53
    %s55 = ssub.s32 %s17, %s24
    %p56 = scmp.eq.s32.totalorder %s55, 0
    %s58 = sadd.s32 %s57, 1
    %s59 = scalar_select %p56, %s57, %s58
    %p62 = pneg %p56
    %p63 = scmp.eq.s32.totalorder %s9, 1
    %p64 = por %p62, %p63
    %p65 = scmp.ne.s32.totalorder %s57, %s60
    %p66 = scmp.eq.s32.totalorder %s9, 0
    %p67 = por %p65, %p66
    %p68 = scmp.ne.s32.totalorder %s57, %s60
    %p69 = scmp.eq.s32.totalorder %s14, 1
    %p70 = por %p68, %p69
    %p71 = scmp.ne.s32.totalorder %s60, %s61
    %p72 = scmp.eq.s32.totalorder %s14, 0
    %p73 = por %p71, %p72
    %p74 = scmp.ne.s32.totalorder %s60, %s61
    %p75 = scmp.eq.s32.totalorder %s15, 1
    %p76 = por %p74, %p75
    %p78 = scmp.ne.s32.totalorder %s61, %s77
    %p79 = scmp.eq.s32.totalorder %s15, 0
    %p80 = por %p78, %p79
    %s81 = ssub.s32 %s17, %s24
    %p82 = scmp.eq.s32.totalorder %s81, 0
    %s84 = sadd.s32 %s83, 1
    %s85 = scalar_select %p82, %s83, %s84
    %p88 = pneg %p82
    %p89 = scmp.eq.s32.totalorder %s9, 1
    %p90 = por %p88, %p89
    %p91 = scmp.ne.s32.totalorder %s83, %s86
    %p92 = scmp.eq.s32.totalorder %s9, 0
    %p93 = por %p91, %p92
    %p94 = scmp.ne.s32.totalorder %s83, %s86
    %p95 = scmp.eq.s32.totalorder %s14, 1
    %p96 = por %p94, %p95
    %p97 = scmp.ne.s32.totalorder %s86, %s87
    %p98 = scmp.eq.s32.totalorder %s14, 0
    %p99 = por %p97, %p98
    %p100 = scmp.ne.s32.totalorder %s86, %s87
    %p101 = scmp.eq.s32.totalorder %s15, 1
    %p102 = por %p100, %p101
    %p104 = scmp.ne.s32.totalorder %s87, %s103
    %p105 = scmp.eq.s32.totalorder %s15, 0
    %p106 = por %p104, %p105
    %s107 = ssub.s32 %s16, %s28
    %s108 = ssub.s32 %s17, %s24
    %s109 = sor.u32 %s107, %s108
    %p110 = scmp.eq.s32.totalorder %s109, 0
    %s112 = sadd.s32 %s111, 1
    %s113 = scalar_select %p110, %s111, %s112
    %p116 = pneg %p110
    %p117 = scmp.eq.s32.totalorder %s9, 1
    %p118 = por %p116, %p117
    %p119 = scmp.ne.s32.totalorder %s111, %s114
    %p120 = scmp.eq.s32.totalorder %s9, 0
    %p121 = por %p119, %p120
    %p122 = scmp.ne.s32.totalorder %s111, %s114
    %p123 = scmp.eq.s32.totalorder %s14, 1
    %p124 = por %p122, %p123
    %p125 = scmp.ne.s32.totalorder %s114, %s115
    %p126 = scmp.eq.s32.totalorder %s14, 0
    %p127 = por %p125, %p126
    %p128 = scmp.ne.s32.totalorder %s114, %s115
    %p129 = scmp.eq.s32.totalorder %s15, 1
    %p130 = por %p128, %p129
    %p132 = scmp.ne.s32.totalorder %s115, %s131
    %p133 = scmp.eq.s32.totalorder %s15, 0
    %p134 = por %p132, %p133
    %p135 = scmp.le.s32.totalorder 1, %s9
    %p136 = scmp.lt.s32.totalorder %s9, 3
    %p137 = pnand %p135, %p136
    %p138 = pneg %p137
    // Predicated region
    $region9: #{squeeze_forward.22} parent=5 // pred_check
      _
    $region10: #{squeeze_forward.22} parent=5 // pred_check_branch
      %140 = sbr.rel (%p137) target = $region12
    $region11: #{squeeze_forward.22} parent=5 // pred_region
      %s141 = ssub.s32 %s9, 1
      // Predicated region
      $region13: #{squeeze_forward.22} parent=11 // pred_check
        %p142 = pneg %p73
      $region14: #{squeeze_forward.22} parent=11 // pred_check_branch
        %144 = sbr.rel (%p142) target = $region16
      $region15: #{squeeze_forward.22} parent=11 // pred_region
        %p145 = scmp.lt.s32.totalorder %s19, 0
        %s146 = scalar_select %p145, %s19, 0
        %s147 = smul.addr %s146, 4
        %s148 = scalar_lea.vmem %s1, %s147
      $region16: #{squeeze_forward.22} parent=11 // pred_fallthru
        _
      // Predicated region
      $region17: #{squeeze_forward.22} parent=11 // pred_check
        %p149 = pneg %p99
      $region18: #{squeeze_forward.22} parent=11 // pred_check_branch
        %151 = sbr.rel (%p149) target = $region20
      $region19: #{squeeze_forward.22} parent=11 // pred_region
        %p152 = scmp.lt.s32.totalorder %s19, 0
        %s153 = scalar_select %p152, %s19, 0
        %s154 = scalar_lea.vmem %s2, %s153
      $region20: #{squeeze_forward.22} parent=11 // pred_fallthru
        _
    $region12: #{squeeze_forward.22} parent=5 // pred_fallthru
      _
    %p155 = scmp.lt.s32.totalorder %s9, 2
    // Predicated region
    $region21: #{squeeze_forward.22} parent=5 // pred_check
      %p156 = pneg %p155
    $region22: #{squeeze_forward.22} parent=5 // pred_check_branch
      %158 = sbr.rel (%p156) target = $region24
    $region23: #{squeeze_forward.22} parent=5 // pred_region
      // Predicated region
      $region25: #{squeeze_forward.22} parent=23 // pred_check
        %p159 = pneg %p41
      $region26: #{squeeze_forward.22} parent=23 // pred_check_branch
        %161 = sbr.rel (%p159) target = $region28
      $region27: #{squeeze_forward.22} parent=23 // pred_region
        %s162 = smul.u32 16, %s16
        %p163 = scmp.lt.s32.totalorder %s162, 31
        %s164 = scalar_select %p163, %s162, 31
        %s165 = smul.addr %s164, 4
        %s166 = scalar_lea.vmem %s0, %s165
        %s167 = smul.u32 16, %s16
      $region28: #{squeeze_forward.22} parent=23 // pred_fallthru
        _
    $region24: #{squeeze_forward.22} parent=5 // pred_fallthru
      _
    %p168 = scmp.le.s32.totalorder 1, %s9
    %p169 = scmp.lt.s32.totalorder %s9, 3
    %p170 = pnand %p168, %p169
    %p171 = pneg %p170
    // Predicated region
    $region29: #{squeeze_forward.22} parent=5 // pred_check
      _
    $region30: #{squeeze_forward.22} parent=5 // pred_check_branch
      %173 = sbr.rel (%p170) target = $region32
    $region31: #{squeeze_forward.22} parent=5 // pred_region
      %s174 = ssub.s32 %s9, 1
      %s175 = smul.u32 16, %s18
      %p176 = scmp.lt.s32.totalorder %s175, 31
      %s177 = scalar_select %p176, %s175, 31
      %s178 = smul.addr %s177, 4
      %s179 = scalar_lea.vmem %s0, %s178
      %p180 = pneg %p47
      %p181 = pneg %p44
      %p182 = scmp.lt.s32.totalorder %s19, 0
      %s183 = scalar_select %p182, %s19, 0
      %s184 = smul.addr %s183, 4
      %s185 = scalar_lea.vmem %s1, %s184
      %p186 = pneg %p73
      %p187 = pneg %p70
      %p188 = scmp.lt.s32.totalorder %s19, 0
      %s189 = scalar_select %p188, %s19, 0
      %s190 = scalar_lea.vmem %s2, %s189
      %p191 = pneg %p99
      %p192 = pneg %p96
      %p193 = pneg %p127
      %p194 = pneg %p124
      %s195 = smul.u32 16, %s18
      %p196 = scmp.lt.s32.totalorder %s195, 31
      %s197 = scalar_select %p196, %s195, 31
      %p198 = scmp.lt.s32.totalorder %s19, 0
      %s199 = scalar_select %p198, %s19, 0
      %s200 = sadd.s32 %s199, %s197
      %s201 = smul.addr %s200, 8
      %s202 = scalar_lea.vmem %s3, %s201
      %s203 = smul.u32 16, %s18
      %p204 = scmp.lt.s32.totalorder %s203, 31
      %s205 = scalar_select %p204, %s203, 31
      %s206 = smul.addr %s205, 4
      %s207 = scalar_lea.vmem %s0, %s206
      %s208 = smul.u32 16, %s18
      %p209 = scmp.lt.s32.totalorder %s19, 0
      %s210 = scalar_select %p209, %s19, 0
      %s211 = smul.addr %s210, 4
      %s212 = scalar_lea.vmem %s1, %s211
      %p213 = scmp.lt.s32.totalorder %s19, 0
      %s214 = scalar_select %p213, %s19, 0
      %s215 = scalar_lea.vmem %s2, %s214
      %s216 = smul.u32 16, %s18
      %p217 = scmp.lt.s32.totalorder %s216, 31
      %s218 = scalar_select %p217, %s216, 31
      %p219 = scmp.lt.s32.totalorder %s19, 0
      %s220 = scalar_select %p219, %s19, 0
      %s221 = sadd.s32 %s220, %s218
      %s222 = smul.addr %s221, 8
      %s223 = scalar_lea.vmem %s3, %s222
      %s224 = smul.u32 16, %s18
      %v226 = vld [vmem:[%s207] sm:$0xf]
      %v227 = vld [vmem:[%s207 + $0x4] sm:$0xf]
      %v228 = vld [vmem:[%s207 + $0x8] sm:$0xf]
      %v229 = vld [vmem:[%s207 + $0xc] sm:$0xf]
      %v230 = vld [vmem:[%s207 + $0x10] sm:$0xf]
      %v231 = vld [vmem:[%s207 + $0x14] sm:$0xf]
      %v232 = vld [vmem:[%s207 + $0x18] sm:$0xf]
      %v233 = vld [vmem:[%s207 + $0x1c] sm:$0xf]
      %v234 = vld [vmem:[%s207 + $0x20] sm:$0xf]
      %v235 = vld [vmem:[%s207 + $0x24] sm:$0xf]
      %v236 = vld [vmem:[%s207 + $0x28] sm:$0xf]
      %v237 = vld [vmem:[%s207 + $0x2c] sm:$0xf]
      %v238 = vld [vmem:[%s207 + $0x30] sm:$0xf]
      %v239 = vld [vmem:[%s207 + $0x34] sm:$0xf]
      %v240 = vld [vmem:[%s207 + $0x38] sm:$0xf]
      %v241 = vld [vmem:[%s207 + $0x3c] sm:$0xf]
      %v242 = vld [vmem:[%s212] sm:$0xf]
      %v243 = vld [vmem:[%s212 + $0x4] sm:$0xf]
      %v244 = vld [vmem:[%s212 + $0x8] sm:$0xf]
      %v245 = vld [vmem:[%s212 + $0xc] sm:$0xf]
      %v246 = vld [vmem:[%s212 + $0x10] sm:$0xf]
      %v247 = vld [vmem:[%s212 + $0x14] sm:$0xf]
      %v248 = vld [vmem:[%s212 + $0x18] sm:$0xf]
      %v249 = vld [vmem:[%s212 + $0x1c] sm:$0xf]
      %v250 = vld [vmem:[%s212 + $0x20] sm:$0xf]
      %v251 = vld [vmem:[%s212 + $0x24] sm:$0xf]
      %v252 = vld [vmem:[%s212 + $0x28] sm:$0xf]
      %v253 = vld [vmem:[%s212 + $0x2c] sm:$0xf]
      %v254 = vld [vmem:[%s212 + $0x30] sm:$0xf]
      %v255 = vld [vmem:[%s212 + $0x34] sm:$0xf]
      %v256 = vld [vmem:[%s212 + $0x38] sm:$0xf]
      %v257 = vld [vmem:[%s212 + $0x3c] sm:$0xf]
      %v258 = vld [vmem:[%s215] sm:$0x1]
      %v260 = vlaneseq
      %v261 = vshrl.u32 %v260, 7
      %v262 = vsub.s32 0, %v261
      %v263 = vrot.slane %v258, %v262
      %v281 = vunpack.c.l.b16 %v226
      %v282 = vunpack.c.l.b16 %v227
      %v283 = vunpack.c.l.b16 %v228
      %v284 = vunpack.c.l.b16 %v229
      %v285 = vunpack.c.l.b16 %v230
      %v286 = vunpack.c.l.b16 %v231
      %v287 = vunpack.c.l.b16 %v232
      %v288 = vunpack.c.l.b16 %v233
      %v289 = vunpack.c.l.b16 %v234
      %v290 = vunpack.c.l.b16 %v235
      %v291 = vunpack.c.l.b16 %v236
      %v292 = vunpack.c.l.b16 %v237
      %v293 = vunpack.c.l.b16 %v238
      %v294 = vunpack.c.l.b16 %v239
      %v295 = vunpack.c.l.b16 %v240
      %v296 = vunpack.c.l.b16 %v241
      %v297 = vpack.c.b16 %v282, %v281
      %v298 = vpack.c.b16 %v284, %v283
      %v299 = vpack.c.b16 %v286, %v285
      %v300 = vpack.c.b16 %v288, %v287
      %v301 = vpack.c.b16 %v290, %v289
      %v302 = vpack.c.b16 %v292, %v291
      %v303 = vpack.c.b16 %v294, %v293
      %v304 = vpack.c.b16 %v296, %v295
      %v329 = vunpack.c.l.b16 %v242
      %v330 = vunpack.c.l.b16 %v243
      %v331 = vunpack.c.l.b16 %v244
      %v332 = vunpack.c.l.b16 %v245
      %v333 = vunpack.c.l.b16 %v246
      %v334 = vunpack.c.l.b16 %v247
      %v335 = vunpack.c.l.b16 %v248
      %v336 = vunpack.c.l.b16 %v249
      %v337 = vunpack.c.l.b16 %v250
      %v338 = vunpack.c.l.b16 %v251
      %v339 = vunpack.c.l.b16 %v252
      %v340 = vunpack.c.l.b16 %v253
      %v341 = vunpack.c.l.b16 %v254
      %v342 = vunpack.c.l.b16 %v255
      %v343 = vunpack.c.l.b16 %v256
      %v344 = vunpack.c.l.b16 %v257
      %v345 = vpack.c.b16 %v330, %v329
      %v346 = vpack.c.b16 %v332, %v331
      %v347 = vpack.c.b16 %v334, %v333
      %v348 = vpack.c.b16 %v336, %v335
      %v349 = vpack.c.b16 %v338, %v337
      %v350 = vpack.c.b16 %v340, %v339
      %v351 = vpack.c.b16 %v342, %v341
      %v352 = vpack.c.b16 %v344, %v343
      %361 = vmatprep.subr.bf16.mxu0 0
      %362 = vmatpush1.bf16.msra.mxu0 %v345
      %363 = vmatprep.subr.bf16.mxu0 0
      %364 = vmatpush1.bf16.msra.mxu0 %v346
      %365 = vmatprep.subr.bf16.mxu0 0
      %366 = vmatpush1.bf16.msra.mxu0 %v347
      %367 = vmatprep.subr.bf16.mxu0 0
      %368 = vmatpush1.bf16.msra.mxu0 %v348
      %369 = vmatprep.subr.bf16.mxu0 0
      %370 = vmatpush1.bf16.msra.mxu0 %v349
      %371 = vmatprep.subr.bf16.mxu0 0
      %372 = vmatpush1.bf16.msra.mxu0 %v350
      %373 = vmatprep.subr.bf16.mxu0 0
      %374 = vmatpush1.bf16.msra.mxu0 %v351
      %375 = vmatprep.subr.bf16.mxu0 0
      %376 = vmatpush1.bf16.msra.mxu0 %v352
      %377 = vmatprep.subr.bf16.mxu0 0
      %378 = vmatpush1.bf16.msra.mxu0 0
      %379 = vmatprep.subr.bf16.mxu0 0
      %380 = vmatpush1.bf16.msra.mxu0 0
      %381 = vmatprep.subr.bf16.mxu0 0
      %382 = vmatpush1.bf16.msra.mxu0 0
      %383 = vmatprep.subr.bf16.mxu0 0
      %384 = vmatpush1.bf16.msra.mxu0 0
      %385 = vmatprep.subr.bf16.mxu0 0
      %386 = vmatpush1.bf16.msra.mxu0 0
      %387 = vmatprep.subr.bf16.mxu0 0
      %388 = vmatpush1.bf16.msra.mxu0 0
      %389 = vmatprep.subr.bf16.mxu0 0
      %390 = vmatpush1.bf16.msra.mxu0 0
      %391 = vmatprep.subr.bf16.mxu0 0
      %392 = vmatpush1.bf16.msra.mxu0 0
      %393 = vmatprep.mubr.bf16.mxu0 0
      %394 = vmatmul.mubr.bf16.gmra.mrb[0].mxu0 %v297
      %v395 = vpop.f32.mrb[0].mxu0
      %v396 = vadd.f32 %v263, %v395
      %v397 = vpop.f32.mrb[0].mxu0
      %v398 = vpop.f32.mrb[0].mxu0
      %v399 = vadd.f32 %v263, %v398
      %v400 = vpop.f32.mrb[0].mxu0
      %401 = vmatprep.mubr.bf16.mxu0 0
      %402 = vmatmul.mubr.bf16.gmra.mrb[0].mxu0 %v298
      %v403 = vpop.f32.mrb[0].mxu0
      %v404 = vadd.f32 %v263, %v403
      %v405 = vpop.f32.mrb[0].mxu0
      %v406 = vpop.f32.mrb[0].mxu0
      %v407 = vadd.f32 %v263, %v406
      %v408 = vpop.f32.mrb[0].mxu0
      %409 = vmatprep.mubr.bf16.mxu0 0
      %410 = vmatmul.mubr.bf16.gmra.mrb[0].mxu0 %v299
      %v411 = vpop.f32.mrb[0].mxu0
      %v412 = vadd.f32 %v263, %v411
      %v413 = vpop.f32.mrb[0].mxu0
      %v414 = vpop.f32.mrb[0].mxu0
      %v415 = vadd.f32 %v263, %v414
      %v416 = vpop.f32.mrb[0].mxu0
      %417 = vmatprep.mubr.bf16.mxu0 0
      %418 = vmatmul.mubr.bf16.gmra.mrb[0].mxu0 %v300
      %v419 = vpop.f32.mrb[0].mxu0
      %v420 = vadd.f32 %v263, %v419
      %v421 = vpop.f32.mrb[0].mxu0
      %v422 = vpop.f32.mrb[0].mxu0
      %v423 = vadd.f32 %v263, %v422
      %v424 = vpop.f32.mrb[0].mxu0
      %425 = vmatprep.mubr.bf16.mxu0 0
      %426 = vmatmul.mubr.bf16.gmra.mrb[0].mxu0 %v301
      %v427 = vpop.f32.mrb[0].mxu0
      %v428 = vadd.f32 %v263, %v427
      %v429 = vpop.f32.mrb[0].mxu0
      %v430 = vpop.f32.mrb[0].mxu0
      %v431 = vadd.f32 %v263, %v430
      %v432 = vpop.f32.mrb[0].mxu0
      %433 = vmatprep.mubr.bf16.mxu0 0
      %434 = vmatmul.mubr.bf16.gmra.mrb[0].mxu0 %v302
      %v435 = vpop.f32.mrb[0].mxu0
      %v436 = vadd.f32 %v263, %v435
      %v437 = vpop.f32.mrb[0].mxu0
      %v438 = vpop.f32.mrb[0].mxu0
      %v439 = vadd.f32 %v263, %v438
      %v440 = vpop.f32.mrb[0].mxu0
      %441 = vmatprep.mubr.bf16.mxu0 0
      %442 = vmatmul.mubr.bf16.gmra.mrb[0].mxu0 %v303
      %v443 = vpop.f32.mrb[0].mxu0
      %v444 = vadd.f32 %v263, %v443
      %v445 = vpop.f32.mrb[0].mxu0
      %v446 = vpop.f32.mrb[0].mxu0
      %v447 = vadd.f32 %v263, %v446
      %v448 = vpop.f32.mrb[0].mxu0
      %449 = vmatprep.mubr.bf16.mxu0 0
      %450 = vmatmul.mubr.bf16.gmra.mrb[0].mxu0 %v304
      %v451 = vpop.f32.mrb[0].mxu0
      %v452 = vadd.f32 %v263, %v451
      %v453 = vpop.f32.mrb[0].mxu0
      %v454 = vpop.f32.mrb[0].mxu0
      %v455 = vadd.f32 %v263, %v454
      %v456 = vpop.f32.mrb[0].mxu0
      %457 = vdwg.mxu0
      %v458 = vmax.f32 %v396, 0.0
      %v459 = vmax.f32 %v399, 0.0
      %v460 = vmax.f32 %v404, 0.0
      %v461 = vmax.f32 %v407, 0.0
      %v462 = vmax.f32 %v412, 0.0
      %v463 = vmax.f32 %v415, 0.0
      %v464 = vmax.f32 %v420, 0.0
      %v465 = vmax.f32 %v423, 0.0
      %v466 = vmax.f32 %v428, 0.0
      %v467 = vmax.f32 %v431, 0.0
      %v468 = vmax.f32 %v436, 0.0
      %v469 = vmax.f32 %v439, 0.0
      %v470 = vmax.f32 %v444, 0.0
      %v471 = vmax.f32 %v447, 0.0
      %v472 = vmax.f32 %v452, 0.0
      %v473 = vmax.f32 %v455, 0.0
      %vm474 = vcmask 130048
      %475 = vst.msk [vmem:[%s223] sm:$0xff] %vm474, %v458
      %476 = vst.msk [vmem:[%s223 + $0x8] sm:$0xff] %vm474, %v459
      %477 = vst.msk [vmem:[%s223 + $0x10] sm:$0xff] %vm474, %v460
      %478 = vst.msk [vmem:[%s223 + $0x18] sm:$0xff] %vm474, %v461
      %479 = vst.msk [vmem:[%s223 + $0x20] sm:$0xff] %vm474, %v462
      %480 = vst.msk [vmem:[%s223 + $0x28] sm:$0xff] %vm474, %v463
      %481 = vst.msk [vmem:[%s223 + $0x30] sm:$0xff] %vm474, %v464
      %482 = vst.msk [vmem:[%s223 + $0x38] sm:$0xff] %vm474, %v465
      %483 = vst.msk [vmem:[%s223 + $0x40] sm:$0xff] %vm474, %v466
      %484 = vst.msk [vmem:[%s223 + $0x48] sm:$0xff] %vm474, %v467
      %485 = vst.msk [vmem:[%s223 + $0x50] sm:$0xff] %vm474, %v468
      %486 = vst.msk [vmem:[%s223 + $0x58] sm:$0xff] %vm474, %v469
      %487 = vst.msk [vmem:[%s223 + $0x60] sm:$0xff] %vm474, %v470
      %488 = vst.msk [vmem:[%s223 + $0x68] sm:$0xff] %vm474, %v471
      %489 = vst.msk [vmem:[%s223 + $0x70] sm:$0xff] %vm474, %v472
      %490 = vst.msk [vmem:[%s223 + $0x78] sm:$0xff] %vm474, %v473
      %s491 = smul.u32 16, %s18
      %p492 = scmp.lt.s32.totalorder %s491, 31
      %s493 = scalar_select %p492, %s491, 31
      %p494 = scmp.lt.s32.totalorder %s19, 0
      %s495 = scalar_select %p494, %s19, 0
      %s496 = sadd.s32 %s495, %s493
      %s497 = smul.addr %s496, 8
      %s498 = scalar_lea.vmem %s3, %s497
      // Predicated region
      $region33: #{squeeze_forward.22} parent=31 // pred_check
        %p499 = pneg %p124
      $region34: #{squeeze_forward.22} parent=31 // pred_check_branch
        %501 = sbr.rel (%p499) target = $region36
      $region35: #{squeeze_forward.22} parent=31 // pred_region
        %s502 = smul.u32 16, %s18
      $region36: #{squeeze_forward.22} parent=31 // pred_fallthru
        _
    $region32: #{squeeze_forward.22} parent=5 // pred_fallthru
      _
    %p503 = scmp.le.s32.totalorder 2, %s9
    // Predicated region
    $region37: #{squeeze_forward.22} parent=5 // pred_check
      %p504 = pneg %p503
    $region38: #{squeeze_forward.22} parent=5 // pred_check_branch
      %506 = sbr.rel (%p504) target = $region40
    $region39: #{squeeze_forward.22} parent=5 // pred_region
      %s507 = ssub.s32 %s9, 2
      // Predicated region
      $region41: #{squeeze_forward.22} parent=39 // pred_check
        %p508 = pneg %p130
      $region42: #{squeeze_forward.22} parent=39 // pred_check_branch
        %510 = sbr.rel (%p508) target = $region44
      $region43: #{squeeze_forward.22} parent=39 // pred_region
        %s511 = smul.u32 16, %s20
        %p512 = scmp.lt.s32.totalorder %s511, 31
        %s513 = scalar_select %p512, %s511, 31
        %p514 = scmp.lt.s32.totalorder %s21, 0
        %s515 = scalar_select %p514, %s21, 0
        %s516 = sadd.s32 %s515, %s513
        %s517 = smul.addr %s516, 8
        %s518 = scalar_lea.vmem %s3, %s517
      $region44: #{squeeze_forward.22} parent=39 // pred_fallthru
        _
    $region40: #{squeeze_forward.22} parent=5 // pred_fallthru
      _
  $region6: #{squeeze_forward.22} parent=0 // loop_footer
    %s13 = sadd.s32 1, %s9
  $region7: #{squeeze_forward.22} parent=0 // loop_footer_branch
    %8 = sbr.rel target = $region3
  $region8: #{squeeze_forward.22} parent=0 // loop_exit
    _

// kernel: squeeze_forward.24
$region0: #{squeeze_forward.24}
  #allocation0 [shape = 'u32[]', space=smem, size = 0x4, offset = 0x4, fixed_abs, tag = 'smem constant byte address 0x4 - core index']
  #allocation1 [shape = 'u32[144,128]{1,0:T(1,128)}', space=vmem, size = 0x12000, scoped, tag = 'internal scratch']
  %s0 = inlined_call_operand.vmem [shape: bf16[256,128], index: 0, kind: input, shape index: {}]
  %s1 = inlined_call_operand.vmem [shape: bf16[128,32], index: 1, kind: input, shape index: {}]
  %s2 = inlined_call_operand.vmem [shape: f32[1,32], index: 2, kind: input, shape index: {}]
  %s3 = inlined_call_operand.vmem [shape: f32[256,32], index: 3, kind: output, shape index: {}]
  %s4 = sld [smem:[#allocation0]]
  $region45: #{squeeze_forward.24} parent=0
    _
  %s6 = ssub.s32 1, %s4
  %s7 = scalar_select 0, %s6, %s4
  loop: start=0, step=1, limit=4
  $region2: #{squeeze_forward.24} parent=0 // loop_pre_header
    _
  $region3: #{squeeze_forward.24} parent=0 // loop_header
    %s9 = sphi 0, %s13
    %p10 = scmp.ge.s32.totalorder %s9, 4
    %s16 = sphi 0, %s28
    %s17 = sphi 0, %s24
    %s18 = sphi 0, %s16
    %s19 = sphi 0, %s17
    %s20 = sphi 0, %s18
    %s21 = sphi 0, %s19
    %s31 = sphi 0, %s33
    %s34 = sphi 0, %s31
    %s35 = sphi 0, %s34
    %s51 = sphi 0, %s35
    %s57 = sphi 0, %s59
    %s60 = sphi 0, %s57
    %s61 = sphi 0, %s60
    %s77 = sphi 0, %s61
    %s83 = sphi 0, %s85
    %s86 = sphi 0, %s83
    %s87 = sphi 0, %s86
    %s103 = sphi 0, %s87
    %s111 = sphi 0, %s113
    %s114 = sphi 0, %s111
    %s115 = sphi 0, %s114
    %s131 = sphi 0, %s115
  $region4: #{squeeze_forward.24} parent=0 // loop_header_branch
    %12 = sbr.rel (%p10) target = $region8
  $region5: #{squeeze_forward.24} parent=0 // loop_body
    %s14 = ssub.s32 %s9, 1
    %s15 = ssub.s32 %s9, 2
    %s22 = sadd.s32 1, %s17
    %p23 = scmp.ge.s32.totalorder %s22, 1
    %s24 = scalar_select %p23, 0, %s22
    %s25 = sadd.s32 1, %s16
    %s26 = scalar_select %p23, %s25, %s16
    %p27 = scmp.ge.s32.totalorder %s26, 2
    %s28 = scalar_select %p27, 0, %s26
    %s29 = ssub.s32 %s16, %s28
    %p30 = scmp.eq.s32.totalorder %s29, 0
    %s32 = sadd.s32 %s31, 1
    %s33 = scalar_select %p30, %s31, %s32
    %p36 = pneg %p30
    %p37 = scmp.eq.s32.totalorder %s9, 1
    %p38 = por %p36, %p37
    %p39 = scmp.ne.s32.totalorder %s31, %s34
    %p40 = scmp.eq.s32.totalorder %s9, 0
    %p41 = por %p39, %p40
    %p42 = scmp.ne.s32.totalorder %s31, %s34
    %p43 = scmp.eq.s32.totalorder %s14, 1
    %p44 = por %p42, %p43
    %p45 = scmp.ne.s32.totalorder %s34, %s35
    %p46 = scmp.eq.s32.totalorder %s14, 0
    %p47 = por %p45, %p46
    %p48 = scmp.ne.s32.totalorder %s34, %s35
    %p49 = scmp.eq.s32.totalorder %s15, 1
    %p50 = por %p48, %p49
    %p52 = scmp.ne.s32.totalorder %s35, %s51
    %p53 = scmp.eq.s32.totalorder %s15, 0
    %p54 = por %p52, %p53
    %s55 = ssub.s32 %s17, %s24
    %p56 = scmp.eq.s32.totalorder %s55, 0
    %s58 = sadd.s32 %s57, 1
    %s59 = scalar_select %p56, %s57, %s58
    %p62 = pneg %p56
    %p63 = scmp.eq.s32.totalorder %s9, 1
    %p64 = por %p62, %p63
    %p65 = scmp.ne.s32.totalorder %s57, %s60
    %p66 = scmp.eq.s32.totalorder %s9, 0
    %p67 = por %p65, %p66
    %p68 = scmp.ne.s32.totalorder %s57, %s60
    %p69 = scmp.eq.s32.totalorder %s14, 1
    %p70 = por %p68, %p69
    %p71 = scmp.ne.s32.totalorder %s60, %s61
    %p72 = scmp.eq.s32.totalorder %s14, 0
    %p73 = por %p71, %p72
    %p74 = scmp.ne.s32.totalorder %s60, %s61
    %p75 = scmp.eq.s32.totalorder %s15, 1
    %p76 = por %p74, %p75
    %p78 = scmp.ne.s32.totalorder %s61, %s77
    %p79 = scmp.eq.s32.totalorder %s15, 0
    %p80 = por %p78, %p79
    %s81 = ssub.s32 %s17, %s24
    %p82 = scmp.eq.s32.totalorder %s81, 0
    %s84 = sadd.s32 %s83, 1
    %s85 = scalar_select %p82, %s83, %s84
    %p88 = pneg %p82
    %p89 = scmp.eq.s32.totalorder %s9, 1
    %p90 = por %p88, %p89
    %p91 = scmp.ne.s32.totalorder %s83, %s86
    %p92 = scmp.eq.s32.totalorder %s9, 0
    %p93 = por %p91, %p92
    %p94 = scmp.ne.s32.totalorder %s83, %s86
    %p95 = scmp.eq.s32.totalorder %s14, 1
    %p96 = por %p94, %p95
    %p97 = scmp.ne.s32.totalorder %s86, %s87
    %p98 = scmp.eq.s32.totalorder %s14, 0
    %p99 = por %p97, %p98
    %p100 = scmp.ne.s32.totalorder %s86, %s87
    %p101 = scmp.eq.s32.totalorder %s15, 1
    %p102 = por %p100, %p101
    %p104 = scmp.ne.s32.totalorder %s87, %s103
    %p105 = scmp.eq.s32.totalorder %s15, 0
    %p106 = por %p104, %p105
    %s107 = ssub.s32 %s16, %s28
    %s108 = ssub.s32 %s17, %s24
    %s109 = sor.u32 %s107, %s108
    %p110 = scmp.eq.s32.totalorder %s109, 0
    %s112 = sadd.s32 %s111, 1
    %s113 = scalar_select %p110, %s111, %s112
    %p116 = pneg %p110
    %p117 = scmp.eq.s32.totalorder %s9, 1
    %p118 = por %p116, %p117
    %p119 = scmp.ne.s32.totalorder %s111, %s114
    %p120 = scmp.eq.s32.totalorder %s9, 0
    %p121 = por %p119, %p120
    %p122 = scmp.ne.s32.totalorder %s111, %s114
    %p123 = scmp.eq.s32.totalorder %s14, 1
    %p124 = por %p122, %p123
    %p125 = scmp.ne.s32.totalorder %s114, %s115
    %p126 = scmp.eq.s32.totalorder %s14, 0
    %p127 = por %p125, %p126
    %p128 = scmp.ne.s32.totalorder %s114, %s115
    %p129 = scmp.eq.s32.totalorder %s15, 1
    %p130 = por %p128, %p129
    %p132 = scmp.ne.s32.totalorder %s115, %s131
    %p133 = scmp.eq.s32.totalorder %s15, 0
    %p134 = por %p132, %p133
    %p135 = scmp.le.s32.totalorder 1, %s9
    %p136 = scmp.lt.s32.totalorder %s9, 3
    %p137 = pnand %p135, %p136
    %p138 = pneg %p137
    // Predicated region
    $region9: #{squeeze_forward.24} parent=5 // pred_check
      _
    $region10: #{squeeze_forward.24} parent=5 // pred_check_branch
      %140 = sbr.rel (%p137) target = $region12
    $region11: #{squeeze_forward.24} parent=5 // pred_region
      %s141 = ssub.s32 %s9, 1
      // Predicated region
      $region13: #{squeeze_forward.24} parent=11 // pred_check
        %p142 = pneg %p73
      $region14: #{squeeze_forward.24} parent=11 // pred_check_branch
        %144 = sbr.rel (%p142) target = $region16
      $region15: #{squeeze_forward.24} parent=11 // pred_region
        %p145 = scmp.lt.s32.totalorder %s19, 0
        %s146 = scalar_select %p145, %s19, 0
        %s147 = smul.addr %s146, 4
        %s148 = scalar_lea.vmem %s1, %s147
      $region16: #{squeeze_forward.24} parent=11 // pred_fallthru
        _
      // Predicated region
      $region17: #{squeeze_forward.24} parent=11 // pred_check
        %p149 = pneg %p99
      $region18: #{squeeze_forward.24} parent=11 // pred_check_branch
        %151 = sbr.rel (%p149) target = $region20
      $region19: #{squeeze_forward.24} parent=11 // pred_region
        %p152 = scmp.lt.s32.totalorder %s19, 0
        %s153 = scalar_select %p152, %s19, 0
        %s154 = scalar_lea.vmem %s2, %s153
      $region20: #{squeeze_forward.24} parent=11 // pred_fallthru
        _
    $region12: #{squeeze_forward.24} parent=5 // pred_fallthru
      _
    %p155 = scmp.lt.s32.totalorder %s9, 2
    // Predicated region
    $region21: #{squeeze_forward.24} parent=5 // pred_check
      %p156 = pneg %p155
    $region22: #{squeeze_forward.24} parent=5 // pred_check_branch
      %158 = sbr.rel (%p156) target = $region24
    $region23: #{squeeze_forward.24} parent=5 // pred_region
      // Predicated region
      $region25: #{squeeze_forward.24} parent=23 // pred_check
        %p159 = pneg %p41
      $region26: #{squeeze_forward.24} parent=23 // pred_check_branch
        %161 = sbr.rel (%p159) target = $region28
      $region27: #{squeeze_forward.24} parent=23 // pred_region
        %s162 = smul.u32 16, %s16
        %p163 = scmp.lt.s32.totalorder %s162, 31
        %s164 = scalar_select %p163, %s162, 31
        %s165 = smul.addr %s164, 4
        %s166 = scalar_lea.vmem %s0, %s165
        %s167 = smul.u32 16, %s16
      $region28: #{squeeze_forward.24} parent=23 // pred_fallthru
        _
    $region24: #{squeeze_forward.24} parent=5 // pred_fallthru
      _
    %p168 = scmp.le.s32.totalorder 1, %s9
    %p169 = scmp.lt.s32.totalorder %s9, 3
    %p170 = pnand %p168, %p169
    %p171 = pneg %p170
    // Predicated region
    $region29: #{squeeze_forward.24} parent=5 // pred_check
      _
    $region30: #{squeeze_forward.24} parent=5 // pred_check_branch
      %173 = sbr.rel (%p170) target = $region32
    $region31: #{squeeze_forward.24} parent=5 // pred_region
      %s174 = ssub.s32 %s9, 1
      %s175 = smul.u32 16, %s18
      %p176 = scmp.lt.s32.totalorder %s175, 31
      %s177 = scalar_select %p176, %s175, 31
      %s178 = smul.addr %s177, 4
      %s179 = scalar_lea.vmem %s0, %s178
      %p180 = pneg %p47
      %p181 = pneg %p44
      %p182 = scmp.lt.s32.totalorder %s19, 0
      %s183 = scalar_select %p182, %s19, 0
      %s184 = smul.addr %s183, 4
      %s185 = scalar_lea.vmem %s1, %s184
      %p186 = pneg %p73
      %p187 = pneg %p70
      %p188 = scmp.lt.s32.totalorder %s19, 0
      %s189 = scalar_select %p188, %s19, 0
      %s190 = scalar_lea.vmem %s2, %s189
      %p191 = pneg %p99
      %p192 = pneg %p96
      %p193 = pneg %p127
      %p194 = pneg %p124
      %s195 = smul.u32 16, %s18
      %p196 = scmp.lt.s32.totalorder %s195, 31
      %s197 = scalar_select %p196, %s195, 31
      %p198 = scmp.lt.s32.totalorder %s19, 0
      %s199 = scalar_select %p198, %s19, 0
      %s200 = sadd.s32 %s199, %s197
      %s201 = smul.addr %s200, 8
      %s202 = scalar_lea.vmem %s3, %s201
      %s203 = smul.u32 16, %s18
      %p204 = scmp.lt.s32.totalorder %s203, 31
      %s205 = scalar_select %p204, %s203, 31
      %s206 = smul.addr %s205, 4
      %s207 = scalar_lea.vmem %s0, %s206
      %s208 = smul.u32 16, %s18
      %p209 = scmp.lt.s32.totalorder %s19, 0
      %s210 = scalar_select %p209, %s19, 0
      %s211 = smul.addr %s210, 4
      %s212 = scalar_lea.vmem %s1, %s211
      %p213 = scmp.lt.s32.totalorder %s19, 0
      %s214 = scalar_select %p213, %s19, 0
      %s215 = scalar_lea.vmem %s2, %s214
      %s216 = smul.u32 16, %s18
      %p217 = scmp.lt.s32.totalorder %s216, 31
      %s218 = scalar_select %p217, %s216, 31
      %p219 = scmp.lt.s32.totalorder %s19, 0
      %s220 = scalar_select %p219, %s19, 0
      %s221 = sadd.s32 %s220, %s218
      %s222 = smul.addr %s221, 8
      %s223 = scalar_lea.vmem %s3, %s222
      %s224 = smul.u32 16, %s18
      %v226 = vld [vmem:[%s207] sm:$0xf]
      %v227 = vld [vmem:[%s207 + $0x4] sm:$0xf]
      %v228 = vld [vmem:[%s207 + $0x8] sm:$0xf]
      %v229 = vld [vmem:[%s207 + $0xc] sm:$0xf]
      %v230 = vld [vmem:[%s207 + $0x10] sm:$0xf]
      %v231 = vld [vmem:[%s207 + $0x14] sm:$0xf]
      %v232 = vld [vmem:[%s207 + $0x18] sm:$0xf]
      %v233 = vld [vmem:[%s207 + $0x1c] sm:$0xf]
      %v234 = vld [vmem:[%s207 + $0x20] sm:$0xf]
      %v235 = vld [vmem:[%s207 + $0x24] sm:$0xf]
      %v236 = vld [vmem:[%s207 + $0x28] sm:$0xf]
      %v237 = vld [vmem:[%s207 + $0x2c] sm:$0xf]
      %v238 = vld [vmem:[%s207 + $0x30] sm:$0xf]
      %v239 = vld [vmem:[%s207 + $0x34] sm:$0xf]
      %v240 = vld [vmem:[%s207 + $0x38] sm:$0xf]
      %v241 = vld [vmem:[%s207 + $0x3c] sm:$0xf]
      %v242 = vld [vmem:[%s212] sm:$0xf]
      %v243 = vld [vmem:[%s212 + $0x4] sm:$0xf]
      %v244 = vld [vmem:[%s212 + $0x8] sm:$0xf]
      %v245 = vld [vmem:[%s212 + $0xc] sm:$0xf]
      %v246 = vld [vmem:[%s212 + $0x10] sm:$0xf]
      %v247 = vld [vmem:[%s212 + $0x14] sm:$0xf]
      %v248 = vld [vmem:[%s212 + $0x18] sm:$0xf]
      %v249 = vld [vmem:[%s212 + $0x1c] sm:$0xf]
      %v250 = vld [vmem:[%s212 + $0x20] sm:$0xf]
      %v251 = vld [vmem:[%s212 + $0x24] sm:$0xf]
      %v252 = vld [vmem:[%s212 + $0x28] sm:$0xf]
      %v253 = vld [vmem:[%s212 + $0x2c] sm:$0xf]
      %v254 = vld [vmem:[%s212 + $0x30] sm:$0xf]
      %v255 = vld [vmem:[%s212 + $0x34] sm:$0xf]
      %v256 = vld [vmem:[%s212 + $0x38] sm:$0xf]
      %v257 = vld [vmem:[%s212 + $0x3c] sm:$0xf]
      %v258 = vld [vmem:[%s215] sm:$0x1]
      %v260 = vlaneseq
      %v261 = vshrl.u32 %v260, 7
      %v262 = vsub.s32 0, %v261
      %v263 = vrot.slane %v258, %v262
      %v281 = vunpack.c.l.b16 %v226
      %v282 = vunpack.c.l.b16 %v227
      %v283 = vunpack.c.l.b16 %v228
      %v284 = vunpack.c.l.b16 %v229
      %v285 = vunpack.c.l.b16 %v230
      %v286 = vunpack.c.l.b16 %v231
      %v287 = vunpack.c.l.b16 %v232
      %v288 = vunpack.c.l.b16 %v233
      %v289 = vunpack.c.l.b16 %v234
      %v290 = vunpack.c.l.b16 %v235
      %v291 = vunpack.c.l.b16 %v236
      %v292 = vunpack.c.l.b16 %v237
      %v293 = vunpack.c.l.b16 %v238
      %v294 = vunpack.c.l.b16 %v239
      %v295 = vunpack.c.l.b16 %v240
      %v296 = vunpack.c.l.b16 %v241
      %v297 = vpack.c.b16 %v282, %v281
      %v298 = vpack.c.b16 %v284, %v283
      %v299 = vpack.c.b16 %v286, %v285
      %v300 = vpack.c.b16 %v288, %v287
      %v301 = vpack.c.b16 %v290, %v289
      %v302 = vpack.c.b16 %v292, %v291
      %v303 = vpack.c.b16 %v294, %v293
      %v304 = vpack.c.b16 %v296, %v295
      %v329 = vunpack.c.l.b16 %v242
      %v330 = vunpack.c.l.b16 %v243
      %v331 = vunpack.c.l.b16 %v244
      %v332 = vunpack.c.l.b16 %v245
      %v333 = vunpack.c.l.b16 %v246
      %v334 = vunpack.c.l.b16 %v247
      %v335 = vunpack.c.l.b16 %v248
      %v336 = vunpack.c.l.b16 %v249
      %v337 = vunpack.c.l.b16 %v250
      %v338 = vunpack.c.l.b16 %v251
      %v339 = vunpack.c.l.b16 %v252
      %v340 = vunpack.c.l.b16 %v253
      %v341 = vunpack.c.l.b16 %v254
      %v342 = vunpack.c.l.b16 %v255
      %v343 = vunpack.c.l.b16 %v256
      %v344 = vunpack.c.l.b16 %v257
      %v345 = vpack.c.b16 %v330, %v329
      %v346 = vpack.c.b16 %v332, %v331
      %v347 = vpack.c.b16 %v334, %v333
      %v348 = vpack.c.b16 %v336, %v335
      %v349 = vpack.c.b16 %v338, %v337
      %v350 = vpack.c.b16 %v340, %v339
      %v351 = vpack.c.b16 %v342, %v341
      %v352 = vpack.c.b16 %v344, %v343
      %361 = vmatprep.subr.bf16.mxu0 0
      %362 = vmatpush1.bf16.msra.mxu0 %v345
      %363 = vmatprep.subr.bf16.mxu0 0
      %364 = vmatpush1.bf16.msra.mxu0 %v346
      %365 = vmatprep.subr.bf16.mxu0 0
      %366 = vmatpush1.bf16.msra.mxu0 %v347
      %367 = vmatprep.subr.bf16.mxu0 0
      %368 = vmatpush1.bf16.msra.mxu0 %v348
      %369 = vmatprep.subr.bf16.mxu0 0
      %370 = vmatpush1.bf16.msra.mxu0 %v349
      %371 = vmatprep.subr.bf16.mxu0 0
      %372 = vmatpush1.bf16.msra.mxu0 %v350
      %373 = vmatprep.subr.bf16.mxu0 0
      %374 = vmatpush1.bf16.msra.mxu0 %v351
      %375 = vmatprep.subr.bf16.mxu0 0
      %376 = vmatpush1.bf16.msra.mxu0 %v352
      %377 = vmatprep.subr.bf16.mxu0 0
      %378 = vmatpush1.bf16.msra.mxu0 0
      %379 = vmatprep.subr.bf16.mxu0 0
      %380 = vmatpush1.bf16.msra.mxu0 0
      %381 = vmatprep.subr.bf16.mxu0 0
      %382 = vmatpush1.bf16.msra.mxu0 0
      %383 = vmatprep.subr.bf16.mxu0 0
      %384 = vmatpush1.bf16.msra.mxu0 0
      %385 = vmatprep.subr.bf16.mxu0 0
      %386 = vmatpush1.bf16.msra.mxu0 0
      %387 = vmatprep.subr.bf16.mxu0 0
      %388 = vmatpush1.bf16.msra.mxu0 0
      %389 = vmatprep.subr.bf16.mxu0 0
      %390 = vmatpush1.bf16.msra.mxu0 0
      %391 = vmatprep.subr.bf16.mxu0 0
      %392 = vmatpush1.bf16.msra.mxu0 0
      %393 = vmatprep.mubr.bf16.mxu0 0
      %394 = vmatmul.mubr.bf16.gmra.mrb[0].mxu0 %v297
      %v395 = vpop.f32.mrb[0].mxu0
      %v396 = vadd.f32 %v263, %v395
      %v397 = vpop.f32.mrb[0].mxu0
      %v398 = vpop.f32.mrb[0].mxu0
      %v399 = vadd.f32 %v263, %v398
      %v400 = vpop.f32.mrb[0].mxu0
      %401 = vmatprep.mubr.bf16.mxu0 0
      %402 = vmatmul.mubr.bf16.gmra.mrb[0].mxu0 %v298
      %v403 = vpop.f32.mrb[0].mxu0
      %v404 = vadd.f32 %v263, %v403
      %v405 = vpop.f32.mrb[0].mxu0
      %v406 = vpop.f32.mrb[0].mxu0
      %v407 = vadd.f32 %v263, %v406
      %v408 = vpop.f32.mrb[0].mxu0
      %409 = vmatprep.mubr.bf16.mxu0 0
      %410 = vmatmul.mubr.bf16.gmra.mrb[0].mxu0 %v299
      %v411 = vpop.f32.mrb[0].mxu0
      %v412 = vadd.f32 %v263, %v411
      %v413 = vpop.f32.mrb[0].mxu0
      %v414 = vpop.f32.mrb[0].mxu0
      %v415 = vadd.f32 %v263, %v414
      %v416 = vpop.f32.mrb[0].mxu0
      %417 = vmatprep.mubr.bf16.mxu0 0
      %418 = vmatmul.mubr.bf16.gmra.mrb[0].mxu0 %v300
      %v419 = vpop.f32.mrb[0].mxu0
      %v420 = vadd.f32 %v263, %v419
      %v421 = vpop.f32.mrb[0].mxu0
      %v422 = vpop.f32.mrb[0].mxu0
      %v423 = vadd.f32 %v263, %v422
      %v424 = vpop.f32.mrb[0].mxu0
      %425 = vmatprep.mubr.bf16.mxu0 0
      %426 = vmatmul.mubr.bf16.gmra.mrb[0].mxu0 %v301
      %v427 = vpop.f32.mrb[0].mxu0
      %v428 = vadd.f32 %v263, %v427
      %v429 = vpop.f32.mrb[0].mxu0
      %v430 = vpop.f32.mrb[0].mxu0
      %v431 = vadd.f32 %v263, %v430
      %v432 = vpop.f32.mrb[0].mxu0
      %433 = vmatprep.mubr.bf16.mxu0 0
      %434 = vmatmul.mubr.bf16.gmra.mrb[0].mxu0 %v302
      %v435 = vpop.f32.mrb[0].mxu0
      %v436 = vadd.f32 %v263, %v435
      %v437 = vpop.f32.mrb[0].mxu0
      %v438 = vpop.f32.mrb[0].mxu0
      %v439 = vadd.f32 %v263, %v438
      %v440 = vpop.f32.mrb[0].mxu0
      %441 = vmatprep.mubr.bf16.mxu0 0
      %442 = vmatmul.mubr.bf16.gmra.mrb[0].mxu0 %v303
      %v443 = vpop.f32.mrb[0].mxu0
      %v444 = vadd.f32 %v263, %v443
      %v445 = vpop.f32.mrb[0].mxu0
      %v446 = vpop.f32.mrb[0].mxu0
      %v447 = vadd.f32 %v263, %v446
      %v448 = vpop.f32.mrb[0].mxu0
      %449 = vmatprep.mubr.bf16.mxu0 0
      %450 = vmatmul.mubr.bf16.gmra.mrb[0].mxu0 %v304
      %v451 = vpop.f32.mrb[0].mxu0
      %v452 = vadd.f32 %v263, %v451
      %v453 = vpop.f32.mrb[0].mxu0
      %v454 = vpop.f32.mrb[0].mxu0
      %v455 = vadd.f32 %v263, %v454
      %v456 = vpop.f32.mrb[0].mxu0
      %457 = vdwg.mxu0
      %v458 = vmax.f32 %v396, 0.0
      %v459 = vmax.f32 %v399, 0.0
      %v460 = vmax.f32 %v404, 0.0
      %v461 = vmax.f32 %v407, 0.0
      %v462 = vmax.f32 %v412, 0.0
      %v463 = vmax.f32 %v415, 0.0
      %v464 = vmax.f32 %v420, 0.0
      %v465 = vmax.f32 %v423, 0.0
      %v466 = vmax.f32 %v428, 0.0
      %v467 = vmax.f32 %v431, 0.0
      %v468 = vmax.f32 %v436, 0.0
      %v469 = vmax.f32 %v439, 0.0
      %v470 = vmax.f32 %v444, 0.0
      %v471 = vmax.f32 %v447, 0.0
      %v472 = vmax.f32 %v452, 0.0
      %v473 = vmax.f32 %v455, 0.0
      %vm474 = vcmask 261120
      %475 = vst.msk [vmem:[%s223] sm:$0xff] %vm474, %v458
      %476 = vst.msk [vmem:[%s223 + $0x8] sm:$0xff] %vm474, %v459
      %477 = vst.msk [vmem:[%s223 + $0x10] sm:$0xff] %vm474, %v460
      %478 = vst.msk [vmem:[%s223 + $0x18] sm:$0xff] %vm474, %v461
      %479 = vst.msk [vmem:[%s223 + $0x20] sm:$0xff] %vm474, %v462
      %480 = vst.msk [vmem:[%s223 + $0x28] sm:$0xff] %vm474, %v463
      %481 = vst.msk [vmem:[%s223 + $0x30] sm:$0xff] %vm474, %v464
      %482 = vst.msk [vmem:[%s223 + $0x38] sm:$0xff] %vm474, %v465
      %483 = vst.msk [vmem:[%s223 + $0x40] sm:$0xff] %vm474, %v466
      %484 = vst.msk [vmem:[%s223 + $0x48] sm:$0xff] %vm474, %v467
      %485 = vst.msk [vmem:[%s223 + $0x50] sm:$0xff] %vm474, %v468
      %486 = vst.msk [vmem:[%s223 + $0x58] sm:$0xff] %vm474, %v469
      %487 = vst.msk [vmem:[%s223 + $0x60] sm:$0xff] %vm474, %v470
      %488 = vst.msk [vmem:[%s223 + $0x68] sm:$0xff] %vm474, %v471
      %489 = vst.msk [vmem:[%s223 + $0x70] sm:$0xff] %vm474, %v472
      %490 = vst.msk [vmem:[%s223 + $0x78] sm:$0xff] %vm474, %v473
      %s491 = smul.u32 16, %s18
      %p492 = scmp.lt.s32.totalorder %s491, 31
      %s493 = scalar_select %p492, %s491, 31
      %p494 = scmp.lt.s32.totalorder %s19, 0
      %s495 = scalar_select %p494, %s19, 0
      %s496 = sadd.s32 %s495, %s493
      %s497 = smul.addr %s496, 8
      %s498 = scalar_lea.vmem %s3, %s497
      // Predicated region
      $region33: #{squeeze_forward.24} parent=31 // pred_check
        %p499 = pneg %p124
      $region34: #{squeeze_forward.24} parent=31 // pred_check_branch
        %501 = sbr.rel (%p499) target = $region36
      $region35: #{squeeze_forward.24} parent=31 // pred_region
        %s502 = smul.u32 16, %s18
      $region36: #{squeeze_forward.24} parent=31 // pred_fallthru
        _
    $region32: #{squeeze_forward.24} parent=5 // pred_fallthru
      _
    %p503 = scmp.le.s32.totalorder 2, %s9
    // Predicated region
    $region37: #{squeeze_forward.24} parent=5 // pred_check
      %p504 = pneg %p503
    $region38: #{squeeze_forward.24} parent=5 // pred_check_branch
      %506 = sbr.rel (%p504) target = $region40
    $region39: #{squeeze_forward.24} parent=5 // pred_region
      %s507 = ssub.s32 %s9, 2
      // Predicated region
      $region41: #{squeeze_forward.24} parent=39 // pred_check
        %p508 = pneg %p130
      $region42: #{squeeze_forward.24} parent=39 // pred_check_branch
        %510 = sbr.rel (%p508) target = $region44
      $region43: #{squeeze_forward.24} parent=39 // pred_region
        %s511 = smul.u32 16, %s20
        %p512 = scmp.lt.s32.totalorder %s511, 31
        %s513 = scalar_select %p512, %s511, 31
        %p514 = scmp.lt.s32.totalorder %s21, 0
        %s515 = scalar_select %p514, %s21, 0
        %s516 = sadd.s32 %s515, %s513
        %s517 = smul.addr %s516, 8
        %s518 = scalar_lea.vmem %s3, %s517
      $region44: #{squeeze_forward.24} parent=39 // pred_fallthru
        _
    $region40: #{squeeze_forward.24} parent=5 // pred_fallthru
      _
  $region6: #{squeeze_forward.24} parent=0 // loop_footer
    %s13 = sadd.s32 1, %s9
  $region7: #{squeeze_forward.24} parent=0 // loop_footer_branch
    %8 = sbr.rel target = $region3
  $region8: #{squeeze_forward.24} parent=0 // loop_exit
    _

// kernel: squeeze_forward.25
$region0: #{squeeze_forward.25}
  #allocation0 [shape = 'u32[]', space=smem, size = 0x4, offset = 0x4, fixed_abs, tag = 'smem constant byte address 0x4 - core index']
  #allocation1 [shape = 'u32[144,128]{1,0:T(1,128)}', space=vmem, size = 0x12000, scoped, tag = 'internal scratch']
  %s0 = inlined_call_operand.vmem [shape: bf16[256,288], index: 0, kind: input, shape index: {}]
  %s1 = inlined_call_operand.vmem [shape: bf16[288,256], index: 1, kind: input, shape index: {}]
  %s2 = inlined_call_operand.vmem [shape: f32[1,256], index: 2, kind: input, shape index: {}]
  %s3 = inlined_call_operand.vmem [shape: f32[256,256], index: 3, kind: output, shape index: {}]
  %s4 = sld [smem:[#allocation0]]
  $region120: #{squeeze_forward.25} parent=0
    _
  %s6 = ssub.s32 1, %s4
  %s7 = scalar_select 0, %s6, %s4
  $region1: #{squeeze_forward.25} parent=0
    #allocation2 [shape = 'u8[147456]{0}', space=vmem, size = 0x24000, scoped, tag = 'input window, operand 1']
    #allocation3 [shape = 'u8[131072]{0}', space=vmem, size = 0x20000, scoped, tag = 'output window, operand 0']
    loop: start=0, step=1, limit=6
    $region2: #{squeeze_forward.25} parent=1 // loop_pre_header
      _
    $region3: #{squeeze_forward.25} parent=1 // loop_header
      %s9 = sphi 0, %s13
      %p10 = scmp.ge.s32.totalorder %s9, 6
      %s16 = sphi 0, %s28
      %s17 = sphi 0, %s24
      %s18 = sphi 0, %s16
      %s19 = sphi 0, %s17
      %s20 = sphi 0, %s18
      %s21 = sphi 0, %s19
      %s31 = sphi 0, %s33
      %s34 = sphi 0, %s31
      %s35 = sphi 0, %s34
      %s51 = sphi 0, %s35
      %s57 = sphi 0, %s59
      %s60 = sphi 0, %s57
      %s61 = sphi 0, %s60
      %s77 = sphi 0, %s61
      %s83 = sphi 0, %s85
      %s86 = sphi 0, %s83
      %s87 = sphi 0, %s86
      %s103 = sphi 0, %s87
      %s111 = sphi 0, %s113
      %s114 = sphi 0, %s111
      %s115 = sphi 0, %s114
      %s131 = sphi 0, %s115
    $region4: #{squeeze_forward.25} parent=1 // loop_header_branch
      %12 = sbr.rel (%p10) target = $region8
    $region5: #{squeeze_forward.25} parent=1 // loop_body
      %s14 = ssub.s32 %s9, 1
      %s15 = ssub.s32 %s9, 2
      %s22 = sadd.s32 1, %s17
      %p23 = scmp.ge.s32.totalorder %s22, 2
      %s24 = scalar_select %p23, 0, %s22
      %s25 = sadd.s32 1, %s16
      %s26 = scalar_select %p23, %s25, %s16
      %p27 = scmp.ge.s32.totalorder %s26, 2
      %s28 = scalar_select %p27, 0, %s26
      %s29 = ssub.s32 %s16, %s28
      %p30 = scmp.eq.s32.totalorder %s29, 0
      %s32 = sadd.s32 %s31, 1
      %s33 = scalar_select %p30, %s31, %s32
      %p36 = pneg %p30
      %p37 = scmp.eq.s32.totalorder %s9, 3
      %p38 = por %p36, %p37
      %p39 = scmp.ne.s32.totalorder %s31, %s34
      %p40 = scmp.eq.s32.totalorder %s9, 0
      %p41 = por %p39, %p40
      %p42 = scmp.ne.s32.totalorder %s31, %s34
      %p43 = scmp.eq.s32.totalorder %s14, 3
      %p44 = por %p42, %p43
      %p45 = scmp.ne.s32.totalorder %s34, %s35
      %p46 = scmp.eq.s32.totalorder %s14, 0
      %p47 = por %p45, %p46
      %p48 = scmp.ne.s32.totalorder %s34, %s35
      %p49 = scmp.eq.s32.totalorder %s15, 3
      %p50 = por %p48, %p49
      %p52 = scmp.ne.s32.totalorder %s35, %s51
      %p53 = scmp.eq.s32.totalorder %s15, 0
      %p54 = por %p52, %p53
      %s55 = ssub.s32 %s17, %s24
      %p56 = scmp.eq.s32.totalorder %s55, 0
      %s58 = sadd.s32 %s57, 1
      %s59 = scalar_select %p56, %s57, %s58
      %p62 = pneg %p56
      %p63 = scmp.eq.s32.totalorder %s9, 3
      %p64 = por %p62, %p63
      %p65 = scmp.ne.s32.totalorder %s57, %s60
      %p66 = scmp.eq.s32.totalorder %s9, 0
      %p67 = por %p65, %p66
      %p68 = scmp.ne.s32.totalorder %s57, %s60
      %p69 = scmp.eq.s32.totalorder %s14, 3
      %p70 = por %p68, %p69
      %p71 = scmp.ne.s32.totalorder %s60, %s61
      %p72 = scmp.eq.s32.totalorder %s14, 0
      %p73 = por %p71, %p72
      %p74 = scmp.ne.s32.totalorder %s60, %s61
      %p75 = scmp.eq.s32.totalorder %s15, 3
      %p76 = por %p74, %p75
      %p78 = scmp.ne.s32.totalorder %s61, %s77
      %p79 = scmp.eq.s32.totalorder %s15, 0
      %p80 = por %p78, %p79
      %s81 = ssub.s32 %s17, %s24
      %p82 = scmp.eq.s32.totalorder %s81, 0
      %s84 = sadd.s32 %s83, 1
      %s85 = scalar_select %p82, %s83, %s84
      %p88 = pneg %p82
      %p89 = scmp.eq.s32.totalorder %s9, 3
      %p90 = por %p88, %p89
      %p91 = scmp.ne.s32.totalorder %s83, %s86
      %p92 = scmp.eq.s32.totalorder %s9, 0
      %p93 = por %p91, %p92
      %p94 = scmp.ne.s32.totalorder %s83, %s86
      %p95 = scmp.eq.s32.totalorder %s14, 3
      %p96 = por %p94, %p95
      %p97 = scmp.ne.s32.totalorder %s86, %s87
      %p98 = scmp.eq.s32.totalorder %s14, 0
      %p99 = por %p97, %p98
      %p100 = scmp.ne.s32.totalorder %s86, %s87
      %p101 = scmp.eq.s32.totalorder %s15, 3
      %p102 = por %p100, %p101
      %p104 = scmp.ne.s32.totalorder %s87, %s103
      %p105 = scmp.eq.s32.totalorder %s15, 0
      %p106 = por %p104, %p105
      %s107 = ssub.s32 %s16, %s28
      %s108 = ssub.s32 %s17, %s24
      %s109 = sor.u32 %s107, %s108
      %p110 = scmp.eq.s32.totalorder %s109, 0
      %s112 = sadd.s32 %s111, 1
      %s113 = scalar_select %p110, %s111, %s112
      %p116 = pneg %p110
      %p117 = scmp.eq.s32.totalorder %s9, 3
      %p118 = por %p116, %p117
      %p119 = scmp.ne.s32.totalorder %s111, %s114
      %p120 = scmp.eq.s32.totalorder %s9, 0
      %p121 = por %p119, %p120
      %p122 = scmp.ne.s32.totalorder %s111, %s114
      %p123 = scmp.eq.s32.totalorder %s14, 3
      %p124 = por %p122, %p123
      %p125 = scmp.ne.s32.totalorder %s114, %s115
      %p126 = scmp.eq.s32.totalorder %s14, 0
      %p127 = por %p125, %p126
      %p128 = scmp.ne.s32.totalorder %s114, %s115
      %p129 = scmp.eq.s32.totalorder %s15, 3
      %p130 = por %p128, %p129
      %p132 = scmp.ne.s32.totalorder %s115, %s131
      %p133 = scmp.eq.s32.totalorder %s15, 0
      %p134 = por %p132, %p133
      %p135 = scmp.le.s32.totalorder 1, %s9
      %p136 = scmp.lt.s32.totalorder %s9, 5
      %p137 = pnand %p135, %p136
      %p138 = pneg %p137
      // Predicated region
      $region9: #{squeeze_forward.25} parent=5 // pred_check
        _
      $region10: #{squeeze_forward.25} parent=5 // pred_check_branch
        %140 = sbr.rel (%p137) target = $region12
      $region11: #{squeeze_forward.25} parent=5 // pred_region
        %s141 = ssub.s32 %s9, 1
      $region12: #{squeeze_forward.25} parent=5 // pred_fallthru
        _
      %p142 = scmp.lt.s32.totalorder %s9, 4
      // Predicated region
      $region13: #{squeeze_forward.25} parent=5 // pred_check
        %p143 = pneg %p142
      $region14: #{squeeze_forward.25} parent=5 // pred_check_branch
        %145 = sbr.rel (%p143) target = $region16
      $region15: #{squeeze_forward.25} parent=5 // pred_region
        // Predicated region
        $region17: #{squeeze_forward.25} parent=15 // pred_check
          %p146 = pneg %p41
        $region18: #{squeeze_forward.25} parent=15 // pred_check_branch
          %148 = sbr.rel (%p146) target = $region20
        $region19: #{squeeze_forward.25} parent=15 // pred_region
          %s149 = smul.u32 16, %s16
          %p150 = scmp.lt.s32.totalorder %s149, 31
          %s151 = scalar_select %p150, %s149, 31
          %s152 = smul.addr %s151, 3
          %s153 = smul.addr %s152, 4
          %s154 = scalar_lea.vmem %s0, %s153
          %s155 = smul.u32 16, %s16
        $region20: #{squeeze_forward.25} parent=15 // pred_fallthru
          _
        // Predicated region
        $region21: #{squeeze_forward.25} parent=15 // pred_check
          %p156 = pneg %p67
        $region22: #{squeeze_forward.25} parent=15 // pred_check_branch
          %158 = sbr.rel (%p156) target = $region24
        $region23: #{squeeze_forward.25} parent=15 // pred_region
          %s159 = sand.u32 %s57, 1
          %s160 = sand.u32 %s57, 1
          %s161 = smul.addr %s160, 144
          %s162 = scalar_lea.vmem [#allocation2], %s161
          %s163 = smul.addr %s17, 4
          %s164 = scalar_lea.vmem %s1, %s163
          // Predicated region
          $region25: #{squeeze_forward.25} parent=23 // pred_check
            _
          $region26: #{squeeze_forward.25} parent=23 // pred_check_branch
            %166 = sbr.rel (0) target = $region28
          $region27: #{squeeze_forward.25} parent=23 // pred_region
            // Predicated region
            $region29: #{squeeze_forward.25} parent=27 // pred_check
              _
            $region30: #{squeeze_forward.25} parent=27 // pred_check_branch
              %168 = sbr.rel target = $region32
            $region31: #{squeeze_forward.25} parent=27 // pred_region
              // Predicated region
              $region44: #{squeeze_forward.25} parent=31 // pred_check
                _
              $region45: #{squeeze_forward.25} parent=31 // pred_check_branch
                %253 = sbr.rel (0) target = $region47
              $region46: #{squeeze_forward.25} parent=31 // pred_region
                loop: start=0, step=1, limit=1
                $region48: #{squeeze_forward.25} parent=46 // loop_pre_header
                  _
                $region49: #{squeeze_forward.25} parent=46 // loop_header
                  %s255 = sphi 0, %s259
                  %p256 = scmp.ge.s32.totalorder %s255, 1
                  %s260 = sphi %s164, %s164
                  %s261 = sphi %s162, %s162
                $region50: #{squeeze_forward.25} parent=46 // loop_header_branch
                  %258 = sbr.rel (%p256) target = $region54
                $region51: #{squeeze_forward.25} parent=46 // loop_body
                  _
                $region52: #{squeeze_forward.25} parent=46 // loop_footer
                  %s259 = sadd.s32 1, %s255
                $region53: #{squeeze_forward.25} parent=46 // loop_footer_branch
                  %254 = sbr.rel target = $region49
                $region54: #{squeeze_forward.25} parent=46 // loop_exit
                  _
                loop: start=0, step=1, limit=1
                $region55: #{squeeze_forward.25} parent=46 // loop_pre_header
                  _
                $region56: #{squeeze_forward.25} parent=46 // loop_header
                  %s264 = sphi 0, %s268
                  %p265 = scmp.ge.s32.totalorder %s264, 1
                  %s269 = sphi %s164, %s164
                  %s270 = sphi %s162, %s162
                $region57: #{squeeze_forward.25} parent=46 // loop_header_branch
                  %267 = sbr.rel (%p265) target = $region61
                $region58: #{squeeze_forward.25} parent=46 // loop_body
                  %v271 = vld [vmem:[%s269] sm:$0xf]
                  %272 = vst [vmem:[%s270] sm:$0xf] %v271
                  %v273 = vld [vmem:[%s269 + $0x8] sm:$0xf]
                  %274 = vst [vmem:[%s270 + $0x4] sm:$0xf] %v273
                  %v275 = vld [vmem:[%s269 + $0x10] sm:$0xf]
                  %276 = vst [vmem:[%s270 + $0x8] sm:$0xf] %v275
                  %v277 = vld [vmem:[%s269 + $0x18] sm:$0xf]
                  %278 = vst [vmem:[%s270 + $0xc] sm:$0xf] %v277
                  %v279 = vld [vmem:[%s269 + $0x20] sm:$0xf]
                  %280 = vst [vmem:[%s270 + $0x10] sm:$0xf] %v279
                  %v281 = vld [vmem:[%s269 + $0x28] sm:$0xf]
                  %282 = vst [vmem:[%s270 + $0x14] sm:$0xf] %v281
                  %v283 = vld [vmem:[%s269 + $0x30] sm:$0xf]
                  %284 = vst [vmem:[%s270 + $0x18] sm:$0xf] %v283
                  %v285 = vld [vmem:[%s269 + $0x38] sm:$0xf]
                  %286 = vst [vmem:[%s270 + $0x1c] sm:$0xf] %v285
                  %v287 = vld [vmem:[%s269 + $0x40] sm:$0xf]
                  %288 = vst [vmem:[%s270 + $0x20] sm:$0xf] %v287
                  %v289 = vld [vmem:[%s269 + $0x48] sm:$0xf]
                  %290 = vst [vmem:[%s270 + $0x24] sm:$0xf] %v289
                  %v291 = vld [vmem:[%s269 + $0x50] sm:$0xf]
                  %292 = vst [vmem:[%s270 + $0x28] sm:$0xf] %v291
                  %v293 = vld [vmem:[%s269 + $0x58] sm:$0xf]
                  %294 = vst [vmem:[%s270 + $0x2c] sm:$0xf] %v293
                  %v295 = vld [vmem:[%s269 + $0x60] sm:$0xf]
                  %296 = vst [vmem:[%s270 + $0x30] sm:$0xf] %v295
                  %v297 = vld [vmem:[%s269 + $0x68] sm:$0xf]
                  %298 = vst [vmem:[%s270 + $0x34] sm:$0xf] %v297
                  %v299 = vld [vmem:[%s269 + $0x70] sm:$0xf]
                  %300 = vst [vmem:[%s270 + $0x38] sm:$0xf] %v299
                  %v301 = vld [vmem:[%s269 + $0x78] sm:$0xf]
                  %302 = vst [vmem:[%s270 + $0x3c] sm:$0xf] %v301
                  %v303 = vld [vmem:[%s269 + $0x80] sm:$0xf]
                  %304 = vst [vmem:[%s270 + $0x40] sm:$0xf] %v303
                  %v305 = vld [vmem:[%s269 + $0x88] sm:$0xf]
                  %306 = vst [vmem:[%s270 + $0x44] sm:$0xf] %v305
                  %v307 = vld [vmem:[%s269 + $0x90] sm:$0xf]
                  %308 = vst [vmem:[%s270 + $0x48] sm:$0xf] %v307
                  %v309 = vld [vmem:[%s269 + $0x98] sm:$0xf]
                  %310 = vst [vmem:[%s270 + $0x4c] sm:$0xf] %v309
                  %v311 = vld [vmem:[%s269 + $0xa0] sm:$0xf]
                  %312 = vst [vmem:[%s270 + $0x50] sm:$0xf] %v311
                  %v313 = vld [vmem:[%s269 + $0xa8] sm:$0xf]
                  %314 = vst [vmem:[%s270 + $0x54] sm:$0xf] %v313
                  %v315 = vld [vmem:[%s269 + $0xb0] sm:$0xf]
                  %316 = vst [vmem:[%s270 + $0x58] sm:$0xf] %v315
                  %v317 = vld [vmem:[%s269 + $0xb8] sm:$0xf]
                  %318 = vst [vmem:[%s270 + $0x5c] sm:$0xf] %v317
                  %v319 = vld [vmem:[%s269 + $0xc0] sm:$0xf]
                  %320 = vst [vmem:[%s270 + $0x60] sm:$0xf] %v319
                  %v321 = vld [vmem:[%s269 + $0xc8] sm:$0xf]
                  %322 = vst [vmem:[%s270 + $0x64] sm:$0xf] %v321
                  %v323 = vld [vmem:[%s269 + $0xd0] sm:$0xf]
                  %324 = vst [vmem:[%s270 + $0x68] sm:$0xf] %v323
                  %v325 = vld [vmem:[%s269 + $0xd8] sm:$0xf]
                  %326 = vst [vmem:[%s270 + $0x6c] sm:$0xf] %v325
                  %v327 = vld [vmem:[%s269 + $0xe0] sm:$0xf]
                  %328 = vst [vmem:[%s270 + $0x70] sm:$0xf] %v327
                  %v329 = vld [vmem:[%s269 + $0xe8] sm:$0xf]
                  %330 = vst [vmem:[%s270 + $0x74] sm:$0xf] %v329
                  %v331 = vld [vmem:[%s269 + $0xf0] sm:$0xf]
                  %332 = vst [vmem:[%s270 + $0x78] sm:$0xf] %v331
                  %v333 = vld [vmem:[%s269 + $0xf8] sm:$0xf]
                  %334 = vst [vmem:[%s270 + $0x7c] sm:$0xf] %v333
                  %v335 = vld [vmem:[%s269 + $0x100] sm:$0xf]
                  %336 = vst [vmem:[%s270 + $0x80] sm:$0xf] %v335
                  %v337 = vld [vmem:[%s269 + $0x108] sm:$0xf]
                  %338 = vst [vmem:[%s270 + $0x84] sm:$0xf] %v337
                  %v339 = vld [vmem:[%s269 + $0x110] sm:$0xf]
                  %340 = vst [vmem:[%s270 + $0x88] sm:$0xf] %v339
                  %v341 = vld [vmem:[%s269 + $0x118] sm:$0xf]
                  %342 = vst [vmem:[%s270 + $0x8c] sm:$0xf] %v341
                $region59: #{squeeze_forward.25} parent=46 // loop_footer
                  %s268 = sadd.s32 1, %s264
                $region60: #{squeeze_forward.25} parent=46 // loop_footer_branch
                  %263 = sbr.rel target = $region56
                $region61: #{squeeze_forward.25} parent=46 // loop_exit
                  _
              $region47: #{squeeze_forward.25} parent=31 // pred_fallthru
                _
            $region32: #{squeeze_forward.25} parent=27 // pred_fallthru
              _
            // Predicated region
            $region33: #{squeeze_forward.25} parent=27 // pred_check
              _
            $region34: #{squeeze_forward.25} parent=27 // pred_check_branch
              %170 = sbr.rel (0) target = $region36
            $region35: #{squeeze_forward.25} parent=27 // pred_region
              loop: start=0, step=1, limit=1
              $region37: #{squeeze_forward.25} parent=35 // loop_pre_header
                _
              $region38: #{squeeze_forward.25} parent=35 // loop_header
                %s173 = sphi 0, %s177
                %p174 = scmp.ge.s32.totalorder %s173, 1
                %s178 = sphi %s164, %s164
                %s179 = sphi %s162, %s162
              $region39: #{squeeze_forward.25} parent=35 // loop_header_branch
                %176 = sbr.rel (%p174) target = $region43
              $region40: #{squeeze_forward.25} parent=35 // loop_body
                %v180 = vld [vmem:[%s178] sm:$0xf]
                %181 = vst [vmem:[%s179] sm:$0xf] %v180
                %v182 = vld [vmem:[%s178 + $0x8] sm:$0xf]
                %183 = vst [vmem:[%s179 + $0x4] sm:$0xf] %v182
                %v184 = vld [vmem:[%s178 + $0x10] sm:$0xf]
                %185 = vst [vmem:[%s179 + $0x8] sm:$0xf] %v184
                %v186 = vld [vmem:[%s178 + $0x18] sm:$0xf]
                %187 = vst [vmem:[%s179 + $0xc] sm:$0xf] %v186
                %v188 = vld [vmem:[%s178 + $0x20] sm:$0xf]
                %189 = vst [vmem:[%s179 + $0x10] sm:$0xf] %v188
                %v190 = vld [vmem:[%s178 + $0x28] sm:$0xf]
                %191 = vst [vmem:[%s179 + $0x14] sm:$0xf] %v190
                %v192 = vld [vmem:[%s178 + $0x30] sm:$0xf]
                %193 = vst [vmem:[%s179 + $0x18] sm:$0xf] %v192
                %v194 = vld [vmem:[%s178 + $0x38] sm:$0xf]
                %195 = vst [vmem:[%s179 + $0x1c] sm:$0xf] %v194
                %v196 = vld [vmem:[%s178 + $0x40] sm:$0xf]
                %197 = vst [vmem:[%s179 + $0x20] sm:$0xf] %v196
                %v198 = vld [vmem:[%s178 + $0x48] sm:$0xf]
                %199 = vst [vmem:[%s179 + $0x24] sm:$0xf] %v198
                %v200 = vld [vmem:[%s178 + $0x50] sm:$0xf]
                %201 = vst [vmem:[%s179 + $0x28] sm:$0xf] %v200
                %v202 = vld [vmem:[%s178 + $0x58] sm:$0xf]
                %203 = vst [vmem:[%s179 + $0x2c] sm:$0xf] %v202
                %v204 = vld [vmem:[%s178 + $0x60] sm:$0xf]
                %205 = vst [vmem:[%s179 + $0x30] sm:$0xf] %v204
                %v206 = vld [vmem:[%s178 + $0x68] sm:$0xf]
                %207 = vst [vmem:[%s179 + $0x34] sm:$0xf] %v206
                %v208 = vld [vmem:[%s178 + $0x70] sm:$0xf]
                %209 = vst [vmem:[%s179 + $0x38] sm:$0xf] %v208
                %v210 = vld [vmem:[%s178 + $0x78] sm:$0xf]
                %211 = vst [vmem:[%s179 + $0x3c] sm:$0xf] %v210
                %v212 = vld [vmem:[%s178 + $0x80] sm:$0xf]
                %213 = vst [vmem:[%s179 + $0x40] sm:$0xf] %v212
                %v214 = vld [vmem:[%s178 + $0x88] sm:$0xf]
                %215 = vst [vmem:[%s179 + $0x44] sm:$0xf] %v214
                %v216 = vld [vmem:[%s178 + $0x90] sm:$0xf]
                %217 = vst [vmem:[%s179 + $0x48] sm:$0xf] %v216
                %v218 = vld [vmem:[%s178 + $0x98] sm:$0xf]
                %219 = vst [vmem:[%s179 + $0x4c] sm:$0xf] %v218
                %v220 = vld [vmem:[%s178 + $0xa0] sm:$0xf]
                %221 = vst [vmem:[%s179 + $0x50] sm:$0xf] %v220
                %v222 = vld [vmem:[%s178 + $0xa8] sm:$0xf]
                %223 = vst [vmem:[%s179 + $0x54] sm:$0xf] %v222
                %v224 = vld [vmem:[%s178 + $0xb0] sm:$0xf]
                %225 = vst [vmem:[%s179 + $0x58] sm:$0xf] %v224
                %v226 = vld [vmem:[%s178 + $0xb8] sm:$0xf]
                %227 = vst [vmem:[%s179 + $0x5c] sm:$0xf] %v226
                %v228 = vld [vmem:[%s178 + $0xc0] sm:$0xf]
                %229 = vst [vmem:[%s179 + $0x60] sm:$0xf] %v228
                %v230 = vld [vmem:[%s178 + $0xc8] sm:$0xf]
                %231 = vst [vmem:[%s179 + $0x64] sm:$0xf] %v230
                %v232 = vld [vmem:[%s178 + $0xd0] sm:$0xf]
                %233 = vst [vmem:[%s179 + $0x68] sm:$0xf] %v232
                %v234 = vld [vmem:[%s178 + $0xd8] sm:$0xf]
                %235 = vst [vmem:[%s179 + $0x6c] sm:$0xf] %v234
                %v236 = vld [vmem:[%s178 + $0xe0] sm:$0xf]
                %237 = vst [vmem:[%s179 + $0x70] sm:$0xf] %v236
                %v238 = vld [vmem:[%s178 + $0xe8] sm:$0xf]
                %239 = vst [vmem:[%s179 + $0x74] sm:$0xf] %v238
                %v240 = vld [vmem:[%s178 + $0xf0] sm:$0xf]
                %241 = vst [vmem:[%s179 + $0x78] sm:$0xf] %v240
                %v242 = vld [vmem:[%s178 + $0xf8] sm:$0xf]
                %243 = vst [vmem:[%s179 + $0x7c] sm:$0xf] %v242
                %v244 = vld [vmem:[%s178 + $0x100] sm:$0xf]
                %245 = vst [vmem:[%s179 + $0x80] sm:$0xf] %v244
                %v246 = vld [vmem:[%s178 + $0x108] sm:$0xf]
                %247 = vst [vmem:[%s179 + $0x84] sm:$0xf] %v246
                %v248 = vld [vmem:[%s178 + $0x110] sm:$0xf]
                %249 = vst [vmem:[%s179 + $0x88] sm:$0xf] %v248
                %v250 = vld [vmem:[%s178 + $0x118] sm:$0xf]
                %251 = vst [vmem:[%s179 + $0x8c] sm:$0xf] %v250
              $region41: #{squeeze_forward.25} parent=35 // loop_footer
                %s177 = sadd.s32 1, %s173
              $region42: #{squeeze_forward.25} parent=35 // loop_footer_branch
                %172 = sbr.rel target = $region38
              $region43: #{squeeze_forward.25} parent=35 // loop_exit
                _
            $region36: #{squeeze_forward.25} parent=27 // pred_fallthru
              _
          $region28: #{squeeze_forward.25} parent=23 // pred_fallthru
            _
          %343 = vnop
        $region24: #{squeeze_forward.25} parent=15 // pred_fallthru
          _
        // Predicated region
        $region62: #{squeeze_forward.25} parent=15 // pred_check
          %p344 = pneg %p93
        $region63: #{squeeze_forward.25} parent=15 // pred_check_branch
          %346 = sbr.rel (%p344) target = $region65
        $region64: #{squeeze_forward.25} parent=15 // pred_region
          %p347 = scmp.lt.s32.totalorder %s17, 1
          %s348 = scalar_select %p347, %s17, 1
          %s349 = scalar_lea.vmem %s2, %s348
        $region65: #{squeeze_forward.25} parent=15 // pred_fallthru
          _
      $region16: #{squeeze_forward.25} parent=5 // pred_fallthru
        _
      %p350 = scmp.le.s32.totalorder 1, %s9
      %p351 = scmp.lt.s32.totalorder %s9, 5
      %p352 = pnand %p350, %p351
      %p353 = pneg %p352
      // Predicated region
      $region66: #{squeeze_forward.25} parent=5 // pred_check
        _
      $region67: #{squeeze_forward.25} parent=5 // pred_check_branch
        %355 = sbr.rel (%p352) target = $region69
      $region68: #{squeeze_forward.25} parent=5 // pred_region
        %s356 = ssub.s32 %s9, 1
        %s357 = sand.u32 %s60, 1
        %s358 = sand.u32 %s60, 1
        %s359 = smul.addr %s358, 144
        %s360 = scalar_lea.vmem [#allocation2], %s359
        // Predicated region
        $region70: #{squeeze_forward.25} parent=68 // pred_check
          %p361 = pneg %p73
        $region71: #{squeeze_forward.25} parent=68 // pred_check_branch
          %363 = sbr.rel (%p361) target = $region73
        $region72: #{squeeze_forward.25} parent=68 // pred_region
          _
        $region73: #{squeeze_forward.25} parent=68 // pred_fallthru
          _
        %s364 = smul.u32 16, %s18
        %p365 = scmp.lt.s32.totalorder %s364, 31
        %s366 = scalar_select %p365, %s364, 31
        %s367 = smul.addr %s366, 3
        %s368 = smul.addr %s367, 4
        %s369 = scalar_lea.vmem %s0, %s368
        %p370 = pneg %p47
        %p371 = pneg %p44
        %s372 = sand.u32 %s60, 1
        %s373 = sand.u32 %s60, 1
        %s374 = smul.addr %s373, 144
        %s375 = scalar_lea.vmem [#allocation2], %s374
        %p376 = pneg %p73
        %p377 = pneg %p70
        %p378 = scmp.lt.s32.totalorder %s19, 1
        %s379 = scalar_select %p378, %s19, 1
        %s380 = scalar_lea.vmem %s2, %s379
        %p381 = pneg %p99
        %p382 = pneg %p96
        %p383 = pneg %p127
        %p384 = pneg %p124
        %s385 = sand.u32 %s114, 1
        %s386 = sand.u32 %s114, 1
        %s387 = smul.addr %s386, 128
        %s388 = scalar_lea.vmem [#allocation3], %s387
        %s389 = smul.u32 16, %s18
        %p390 = scmp.lt.s32.totalorder %s389, 31
        %s391 = scalar_select %p390, %s389, 31
        %s392 = smul.addr %s391, 3
        %s393 = smul.addr %s392, 4
        %s394 = scalar_lea.vmem %s0, %s393
        %s395 = smul.u32 16, %s18
        %p396 = scmp.lt.s32.totalorder %s19, 1
        %s397 = scalar_select %p396, %s19, 1
        %s398 = scalar_lea.vmem %s2, %s397
        %s399 = smul.u32 16, %s18
        %v401 = vld [vmem:[%s394] sm:$0xff]
        %v402 = vld [vmem:[%s394 + $0x8] sm:$0xf]
        %v403 = vld [vmem:[%s394 + $0xc] sm:$0xff]
        %v404 = vld [vmem:[%s394 + $0x14] sm:$0xf]
        %v405 = vld [vmem:[%s394 + $0x18] sm:$0xff]
        %v406 = vld [vmem:[%s394 + $0x20] sm:$0xf]
        %v407 = vld [vmem:[%s394 + $0x24] sm:$0xff]
        %v408 = vld [vmem:[%s394 + $0x2c] sm:$0xf]
        %v409 = vld [vmem:[%s394 + $0x30] sm:$0xff]
        %v410 = vld [vmem:[%s394 + $0x38] sm:$0xf]
        %v411 = vld [vmem:[%s394 + $0x3c] sm:$0xff]
        %v412 = vld [vmem:[%s394 + $0x44] sm:$0xf]
        %v413 = vld [vmem:[%s394 + $0x48] sm:$0xff]
        %v414 = vld [vmem:[%s394 + $0x50] sm:$0xf]
        %v415 = vld [vmem:[%s394 + $0x54] sm:$0xff]
        %v416 = vld [vmem:[%s394 + $0x5c] sm:$0xf]
        %v417 = vld [vmem:[%s394 + $0x60] sm:$0xff]
        %v418 = vld [vmem:[%s394 + $0x68] sm:$0xf]
        %v419 = vld [vmem:[%s394 + $0x6c] sm:$0xff]
        %v420 = vld [vmem:[%s394 + $0x74] sm:$0xf]
        %v421 = vld [vmem:[%s394 + $0x78] sm:$0xff]
        %v422 = vld [vmem:[%s394 + $0x80] sm:$0xf]
        %v423 = vld [vmem:[%s394 + $0x84] sm:$0xff]
        %v424 = vld [vmem:[%s394 + $0x8c] sm:$0xf]
        %v425 = vld [vmem:[%s394 + $0x90] sm:$0xff]
        %v426 = vld [vmem:[%s394 + $0x98] sm:$0xf]
        %v427 = vld [vmem:[%s394 + $0x9c] sm:$0xff]
        %v428 = vld [vmem:[%s394 + $0xa4] sm:$0xf]
        %v429 = vld [vmem:[%s394 + $0xa8] sm:$0xff]
        %v430 = vld [vmem:[%s394 + $0xb0] sm:$0xf]
        %v431 = vld [vmem:[%s394 + $0xb4] sm:$0xff]
        %v432 = vld [vmem:[%s394 + $0xbc] sm:$0xf]
        %v433 = vld [vmem:[%s360] sm:$0xf]
        %v434 = vld [vmem:[%s360 + $0x4] sm:$0xf]
        %v435 = vld [vmem:[%s360 + $0x8] sm:$0xf]
        %v436 = vld [vmem:[%s360 + $0xc] sm:$0xf]
        %v437 = vld [vmem:[%s360 + $0x10] sm:$0xf]
        %v438 = vld [vmem:[%s360 + $0x14] sm:$0xf]
        %v439 = vld [vmem:[%s360 + $0x18] sm:$0xf]
        %v440 = vld [vmem:[%s360 + $0x1c] sm:$0xf]
        %v441 = vld [vmem:[%s360 + $0x20] sm:$0xf]
        %v442 = vld [vmem:[%s360 + $0x24] sm:$0xf]
        %v443 = vld [vmem:[%s360 + $0x28] sm:$0xf]
        %v444 = vld [vmem:[%s360 + $0x2c] sm:$0xf]
        %v445 = vld [vmem:[%s360 + $0x30] sm:$0xf]
        %v446 = vld [vmem:[%s360 + $0x34] sm:$0xf]
        %v447 = vld [vmem:[%s360 + $0x38] sm:$0xf]
        %v448 = vld [vmem:[%s360 + $0x3c] sm:$0xf]
        %v449 = vld [vmem:[%s360 + $0x40] sm:$0xf]
        %v450 = vld [vmem:[%s360 + $0x44] sm:$0xf]
        %v451 = vld [vmem:[%s360 + $0x48] sm:$0xf]
        %v452 = vld [vmem:[%s360 + $0x4c] sm:$0xf]
        %v453 = vld [vmem:[%s360 + $0x50] sm:$0xf]
        %v454 = vld [vmem:[%s360 + $0x54] sm:$0xf]
        %v455 = vld [vmem:[%s360 + $0x58] sm:$0xf]
        %v456 = vld [vmem:[%s360 + $0x5c] sm:$0xf]
        %v457 = vld [vmem:[%s360 + $0x60] sm:$0xf]
        %v458 = vld [vmem:[%s360 + $0x64] sm:$0xf]
        %v459 = vld [vmem:[%s360 + $0x68] sm:$0xf]
        %v460 = vld [vmem:[%s360 + $0x6c] sm:$0xf]
        %v461 = vld [vmem:[%s360 + $0x70] sm:$0xf]
        %v462 = vld [vmem:[%s360 + $0x74] sm:$0xf]
        %v463 = vld [vmem:[%s360 + $0x78] sm:$0xf]
        %v464 = vld [vmem:[%s360 + $0x7c] sm:$0xf]
        %v465 = vld [vmem:[%s360 + $0x80] sm:$0xf]
        %v466 = vld [vmem:[%s360 + $0x84] sm:$0xf]
        %v467 = vld [vmem:[%s360 + $0x88] sm:$0xf]
        %v468 = vld [vmem:[%s360 + $0x8c] sm:$0xf]
        %v469 = vld [vmem:[%s398] sm:$0x1]
        %v471 = vlaneseq
        %v472 = vshrl.u32 %v471, 7
        %v473 = vsub.s32 0, %v472
        %v474 = vrot.slane %v469, %v473
        %v508 = vunpack.c.l.b16 %v401
        %v509 = vunpack.c.h.b16 %v401
        %v510 = vunpack.c.l.b16 %v402
        %v511 = vunpack.c.l.b16 %v403
        %v512 = vunpack.c.h.b16 %v403
        %v513 = vunpack.c.l.b16 %v404
        %v514 = vunpack.c.l.b16 %v405
        %v515 = vunpack.c.h.b16 %v405
        %v516 = vunpack.c.l.b16 %v406
        %v517 = vunpack.c.l.b16 %v407
        %v518 = vunpack.c.h.b16 %v407
        %v519 = vunpack.c.l.b16 %v408
        %v520 = vunpack.c.l.b16 %v409
        %v521 = vunpack.c.h.b16 %v409
        %v522 = vunpack.c.l.b16 %v410
        %v523 = vunpack.c.l.b16 %v411
        %v524 = vunpack.c.h.b16 %v411
        %v525 = vunpack.c.l.b16 %v412
        %v526 = vunpack.c.l.b16 %v413
        %v527 = vunpack.c.h.b16 %v413
        %v528 = vunpack.c.l.b16 %v414
        %v529 = vunpack.c.l.b16 %v415
        %v530 = vunpack.c.h.b16 %v415
        %v531 = vunpack.c.l.b16 %v416
        %v532 = vunpack.c.l.b16 %v417
        %v533 = vunpack.c.h.b16 %v417
        %v534 = vunpack.c.l.b16 %v418
        %v535 = vunpack.c.l.b16 %v419
        %v536 = vunpack.c.h.b16 %v419
        %v537 = vunpack.c.l.b16 %v420
        %v538 = vunpack.c.l.b16 %v421
        %v539 = vunpack.c.h.b16 %v421
        %v540 = vunpack.c.l.b16 %v422
        %v541 = vunpack.c.l.b16 %v423
        %v542 = vunpack.c.h.b16 %v423
        %v543 = vunpack.c.l.b16 %v424
        %v544 = vunpack.c.l.b16 %v425
        %v545 = vunpack.c.h.b16 %v425
        %v546 = vunpack.c.l.b16 %v426
        %v547 = vunpack.c.l.b16 %v427
        %v548 = vunpack.c.h.b16 %v427
        %v549 = vunpack.c.l.b16 %v428
        %v550 = vunpack.c.l.b16 %v429
        %v551 = vunpack.c.h.b16 %v429
        %v552 = vunpack.c.l.b16 %v430
        %v553 = vunpack.c.l.b16 %v431
        %v554 = vunpack.c.h.b16 %v431
        %v555 = vunpack.c.l.b16 %v432
        %v556 = vpack.c.b16 %v511, %v508
        %v557 = vpack.c.b16 %v512, %v509
        %v558 = vpack.c.b16 %v513, %v510
        %v559 = vpack.c.b16 %v517, %v514
        %v560 = vpack.c.b16 %v518, %v515
        %v561 = vpack.c.b16 %v519, %v516
        %v562 = vpack.c.b16 %v523, %v520
        %v563 = vpack.c.b16 %v524, %v521
        %v564 = vpack.c.b16 %v525, %v522
        %v565 = vpack.c.b16 %v529, %v526
        %v566 = vpack.c.b16 %v530, %v527
        %v567 = vpack.c.b16 %v531, %v528
        %v568 = vpack.c.b16 %v535, %v532
        %v569 = vpack.c.b16 %v536, %v533
        %v570 = vpack.c.b16 %v537, %v534
        %v571 = vpack.c.b16 %v541, %v538
        %v572 = vpack.c.b16 %v542, %v539
        %v573 = vpack.c.b16 %v543, %v540
        %v574 = vpack.c.b16 %v547, %v544
        %v575 = vpack.c.b16 %v548, %v545
        %v576 = vpack.c.b16 %v549, %v546
        %v577 = vpack.c.b16 %v553, %v550
        %v578 = vpack.c.b16 %v554, %v551
        %v579 = vpack.c.b16 %v555, %v552
        %v632 = vunpack.c.l.b16 %v433
        %v633 = vunpack.c.l.b16 %v434
        %v634 = vunpack.c.l.b16 %v435
        %v635 = vunpack.c.l.b16 %v436
        %v636 = vunpack.c.l.b16 %v437
        %v637 = vunpack.c.l.b16 %v438
        %v638 = vunpack.c.l.b16 %v439
        %v639 = vunpack.c.l.b16 %v440
        %v640 = vunpack.c.l.b16 %v441
        %v641 = vunpack.c.l.b16 %v442
        %v642 = vunpack.c.l.b16 %v443
        %v643 = vunpack.c.l.b16 %v444
        %v644 = vunpack.c.l.b16 %v445
        %v645 = vunpack.c.l.b16 %v446
        %v646 = vunpack.c.l.b16 %v447
        %v647 = vunpack.c.l.b16 %v448
        %v648 = vunpack.c.l.b16 %v449
        %v649 = vunpack.c.l.b16 %v450
        %v650 = vunpack.c.l.b16 %v451
        %v651 = vunpack.c.l.b16 %v452
        %v652 = vunpack.c.l.b16 %v453
        %v653 = vunpack.c.l.b16 %v454
        %v654 = vunpack.c.l.b16 %v455
        %v655 = vunpack.c.l.b16 %v456
        %v656 = vunpack.c.l.b16 %v457
        %v657 = vunpack.c.l.b16 %v458
        %v658 = vunpack.c.l.b16 %v459
        %v659 = vunpack.c.l.b16 %v460
        %v660 = vunpack.c.l.b16 %v461
        %v661 = vunpack.c.l.b16 %v462
        %v662 = vunpack.c.l.b16 %v463
        %v663 = vunpack.c.l.b16 %v464
        %v664 = vunpack.c.l.b16 %v465
        %v665 = vunpack.c.l.b16 %v466
        %v666 = vunpack.c.l.b16 %v467
        %v667 = vunpack.c.l.b16 %v468
        %v668 = vpack.c.b16 %v633, %v632
        %v669 = vpack.c.b16 %v635, %v634
        %v670 = vpack.c.b16 %v637, %v636
        %v671 = vpack.c.b16 %v639, %v638
        %v672 = vpack.c.b16 %v641, %v640
        %v673 = vpack.c.b16 %v643, %v642
        %v674 = vpack.c.b16 %v645, %v644
        %v675 = vpack.c.b16 %v647, %v646
        %v676 = vpack.c.b16 %v649, %v648
        %v677 = vpack.c.b16 %v651, %v650
        %v678 = vpack.c.b16 %v653, %v652
        %v679 = vpack.c.b16 %v655, %v654
        %v680 = vpack.c.b16 %v657, %v656
        %v681 = vpack.c.b16 %v659, %v658
        %v682 = vpack.c.b16 %v661, %v660
        %v683 = vpack.c.b16 %v663, %v662
        %v684 = vpack.c.b16 %v665, %v664
        %v685 = vpack.c.b16 %v667, %v666
        %vm704 = vcmask 261120
        %v706 = vsel %vm704, %v558, 0
        %v709 = vsel %vm704, %v561, 0
        %v712 = vsel %vm704, %v564, 0
        %v715 = vsel %vm704, %v567, 0
        %v718 = vsel %vm704, %v570, 0
        %v721 = vsel %vm704, %v573, 0
        %v724 = vsel %vm704, %v576, 0
        %v727 = vsel %vm704, %v579, 0
        %729 = vmatprep.subr.bf16.mxu0 0
        %730 = vmatpush1.bf16.msra.mxu0 %v668
        %731 = vmatprep.subr.bf16.mxu0 0
        %732 = vmatpush1.bf16.msra.mxu0 %v669
        %733 = vmatprep.subr.bf16.mxu0 0
        %734 = vmatpush1.bf16.msra.mxu0 %v670
        %735 = vmatprep.subr.bf16.mxu0 0
        %736 = vmatpush1.bf16.msra.mxu0 %v671
        %737 = vmatprep.subr.bf16.mxu0 0
        %738 = vmatpush1.bf16.msra.mxu0 %v672
        %739 = vmatprep.subr.bf16.mxu0 0
        %740 = vmatpush1.bf16.msra.mxu0 %v673
        %741 = vmatprep.subr.bf16.mxu0 0
        %742 = vmatpush1.bf16.msra.mxu0 %v674
        %743 = vmatprep.subr.bf16.mxu0 0
        %744 = vmatpush1.bf16.msra.mxu0 %v675
        %745 = vmatprep.subr.bf16.mxu0 0
        %746 = vmatpush1.bf16.msra.mxu0 %v676
        %747 = vmatprep.subr.bf16.mxu0 0
        %748 = vmatpush1.bf16.msra.mxu0 %v677
        %749 = vmatprep.subr.bf16.mxu0 0
        %750 = vmatpush1.bf16.msra.mxu0 %v678
        %751 = vmatprep.subr.bf16.mxu0 0
        %752 = vmatpush1.bf16.msra.mxu0 %v679
        %753 = vmatprep.subr.bf16.mxu0 0
        %754 = vmatpush1.bf16.msra.mxu0 %v680
        %755 = vmatprep.subr.bf16.mxu0 0
        %756 = vmatpush1.bf16.msra.mxu0 %v681
        %757 = vmatprep.subr.bf16.mxu0 0
        %758 = vmatpush1.bf16.msra.mxu0 %v682
        %759 = vmatprep.subr.bf16.mxu0 0
        %760 = vmatpush1.bf16.msra.mxu0 %v683
        %761 = vmatprep.mubr.bf16.mxu0 %v557
        %762 = vmatmul.mubr.bf16.gmra.mrb[0].mxu0 %v556
        %v763 = vpop.f32.mrb[0].mxu0
        %v764 = vadd.f32 %v474, %v763
        %v765 = vpop.f32.mrb[0].mxu0
        %v766 = vpop.f32.mrb[0].mxu0
        %v767 = vadd.f32 %v474, %v766
        %v768 = vpop.f32.mrb[0].mxu0
        %769 = vmatprep.mubr.bf16.mxu0 %v560
        %770 = vmatmul.mubr.bf16.gmra.mrb[0].mxu0 %v559
        %v771 = vpop.f32.mrb[0].mxu0
        %v772 = vadd.f32 %v474, %v771
        %v773 = vpop.f32.mrb[0].mxu0
        %v774 = vpop.f32.mrb[0].mxu0
        %v775 = vadd.f32 %v474, %v774
        %v776 = vpop.f32.mrb[0].mxu0
        %777 = vmatprep.mubr.bf16.mxu0 %v563
        %778 = vmatmul.mubr.bf16.gmra.mrb[0].mxu0 %v562
        %v779 = vpop.f32.mrb[0].mxu0
        %v780 = vadd.f32 %v474, %v779
        %v781 = vpop.f32.mrb[0].mxu0
        %v782 = vpop.f32.mrb[0].mxu0
        %v783 = vadd.f32 %v474, %v782
        %v784 = vpop.f32.mrb[0].mxu0
        %785 = vmatprep.mubr.bf16.mxu0 %v566
        %786 = vmatmul.mubr.bf16.gmra.mrb[0].mxu0 %v565
        %v787 = vpop.f32.mrb[0].mxu0
        %v788 = vadd.f32 %v474, %v787
        %v789 = vpop.f32.mrb[0].mxu0
        %v790 = vpop.f32.mrb[0].mxu0
        %v791 = vadd.f32 %v474, %v790
        %v792 = vpop.f32.mrb[0].mxu0
        %793 = vmatprep.mubr.bf16.mxu0 %v569
        %794 = vmatmul.mubr.bf16.gmra.mrb[0].mxu0 %v568
        %v795 = vpop.f32.mrb[0].mxu0
        %v796 = vadd.f32 %v474, %v795
        %v797 = vpop.f32.mrb[0].mxu0
        %v798 = vpop.f32.mrb[0].mxu0
        %v799 = vadd.f32 %v474, %v798
        %v800 = vpop.f32.mrb[0].mxu0
        %801 = vmatprep.mubr.bf16.mxu0 %v572
        %802 = vmatmul.mubr.bf16.gmra.mrb[0].mxu0 %v571
        %v803 = vpop.f32.mrb[0].mxu0
        %v804 = vadd.f32 %v474, %v803
        %v805 = vpop.f32.mrb[0].mxu0
        %v806 = vpop.f32.mrb[0].mxu0
        %v807 = vadd.f32 %v474, %v806
        %v808 = vpop.f32.mrb[0].mxu0
        %809 = vmatprep.mubr.bf16.mxu0 %v575
        %810 = vmatmul.mubr.bf16.gmra.mrb[0].mxu0 %v574
        %v811 = vpop.f32.mrb[0].mxu0
        %v812 = vadd.f32 %v474, %v811
        %v813 = vpop.f32.mrb[0].mxu0
        %v814 = vpop.f32.mrb[0].mxu0
        %v815 = vadd.f32 %v474, %v814
        %v816 = vpop.f32.mrb[0].mxu0
        %817 = vmatprep.mubr.bf16.mxu0 %v578
        %818 = vmatmul.mubr.bf16.gmra.mrb[0].mxu0 %v577
        %v819 = vpop.f32.mrb[0].mxu0
        %v820 = vadd.f32 %v474, %v819
        %v821 = vpop.f32.mrb[0].mxu0
        %v822 = vpop.f32.mrb[0].mxu0
        %v823 = vadd.f32 %v474, %v822
        %v824 = vpop.f32.mrb[0].mxu0
        %825 = vdwg.mxu0
        %826 = vmatprep.subr.bf16.mxu0 0
        %827 = vmatpush1.bf16.msra.mxu0 %v684
        %828 = vmatprep.subr.bf16.mxu0 0
        %829 = vmatpush1.bf16.msra.mxu0 %v685
        %830 = vmatprep.subr.bf16.mxu0 0
        %831 = vmatpush1.bf16.msra.mxu0 0
        %832 = vmatprep.subr.bf16.mxu0 0
        %833 = vmatpush1.bf16.msra.mxu0 0
        %834 = vmatprep.subr.bf16.mxu0 0
        %835 = vmatpush1.bf16.msra.mxu0 0
        %836 = vmatprep.subr.bf16.mxu0 0
        %837 = vmatpush1.bf16.msra.mxu0 0
        %838 = vmatprep.subr.bf16.mxu0 0
        %839 = vmatpush1.bf16.msra.mxu0 0
        %840 = vmatprep.subr.bf16.mxu0 0
        %841 = vmatpush1.bf16.msra.mxu0 0
        %842 = vmatprep.subr.bf16.mxu0 0
        %843 = vmatpush1.bf16.msra.mxu0 0
        %844 = vmatprep.subr.bf16.mxu0 0
        %845 = vmatpush1.bf16.msra.mxu0 0
        %846 = vmatprep.subr.bf16.mxu0 0
        %847 = vmatpush1.bf16.msra.mxu0 0
        %848 = vmatprep.subr.bf16.mxu0 0
        %849 = vmatpush1.bf16.msra.mxu0 0
        %850 = vmatprep.subr.bf16.mxu0 0
        %851 = vmatpush1.bf16.msra.mxu0 0
        %852 = vmatprep.subr.bf16.mxu0 0
        %853 = vmatpush1.bf16.msra.mxu0 0
        %854 = vmatprep.subr.bf16.mxu0 0
        %855 = vmatpush1.bf16.msra.mxu0 0
        %856 = vmatprep.subr.bf16.mxu0 0
        %857 = vmatpush1.bf16.msra.mxu0 0
        %858 = vmatprep.mubr.bf16.mxu0 0
        %859 = vmatmul.mubr.bf16.gmra.mrb[0].mxu0 %v706
        %v860 = vpop.f32.mrb[0].mxu0
        %v861 = vadd.f32 %v764, %v860
        %v862 = vpop.f32.mrb[0].mxu0
        %v863 = vpop.f32.mrb[0].mxu0
        %v864 = vadd.f32 %v767, %v863
        %v865 = vpop.f32.mrb[0].mxu0
        %866 = vmatprep.mubr.bf16.mxu0 0
        %867 = vmatmul.mubr.bf16.gmra.mrb[0].mxu0 %v709
        %v868 = vpop.f32.mrb[0].mxu0
        %v869 = vadd.f32 %v772, %v868
        %v870 = vpop.f32.mrb[0].mxu0
        %v871 = vpop.f32.mrb[0].mxu0
        %v872 = vadd.f32 %v775, %v871
        %v873 = vpop.f32.mrb[0].mxu0
        %874 = vmatprep.mubr.bf16.mxu0 0
        %875 = vmatmul.mubr.bf16.gmra.mrb[0].mxu0 %v712
        %v876 = vpop.f32.mrb[0].mxu0
        %v877 = vadd.f32 %v780, %v876
        %v878 = vpop.f32.mrb[0].mxu0
        %v879 = vpop.f32.mrb[0].mxu0
        %v880 = vadd.f32 %v783, %v879
        %v881 = vpop.f32.mrb[0].mxu0
        %882 = vmatprep.mubr.bf16.mxu0 0
        %883 = vmatmul.mubr.bf16.gmra.mrb[0].mxu0 %v715
        %v884 = vpop.f32.mrb[0].mxu0
        %v885 = vadd.f32 %v788, %v884
        %v886 = vpop.f32.mrb[0].mxu0
        %v887 = vpop.f32.mrb[0].mxu0
        %v888 = vadd.f32 %v791, %v887
        %v889 = vpop.f32.mrb[0].mxu0
        %890 = vmatprep.mubr.bf16.mxu0 0
        %891 = vmatmul.mubr.bf16.gmra.mrb[0].mxu0 %v718
        %v892 = vpop.f32.mrb[0].mxu0
        %v893 = vadd.f32 %v796, %v892
        %v894 = vpop.f32.mrb[0].mxu0
        %v895 = vpop.f32.mrb[0].mxu0
        %v896 = vadd.f32 %v799, %v895
        %v897 = vpop.f32.mrb[0].mxu0
        %898 = vmatprep.mubr.bf16.mxu0 0
        %899 = vmatmul.mubr.bf16.gmra.mrb[0].mxu0 %v721
        %v900 = vpop.f32.mrb[0].mxu0
        %v901 = vadd.f32 %v804, %v900
        %v902 = vpop.f32.mrb[0].mxu0
        %v903 = vpop.f32.mrb[0].mxu0
        %v904 = vadd.f32 %v807, %v903
        %v905 = vpop.f32.mrb[0].mxu0
        %906 = vmatprep.mubr.bf16.mxu0 0
        %907 = vmatmul.mubr.bf16.gmra.mrb[0].mxu0 %v724
        %v908 = vpop.f32.mrb[0].mxu0
        %v909 = vadd.f32 %v812, %v908
        %v910 = vpop.f32.mrb[0].mxu0
        %v911 = vpop.f32.mrb[0].mxu0
        %v912 = vadd.f32 %v815, %v911
        %v913 = vpop.f32.mrb[0].mxu0
        %914 = vmatprep.mubr.bf16.mxu0 0
        %915 = vmatmul.mubr.bf16.gmra.mrb[0].mxu0 %v727
        %v916 = vpop.f32.mrb[0].mxu0
        %v917 = vadd.f32 %v820, %v916
        %v918 = vpop.f32.mrb[0].mxu0
        %v919 = vpop.f32.mrb[0].mxu0
        %v920 = vadd.f32 %v823, %v919
        %v921 = vpop.f32.mrb[0].mxu0
        %922 = vdwg.mxu0
        %v923 = vmax.f32 %v861, 0.0
        %v924 = vmax.f32 %v864, 0.0
        %v925 = vmax.f32 %v869, 0.0
        %v926 = vmax.f32 %v872, 0.0
        %v927 = vmax.f32 %v877, 0.0
        %v928 = vmax.f32 %v880, 0.0
        %v929 = vmax.f32 %v885, 0.0
        %v930 = vmax.f32 %v888, 0.0
        %v931 = vmax.f32 %v893, 0.0
        %v932 = vmax.f32 %v896, 0.0
        %v933 = vmax.f32 %v901, 0.0
        %v934 = vmax.f32 %v904, 0.0
        %v935 = vmax.f32 %v909, 0.0
        %v936 = vmax.f32 %v912, 0.0
        %v937 = vmax.f32 %v917, 0.0
        %v938 = vmax.f32 %v920, 0.0
        %939 = vst [vmem:[%s388] sm:$0xff] %v923
        %940 = vst [vmem:[%s388 + $0x8] sm:$0xff] %v924
        %941 = vst [vmem:[%s388 + $0x10] sm:$0xff] %v925
        %942 = vst [vmem:[%s388 + $0x18] sm:$0xff] %v926
        %943 = vst [vmem:[%s388 + $0x20] sm:$0xff] %v927
        %944 = vst [vmem:[%s388 + $0x28] sm:$0xff] %v928
        %945 = vst [vmem:[%s388 + $0x30] sm:$0xff] %v929
        %946 = vst [vmem:[%s388 + $0x38] sm:$0xff] %v930
        %947 = vst [vmem:[%s388 + $0x40] sm:$0xff] %v931
        %948 = vst [vmem:[%s388 + $0x48] sm:$0xff] %v932
        %949 = vst [vmem:[%s388 + $0x50] sm:$0xff] %v933
        %950 = vst [vmem:[%s388 + $0x58] sm:$0xff] %v934
        %951 = vst [vmem:[%s388 + $0x60] sm:$0xff] %v935
        %952 = vst [vmem:[%s388 + $0x68] sm:$0xff] %v936
        %953 = vst [vmem:[%s388 + $0x70] sm:$0xff] %v937
        %954 = vst [vmem:[%s388 + $0x78] sm:$0xff] %v938
        %s955 = sand.u32 %s114, 1
        %s956 = sand.u32 %s114, 1
        %s957 = smul.addr %s956, 128
        %s958 = scalar_lea.vmem [#allocation3], %s957
        // Predicated region
        $region74: #{squeeze_forward.25} parent=68 // pred_check
          %p959 = pneg %p124
        $region75: #{squeeze_forward.25} parent=68 // pred_check_branch
          %961 = sbr.rel (%p959) target = $region77
        $region76: #{squeeze_forward.25} parent=68 // pred_region
          %s962 = smul.u32 16, %s18
          %s963 = smul.addr %s962, 2
          %s964 = sadd.s32 %s19, %s963
          %s965 = smul.addr %s964, 8
          %s966 = scalar_lea.vmem %s3, %s965
          // Predicated region
          $region78: #{squeeze_forward.25} parent=76 // pred_check
            _
          $region79: #{squeeze_forward.25} parent=76 // pred_check_branch
            %968 = sbr.rel (0) target = $region81
          $region80: #{squeeze_forward.25} parent=76 // pred_region
            // Predicated region
            $region82: #{squeeze_forward.25} parent=80 // pred_check
              _
            $region83: #{squeeze_forward.25} parent=80 // pred_check_branch
              %970 = sbr.rel (0) target = $region85
            $region84: #{squeeze_forward.25} parent=80 // pred_region
              // Predicated region
              $region97: #{squeeze_forward.25} parent=84 // pred_check
                _
              $region98: #{squeeze_forward.25} parent=84 // pred_check_branch
                %1015 = sbr.rel (0) target = $region100
              $region99: #{squeeze_forward.25} parent=84 // pred_region
                loop: start=0, step=1, limit=1
                $region101: #{squeeze_forward.25} parent=99 // loop_pre_header
                  _
                $region102: #{squeeze_forward.25} parent=99 // loop_header
                  %s1017 = sphi 0, %s1021
                  %p1018 = scmp.ge.s32.totalorder %s1017, 1
                  %s1022 = sphi %s958, %s958
                  %s1023 = sphi %s966, %s966
                $region103: #{squeeze_forward.25} parent=99 // loop_header_branch
                  %1020 = sbr.rel (%p1018) target = $region107
                $region104: #{squeeze_forward.25} parent=99 // loop_body
                  %v1024 = vld [vmem:[%s1022] sm:$0xff]
                  %1025 = vst [vmem:[%s1023] sm:$0xff] %v1024
                  %v1026 = vld [vmem:[%s1022 + $0x8] sm:$0xff]
                  %1027 = vst [vmem:[%s1023 + $0x10] sm:$0xff] %v1026
                  %v1028 = vld [vmem:[%s1022 + $0x10] sm:$0xff]
                  %1029 = vst [vmem:[%s1023 + $0x20] sm:$0xff] %v1028
                  %v1030 = vld [vmem:[%s1022 + $0x18] sm:$0xff]
                  %1031 = vst [vmem:[%s1023 + $0x30] sm:$0xff] %v1030
                  %v1032 = vld [vmem:[%s1022 + $0x20] sm:$0xff]
                  %1033 = vst [vmem:[%s1023 + $0x40] sm:$0xff] %v1032
                  %v1034 = vld [vmem:[%s1022 + $0x28] sm:$0xff]
                  %1035 = vst [vmem:[%s1023 + $0x50] sm:$0xff] %v1034
                  %v1036 = vld [vmem:[%s1022 + $0x30] sm:$0xff]
                  %1037 = vst [vmem:[%s1023 + $0x60] sm:$0xff] %v1036
                  %v1038 = vld [vmem:[%s1022 + $0x38] sm:$0xff]
                  %1039 = vst [vmem:[%s1023 + $0x70] sm:$0xff] %v1038
                  %v1040 = vld [vmem:[%s1022 + $0x40] sm:$0xff]
                  %1041 = vst [vmem:[%s1023 + $0x80] sm:$0xff] %v1040
                  %v1042 = vld [vmem:[%s1022 + $0x48] sm:$0xff]
                  %1043 = vst [vmem:[%s1023 + $0x90] sm:$0xff] %v1042
                  %v1044 = vld [vmem:[%s1022 + $0x50] sm:$0xff]
                  %1045 = vst [vmem:[%s1023 + $0xa0] sm:$0xff] %v1044
                  %v1046 = vld [vmem:[%s1022 + $0x58] sm:$0xff]
                  %1047 = vst [vmem:[%s1023 + $0xb0] sm:$0xff] %v1046
                  %v1048 = vld [vmem:[%s1022 + $0x60] sm:$0xff]
                  %1049 = vst [vmem:[%s1023 + $0xc0] sm:$0xff] %v1048
                  %v1050 = vld [vmem:[%s1022 + $0x68] sm:$0xff]
                  %1051 = vst [vmem:[%s1023 + $0xd0] sm:$0xff] %v1050
                  %v1052 = vld [vmem:[%s1022 + $0x70] sm:$0xff]
                  %1053 = vst [vmem:[%s1023 + $0xe0] sm:$0xff] %v1052
                  %v1054 = vld [vmem:[%s1022 + $0x78] sm:$0xff]
                  %1055 = vst [vmem:[%s1023 + $0xf0] sm:$0xff] %v1054
                $region105: #{squeeze_forward.25} parent=99 // loop_footer
                  %s1021 = sadd.s32 1, %s1017
                $region106: #{squeeze_forward.25} parent=99 // loop_footer_branch
                  %1016 = sbr.rel target = $region102
                $region107: #{squeeze_forward.25} parent=99 // loop_exit
                  _
              $region100: #{squeeze_forward.25} parent=84 // pred_fallthru
                _
              // Predicated region
              $region108: #{squeeze_forward.25} parent=84 // pred_check
                _
              $region109: #{squeeze_forward.25} parent=84 // pred_check_branch
                %1057 = sbr.rel target = $region111
              $region110: #{squeeze_forward.25} parent=84 // pred_region
                _
              $region111: #{squeeze_forward.25} parent=84 // pred_fallthru
                _
            $region85: #{squeeze_forward.25} parent=80 // pred_fallthru
              _
            // Predicated region
            $region86: #{squeeze_forward.25} parent=80 // pred_check
              _
            $region87: #{squeeze_forward.25} parent=80 // pred_check_branch
              %972 = sbr.rel target = $region89
            $region88: #{squeeze_forward.25} parent=80 // pred_region
              loop: start=0, step=1, limit=1
              $region90: #{squeeze_forward.25} parent=88 // loop_pre_header
                _
              $region91: #{squeeze_forward.25} parent=88 // loop_header
                %s975 = sphi 0, %s979
                %p976 = scmp.ge.s32.totalorder %s975, 1
                %s980 = sphi %s958, %s958
                %s981 = sphi %s966, %s966
              $region92: #{squeeze_forward.25} parent=88 // loop_header_branch
                %978 = sbr.rel (%p976) target = $region96
              $region93: #{squeeze_forward.25} parent=88 // loop_body
                %v982 = vld [vmem:[%s980] sm:$0xff]
                %983 = vst [vmem:[%s981] sm:$0xff] %v982
                %v984 = vld [vmem:[%s980 + $0x8] sm:$0xff]
                %985 = vst [vmem:[%s981 + $0x10] sm:$0xff] %v984
                %v986 = vld [vmem:[%s980 + $0x10] sm:$0xff]
                %987 = vst [vmem:[%s981 + $0x20] sm:$0xff] %v986
                %v988 = vld [vmem:[%s980 + $0x18] sm:$0xff]
                %989 = vst [vmem:[%s981 + $0x30] sm:$0xff] %v988
                %v990 = vld [vmem:[%s980 + $0x20] sm:$0xff]
                %991 = vst [vmem:[%s981 + $0x40] sm:$0xff] %v990
                %v992 = vld [vmem:[%s980 + $0x28] sm:$0xff]
                %993 = vst [vmem:[%s981 + $0x50] sm:$0xff] %v992
                %v994 = vld [vmem:[%s980 + $0x30] sm:$0xff]
                %995 = vst [vmem:[%s981 + $0x60] sm:$0xff] %v994
                %v996 = vld [vmem:[%s980 + $0x38] sm:$0xff]
                %997 = vst [vmem:[%s981 + $0x70] sm:$0xff] %v996
                %v998 = vld [vmem:[%s980 + $0x40] sm:$0xff]
                %999 = vst [vmem:[%s981 + $0x80] sm:$0xff] %v998
                %v1000 = vld [vmem:[%s980 + $0x48] sm:$0xff]
                %1001 = vst [vmem:[%s981 + $0x90] sm:$0xff] %v1000
                %v1002 = vld [vmem:[%s980 + $0x50] sm:$0xff]
                %1003 = vst [vmem:[%s981 + $0xa0] sm:$0xff] %v1002
                %v1004 = vld [vmem:[%s980 + $0x58] sm:$0xff]
                %1005 = vst [vmem:[%s981 + $0xb0] sm:$0xff] %v1004
                %v1006 = vld [vmem:[%s980 + $0x60] sm:$0xff]
                %1007 = vst [vmem:[%s981 + $0xc0] sm:$0xff] %v1006
                %v1008 = vld [vmem:[%s980 + $0x68] sm:$0xff]
                %1009 = vst [vmem:[%s981 + $0xd0] sm:$0xff] %v1008
                %v1010 = vld [vmem:[%s980 + $0x70] sm:$0xff]
                %1011 = vst [vmem:[%s981 + $0xe0] sm:$0xff] %v1010
                %v1012 = vld [vmem:[%s980 + $0x78] sm:$0xff]
                %1013 = vst [vmem:[%s981 + $0xf0] sm:$0xff] %v1012
              $region94: #{squeeze_forward.25} parent=88 // loop_footer
                %s979 = sadd.s32 1, %s975
              $region95: #{squeeze_forward.25} parent=88 // loop_footer_branch
                %974 = sbr.rel target = $region91
              $region96: #{squeeze_forward.25} parent=88 // loop_exit
                _
            $region89: #{squeeze_forward.25} parent=80 // pred_fallthru
              _
          $region81: #{squeeze_forward.25} parent=76 // pred_fallthru
            _
          %1058 = vnop
        $region77: #{squeeze_forward.25} parent=68 // pred_fallthru
          _
      $region69: #{squeeze_forward.25} parent=5 // pred_fallthru
        _
      %p1059 = scmp.le.s32.totalorder 2, %s9
      // Predicated region
      $region112: #{squeeze_forward.25} parent=5 // pred_check
        %p1060 = pneg %p1059
      $region113: #{squeeze_forward.25} parent=5 // pred_check_branch
        %1062 = sbr.rel (%p1060) target = $region115
      $region114: #{squeeze_forward.25} parent=5 // pred_region
        %s1063 = ssub.s32 %s9, 2
        // Predicated region
        $region116: #{squeeze_forward.25} parent=114 // pred_check
          %p1064 = pneg %p130
        $region117: #{squeeze_forward.25} parent=114 // pred_check_branch
          %1066 = sbr.rel (%p1064) target = $region119
        $region118: #{squeeze_forward.25} parent=114 // pred_region
          %s1067 = sand.u32 %s115, 1
          %s1068 = sand.u32 %s115, 1
          %s1069 = smul.addr %s1068, 128
          %s1070 = scalar_lea.vmem [#allocation3], %s1069
        $region119: #{squeeze_forward.25} parent=114 // pred_fallthru
          _
      $region115: #{squeeze_forward.25} parent=5 // pred_fallthru
        _
    $region6: #{squeeze_forward.25} parent=1 // loop_footer
      %s13 = sadd.s32 1, %s9
    $region7: #{squeeze_forward.25} parent=1 // loop_footer_branch
      %8 = sbr.rel target = $region3
    $region8: #{squeeze_forward.25} parent=1 // loop_exit
      _

// kernel: squeeze_forward.26
$region0: #{squeeze_forward.26}
  #allocation0 [shape = 'u32[]', space=smem, size = 0x4, offset = 0x4, fixed_abs, tag = 'smem constant byte address 0x4 - core index']
  #allocation1 [shape = 'u32[144,128]{1,0:T(1,128)}', space=vmem, size = 0x12000, scoped, tag = 'internal scratch']
  %s0 = inlined_call_operand.vmem [shape: f32[2,12,6,512], index: 0, kind: input, shape index: {}]
  %s1 = inlined_call_operand.vmem [shape: f32[2,5,5,256], index: 1, kind: output, shape index: {}]
  %s2 = sld [smem:[#allocation0]]
  $region37: #{squeeze_forward.26} parent=0
    _
  %s4 = ssub.s32 1, %s2
  %s5 = scalar_select 0, %s4, %s2
  loop: start=0, step=1, limit=4
  $region2: #{squeeze_forward.26} parent=0 // loop_pre_header
    _
  $region3: #{squeeze_forward.26} parent=0 // loop_header
    %s7 = sphi 0, %s11
    %p8 = scmp.ge.s32.totalorder %s7, 4
    %s17 = sphi 0, %s19
    %s20 = sphi 0, %s17
    %s21 = sphi 0, %s20
    %s37 = sphi 0, %s21
    %s43 = sphi 0, %s45
    %s46 = sphi 0, %s43
    %s47 = sphi 0, %s46
    %s63 = sphi 0, %s47
  $region4: #{squeeze_forward.26} parent=0 // loop_header_branch
    %10 = sbr.rel (%p8) target = $region8
  $region5: #{squeeze_forward.26} parent=0 // loop_body
    %s12 = ssub.s32 %s7, 1
    %s13 = ssub.s32 %s7, 2
    %s14 = sadd.s32 %s7, 1
    %s15 = ssub.s32 %s7, %s14
    %p16 = scmp.eq.s32.totalorder %s15, 0
    %s18 = sadd.s32 %s17, 1
    %s19 = scalar_select %p16, %s17, %s18
    %p22 = pneg %p16
    %p23 = scmp.eq.s32.totalorder %s7, 1
    %p24 = por %p22, %p23
    %p25 = scmp.ne.s32.totalorder %s17, %s20
    %p26 = scmp.eq.s32.totalorder %s7, 0
    %p27 = por %p25, %p26
    %p28 = scmp.ne.s32.totalorder %s17, %s20
    %p29 = scmp.eq.s32.totalorder %s12, 1
    %p30 = por %p28, %p29
    %p31 = scmp.ne.s32.totalorder %s20, %s21
    %p32 = scmp.eq.s32.totalorder %s12, 0
    %p33 = por %p31, %p32
    %p34 = scmp.ne.s32.totalorder %s20, %s21
    %p35 = scmp.eq.s32.totalorder %s13, 1
    %p36 = por %p34, %p35
    %p38 = scmp.ne.s32.totalorder %s21, %s37
    %p39 = scmp.eq.s32.totalorder %s13, 0
    %p40 = por %p38, %p39
    %s41 = ssub.s32 %s7, %s14
    %p42 = scmp.eq.s32.totalorder %s41, 0
    %s44 = sadd.s32 %s43, 1
    %s45 = scalar_select %p42, %s43, %s44
    %p48 = pneg %p42
    %p49 = scmp.eq.s32.totalorder %s7, 1
    %p50 = por %p48, %p49
    %p51 = scmp.ne.s32.totalorder %s43, %s46
    %p52 = scmp.eq.s32.totalorder %s7, 0
    %p53 = por %p51, %p52
    %p54 = scmp.ne.s32.totalorder %s43, %s46
    %p55 = scmp.eq.s32.totalorder %s12, 1
    %p56 = por %p54, %p55
    %p57 = scmp.ne.s32.totalorder %s46, %s47
    %p58 = scmp.eq.s32.totalorder %s12, 0
    %p59 = por %p57, %p58
    %p60 = scmp.ne.s32.totalorder %s46, %s47
    %p61 = scmp.eq.s32.totalorder %s13, 1
    %p62 = por %p60, %p61
    %p64 = scmp.ne.s32.totalorder %s47, %s63
    %p65 = scmp.eq.s32.totalorder %s13, 0
    %p66 = por %p64, %p65
    %p67 = scmp.le.s32.totalorder 1, %s7
    %p68 = scmp.lt.s32.totalorder %s7, 3
    %p69 = pnand %p67, %p68
    %p70 = pneg %p69
    // Predicated region
    $region9: #{squeeze_forward.26} parent=5 // pred_check
      _
    $region10: #{squeeze_forward.26} parent=5 // pred_check_branch
      %72 = sbr.rel (%p69) target = $region12
    $region11: #{squeeze_forward.26} parent=5 // pred_region
      %s73 = ssub.s32 %s7, 1
    $region12: #{squeeze_forward.26} parent=5 // pred_fallthru
      _
    %p74 = scmp.lt.s32.totalorder %s7, 2
    // Predicated region
    $region13: #{squeeze_forward.26} parent=5 // pred_check
      %p75 = pneg %p74
    $region14: #{squeeze_forward.26} parent=5 // pred_check_branch
      %77 = sbr.rel (%p75) target = $region16
    $region15: #{squeeze_forward.26} parent=5 // pred_region
      // Predicated region
      $region17: #{squeeze_forward.26} parent=15 // pred_check
        %p78 = pneg %p27
      $region18: #{squeeze_forward.26} parent=15 // pred_check_branch
        %80 = sbr.rel (%p78) target = $region20
      $region19: #{squeeze_forward.26} parent=15 // pred_region
        %p81 = scmp.lt.s32.totalorder %s7, 1
        %s82 = scalar_select %p81, %s7, 1
        %s83 = smul.addr %s82, 48
        %s84 = smul.addr %s83, 8
        %s85 = scalar_lea.vmem %s0, %s84
      $region20: #{squeeze_forward.26} parent=15 // pred_fallthru
        _
    $region16: #{squeeze_forward.26} parent=5 // pred_fallthru
      _
    %p86 = scmp.le.s32.totalorder 1, %s7
    %p87 = scmp.lt.s32.totalorder %s7, 3
    %p88 = pnand %p86, %p87
    %p89 = pneg %p88
    // Predicated region
    $region21: #{squeeze_forward.26} parent=5 // pred_check
      _
    $region22: #{squeeze_forward.26} parent=5 // pred_check_branch
      %91 = sbr.rel (%p88) target = $region24
    $region23: #{squeeze_forward.26} parent=5 // pred_region
      %s92 = ssub.s32 %s7, 1
      %p93 = scmp.lt.s32.totalorder %s12, 1
      %s94 = scalar_select %p93, %s12, 1
      %s95 = smul.addr %s94, 48
      %s96 = smul.addr %s95, 8
      %s97 = scalar_lea.vmem %s0, %s96
      %p98 = pneg %p33
      %p99 = pneg %p30
      %p100 = pneg %p59
      %p101 = pneg %p56
      %p102 = scmp.lt.s32.totalorder %s12, 1
      %s103 = scalar_select %p102, %s12, 1
      %s104 = smul.addr %s103, 10
      %s105 = smul.addr %s104, 8
      %s106 = scalar_lea.vmem %s1, %s105
      %p107 = scmp.lt.s32.totalorder %s12, 1
      %s108 = scalar_select %p107, %s12, 1
      %s109 = smul.addr %s108, 48
      %s110 = smul.addr %s109, 8
      %s111 = scalar_lea.vmem %s0, %s110
      %p112 = scmp.lt.s32.totalorder %s12, 1
      %s113 = scalar_select %p112, %s12, 1
      %s114 = smul.addr %s113, 10
      %s115 = smul.addr %s114, 8
      %s116 = scalar_lea.vmem %s1, %s115
      %v117 = vld [vmem:[%s111] sm:$0x3f]
      %v118 = vld [vmem:[%s111 + $0x8] sm:$0x3f]
      %v119 = vld [vmem:[%s111 + $0x10] sm:$0x3f]
      %v120 = vld [vmem:[%s111 + $0x18] sm:$0x3f]
      %v121 = vld [vmem:[%s111 + $0x20] sm:$0x3f]
      %v122 = vld [vmem:[%s111 + $0x28] sm:$0x3f]
      %v123 = vld [vmem:[%s111 + $0x30] sm:$0x3f]
      %v124 = vld [vmem:[%s111 + $0x38] sm:$0x3f]
      %v125 = vld [vmem:[%s111 + $0x40] sm:$0x3f]
      %v126 = vld [vmem:[%s111 + $0x48] sm:$0x3f]
      %v127 = vld [vmem:[%s111 + $0x50] sm:$0x3f]
      %v128 = vld [vmem:[%s111 + $0x58] sm:$0x3f]
      %v129 = vld [vmem:[%s111 + $0x60] sm:$0x3f]
      %v130 = vld [vmem:[%s111 + $0x68] sm:$0x3f]
      %v131 = vld [vmem:[%s111 + $0x70] sm:$0x3f]
      %v132 = vld [vmem:[%s111 + $0x78] sm:$0x3f]
      %v133 = vld [vmem:[%s111 + $0x80] sm:$0x3f]
      %v134 = vld [vmem:[%s111 + $0x88] sm:$0x3f]
      %v135 = vld [vmem:[%s111 + $0x90] sm:$0x3f]
      %v136 = vld [vmem:[%s111 + $0x98] sm:$0x3f]
      %v137 = vld [vmem:[%s111 + $0xa0] sm:$0x3f]
      %v138 = vld [vmem:[%s111 + $0xa8] sm:$0x3f]
      %v139 = vld [vmem:[%s111 + $0xb0] sm:$0x3f]
      %v140 = vld [vmem:[%s111 + $0xb8] sm:$0x3f]
      %v141 = vld [vmem:[%s111 + $0xc0] sm:$0x3f]
      %v142 = vld [vmem:[%s111 + $0xc8] sm:$0x3f]
      %v143 = vld [vmem:[%s111 + $0xd0] sm:$0x3f]
      %v144 = vld [vmem:[%s111 + $0xd8] sm:$0x3f]
      %v145 = vld [vmem:[%s111 + $0xe0] sm:$0x3f]
      %v146 = vld [vmem:[%s111 + $0xe8] sm:$0x3f]
      %v147 = vld [vmem:[%s111 + $0xf0] sm:$0x3f]
      %v148 = vld [vmem:[%s111 + $0xf8] sm:$0x3f]
      %v149 = vld [vmem:[%s111 + $0x100] sm:$0x3f]
      %v150 = vld [vmem:[%s111 + $0x108] sm:$0x3f]
      %v151 = vld [vmem:[%s111 + $0x110] sm:$0x3f]
      %v152 = vld [vmem:[%s111 + $0x118] sm:$0x3f]
      %v153 = vld [vmem:[%s111 + $0x120] sm:$0x3f]
      %v154 = vld [vmem:[%s111 + $0x128] sm:$0x3f]
      %v155 = vld [vmem:[%s111 + $0x130] sm:$0x3f]
      %v156 = vld [vmem:[%s111 + $0x138] sm:$0x3f]
      %v157 = vld [vmem:[%s111 + $0x140] sm:$0x3f]
      %v158 = vld [vmem:[%s111 + $0x148] sm:$0x3f]
      %v159 = vld [vmem:[%s111 + $0x150] sm:$0x3f]
      %v160 = vld [vmem:[%s111 + $0x158] sm:$0x3f]
      %v161 = vmax.f32 %v117, %v119
      %v162 = vmax.f32 %v118, %v120
      %v163 = vmax.f32 %v121, %v123
      %v164 = vmax.f32 %v122, %v124
      %v165 = vmax.f32 %v125, %v127
      %v166 = vmax.f32 %v126, %v128
      %v167 = vmax.f32 %v129, %v131
      %v168 = vmax.f32 %v130, %v132
      %v169 = vmax.f32 %v133, %v135
      %v170 = vmax.f32 %v134, %v136
      %v171 = vmax.f32 %v137, %v139
      %v172 = vmax.f32 %v138, %v140
      %v173 = vmax.f32 %v141, %v143
      %v174 = vmax.f32 %v142, %v144
      %v175 = vmax.f32 %v145, %v147
      %v176 = vmax.f32 %v146, %v148
      %v177 = vmax.f32 %v149, %v151
      %v178 = vmax.f32 %v150, %v152
      %v179 = vmax.f32 %v153, %v155
      %v180 = vmax.f32 %v154, %v156
      %v181 = vmax.f32 %v157, %v159
      %v182 = vmax.f32 %v158, %v160
      %v205 = vrot.slane %v117, 1
      %v206 = vrot.slane %v118, 1
      %v207 = vrot.slane %v121, 1
      %v208 = vrot.slane %v122, 1
      %v209 = vrot.slane %v125, 1
      %v210 = vrot.slane %v126, 1
      %v211 = vrot.slane %v129, 1
      %v212 = vrot.slane %v130, 1
      %v213 = vrot.slane %v133, 1
      %v214 = vrot.slane %v134, 1
      %v215 = vrot.slane %v137, 1
      %v216 = vrot.slane %v138, 1
      %v217 = vrot.slane %v141, 1
      %v218 = vrot.slane %v142, 1
      %v219 = vrot.slane %v145, 1
      %v220 = vrot.slane %v146, 1
      %v221 = vrot.slane %v149, 1
      %v222 = vrot.slane %v150, 1
      %v223 = vrot.slane %v153, 1
      %v224 = vrot.slane %v154, 1
      %v225 = vrot.slane %v157, 1
      %v226 = vrot.slane %v158, 1
      %v249 = vmax.f32 %v161, %v205
      %v250 = vmax.f32 %v162, %v206
      %v251 = vmax.f32 %v163, %v207
      %v252 = vmax.f32 %v164, %v208
      %v253 = vmax.f32 %v165, %v209
      %v254 = vmax.f32 %v166, %v210
      %v255 = vmax.f32 %v167, %v211
      %v256 = vmax.f32 %v168, %v212
      %v257 = vmax.f32 %v169, %v213
      %v258 = vmax.f32 %v170, %v214
      %v259 = vmax.f32 %v171, %v215
      %v260 = vmax.f32 %v172, %v216
      %v261 = vmax.f32 %v173, %v217
      %v262 = vmax.f32 %v174, %v218
      %v263 = vmax.f32 %v175, %v219
      %v264 = vmax.f32 %v176, %v220
      %v265 = vmax.f32 %v177, %v221
      %v266 = vmax.f32 %v178, %v222
      %v267 = vmax.f32 %v179, %v223
      %v268 = vmax.f32 %v180, %v224
      %v269 = vmax.f32 %v181, %v225
      %v270 = vmax.f32 %v182, %v226
      %v271 = vmax.f32 %v249, %v251
      %v272 = vmax.f32 %v250, %v252
      %v273 = vmax.f32 %v253, %v255
      %v274 = vmax.f32 %v254, %v256
      %v275 = vmax.f32 %v257, %v259
      %v276 = vmax.f32 %v258, %v260
      %v277 = vmax.f32 %v261, %v263
      %v278 = vmax.f32 %v262, %v264
      %v279 = vmax.f32 %v265, %v267
      %v280 = vmax.f32 %v266, %v268
      %v281 = vmax.f32 %v271, %v253
      %v282 = vmax.f32 %v272, %v254
      %v283 = vmax.f32 %v273, %v257
      %v284 = vmax.f32 %v274, %v258
      %v285 = vmax.f32 %v275, %v261
      %v286 = vmax.f32 %v276, %v262
      %v287 = vmax.f32 %v277, %v265
      %v288 = vmax.f32 %v278, %v266
      %v289 = vmax.f32 %v279, %v269
      %v290 = vmax.f32 %v280, %v270
      %291 = vst [vmem:[%s116] sm:$0x1f] %v281
      %292 = vst [vmem:[%s116 + $0x8] sm:$0x1f] %v282
      %293 = vst [vmem:[%s116 + $0x10] sm:$0x1f] %v283
      %294 = vst [vmem:[%s116 + $0x18] sm:$0x1f] %v284
      %295 = vst [vmem:[%s116 + $0x20] sm:$0x1f] %v285
      %296 = vst [vmem:[%s116 + $0x28] sm:$0x1f] %v286
      %297 = vst [vmem:[%s116 + $0x30] sm:$0x1f] %v287
      %298 = vst [vmem:[%s116 + $0x38] sm:$0x1f] %v288
      %299 = vst [vmem:[%s116 + $0x40] sm:$0x1f] %v289
      %300 = vst [vmem:[%s116 + $0x48] sm:$0x1f] %v290
      %p301 = scmp.lt.s32.totalorder %s12, 1
      %s302 = scalar_select %p301, %s12, 1
      %s303 = smul.addr %s302, 10
      %s304 = smul.addr %s303, 8
      %s305 = scalar_lea.vmem %s1, %s304
      // Predicated region
      $region25: #{squeeze_forward.26} parent=23 // pred_check
        %p306 = pneg %p56
      $region26: #{squeeze_forward.26} parent=23 // pred_check_branch
        %308 = sbr.rel (%p306) target = $region28
      $region27: #{squeeze_forward.26} parent=23 // pred_region
        _
      $region28: #{squeeze_forward.26} parent=23 // pred_fallthru
        _
    $region24: #{squeeze_forward.26} parent=5 // pred_fallthru
      _
    %p309 = scmp.le.s32.totalorder 2, %s7
    // Predicated region
    $region29: #{squeeze_forward.26} parent=5 // pred_check
      %p310 = pneg %p309
    $region30: #{squeeze_forward.26} parent=5 // pred_check_branch
      %312 = sbr.rel (%p310) target = $region32
    $region31: #{squeeze_forward.26} parent=5 // pred_region
      %s313 = ssub.s32 %s7, 2
      // Predicated region
      $region33: #{squeeze_forward.26} parent=31 // pred_check
        %p314 = pneg %p62
      $region34: #{squeeze_forward.26} parent=31 // pred_check_branch
        %316 = sbr.rel (%p314) target = $region36
      $region35: #{squeeze_forward.26} parent=31 // pred_region
        %p317 = scmp.lt.s32.totalorder %s13, 1
        %s318 = scalar_select %p317, %s13, 1
        %s319 = smul.addr %s318, 10
        %s320 = smul.addr %s319, 8
        %s321 = scalar_lea.vmem %s1, %s320
      $region36: #{squeeze_forward.26} parent=31 // pred_fallthru
        _
    $region32: #{squeeze_forward.26} parent=5 // pred_fallthru
      _
  $region6: #{squeeze_forward.26} parent=0 // loop_footer
    %s11 = sadd.s32 1, %s7
  $region7: #{squeeze_forward.26} parent=0 // loop_footer_branch
    %6 = sbr.rel target = $region3
  $region8: #{squeeze_forward.26} parent=0 // loop_exit
    _

// kernel: squeeze_forward.27
$region0: #{squeeze_forward.27}
  #allocation0 [shape = 'u32[]', space=smem, size = 0x4, offset = 0x4, fixed_abs, tag = 'smem constant byte address 0x4 - core index']
  #allocation1 [shape = 'u32[144,128]{1,0:T(1,128)}', space=vmem, size = 0x12000, scoped, tag = 'internal scratch']
  %s0 = inlined_call_operand.vmem [shape: bf16[50,256], index: 0, kind: input, shape index: {}]
  %s1 = inlined_call_operand.vmem [shape: bf16[256,32], index: 1, kind: input, shape index: {}]
  %s2 = inlined_call_operand.vmem [shape: f32[1,32], index: 2, kind: input, shape index: {}]
  %s3 = inlined_call_operand.vmem [shape: f32[50,32], index: 3, kind: output, shape index: {}]
  %s4 = sld [smem:[#allocation0]]
  $region22: #{squeeze_forward.27} parent=0
    _
  %s6 = ssub.s32 1, %s4
  %s7 = scalar_select 0, %s6, %s4
  // Predicated region
  $region2: #{squeeze_forward.27} parent=0 // pred_check
    _
  $region3: #{squeeze_forward.27} parent=0 // pred_check_branch
    %9 = sbr.rel (0) target = $region5
  $region4: #{squeeze_forward.27} parent=0 // pred_region
    _
  $region5: #{squeeze_forward.27} parent=0 // pred_fallthru
    _
  // Predicated region
  $region6: #{squeeze_forward.27} parent=0 // pred_check
    _
  $region7: #{squeeze_forward.27} parent=0 // pred_check_branch
    %11 = sbr.rel (0) target = $region9
  $region8: #{squeeze_forward.27} parent=0 // pred_region
    _
  $region9: #{squeeze_forward.27} parent=0 // pred_fallthru
    _
  // Predicated region
  $region10: #{squeeze_forward.27} parent=0 // pred_check
    _
  $region11: #{squeeze_forward.27} parent=0 // pred_check_branch
    %13 = sbr.rel (0) target = $region13
  $region12: #{squeeze_forward.27} parent=0 // pred_region
    _
  $region13: #{squeeze_forward.27} parent=0 // pred_fallthru
    _
  %v15 = vld [vmem:[%s0] sm:$0xff]
  %v16 = vld [vmem:[%s0 + $0x8] sm:$0xff]
  %v17 = vld [vmem:[%s0 + $0x10] sm:$0xff]
  %v18 = vld [vmem:[%s0 + $0x18] sm:$0xff]
  %v19 = vld [vmem:[%s0 + $0x20] sm:$0xff]
  %v20 = vld [vmem:[%s0 + $0x28] sm:$0xff]
  %v21 = vld [vmem:[%s0 + $0x30] sm:$0x11]
  %v22 = vld [vmem:[%s1] sm:$0xf]
  %v23 = vld [vmem:[%s1 + $0x4] sm:$0xf]
  %v24 = vld [vmem:[%s1 + $0x8] sm:$0xf]
  %v25 = vld [vmem:[%s1 + $0xc] sm:$0xf]
  %v26 = vld [vmem:[%s1 + $0x10] sm:$0xf]
  %v27 = vld [vmem:[%s1 + $0x14] sm:$0xf]
  %v28 = vld [vmem:[%s1 + $0x18] sm:$0xf]
  %v29 = vld [vmem:[%s1 + $0x1c] sm:$0xf]
  %v30 = vld [vmem:[%s1 + $0x20] sm:$0xf]
  %v31 = vld [vmem:[%s1 + $0x24] sm:$0xf]
  %v32 = vld [vmem:[%s1 + $0x28] sm:$0xf]
  %v33 = vld [vmem:[%s1 + $0x2c] sm:$0xf]
  %v34 = vld [vmem:[%s1 + $0x30] sm:$0xf]
  %v35 = vld [vmem:[%s1 + $0x34] sm:$0xf]
  %v36 = vld [vmem:[%s1 + $0x38] sm:$0xf]
  %v37 = vld [vmem:[%s1 + $0x3c] sm:$0xf]
  %v38 = vld [vmem:[%s1 + $0x40] sm:$0xf]
  %v39 = vld [vmem:[%s1 + $0x44] sm:$0xf]
  %v40 = vld [vmem:[%s1 + $0x48] sm:$0xf]
  %v41 = vld [vmem:[%s1 + $0x4c] sm:$0xf]
  %v42 = vld [vmem:[%s1 + $0x50] sm:$0xf]
  %v43 = vld [vmem:[%s1 + $0x54] sm:$0xf]
  %v44 = vld [vmem:[%s1 + $0x58] sm:$0xf]
  %v45 = vld [vmem:[%s1 + $0x5c] sm:$0xf]
  %v46 = vld [vmem:[%s1 + $0x60] sm:$0xf]
  %v47 = vld [vmem:[%s1 + $0x64] sm:$0xf]
  %v48 = vld [vmem:[%s1 + $0x68] sm:$0xf]
  %v49 = vld [vmem:[%s1 + $0x6c] sm:$0xf]
  %v50 = vld [vmem:[%s1 + $0x70] sm:$0xf]
  %v51 = vld [vmem:[%s1 + $0x74] sm:$0xf]
  %v52 = vld [vmem:[%s1 + $0x78] sm:$0xf]
  %v53 = vld [vmem:[%s1 + $0x7c] sm:$0xf]
  %v54 = vld [vmem:[%s2] sm:$0x1]
  %v56 = vlaneseq
  %v57 = vshrl.u32 %v56, 7
  %v58 = vsub.s32 0, %v57
  %v59 = vrot.slane %v54, %v58
  %v68 = vunpack.c.l.b16 %v15
  %v69 = vunpack.c.h.b16 %v15
  %v70 = vunpack.c.l.b16 %v16
  %v71 = vunpack.c.h.b16 %v16
  %v72 = vunpack.c.l.b16 %v17
  %v73 = vunpack.c.h.b16 %v17
  %v74 = vunpack.c.l.b16 %v18
  %v75 = vunpack.c.h.b16 %v18
  %v76 = vunpack.c.l.b16 %v19
  %v77 = vunpack.c.h.b16 %v19
  %v78 = vunpack.c.l.b16 %v20
  %v79 = vunpack.c.h.b16 %v20
  %v80 = vunpack.c.l.b16 %v21
  %v81 = vunpack.c.h.b16 %v21
  %v82 = vpack.c.b16 %v70, %v68
  %v83 = vpack.c.b16 %v71, %v69
  %v84 = vpack.c.b16 %v74, %v72
  %v85 = vpack.c.b16 %v75, %v73
  %v86 = vpack.c.b16 %v78, %v76
  %v87 = vpack.c.b16 %v79, %v77
  %v88 = vpack.c.b16 %v80, %v80
  %v89 = vpack.c.b16 %v81, %v81
  %v130 = vunpack.c.l.b16 %v22
  %v131 = vunpack.c.l.b16 %v23
  %v132 = vunpack.c.l.b16 %v24
  %v133 = vunpack.c.l.b16 %v25
  %v134 = vunpack.c.l.b16 %v26
  %v135 = vunpack.c.l.b16 %v27
  %v136 = vunpack.c.l.b16 %v28
  %v137 = vunpack.c.l.b16 %v29
  %v138 = vunpack.c.l.b16 %v30
  %v139 = vunpack.c.l.b16 %v31
  %v140 = vunpack.c.l.b16 %v32
  %v141 = vunpack.c.l.b16 %v33
  %v142 = vunpack.c.l.b16 %v34
  %v143 = vunpack.c.l.b16 %v35
  %v144 = vunpack.c.l.b16 %v36
  %v145 = vunpack.c.l.b16 %v37
  %v146 = vunpack.c.l.b16 %v38
  %v147 = vunpack.c.l.b16 %v39
  %v148 = vunpack.c.l.b16 %v40
  %v149 = vunpack.c.l.b16 %v41
  %v150 = vunpack.c.l.b16 %v42
  %v151 = vunpack.c.l.b16 %v43
  %v152 = vunpack.c.l.b16 %v44
  %v153 = vunpack.c.l.b16 %v45
  %v154 = vunpack.c.l.b16 %v46
  %v155 = vunpack.c.l.b16 %v47
  %v156 = vunpack.c.l.b16 %v48
  %v157 = vunpack.c.l.b16 %v49
  %v158 = vunpack.c.l.b16 %v50
  %v159 = vunpack.c.l.b16 %v51
  %v160 = vunpack.c.l.b16 %v52
  %v161 = vunpack.c.l.b16 %v53
  %v162 = vpack.c.b16 %v131, %v130
  %v163 = vpack.c.b16 %v133, %v132
  %v164 = vpack.c.b16 %v135, %v134
  %v165 = vpack.c.b16 %v137, %v136
  %v166 = vpack.c.b16 %v139, %v138
  %v167 = vpack.c.b16 %v141, %v140
  %v168 = vpack.c.b16 %v143, %v142
  %v169 = vpack.c.b16 %v145, %v144
  %v170 = vpack.c.b16 %v147, %v146
  %v171 = vpack.c.b16 %v149, %v148
  %v172 = vpack.c.b16 %v151, %v150
  %v173 = vpack.c.b16 %v153, %v152
  %v174 = vpack.c.b16 %v155, %v154
  %v175 = vpack.c.b16 %v157, %v156
  %v176 = vpack.c.b16 %v159, %v158
  %v177 = vpack.c.b16 %v161, %v160
  %194 = vmatprep.subr.bf16.mxu0 0
  %195 = vmatpush1.bf16.msra.mxu0 %v162
  %196 = vmatprep.subr.bf16.mxu0 0
  %197 = vmatpush1.bf16.msra.mxu0 %v163
  %198 = vmatprep.subr.bf16.mxu0 0
  %199 = vmatpush1.bf16.msra.mxu0 %v164
  %200 = vmatprep.subr.bf16.mxu0 0
  %201 = vmatpush1.bf16.msra.mxu0 %v165
  %202 = vmatprep.subr.bf16.mxu0 0
  %203 = vmatpush1.bf16.msra.mxu0 %v166
  %204 = vmatprep.subr.bf16.mxu0 0
  %205 = vmatpush1.bf16.msra.mxu0 %v167
  %206 = vmatprep.subr.bf16.mxu0 0
  %207 = vmatpush1.bf16.msra.mxu0 %v168
  %208 = vmatprep.subr.bf16.mxu0 0
  %209 = vmatpush1.bf16.msra.mxu0 %v169
  %210 = vmatprep.subr.bf16.mxu0 0
  %211 = vmatpush1.bf16.msra.mxu0 %v170
  %212 = vmatprep.subr.bf16.mxu0 0
  %213 = vmatpush1.bf16.msra.mxu0 %v171
  %214 = vmatprep.subr.bf16.mxu0 0
  %215 = vmatpush1.bf16.msra.mxu0 %v172
  %216 = vmatprep.subr.bf16.mxu0 0
  %217 = vmatpush1.bf16.msra.mxu0 %v173
  %218 = vmatprep.subr.bf16.mxu0 0
  %219 = vmatpush1.bf16.msra.mxu0 %v174
  %220 = vmatprep.subr.bf16.mxu0 0
  %221 = vmatpush1.bf16.msra.mxu0 %v175
  %222 = vmatprep.subr.bf16.mxu0 0
  %223 = vmatpush1.bf16.msra.mxu0 %v176
  %224 = vmatprep.subr.bf16.mxu0 0
  %225 = vmatpush1.bf16.msra.mxu0 %v177
  %226 = vmatprep.mubr.bf16.mxu0 %v83
  %227 = vmatmul.mubr.bf16.gmra.mrb[0].mxu0 %v82
  %v228 = vpop.f32.mrb[0].mxu0
  %v229 = vadd.f32 %v59, %v228
  %v230 = vpop.f32.mrb[0].mxu0
  %v231 = vpop.f32.mrb[0].mxu0
  %v232 = vadd.f32 %v59, %v231
  %v233 = vpop.f32.mrb[0].mxu0
  %234 = vmatprep.mubr.bf16.mxu0 %v85
  %235 = vmatmul.mubr.bf16.gmra.mrb[0].mxu0 %v84
  %v236 = vpop.f32.mrb[0].mxu0
  %v237 = vadd.f32 %v59, %v236
  %v238 = vpop.f32.mrb[0].mxu0
  %v239 = vpop.f32.mrb[0].mxu0
  %v240 = vadd.f32 %v59, %v239
  %v241 = vpop.f32.mrb[0].mxu0
  %242 = vmatprep.mubr.bf16.mxu0 %v87
  %243 = vmatmul.mubr.bf16.gmra.mrb[0].mxu0 %v86
  %v244 = vpop.f32.mrb[0].mxu0
  %v245 = vadd.f32 %v59, %v244
  %v246 = vpop.f32.mrb[0].mxu0
  %v247 = vpop.f32.mrb[0].mxu0
  %v248 = vadd.f32 %v59, %v247
  %v249 = vpop.f32.mrb[0].mxu0
  %250 = vmatprep.mubr.bf16.mxu0 %v89
  %251 = vmatmul.mubr.bf16.gmra.mrb[0].mxu0 %v88
  %v252 = vpop.f32.mrb[0].mxu0
  %v253 = vadd.f32 %v59, %v252
  %v254 = vpop.f32.mrb[0].mxu0
  %v255 = vpop.f32.mrb[0].mxu0
  %v256 = vpop.f32.mrb[0].mxu0
  %257 = vdwg.mxu0
  %v258 = vmax.f32 %v229, 0.0
  %v259 = vmax.f32 %v232, 0.0
  %v260 = vmax.f32 %v237, 0.0
  %v261 = vmax.f32 %v240, 0.0
  %v262 = vmax.f32 %v245, 0.0
  %v263 = vmax.f32 %v248, 0.0
  %v264 = vmax.f32 %v253, 0.0
  %vm265 = vcmask 261120
  %266 = vst.msk [vmem:[%s3] sm:$0xff] %vm265, %v258
  %267 = vst.msk [vmem:[%s3 + $0x8] sm:$0xff] %vm265, %v259
  %268 = vst.msk [vmem:[%s3 + $0x10] sm:$0xff] %vm265, %v260
  %269 = vst.msk [vmem:[%s3 + $0x18] sm:$0xff] %vm265, %v261
  %270 = vst.msk [vmem:[%s3 + $0x20] sm:$0xff] %vm265, %v262
  %271 = vst.msk [vmem:[%s3 + $0x28] sm:$0xff] %vm265, %v263
  %vm272 = vcmask 254976
  %273 = vst.msk [vmem:[%s3 + $0x30] sm:$0x3] %vm272, %v264
  // Predicated region
  $region14: #{squeeze_forward.27} parent=0 // pred_check
    _
  $region15: #{squeeze_forward.27} parent=0 // pred_check_branch
    %275 = sbr.rel (0) target = $region17
  $region16: #{squeeze_forward.27} parent=0 // pred_region
    _
  $region17: #{squeeze_forward.27} parent=0 // pred_fallthru
    _
  // Predicated region
  $region18: #{squeeze_forward.27} parent=0 // pred_check
    _
  $region19: #{squeeze_forward.27} parent=0 // pred_check_branch
    %277 = sbr.rel (0) target = $region21
  $region20: #{squeeze_forward.27} parent=0 // pred_region
    _
  $region21: #{squeeze_forward.27} parent=0 // pred_fallthru
    _

// kernel: squeeze_forward.28
$region0: #{squeeze_forward.28}
  #allocation0 [shape = 'u32[]', space=smem, size = 0x4, offset = 0x4, fixed_abs, tag = 'smem constant byte address 0x4 - core index']
  #allocation1 [shape = 'u32[144,128]{1,0:T(1,128)}', space=vmem, size = 0x12000, scoped, tag = 'internal scratch']
  %s0 = inlined_call_operand.vmem [shape: bf16[50,288], index: 0, kind: input, shape index: {}]
  %s1 = inlined_call_operand.vmem [shape: bf16[288,256], index: 1, kind: input, shape index: {}]
  %s2 = inlined_call_operand.vmem [shape: f32[1,256], index: 2, kind: input, shape index: {}]
  %s3 = inlined_call_operand.vmem [shape: f32[50,256], index: 3, kind: output, shape index: {}]
  %s4 = sld [smem:[#allocation0]]
  $region120: #{squeeze_forward.28} parent=0
    _
  %s6 = ssub.s32 1, %s4
  %s7 = scalar_select 0, %s6, %s4
  $region1: #{squeeze_forward.28} parent=0
    #allocation2 [shape = 'u8[147456]{0}', space=vmem, size = 0x24000, scoped, tag = 'input window, operand 1']
    #allocation3 [shape = 'u8[57344]{0}', space=vmem, size = 0xe000, scoped, tag = 'output window, operand 0']
    loop: start=0, step=1, limit=4
    $region2: #{squeeze_forward.28} parent=1 // loop_pre_header
      _
    $region3: #{squeeze_forward.28} parent=1 // loop_header
      %s9 = sphi 0, %s13
      %p10 = scmp.ge.s32.totalorder %s9, 4
      %s16 = sphi 0, %s28
      %s17 = sphi 0, %s24
      %s18 = sphi 0, %s16
      %s19 = sphi 0, %s17
      %s20 = sphi 0, %s18
      %s21 = sphi 0, %s19
      %s31 = sphi 0, %s33
      %s34 = sphi 0, %s31
      %s35 = sphi 0, %s34
      %s51 = sphi 0, %s35
      %s57 = sphi 0, %s59
      %s60 = sphi 0, %s57
      %s61 = sphi 0, %s60
      %s77 = sphi 0, %s61
      %s83 = sphi 0, %s85
      %s86 = sphi 0, %s83
      %s87 = sphi 0, %s86
      %s103 = sphi 0, %s87
      %s111 = sphi 0, %s113
      %s114 = sphi 0, %s111
      %s115 = sphi 0, %s114
      %s131 = sphi 0, %s115
    $region4: #{squeeze_forward.28} parent=1 // loop_header_branch
      %12 = sbr.rel (%p10) target = $region8
    $region5: #{squeeze_forward.28} parent=1 // loop_body
      %s14 = ssub.s32 %s9, 1
      %s15 = ssub.s32 %s9, 2
      %s22 = sadd.s32 1, %s17
      %p23 = scmp.ge.s32.totalorder %s22, 2
      %s24 = scalar_select %p23, 0, %s22
      %s25 = sadd.s32 1, %s16
      %s26 = scalar_select %p23, %s25, %s16
      %p27 = scmp.ge.s32.totalorder %s26, 1
      %s28 = scalar_select %p27, 0, %s26
      %s29 = ssub.s32 %s16, %s28
      %p30 = scmp.eq.s32.totalorder %s29, 0
      %s32 = sadd.s32 %s31, 1
      %s33 = scalar_select %p30, %s31, %s32
      %p36 = pneg %p30
      %p37 = scmp.eq.s32.totalorder %s9, 1
      %p38 = por %p36, %p37
      %p39 = scmp.ne.s32.totalorder %s31, %s34
      %p40 = scmp.eq.s32.totalorder %s9, 0
      %p41 = por %p39, %p40
      %p42 = scmp.ne.s32.totalorder %s31, %s34
      %p43 = scmp.eq.s32.totalorder %s14, 1
      %p44 = por %p42, %p43
      %p45 = scmp.ne.s32.totalorder %s34, %s35
      %p46 = scmp.eq.s32.totalorder %s14, 0
      %p47 = por %p45, %p46
      %p48 = scmp.ne.s32.totalorder %s34, %s35
      %p49 = scmp.eq.s32.totalorder %s15, 1
      %p50 = por %p48, %p49
      %p52 = scmp.ne.s32.totalorder %s35, %s51
      %p53 = scmp.eq.s32.totalorder %s15, 0
      %p54 = por %p52, %p53
      %s55 = ssub.s32 %s17, %s24
      %p56 = scmp.eq.s32.totalorder %s55, 0
      %s58 = sadd.s32 %s57, 1
      %s59 = scalar_select %p56, %s57, %s58
      %p62 = pneg %p56
      %p63 = scmp.eq.s32.totalorder %s9, 1
      %p64 = por %p62, %p63
      %p65 = scmp.ne.s32.totalorder %s57, %s60
      %p66 = scmp.eq.s32.totalorder %s9, 0
      %p67 = por %p65, %p66
      %p68 = scmp.ne.s32.totalorder %s57, %s60
      %p69 = scmp.eq.s32.totalorder %s14, 1
      %p70 = por %p68, %p69
      %p71 = scmp.ne.s32.totalorder %s60, %s61
      %p72 = scmp.eq.s32.totalorder %s14, 0
      %p73 = por %p71, %p72
      %p74 = scmp.ne.s32.totalorder %s60, %s61
      %p75 = scmp.eq.s32.totalorder %s15, 1
      %p76 = por %p74, %p75
      %p78 = scmp.ne.s32.totalorder %s61, %s77
      %p79 = scmp.eq.s32.totalorder %s15, 0
      %p80 = por %p78, %p79
      %s81 = ssub.s32 %s17, %s24
      %p82 = scmp.eq.s32.totalorder %s81, 0
      %s84 = sadd.s32 %s83, 1
      %s85 = scalar_select %p82, %s83, %s84
      %p88 = pneg %p82
      %p89 = scmp.eq.s32.totalorder %s9, 1
      %p90 = por %p88, %p89
      %p91 = scmp.ne.s32.totalorder %s83, %s86
      %p92 = scmp.eq.s32.totalorder %s9, 0
      %p93 = por %p91, %p92
      %p94 = scmp.ne.s32.totalorder %s83, %s86
      %p95 = scmp.eq.s32.totalorder %s14, 1
      %p96 = por %p94, %p95
      %p97 = scmp.ne.s32.totalorder %s86, %s87
      %p98 = scmp.eq.s32.totalorder %s14, 0
      %p99 = por %p97, %p98
      %p100 = scmp.ne.s32.totalorder %s86, %s87
      %p101 = scmp.eq.s32.totalorder %s15, 1
      %p102 = por %p100, %p101
      %p104 = scmp.ne.s32.totalorder %s87, %s103
      %p105 = scmp.eq.s32.totalorder %s15, 0
      %p106 = por %p104, %p105
      %s107 = ssub.s32 %s16, %s28
      %s108 = ssub.s32 %s17, %s24
      %s109 = sor.u32 %s107, %s108
      %p110 = scmp.eq.s32.totalorder %s109, 0
      %s112 = sadd.s32 %s111, 1
      %s113 = scalar_select %p110, %s111, %s112
      %p116 = pneg %p110
      %p117 = scmp.eq.s32.totalorder %s9, 1
      %p118 = por %p116, %p117
      %p119 = scmp.ne.s32.totalorder %s111, %s114
      %p120 = scmp.eq.s32.totalorder %s9, 0
      %p121 = por %p119, %p120
      %p122 = scmp.ne.s32.totalorder %s111, %s114
      %p123 = scmp.eq.s32.totalorder %s14, 1
      %p124 = por %p122, %p123
      %p125 = scmp.ne.s32.totalorder %s114, %s115
      %p126 = scmp.eq.s32.totalorder %s14, 0
      %p127 = por %p125, %p126
      %p128 = scmp.ne.s32.totalorder %s114, %s115
      %p129 = scmp.eq.s32.totalorder %s15, 1
      %p130 = por %p128, %p129
      %p132 = scmp.ne.s32.totalorder %s115, %s131
      %p133 = scmp.eq.s32.totalorder %s15, 0
      %p134 = por %p132, %p133
      %p135 = scmp.le.s32.totalorder 1, %s9
      %p136 = scmp.lt.s32.totalorder %s9, 3
      %p137 = pnand %p135, %p136
      %p138 = pneg %p137
      // Predicated region
      $region9: #{squeeze_forward.28} parent=5 // pred_check
        _
      $region10: #{squeeze_forward.28} parent=5 // pred_check_branch
        %140 = sbr.rel (%p137) target = $region12
      $region11: #{squeeze_forward.28} parent=5 // pred_region
        %s141 = ssub.s32 %s9, 1
        // Predicated region
        $region13: #{squeeze_forward.28} parent=11 // pred_check
          %p142 = pneg %p47
        $region14: #{squeeze_forward.28} parent=11 // pred_check_branch
          %144 = sbr.rel (%p142) target = $region16
        $region15: #{squeeze_forward.28} parent=11 // pred_region
          %s145 = smul.u32 7, %s18
          %p146 = scmp.lt.s32.totalorder %s145, 6
          %s147 = scalar_select %p146, %s145, 6
          %s148 = smul.addr %s147, 3
          %s149 = smul.addr %s148, 4
          %s150 = scalar_lea.vmem %s0, %s149
          %s151 = smul.u32 7, %s18
        $region16: #{squeeze_forward.28} parent=11 // pred_fallthru
          _
      $region12: #{squeeze_forward.28} parent=5 // pred_fallthru
        _
      %p152 = scmp.lt.s32.totalorder %s9, 2
      // Predicated region
      $region17: #{squeeze_forward.28} parent=5 // pred_check
        %p153 = pneg %p152
      $region18: #{squeeze_forward.28} parent=5 // pred_check_branch
        %155 = sbr.rel (%p153) target = $region20
      $region19: #{squeeze_forward.28} parent=5 // pred_region
        // Predicated region
        $region21: #{squeeze_forward.28} parent=19 // pred_check
          %p156 = pneg %p67
        $region22: #{squeeze_forward.28} parent=19 // pred_check_branch
          %158 = sbr.rel (%p156) target = $region24
        $region23: #{squeeze_forward.28} parent=19 // pred_region
          %s159 = sand.u32 %s57, 1
          %s160 = sand.u32 %s57, 1
          %s161 = smul.addr %s160, 144
          %s162 = scalar_lea.vmem [#allocation2], %s161
          %s163 = smul.addr %s17, 4
          %s164 = scalar_lea.vmem %s1, %s163
          // Predicated region
          $region25: #{squeeze_forward.28} parent=23 // pred_check
            _
          $region26: #{squeeze_forward.28} parent=23 // pred_check_branch
            %166 = sbr.rel (0) target = $region28
          $region27: #{squeeze_forward.28} parent=23 // pred_region
            // Predicated region
            $region29: #{squeeze_forward.28} parent=27 // pred_check
              _
            $region30: #{squeeze_forward.28} parent=27 // pred_check_branch
              %168 = sbr.rel target = $region32
            $region31: #{squeeze_forward.28} parent=27 // pred_region
              // Predicated region
              $region44: #{squeeze_forward.28} parent=31 // pred_check
                _
              $region45: #{squeeze_forward.28} parent=31 // pred_check_branch
                %253 = sbr.rel (0) target = $region47
              $region46: #{squeeze_forward.28} parent=31 // pred_region
                loop: start=0, step=1, limit=1
                $region48: #{squeeze_forward.28} parent=46 // loop_pre_header
                  _
                $region49: #{squeeze_forward.28} parent=46 // loop_header
                  %s255 = sphi 0, %s259
                  %p256 = scmp.ge.s32.totalorder %s255, 1
                  %s260 = sphi %s164, %s164
                  %s261 = sphi %s162, %s162
                $region50: #{squeeze_forward.28} parent=46 // loop_header_branch
                  %258 = sbr.rel (%p256) target = $region54
                $region51: #{squeeze_forward.28} parent=46 // loop_body
                  _
                $region52: #{squeeze_forward.28} parent=46 // loop_footer
                  %s259 = sadd.s32 1, %s255
                $region53: #{squeeze_forward.28} parent=46 // loop_footer_branch
                  %254 = sbr.rel target = $region49
                $region54: #{squeeze_forward.28} parent=46 // loop_exit
                  _
                loop: start=0, step=1, limit=1
                $region55: #{squeeze_forward.28} parent=46 // loop_pre_header
                  _
                $region56: #{squeeze_forward.28} parent=46 // loop_header
                  %s264 = sphi 0, %s268
                  %p265 = scmp.ge.s32.totalorder %s264, 1
                  %s269 = sphi %s164, %s164
                  %s270 = sphi %s162, %s162
                $region57: #{squeeze_forward.28} parent=46 // loop_header_branch
                  %267 = sbr.rel (%p265) target = $region61
                $region58: #{squeeze_forward.28} parent=46 // loop_body
                  %v271 = vld [vmem:[%s269] sm:$0xf]
                  %272 = vst [vmem:[%s270] sm:$0xf] %v271
                  %v273 = vld [vmem:[%s269 + $0x8] sm:$0xf]
                  %274 = vst [vmem:[%s270 + $0x4] sm:$0xf] %v273
                  %v275 = vld [vmem:[%s269 + $0x10] sm:$0xf]
                  %276 = vst [vmem:[%s270 + $0x8] sm:$0xf] %v275
                  %v277 = vld [vmem:[%s269 + $0x18] sm:$0xf]
                  %278 = vst [vmem:[%s270 + $0xc] sm:$0xf] %v277
                  %v279 = vld [vmem:[%s269 + $0x20] sm:$0xf]
                  %280 = vst [vmem:[%s270 + $0x10] sm:$0xf] %v279
                  %v281 = vld [vmem:[%s269 + $0x28] sm:$0xf]
                  %282 = vst [vmem:[%s270 + $0x14] sm:$0xf] %v281
                  %v283 = vld [vmem:[%s269 + $0x30] sm:$0xf]
                  %284 = vst [vmem:[%s270 + $0x18] sm:$0xf] %v283
                  %v285 = vld [vmem:[%s269 + $0x38] sm:$0xf]
                  %286 = vst [vmem:[%s270 + $0x1c] sm:$0xf] %v285
                  %v287 = vld [vmem:[%s269 + $0x40] sm:$0xf]
                  %288 = vst [vmem:[%s270 + $0x20] sm:$0xf] %v287
                  %v289 = vld [vmem:[%s269 + $0x48] sm:$0xf]
                  %290 = vst [vmem:[%s270 + $0x24] sm:$0xf] %v289
                  %v291 = vld [vmem:[%s269 + $0x50] sm:$0xf]
                  %292 = vst [vmem:[%s270 + $0x28] sm:$0xf] %v291
                  %v293 = vld [vmem:[%s269 + $0x58] sm:$0xf]
                  %294 = vst [vmem:[%s270 + $0x2c] sm:$0xf] %v293
                  %v295 = vld [vmem:[%s269 + $0x60] sm:$0xf]
                  %296 = vst [vmem:[%s270 + $0x30] sm:$0xf] %v295
                  %v297 = vld [vmem:[%s269 + $0x68] sm:$0xf]
                  %298 = vst [vmem:[%s270 + $0x34] sm:$0xf] %v297
                  %v299 = vld [vmem:[%s269 + $0x70] sm:$0xf]
                  %300 = vst [vmem:[%s270 + $0x38] sm:$0xf] %v299
                  %v301 = vld [vmem:[%s269 + $0x78] sm:$0xf]
                  %302 = vst [vmem:[%s270 + $0x3c] sm:$0xf] %v301
                  %v303 = vld [vmem:[%s269 + $0x80] sm:$0xf]
                  %304 = vst [vmem:[%s270 + $0x40] sm:$0xf] %v303
                  %v305 = vld [vmem:[%s269 + $0x88] sm:$0xf]
                  %306 = vst [vmem:[%s270 + $0x44] sm:$0xf] %v305
                  %v307 = vld [vmem:[%s269 + $0x90] sm:$0xf]
                  %308 = vst [vmem:[%s270 + $0x48] sm:$0xf] %v307
                  %v309 = vld [vmem:[%s269 + $0x98] sm:$0xf]
                  %310 = vst [vmem:[%s270 + $0x4c] sm:$0xf] %v309
                  %v311 = vld [vmem:[%s269 + $0xa0] sm:$0xf]
                  %312 = vst [vmem:[%s270 + $0x50] sm:$0xf] %v311
                  %v313 = vld [vmem:[%s269 + $0xa8] sm:$0xf]
                  %314 = vst [vmem:[%s270 + $0x54] sm:$0xf] %v313
                  %v315 = vld [vmem:[%s269 + $0xb0] sm:$0xf]
                  %316 = vst [vmem:[%s270 + $0x58] sm:$0xf] %v315
                  %v317 = vld [vmem:[%s269 + $0xb8] sm:$0xf]
                  %318 = vst [vmem:[%s270 + $0x5c] sm:$0xf] %v317
                  %v319 = vld [vmem:[%s269 + $0xc0] sm:$0xf]
                  %320 = vst [vmem:[%s270 + $0x60] sm:$0xf] %v319
                  %v321 = vld [vmem:[%s269 + $0xc8] sm:$0xf]
                  %322 = vst [vmem:[%s270 + $0x64] sm:$0xf] %v321
                  %v323 = vld [vmem:[%s269 + $0xd0] sm:$0xf]
                  %324 = vst [vmem:[%s270 + $0x68] sm:$0xf] %v323
                  %v325 = vld [vmem:[%s269 + $0xd8] sm:$0xf]
                  %326 = vst [vmem:[%s270 + $0x6c] sm:$0xf] %v325
                  %v327 = vld [vmem:[%s269 + $0xe0] sm:$0xf]
                  %328 = vst [vmem:[%s270 + $0x70] sm:$0xf] %v327
                  %v329 = vld [vmem:[%s269 + $0xe8] sm:$0xf]
                  %330 = vst [vmem:[%s270 + $0x74] sm:$0xf] %v329
                  %v331 = vld [vmem:[%s269 + $0xf0] sm:$0xf]
                  %332 = vst [vmem:[%s270 + $0x78] sm:$0xf] %v331
                  %v333 = vld [vmem:[%s269 + $0xf8] sm:$0xf]
                  %334 = vst [vmem:[%s270 + $0x7c] sm:$0xf] %v333
                  %v335 = vld [vmem:[%s269 + $0x100] sm:$0xf]
                  %336 = vst [vmem:[%s270 + $0x80] sm:$0xf] %v335
                  %v337 = vld [vmem:[%s269 + $0x108] sm:$0xf]
                  %338 = vst [vmem:[%s270 + $0x84] sm:$0xf] %v337
                  %v339 = vld [vmem:[%s269 + $0x110] sm:$0xf]
                  %340 = vst [vmem:[%s270 + $0x88] sm:$0xf] %v339
                  %v341 = vld [vmem:[%s269 + $0x118] sm:$0xf]
                  %342 = vst [vmem:[%s270 + $0x8c] sm:$0xf] %v341
                $region59: #{squeeze_forward.28} parent=46 // loop_footer
                  %s268 = sadd.s32 1, %s264
                $region60: #{squeeze_forward.28} parent=46 // loop_footer_branch
                  %263 = sbr.rel target = $region56
                $region61: #{squeeze_forward.28} parent=46 // loop_exit
                  _
              $region47: #{squeeze_forward.28} parent=31 // pred_fallthru
                _
            $region32: #{squeeze_forward.28} parent=27 // pred_fallthru
              _
            // Predicated region
            $region33: #{squeeze_forward.28} parent=27 // pred_check
              _
            $region34: #{squeeze_forward.28} parent=27 // pred_check_branch
              %170 = sbr.rel (0) target = $region36
            $region35: #{squeeze_forward.28} parent=27 // pred_region
              loop: start=0, step=1, limit=1
              $region37: #{squeeze_forward.28} parent=35 // loop_pre_header
                _
              $region38: #{squeeze_forward.28} parent=35 // loop_header
                %s173 = sphi 0, %s177
                %p174 = scmp.ge.s32.totalorder %s173, 1
                %s178 = sphi %s164, %s164
                %s179 = sphi %s162, %s162
              $region39: #{squeeze_forward.28} parent=35 // loop_header_branch
                %176 = sbr.rel (%p174) target = $region43
              $region40: #{squeeze_forward.28} parent=35 // loop_body
                %v180 = vld [vmem:[%s178] sm:$0xf]
                %181 = vst [vmem:[%s179] sm:$0xf] %v180
                %v182 = vld [vmem:[%s178 + $0x8] sm:$0xf]
                %183 = vst [vmem:[%s179 + $0x4] sm:$0xf] %v182
                %v184 = vld [vmem:[%s178 + $0x10] sm:$0xf]
                %185 = vst [vmem:[%s179 + $0x8] sm:$0xf] %v184
                %v186 = vld [vmem:[%s178 + $0x18] sm:$0xf]
                %187 = vst [vmem:[%s179 + $0xc] sm:$0xf] %v186
                %v188 = vld [vmem:[%s178 + $0x20] sm:$0xf]
                %189 = vst [vmem:[%s179 + $0x10] sm:$0xf] %v188
                %v190 = vld [vmem:[%s178 + $0x28] sm:$0xf]
                %191 = vst [vmem:[%s179 + $0x14] sm:$0xf] %v190
                %v192 = vld [vmem:[%s178 + $0x30] sm:$0xf]
                %193 = vst [vmem:[%s179 + $0x18] sm:$0xf] %v192
                %v194 = vld [vmem:[%s178 + $0x38] sm:$0xf]
                %195 = vst [vmem:[%s179 + $0x1c] sm:$0xf] %v194
                %v196 = vld [vmem:[%s178 + $0x40] sm:$0xf]
                %197 = vst [vmem:[%s179 + $0x20] sm:$0xf] %v196
                %v198 = vld [vmem:[%s178 + $0x48] sm:$0xf]
                %199 = vst [vmem:[%s179 + $0x24] sm:$0xf] %v198
                %v200 = vld [vmem:[%s178 + $0x50] sm:$0xf]
                %201 = vst [vmem:[%s179 + $0x28] sm:$0xf] %v200
                %v202 = vld [vmem:[%s178 + $0x58] sm:$0xf]
                %203 = vst [vmem:[%s179 + $0x2c] sm:$0xf] %v202
                %v204 = vld [vmem:[%s178 + $0x60] sm:$0xf]
                %205 = vst [vmem:[%s179 + $0x30] sm:$0xf] %v204
                %v206 = vld [vmem:[%s178 + $0x68] sm:$0xf]
                %207 = vst [vmem:[%s179 + $0x34] sm:$0xf] %v206
                %v208 = vld [vmem:[%s178 + $0x70] sm:$0xf]
                %209 = vst [vmem:[%s179 + $0x38] sm:$0xf] %v208
                %v210 = vld [vmem:[%s178 + $0x78] sm:$0xf]
                %211 = vst [vmem:[%s179 + $0x3c] sm:$0xf] %v210
                %v212 = vld [vmem:[%s178 + $0x80] sm:$0xf]
                %213 = vst [vmem:[%s179 + $0x40] sm:$0xf] %v212
                %v214 = vld [vmem:[%s178 + $0x88] sm:$0xf]
                %215 = vst [vmem:[%s179 + $0x44] sm:$0xf] %v214
                %v216 = vld [vmem:[%s178 + $0x90] sm:$0xf]
                %217 = vst [vmem:[%s179 + $0x48] sm:$0xf] %v216
                %v218 = vld [vmem:[%s178 + $0x98] sm:$0xf]
                %219 = vst [vmem:[%s179 + $0x4c] sm:$0xf] %v218
                %v220 = vld [vmem:[%s178 + $0xa0] sm:$0xf]
                %221 = vst [vmem:[%s179 + $0x50] sm:$0xf] %v220
                %v222 = vld [vmem:[%s178 + $0xa8] sm:$0xf]
                %223 = vst [vmem:[%s179 + $0x54] sm:$0xf] %v222
                %v224 = vld [vmem:[%s178 + $0xb0] sm:$0xf]
                %225 = vst [vmem:[%s179 + $0x58] sm:$0xf] %v224
                %v226 = vld [vmem:[%s178 + $0xb8] sm:$0xf]
                %227 = vst [vmem:[%s179 + $0x5c] sm:$0xf] %v226
                %v228 = vld [vmem:[%s178 + $0xc0] sm:$0xf]
                %229 = vst [vmem:[%s179 + $0x60] sm:$0xf] %v228
                %v230 = vld [vmem:[%s178 + $0xc8] sm:$0xf]
                %231 = vst [vmem:[%s179 + $0x64] sm:$0xf] %v230
                %v232 = vld [vmem:[%s178 + $0xd0] sm:$0xf]
                %233 = vst [vmem:[%s179 + $0x68] sm:$0xf] %v232
                %v234 = vld [vmem:[%s178 + $0xd8] sm:$0xf]
                %235 = vst [vmem:[%s179 + $0x6c] sm:$0xf] %v234
                %v236 = vld [vmem:[%s178 + $0xe0] sm:$0xf]
                %237 = vst [vmem:[%s179 + $0x70] sm:$0xf] %v236
                %v238 = vld [vmem:[%s178 + $0xe8] sm:$0xf]
                %239 = vst [vmem:[%s179 + $0x74] sm:$0xf] %v238
                %v240 = vld [vmem:[%s178 + $0xf0] sm:$0xf]
                %241 = vst [vmem:[%s179 + $0x78] sm:$0xf] %v240
                %v242 = vld [vmem:[%s178 + $0xf8] sm:$0xf]
                %243 = vst [vmem:[%s179 + $0x7c] sm:$0xf] %v242
                %v244 = vld [vmem:[%s178 + $0x100] sm:$0xf]
                %245 = vst [vmem:[%s179 + $0x80] sm:$0xf] %v244
                %v246 = vld [vmem:[%s178 + $0x108] sm:$0xf]
                %247 = vst [vmem:[%s179 + $0x84] sm:$0xf] %v246
                %v248 = vld [vmem:[%s178 + $0x110] sm:$0xf]
                %249 = vst [vmem:[%s179 + $0x88] sm:$0xf] %v248
                %v250 = vld [vmem:[%s178 + $0x118] sm:$0xf]
                %251 = vst [vmem:[%s179 + $0x8c] sm:$0xf] %v250
              $region41: #{squeeze_forward.28} parent=35 // loop_footer
                %s177 = sadd.s32 1, %s173
              $region42: #{squeeze_forward.28} parent=35 // loop_footer_branch
                %172 = sbr.rel target = $region38
              $region43: #{squeeze_forward.28} parent=35 // loop_exit
                _
            $region36: #{squeeze_forward.28} parent=27 // pred_fallthru
              _
          $region28: #{squeeze_forward.28} parent=23 // pred_fallthru
            _
          %343 = vnop
        $region24: #{squeeze_forward.28} parent=19 // pred_fallthru
          _
        // Predicated region
        $region62: #{squeeze_forward.28} parent=19 // pred_check
          %p344 = pneg %p93
        $region63: #{squeeze_forward.28} parent=19 // pred_check_branch
          %346 = sbr.rel (%p344) target = $region65
        $region64: #{squeeze_forward.28} parent=19 // pred_region
          %p347 = scmp.lt.s32.totalorder %s17, 1
          %s348 = scalar_select %p347, %s17, 1
          %s349 = scalar_lea.vmem %s2, %s348
        $region65: #{squeeze_forward.28} parent=19 // pred_fallthru
          _
      $region20: #{squeeze_forward.28} parent=5 // pred_fallthru
        _
      %p350 = scmp.le.s32.totalorder 1, %s9
      %p351 = scmp.lt.s32.totalorder %s9, 3
      %p352 = pnand %p350, %p351
      %p353 = pneg %p352
      // Predicated region
      $region66: #{squeeze_forward.28} parent=5 // pred_check
        _
      $region67: #{squeeze_forward.28} parent=5 // pred_check_branch
        %355 = sbr.rel (%p352) target = $region69
      $region68: #{squeeze_forward.28} parent=5 // pred_region
        %s356 = ssub.s32 %s9, 1
        %s357 = sand.u32 %s60, 1
        %s358 = sand.u32 %s60, 1
        %s359 = smul.addr %s358, 144
        %s360 = scalar_lea.vmem [#allocation2], %s359
        // Predicated region
        $region70: #{squeeze_forward.28} parent=68 // pred_check
          %p361 = pneg %p73
        $region71: #{squeeze_forward.28} parent=68 // pred_check_branch
          %363 = sbr.rel (%p361) target = $region73
        $region72: #{squeeze_forward.28} parent=68 // pred_region
          _
        $region73: #{squeeze_forward.28} parent=68 // pred_fallthru
          _
        %s364 = smul.u32 7, %s18
        %p365 = scmp.lt.s32.totalorder %s364, 6
        %s366 = scalar_select %p365, %s364, 6
        %s367 = smul.addr %s366, 3
        %s368 = smul.addr %s367, 4
        %s369 = scalar_lea.vmem %s0, %s368
        %p370 = pneg %p47
        %p371 = pneg %p44
        %s372 = sand.u32 %s60, 1
        %s373 = sand.u32 %s60, 1
        %s374 = smul.addr %s373, 144
        %s375 = scalar_lea.vmem [#allocation2], %s374
        %p376 = pneg %p73
        %p377 = pneg %p70
        %p378 = scmp.lt.s32.totalorder %s19, 1
        %s379 = scalar_select %p378, %s19, 1
        %s380 = scalar_lea.vmem %s2, %s379
        %p381 = pneg %p99
        %p382 = pneg %p96
        %p383 = pneg %p127
        %p384 = pneg %p124
        %s385 = sand.u32 %s114, 1
        %s386 = sand.u32 %s114, 1
        %s387 = smul.addr %s386, 56
        %s388 = scalar_lea.vmem [#allocation3], %s387
        %s389 = smul.u32 7, %s18
        %p390 = scmp.lt.s32.totalorder %s389, 6
        %s391 = scalar_select %p390, %s389, 6
        %s392 = smul.addr %s391, 3
        %s393 = smul.addr %s392, 4
        %s394 = scalar_lea.vmem %s0, %s393
        %s395 = smul.u32 7, %s18
        %p396 = scmp.lt.s32.totalorder %s19, 1
        %s397 = scalar_select %p396, %s19, 1
        %s398 = scalar_lea.vmem %s2, %s397
        %s399 = smul.u32 7, %s18
        %v401 = vld [vmem:[%s394] sm:$0xff]
        %v402 = vld [vmem:[%s394 + $0x8] sm:$0xf]
        %v403 = vld [vmem:[%s394 + $0xc] sm:$0xff]
        %v404 = vld [vmem:[%s394 + $0x14] sm:$0xf]
        %v405 = vld [vmem:[%s394 + $0x18] sm:$0xff]
        %v406 = vld [vmem:[%s394 + $0x20] sm:$0xf]
        %v407 = vld [vmem:[%s394 + $0x24] sm:$0xff]
        %v408 = vld [vmem:[%s394 + $0x2c] sm:$0xf]
        %v409 = vld [vmem:[%s394 + $0x30] sm:$0xff]
        %v410 = vld [vmem:[%s394 + $0x38] sm:$0xf]
        %v411 = vld [vmem:[%s394 + $0x3c] sm:$0xff]
        %v412 = vld [vmem:[%s394 + $0x44] sm:$0xf]
        %v413 = vld [vmem:[%s394 + $0x48] sm:$0x11]
        %v414 = vld [vmem:[%s394 + $0x50] sm:$0x1]
        %v415 = vld [vmem:[%s360] sm:$0xf]
        %v416 = vld [vmem:[%s360 + $0x4] sm:$0xf]
        %v417 = vld [vmem:[%s360 + $0x8] sm:$0xf]
        %v418 = vld [vmem:[%s360 + $0xc] sm:$0xf]
        %v419 = vld [vmem:[%s360 + $0x10] sm:$0xf]
        %v420 = vld [vmem:[%s360 + $0x14] sm:$0xf]
        %v421 = vld [vmem:[%s360 + $0x18] sm:$0xf]
        %v422 = vld [vmem:[%s360 + $0x1c] sm:$0xf]
        %v423 = vld [vmem:[%s360 + $0x20] sm:$0xf]
        %v424 = vld [vmem:[%s360 + $0x24] sm:$0xf]
        %v425 = vld [vmem:[%s360 + $0x28] sm:$0xf]
        %v426 = vld [vmem:[%s360 + $0x2c] sm:$0xf]
        %v427 = vld [vmem:[%s360 + $0x30] sm:$0xf]
        %v428 = vld [vmem:[%s360 + $0x34] sm:$0xf]
        %v429 = vld [vmem:[%s360 + $0x38] sm:$0xf]
        %v430 = vld [vmem:[%s360 + $0x3c] sm:$0xf]
        %v431 = vld [vmem:[%s360 + $0x40] sm:$0xf]
        %v432 = vld [vmem:[%s360 + $0x44] sm:$0xf]
        %v433 = vld [vmem:[%s360 + $0x48] sm:$0xf]
        %v434 = vld [vmem:[%s360 + $0x4c] sm:$0xf]
        %v435 = vld [vmem:[%s360 + $0x50] sm:$0xf]
        %v436 = vld [vmem:[%s360 + $0x54] sm:$0xf]
        %v437 = vld [vmem:[%s360 + $0x58] sm:$0xf]
        %v438 = vld [vmem:[%s360 + $0x5c] sm:$0xf]
        %v439 = vld [vmem:[%s360 + $0x60] sm:$0xf]
        %v440 = vld [vmem:[%s360 + $0x64] sm:$0xf]
        %v441 = vld [vmem:[%s360 + $0x68] sm:$0xf]
        %v442 = vld [vmem:[%s360 + $0x6c] sm:$0xf]
        %v443 = vld [vmem:[%s360 + $0x70] sm:$0xf]
        %v444 = vld [vmem:[%s360 + $0x74] sm:$0xf]
        %v445 = vld [vmem:[%s360 + $0x78] sm:$0xf]
        %v446 = vld [vmem:[%s360 + $0x7c] sm:$0xf]
        %v447 = vld [vmem:[%s360 + $0x80] sm:$0xf]
        %v448 = vld [vmem:[%s360 + $0x84] sm:$0xf]
        %v449 = vld [vmem:[%s360 + $0x88] sm:$0xf]
        %v450 = vld [vmem:[%s360 + $0x8c] sm:$0xf]
        %v451 = vld [vmem:[%s398] sm:$0x1]
        %v453 = vlaneseq
        %v454 = vshrl.u32 %v453, 7
        %v455 = vsub.s32 0, %v454
        %v456 = vrot.slane %v451, %v455
        %v472 = vunpack.c.l.b16 %v401
        %v473 = vunpack.c.h.b16 %v401
        %v474 = vunpack.c.l.b16 %v402
        %v475 = vunpack.c.l.b16 %v403
        %v476 = vunpack.c.h.b16 %v403
        %v477 = vunpack.c.l.b16 %v404
        %v478 = vunpack.c.l.b16 %v405
        %v479 = vunpack.c.h.b16 %v405
        %v480 = vunpack.c.l.b16 %v406
        %v481 = vunpack.c.l.b16 %v407
        %v482 = vunpack.c.h.b16 %v407
        %v483 = vunpack.c.l.b16 %v408
        %v484 = vunpack.c.l.b16 %v409
        %v485 = vunpack.c.h.b16 %v409
        %v486 = vunpack.c.l.b16 %v410
        %v487 = vunpack.c.l.b16 %v411
        %v488 = vunpack.c.h.b16 %v411
        %v489 = vunpack.c.l.b16 %v412
        %v490 = vunpack.c.l.b16 %v413
        %v491 = vunpack.c.h.b16 %v413
        %v492 = vunpack.c.l.b16 %v414
        %v493 = vpack.c.b16 %v475, %v472
        %v494 = vpack.c.b16 %v476, %v473
        %v495 = vpack.c.b16 %v477, %v474
        %v496 = vpack.c.b16 %v481, %v478
        %v497 = vpack.c.b16 %v482, %v479
        %v498 = vpack.c.b16 %v483, %v480
        %v499 = vpack.c.b16 %v487, %v484
        %v500 = vpack.c.b16 %v488, %v485
        %v501 = vpack.c.b16 %v489, %v486
        %v502 = vpack.c.b16 %v490, %v490
        %v503 = vpack.c.b16 %v491, %v491
        %v504 = vpack.c.b16 %v492, %v492
        %v549 = vunpack.c.l.b16 %v415
        %v550 = vunpack.c.l.b16 %v416
        %v551 = vunpack.c.l.b16 %v417
        %v552 = vunpack.c.l.b16 %v418
        %v553 = vunpack.c.l.b16 %v419
        %v554 = vunpack.c.l.b16 %v420
        %v555 = vunpack.c.l.b16 %v421
        %v556 = vunpack.c.l.b16 %v422
        %v557 = vunpack.c.l.b16 %v423
        %v558 = vunpack.c.l.b16 %v424
        %v559 = vunpack.c.l.b16 %v425
        %v560 = vunpack.c.l.b16 %v426
        %v561 = vunpack.c.l.b16 %v427
        %v562 = vunpack.c.l.b16 %v428
        %v563 = vunpack.c.l.b16 %v429
        %v564 = vunpack.c.l.b16 %v430
        %v565 = vunpack.c.l.b16 %v431
        %v566 = vunpack.c.l.b16 %v432
        %v567 = vunpack.c.l.b16 %v433
        %v568 = vunpack.c.l.b16 %v434
        %v569 = vunpack.c.l.b16 %v435
        %v570 = vunpack.c.l.b16 %v436
        %v571 = vunpack.c.l.b16 %v437
        %v572 = vunpack.c.l.b16 %v438
        %v573 = vunpack.c.l.b16 %v439
        %v574 = vunpack.c.l.b16 %v440
        %v575 = vunpack.c.l.b16 %v441
        %v576 = vunpack.c.l.b16 %v442
        %v577 = vunpack.c.l.b16 %v443
        %v578 = vunpack.c.l.b16 %v444
        %v579 = vunpack.c.l.b16 %v445
        %v580 = vunpack.c.l.b16 %v446
        %v581 = vunpack.c.l.b16 %v447
        %v582 = vunpack.c.l.b16 %v448
        %v583 = vunpack.c.l.b16 %v449
        %v584 = vunpack.c.l.b16 %v450
        %v585 = vpack.c.b16 %v550, %v549
        %v586 = vpack.c.b16 %v552, %v551
        %v587 = vpack.c.b16 %v554, %v553
        %v588 = vpack.c.b16 %v556, %v555
        %v589 = vpack.c.b16 %v558, %v557
        %v590 = vpack.c.b16 %v560, %v559
        %v591 = vpack.c.b16 %v562, %v561
        %v592 = vpack.c.b16 %v564, %v563
        %v593 = vpack.c.b16 %v566, %v565
        %v594 = vpack.c.b16 %v568, %v567
        %v595 = vpack.c.b16 %v570, %v569
        %v596 = vpack.c.b16 %v572, %v571
        %v597 = vpack.c.b16 %v574, %v573
        %v598 = vpack.c.b16 %v576, %v575
        %v599 = vpack.c.b16 %v578, %v577
        %v600 = vpack.c.b16 %v580, %v579
        %v601 = vpack.c.b16 %v582, %v581
        %v602 = vpack.c.b16 %v584, %v583
        %vm621 = vcmask 261120
        %v623 = vsel %vm621, %v495, 0
        %v626 = vsel %vm621, %v498, 0
        %v629 = vsel %vm621, %v501, 0
        %v632 = vsel %vm621, %v504, 0
        %634 = vmatprep.subr.bf16.mxu0 0
        %635 = vmatpush1.bf16.msra.mxu0 %v585
        %636 = vmatprep.subr.bf16.mxu0 0
        %637 = vmatpush1.bf16.msra.mxu0 %v586
        %638 = vmatprep.subr.bf16.mxu0 0
        %639 = vmatpush1.bf16.msra.mxu0 %v587
        %640 = vmatprep.subr.bf16.mxu0 0
        %641 = vmatpush1.bf16.msra.mxu0 %v588
        %642 = vmatprep.subr.bf16.mxu0 0
        %643 = vmatpush1.bf16.msra.mxu0 %v589
        %644 = vmatprep.subr.bf16.mxu0 0
        %645 = vmatpush1.bf16.msra.mxu0 %v590
        %646 = vmatprep.subr.bf16.mxu0 0
        %647 = vmatpush1.bf16.msra.mxu0 %v591
        %648 = vmatprep.subr.bf16.mxu0 0
        %649 = vmatpush1.bf16.msra.mxu0 %v592
        %650 = vmatprep.subr.bf16.mxu0 0
        %651 = vmatpush1.bf16.msra.mxu0 %v593
        %652 = vmatprep.subr.bf16.mxu0 0
        %653 = vmatpush1.bf16.msra.mxu0 %v594
        %654 = vmatprep.subr.bf16.mxu0 0
        %655 = vmatpush1.bf16.msra.mxu0 %v595
        %656 = vmatprep.subr.bf16.mxu0 0
        %657 = vmatpush1.bf16.msra.mxu0 %v596
        %658 = vmatprep.subr.bf16.mxu0 0
        %659 = vmatpush1.bf16.msra.mxu0 %v597
        %660 = vmatprep.subr.bf16.mxu0 0
        %661 = vmatpush1.bf16.msra.mxu0 %v598
        %662 = vmatprep.subr.bf16.mxu0 0
        %663 = vmatpush1.bf16.msra.mxu0 %v599
        %664 = vmatprep.subr.bf16.mxu0 0
        %665 = vmatpush1.bf16.msra.mxu0 %v600
        %666 = vmatprep.mubr.bf16.mxu0 %v494
        %667 = vmatmul.mubr.bf16.gmra.mrb[0].mxu0 %v493
        %v668 = vpop.f32.mrb[0].mxu0
        %v669 = vadd.f32 %v456, %v668
        %v670 = vpop.f32.mrb[0].mxu0
        %v671 = vpop.f32.mrb[0].mxu0
        %v672 = vadd.f32 %v456, %v671
        %v673 = vpop.f32.mrb[0].mxu0
        %674 = vmatprep.mubr.bf16.mxu0 %v497
        %675 = vmatmul.mubr.bf16.gmra.mrb[0].mxu0 %v496
        %v676 = vpop.f32.mrb[0].mxu0
        %v677 = vadd.f32 %v456, %v676
        %v678 = vpop.f32.mrb[0].mxu0
        %v679 = vpop.f32.mrb[0].mxu0
        %v680 = vadd.f32 %v456, %v679
        %v681 = vpop.f32.mrb[0].mxu0
        %682 = vmatprep.mubr.bf16.mxu0 %v500
        %683 = vmatmul.mubr.bf16.gmra.mrb[0].mxu0 %v499
        %v684 = vpop.f32.mrb[0].mxu0
        %v685 = vadd.f32 %v456, %v684
        %v686 = vpop.f32.mrb[0].mxu0
        %v687 = vpop.f32.mrb[0].mxu0
        %v688 = vadd.f32 %v456, %v687
        %v689 = vpop.f32.mrb[0].mxu0
        %690 = vmatprep.mubr.bf16.mxu0 %v503
        %691 = vmatmul.mubr.bf16.gmra.mrb[0].mxu0 %v502
        %v692 = vpop.f32.mrb[0].mxu0
        %v693 = vadd.f32 %v456, %v692
        %v694 = vpop.f32.mrb[0].mxu0
        %v695 = vpop.f32.mrb[0].mxu0
        %v696 = vpop.f32.mrb[0].mxu0
        %697 = vdwg.mxu0
        %698 = vmatprep.subr.bf16.mxu0 0
        %699 = vmatpush1.bf16.msra.mxu0 %v601
        %700 = vmatprep.subr.bf16.mxu0 0
        %701 = vmatpush1.bf16.msra.mxu0 %v602
        %702 = vmatprep.subr.bf16.mxu0 0
        %703 = vmatpush1.bf16.msra.mxu0 0
        %704 = vmatprep.subr.bf16.mxu0 0
        %705 = vmatpush1.bf16.msra.mxu0 0
        %706 = vmatprep.subr.bf16.mxu0 0
        %707 = vmatpush1.bf16.msra.mxu0 0
        %708 = vmatprep.subr.bf16.mxu0 0
        %709 = vmatpush1.bf16.msra.mxu0 0
        %710 = vmatprep.subr.bf16.mxu0 0
        %711 = vmatpush1.bf16.msra.mxu0 0
        %712 = vmatprep.subr.bf16.mxu0 0
        %713 = vmatpush1.bf16.msra.mxu0 0
        %714 = vmatprep.subr.bf16.mxu0 0
        %715 = vmatpush1.bf16.msra.mxu0 0
        %716 = vmatprep.subr.bf16.mxu0 0
        %717 = vmatpush1.bf16.msra.mxu0 0
        %718 = vmatprep.subr.bf16.mxu0 0
        %719 = vmatpush1.bf16.msra.mxu0 0
        %720 = vmatprep.subr.bf16.mxu0 0
        %721 = vmatpush1.bf16.msra.mxu0 0
        %722 = vmatprep.subr.bf16.mxu0 0
        %723 = vmatpush1.bf16.msra.mxu0 0
        %724 = vmatprep.subr.bf16.mxu0 0
        %725 = vmatpush1.bf16.msra.mxu0 0
        %726 = vmatprep.subr.bf16.mxu0 0
        %727 = vmatpush1.bf16.msra.mxu0 0
        %728 = vmatprep.subr.bf16.mxu0 0
        %729 = vmatpush1.bf16.msra.mxu0 0
        %730 = vmatprep.mubr.bf16.mxu0 0
        %731 = vmatmul.mubr.bf16.gmra.mrb[0].mxu0 %v623
        %v732 = vpop.f32.mrb[0].mxu0
        %v733 = vadd.f32 %v669, %v732
        %v734 = vpop.f32.mrb[0].mxu0
        %v735 = vpop.f32.mrb[0].mxu0
        %v736 = vadd.f32 %v672, %v735
        %v737 = vpop.f32.mrb[0].mxu0
        %738 = vmatprep.mubr.bf16.mxu0 0
        %739 = vmatmul.mubr.bf16.gmra.mrb[0].mxu0 %v626
        %v740 = vpop.f32.mrb[0].mxu0
        %v741 = vadd.f32 %v677, %v740
        %v742 = vpop.f32.mrb[0].mxu0
        %v743 = vpop.f32.mrb[0].mxu0
        %v744 = vadd.f32 %v680, %v743
        %v745 = vpop.f32.mrb[0].mxu0
        %746 = vmatprep.mubr.bf16.mxu0 0
        %747 = vmatmul.mubr.bf16.gmra.mrb[0].mxu0 %v629
        %v748 = vpop.f32.mrb[0].mxu0
        %v749 = vadd.f32 %v685, %v748
        %v750 = vpop.f32.mrb[0].mxu0
        %v751 = vpop.f32.mrb[0].mxu0
        %v752 = vadd.f32 %v688, %v751
        %v753 = vpop.f32.mrb[0].mxu0
        %754 = vmatprep.mubr.bf16.mxu0 0
        %755 = vmatmul.mubr.bf16.gmra.mrb[0].mxu0 %v632
        %v756 = vpop.f32.mrb[0].mxu0
        %v757 = vadd.f32 %v693, %v756
        %v758 = vpop.f32.mrb[0].mxu0
        %v759 = vpop.f32.mrb[0].mxu0
        %v760 = vpop.f32.mrb[0].mxu0
        %761 = vdwg.mxu0
        %v762 = vmax.f32 %v733, 0.0
        %v763 = vmax.f32 %v736, 0.0
        %v764 = vmax.f32 %v741, 0.0
        %v765 = vmax.f32 %v744, 0.0
        %v766 = vmax.f32 %v749, 0.0
        %v767 = vmax.f32 %v752, 0.0
        %v768 = vmax.f32 %v757, 0.0
        %769 = vst [vmem:[%s388] sm:$0xff] %v762
        %770 = vst [vmem:[%s388 + $0x8] sm:$0xff] %v763
        %771 = vst [vmem:[%s388 + $0x10] sm:$0xff] %v764
        %772 = vst [vmem:[%s388 + $0x18] sm:$0xff] %v765
        %773 = vst [vmem:[%s388 + $0x20] sm:$0xff] %v766
        %774 = vst [vmem:[%s388 + $0x28] sm:$0xff] %v767
        %775 = vst [vmem:[%s388 + $0x30] sm:$0x3] %v768
        %s776 = sand.u32 %s114, 1
        %s777 = sand.u32 %s114, 1
        %s778 = smul.addr %s777, 56
        %s779 = scalar_lea.vmem [#allocation3], %s778
        // Predicated region
        $region74: #{squeeze_forward.28} parent=68 // pred_check
          %p780 = pneg %p124
        $region75: #{squeeze_forward.28} parent=68 // pred_check_branch
          %782 = sbr.rel (%p780) target = $region77
        $region76: #{squeeze_forward.28} parent=68 // pred_region
          %s783 = smul.u32 7, %s18
          %s784 = smul.addr %s783, 2
          %s785 = sadd.s32 %s19, %s784
          %s786 = smul.addr %s785, 8
          %s787 = scalar_lea.vmem %s3, %s786
          // Predicated region
          $region78: #{squeeze_forward.28} parent=76 // pred_check
            _
          $region79: #{squeeze_forward.28} parent=76 // pred_check_branch
            %789 = sbr.rel (0) target = $region81
          $region80: #{squeeze_forward.28} parent=76 // pred_region
            // Predicated region
            $region82: #{squeeze_forward.28} parent=80 // pred_check
              _
            $region83: #{squeeze_forward.28} parent=80 // pred_check_branch
              %791 = sbr.rel (0) target = $region85
            $region84: #{squeeze_forward.28} parent=80 // pred_region
              // Predicated region
              $region97: #{squeeze_forward.28} parent=84 // pred_check
                _
              $region98: #{squeeze_forward.28} parent=84 // pred_check_branch
                %818 = sbr.rel (0) target = $region100
              $region99: #{squeeze_forward.28} parent=84 // pred_region
                loop: start=0, step=1, limit=1
                $region101: #{squeeze_forward.28} parent=99 // loop_pre_header
                  _
                $region102: #{squeeze_forward.28} parent=99 // loop_header
                  %s820 = sphi 0, %s824
                  %p821 = scmp.ge.s32.totalorder %s820, 1
                  %s825 = sphi %s779, %s779
                  %s826 = sphi %s787, %s787
                $region103: #{squeeze_forward.28} parent=99 // loop_header_branch
                  %823 = sbr.rel (%p821) target = $region107
                $region104: #{squeeze_forward.28} parent=99 // loop_body
                  %v827 = vld [vmem:[%s825] sm:$0xff]
                  %828 = vst [vmem:[%s826] sm:$0xff] %v827
                  %v829 = vld [vmem:[%s825 + $0x8] sm:$0xff]
                  %830 = vst [vmem:[%s826 + $0x10] sm:$0xff] %v829
                  %v831 = vld [vmem:[%s825 + $0x10] sm:$0xff]
                  %832 = vst [vmem:[%s826 + $0x20] sm:$0xff] %v831
                  %v833 = vld [vmem:[%s825 + $0x18] sm:$0xff]
                  %834 = vst [vmem:[%s826 + $0x30] sm:$0xff] %v833
                  %v835 = vld [vmem:[%s825 + $0x20] sm:$0xff]
                  %836 = vst [vmem:[%s826 + $0x40] sm:$0xff] %v835
                  %v837 = vld [vmem:[%s825 + $0x28] sm:$0xff]
                  %838 = vst [vmem:[%s826 + $0x50] sm:$0xff] %v837
                  %v839 = vld [vmem:[%s825 + $0x30] sm:$0xff]
                  %840 = vst [vmem:[%s826 + $0x60] sm:$0xff] %v839
                $region105: #{squeeze_forward.28} parent=99 // loop_footer
                  %s824 = sadd.s32 1, %s820
                $region106: #{squeeze_forward.28} parent=99 // loop_footer_branch
                  %819 = sbr.rel target = $region102
                $region107: #{squeeze_forward.28} parent=99 // loop_exit
                  _
              $region100: #{squeeze_forward.28} parent=84 // pred_fallthru
                _
              // Predicated region
              $region108: #{squeeze_forward.28} parent=84 // pred_check
                _
              $region109: #{squeeze_forward.28} parent=84 // pred_check_branch
                %842 = sbr.rel target = $region111
              $region110: #{squeeze_forward.28} parent=84 // pred_region
                _
              $region111: #{squeeze_forward.28} parent=84 // pred_fallthru
                _
            $region85: #{squeeze_forward.28} parent=80 // pred_fallthru
              _
            // Predicated region
            $region86: #{squeeze_forward.28} parent=80 // pred_check
              _
            $region87: #{squeeze_forward.28} parent=80 // pred_check_branch
              %793 = sbr.rel target = $region89
            $region88: #{squeeze_forward.28} parent=80 // pred_region
              loop: start=0, step=1, limit=1
              $region90: #{squeeze_forward.28} parent=88 // loop_pre_header
                _
              $region91: #{squeeze_forward.28} parent=88 // loop_header
                %s796 = sphi 0, %s800
                %p797 = scmp.ge.s32.totalorder %s796, 1
                %s801 = sphi %s779, %s779
                %s802 = sphi %s787, %s787
              $region92: #{squeeze_forward.28} parent=88 // loop_header_branch
                %799 = sbr.rel (%p797) target = $region96
              $region93: #{squeeze_forward.28} parent=88 // loop_body
                %v803 = vld [vmem:[%s801] sm:$0xff]
                %804 = vst [vmem:[%s802] sm:$0xff] %v803
                %v805 = vld [vmem:[%s801 + $0x8] sm:$0xff]
                %806 = vst [vmem:[%s802 + $0x10] sm:$0xff] %v805
                %v807 = vld [vmem:[%s801 + $0x10] sm:$0xff]
                %808 = vst [vmem:[%s802 + $0x20] sm:$0xff] %v807
                %v809 = vld [vmem:[%s801 + $0x18] sm:$0xff]
                %810 = vst [vmem:[%s802 + $0x30] sm:$0xff] %v809
                %v811 = vld [vmem:[%s801 + $0x20] sm:$0xff]
                %812 = vst [vmem:[%s802 + $0x40] sm:$0xff] %v811
                %v813 = vld [vmem:[%s801 + $0x28] sm:$0xff]
                %814 = vst [vmem:[%s802 + $0x50] sm:$0xff] %v813
                %v815 = vld [vmem:[%s801 + $0x30] sm:$0xff]
                %816 = vst [vmem:[%s802 + $0x60] sm:$0xff] %v815
              $region94: #{squeeze_forward.28} parent=88 // loop_footer
                %s800 = sadd.s32 1, %s796
              $region95: #{squeeze_forward.28} parent=88 // loop_footer_branch
                %795 = sbr.rel target = $region91
              $region96: #{squeeze_forward.28} parent=88 // loop_exit
                _
            $region89: #{squeeze_forward.28} parent=80 // pred_fallthru
              _
          $region81: #{squeeze_forward.28} parent=76 // pred_fallthru
            _
          %843 = vnop
        $region77: #{squeeze_forward.28} parent=68 // pred_fallthru
          _
      $region69: #{squeeze_forward.28} parent=5 // pred_fallthru
        _
      %p844 = scmp.le.s32.totalorder 2, %s9
      // Predicated region
      $region112: #{squeeze_forward.28} parent=5 // pred_check
        %p845 = pneg %p844
      $region113: #{squeeze_forward.28} parent=5 // pred_check_branch
        %847 = sbr.rel (%p845) target = $region115
      $region114: #{squeeze_forward.28} parent=5 // pred_region
        %s848 = ssub.s32 %s9, 2
        // Predicated region
        $region116: #{squeeze_forward.28} parent=114 // pred_check
          %p849 = pneg %p130
        $region117: #{squeeze_forward.28} parent=114 // pred_check_branch
          %851 = sbr.rel (%p849) target = $region119
        $region118: #{squeeze_forward.28} parent=114 // pred_region
          %s852 = sand.u32 %s115, 1
          %s853 = sand.u32 %s115, 1
          %s854 = smul.addr %s853, 56
          %s855 = scalar_lea.vmem [#allocation3], %s854
        $region119: #{squeeze_forward.28} parent=114 // pred_fallthru
          _
      $region115: #{squeeze_forward.28} parent=5 // pred_fallthru
        _
    $region6: #{squeeze_forward.28} parent=1 // loop_footer
      %s13 = sadd.s32 1, %s9
    $region7: #{squeeze_forward.28} parent=1 // loop_footer_branch
      %8 = sbr.rel target = $region3
    $region8: #{squeeze_forward.28} parent=1 // loop_exit
      _

// kernel: squeeze_forward.29
$region0: #{squeeze_forward.29}
  #allocation0 [shape = 'u32[]', space=smem, size = 0x4, offset = 0x4, fixed_abs, tag = 'smem constant byte address 0x4 - core index']
  #allocation1 [shape = 'u32[144,128]{1,0:T(1,128)}', space=vmem, size = 0x12000, scoped, tag = 'internal scratch']
  %s0 = inlined_call_operand.vmem [shape: bf16[50,256], index: 0, kind: input, shape index: {}]
  %s1 = inlined_call_operand.vmem [shape: bf16[256,48], index: 1, kind: input, shape index: {}]
  %s2 = inlined_call_operand.vmem [shape: f32[1,48], index: 2, kind: input, shape index: {}]
  %s3 = inlined_call_operand.vmem [shape: f32[50,48], index: 3, kind: output, shape index: {}]
  %s4 = sld [smem:[#allocation0]]
  $region22: #{squeeze_forward.29} parent=0
    _
  %s6 = ssub.s32 1, %s4
  %s7 = scalar_select 0, %s6, %s4
  // Predicated region
  $region2: #{squeeze_forward.29} parent=0 // pred_check
    _
  $region3: #{squeeze_forward.29} parent=0 // pred_check_branch
    %9 = sbr.rel (0) target = $region5
  $region4: #{squeeze_forward.29} parent=0 // pred_region
    _
  $region5: #{squeeze_forward.29} parent=0 // pred_fallthru
    _
  // Predicated region
  $region6: #{squeeze_forward.29} parent=0 // pred_check
    _
  $region7: #{squeeze_forward.29} parent=0 // pred_check_branch
    %11 = sbr.rel (0) target = $region9
  $region8: #{squeeze_forward.29} parent=0 // pred_region
    _
  $region9: #{squeeze_forward.29} parent=0 // pred_fallthru
    _
  // Predicated region
  $region10: #{squeeze_forward.29} parent=0 // pred_check
    _
  $region11: #{squeeze_forward.29} parent=0 // pred_check_branch
    %13 = sbr.rel (0) target = $region13
  $region12: #{squeeze_forward.29} parent=0 // pred_region
    _
  $region13: #{squeeze_forward.29} parent=0 // pred_fallthru
    _
  %v15 = vld [vmem:[%s0] sm:$0xff]
  %v16 = vld [vmem:[%s0 + $0x8] sm:$0xff]
  %v17 = vld [vmem:[%s0 + $0x10] sm:$0xff]
  %v18 = vld [vmem:[%s0 + $0x18] sm:$0xff]
  %v19 = vld [vmem:[%s0 + $0x20] sm:$0xff]
  %v20 = vld [vmem:[%s0 + $0x28] sm:$0xff]
  %v21 = vld [vmem:[%s0 + $0x30] sm:$0x11]
  %v22 = vld [vmem:[%s1] sm:$0xf]
  %v23 = vld [vmem:[%s1 + $0x4] sm:$0xf]
  %v24 = vld [vmem:[%s1 + $0x8] sm:$0xf]
  %v25 = vld [vmem:[%s1 + $0xc] sm:$0xf]
  %v26 = vld [vmem:[%s1 + $0x10] sm:$0xf]
  %v27 = vld [vmem:[%s1 + $0x14] sm:$0xf]
  %v28 = vld [vmem:[%s1 + $0x18] sm:$0xf]
  %v29 = vld [vmem:[%s1 + $0x1c] sm:$0xf]
  %v30 = vld [vmem:[%s1 + $0x20] sm:$0xf]
  %v31 = vld [vmem:[%s1 + $0x24] sm:$0xf]
  %v32 = vld [vmem:[%s1 + $0x28] sm:$0xf]
  %v33 = vld [vmem:[%s1 + $0x2c] sm:$0xf]
  %v34 = vld [vmem:[%s1 + $0x30] sm:$0xf]
  %v35 = vld [vmem:[%s1 + $0x34] sm:$0xf]
  %v36 = vld [vmem:[%s1 + $0x38] sm:$0xf]
  %v37 = vld [vmem:[%s1 + $0x3c] sm:$0xf]
  %v38 = vld [vmem:[%s1 + $0x40] sm:$0xf]
  %v39 = vld [vmem:[%s1 + $0x44] sm:$0xf]
  %v40 = vld [vmem:[%s1 + $0x48] sm:$0xf]
  %v41 = vld [vmem:[%s1 + $0x4c] sm:$0xf]
  %v42 = vld [vmem:[%s1 + $0x50] sm:$0xf]
  %v43 = vld [vmem:[%s1 + $0x54] sm:$0xf]
  %v44 = vld [vmem:[%s1 + $0x58] sm:$0xf]
  %v45 = vld [vmem:[%s1 + $0x5c] sm:$0xf]
  %v46 = vld [vmem:[%s1 + $0x60] sm:$0xf]
  %v47 = vld [vmem:[%s1 + $0x64] sm:$0xf]
  %v48 = vld [vmem:[%s1 + $0x68] sm:$0xf]
  %v49 = vld [vmem:[%s1 + $0x6c] sm:$0xf]
  %v50 = vld [vmem:[%s1 + $0x70] sm:$0xf]
  %v51 = vld [vmem:[%s1 + $0x74] sm:$0xf]
  %v52 = vld [vmem:[%s1 + $0x78] sm:$0xf]
  %v53 = vld [vmem:[%s1 + $0x7c] sm:$0xf]
  %v54 = vld [vmem:[%s2] sm:$0x1]
  %v56 = vlaneseq
  %v57 = vshrl.u32 %v56, 7
  %v58 = vsub.s32 0, %v57
  %v59 = vrot.slane %v54, %v58
  %v68 = vunpack.c.l.b16 %v15
  %v69 = vunpack.c.h.b16 %v15
  %v70 = vunpack.c.l.b16 %v16
  %v71 = vunpack.c.h.b16 %v16
  %v72 = vunpack.c.l.b16 %v17
  %v73 = vunpack.c.h.b16 %v17
  %v74 = vunpack.c.l.b16 %v18
  %v75 = vunpack.c.h.b16 %v18
  %v76 = vunpack.c.l.b16 %v19
  %v77 = vunpack.c.h.b16 %v19
  %v78 = vunpack.c.l.b16 %v20
  %v79 = vunpack.c.h.b16 %v20
  %v80 = vunpack.c.l.b16 %v21
  %v81 = vunpack.c.h.b16 %v21
  %v82 = vpack.c.b16 %v70, %v68
  %v83 = vpack.c.b16 %v71, %v69
  %v84 = vpack.c.b16 %v74, %v72
  %v85 = vpack.c.b16 %v75, %v73
  %v86 = vpack.c.b16 %v78, %v76
  %v87 = vpack.c.b16 %v79, %v77
  %v88 = vpack.c.b16 %v80, %v80
  %v89 = vpack.c.b16 %v81, %v81
  %v130 = vunpack.c.l.b16 %v22
  %v131 = vunpack.c.l.b16 %v23
  %v132 = vunpack.c.l.b16 %v24
  %v133 = vunpack.c.l.b16 %v25
  %v134 = vunpack.c.l.b16 %v26
  %v135 = vunpack.c.l.b16 %v27
  %v136 = vunpack.c.l.b16 %v28
  %v137 = vunpack.c.l.b16 %v29
  %v138 = vunpack.c.l.b16 %v30
  %v139 = vunpack.c.l.b16 %v31
  %v140 = vunpack.c.l.b16 %v32
  %v141 = vunpack.c.l.b16 %v33
  %v142 = vunpack.c.l.b16 %v34
  %v143 = vunpack.c.l.b16 %v35
  %v144 = vunpack.c.l.b16 %v36
  %v145 = vunpack.c.l.b16 %v37
  %v146 = vunpack.c.l.b16 %v38
  %v147 = vunpack.c.l.b16 %v39
  %v148 = vunpack.c.l.b16 %v40
  %v149 = vunpack.c.l.b16 %v41
  %v150 = vunpack.c.l.b16 %v42
  %v151 = vunpack.c.l.b16 %v43
  %v152 = vunpack.c.l.b16 %v44
  %v153 = vunpack.c.l.b16 %v45
  %v154 = vunpack.c.l.b16 %v46
  %v155 = vunpack.c.l.b16 %v47
  %v156 = vunpack.c.l.b16 %v48
  %v157 = vunpack.c.l.b16 %v49
  %v158 = vunpack.c.l.b16 %v50
  %v159 = vunpack.c.l.b16 %v51
  %v160 = vunpack.c.l.b16 %v52
  %v161 = vunpack.c.l.b16 %v53
  %v162 = vpack.c.b16 %v131, %v130
  %v163 = vpack.c.b16 %v133, %v132
  %v164 = vpack.c.b16 %v135, %v134
  %v165 = vpack.c.b16 %v137, %v136
  %v166 = vpack.c.b16 %v139, %v138
  %v167 = vpack.c.b16 %v141, %v140
  %v168 = vpack.c.b16 %v143, %v142
  %v169 = vpack.c.b16 %v145, %v144
  %v170 = vpack.c.b16 %v147, %v146
  %v171 = vpack.c.b16 %v149, %v148
  %v172 = vpack.c.b16 %v151, %v150
  %v173 = vpack.c.b16 %v153, %v152
  %v174 = vpack.c.b16 %v155, %v154
  %v175 = vpack.c.b16 %v157, %v156
  %v176 = vpack.c.b16 %v159, %v158
  %v177 = vpack.c.b16 %v161, %v160
  %194 = vmatprep.subr.bf16.mxu0 0
  %195 = vmatpush1.bf16.msra.mxu0 %v162
  %196 = vmatprep.subr.bf16.mxu0 0
  %197 = vmatpush1.bf16.msra.mxu0 %v163
  %198 = vmatprep.subr.bf16.mxu0 0
  %199 = vmatpush1.bf16.msra.mxu0 %v164
  %200 = vmatprep.subr.bf16.mxu0 0
  %201 = vmatpush1.bf16.msra.mxu0 %v165
  %202 = vmatprep.subr.bf16.mxu0 0
  %203 = vmatpush1.bf16.msra.mxu0 %v166
  %204 = vmatprep.subr.bf16.mxu0 0
  %205 = vmatpush1.bf16.msra.mxu0 %v167
  %206 = vmatprep.subr.bf16.mxu0 0
  %207 = vmatpush1.bf16.msra.mxu0 %v168
  %208 = vmatprep.subr.bf16.mxu0 0
  %209 = vmatpush1.bf16.msra.mxu0 %v169
  %210 = vmatprep.subr.bf16.mxu0 0
  %211 = vmatpush1.bf16.msra.mxu0 %v170
  %212 = vmatprep.subr.bf16.mxu0 0
  %213 = vmatpush1.bf16.msra.mxu0 %v171
  %214 = vmatprep.subr.bf16.mxu0 0
  %215 = vmatpush1.bf16.msra.mxu0 %v172
  %216 = vmatprep.subr.bf16.mxu0 0
  %217 = vmatpush1.bf16.msra.mxu0 %v173
  %218 = vmatprep.subr.bf16.mxu0 0
  %219 = vmatpush1.bf16.msra.mxu0 %v174
  %220 = vmatprep.subr.bf16.mxu0 0
  %221 = vmatpush1.bf16.msra.mxu0 %v175
  %222 = vmatprep.subr.bf16.mxu0 0
  %223 = vmatpush1.bf16.msra.mxu0 %v176
  %224 = vmatprep.subr.bf16.mxu0 0
  %225 = vmatpush1.bf16.msra.mxu0 %v177
  %226 = vmatprep.mubr.bf16.mxu0 %v83
  %227 = vmatmul.mubr.bf16.gmra.mrb[0].mxu0 %v82
  %v228 = vpop.f32.mrb[0].mxu0
  %v229 = vadd.f32 %v59, %v228
  %v230 = vpop.f32.mrb[0].mxu0
  %v231 = vpop.f32.mrb[0].mxu0
  %v232 = vadd.f32 %v59, %v231
  %v233 = vpop.f32.mrb[0].mxu0
  %234 = vmatprep.mubr.bf16.mxu0 %v85
  %235 = vmatmul.mubr.bf16.gmra.mrb[0].mxu0 %v84
  %v236 = vpop.f32.mrb[0].mxu0
  %v237 = vadd.f32 %v59, %v236
  %v238 = vpop.f32.mrb[0].mxu0
  %v239 = vpop.f32.mrb[0].mxu0
  %v240 = vadd.f32 %v59, %v239
  %v241 = vpop.f32.mrb[0].mxu0
  %242 = vmatprep.mubr.bf16.mxu0 %v87
  %243 = vmatmul.mubr.bf16.gmra.mrb[0].mxu0 %v86
  %v244 = vpop.f32.mrb[0].mxu0
  %v245 = vadd.f32 %v59, %v244
  %v246 = vpop.f32.mrb[0].mxu0
  %v247 = vpop.f32.mrb[0].mxu0
  %v248 = vadd.f32 %v59, %v247
  %v249 = vpop.f32.mrb[0].mxu0
  %250 = vmatprep.mubr.bf16.mxu0 %v89
  %251 = vmatmul.mubr.bf16.gmra.mrb[0].mxu0 %v88
  %v252 = vpop.f32.mrb[0].mxu0
  %v253 = vadd.f32 %v59, %v252
  %v254 = vpop.f32.mrb[0].mxu0
  %v255 = vpop.f32.mrb[0].mxu0
  %v256 = vpop.f32.mrb[0].mxu0
  %257 = vdwg.mxu0
  %v258 = vmax.f32 %v229, 0.0
  %v259 = vmax.f32 %v232, 0.0
  %v260 = vmax.f32 %v237, 0.0
  %v261 = vmax.f32 %v240, 0.0
  %v262 = vmax.f32 %v245, 0.0
  %v263 = vmax.f32 %v248, 0.0
  %v264 = vmax.f32 %v253, 0.0
  %vm265 = vcmask 392192
  %266 = vst.msk [vmem:[%s3] sm:$0xff] %vm265, %v258
  %267 = vst.msk [vmem:[%s3 + $0x8] sm:$0xff] %vm265, %v259
  %268 = vst.msk [vmem:[%s3 + $0x10] sm:$0xff] %vm265, %v260
  %269 = vst.msk [vmem:[%s3 + $0x18] sm:$0xff] %vm265, %v261
  %270 = vst.msk [vmem:[%s3 + $0x20] sm:$0xff] %vm265, %v262
  %271 = vst.msk [vmem:[%s3 + $0x28] sm:$0xff] %vm265, %v263
  %vm272 = vcmask 386048
  %273 = vst.msk [vmem:[%s3 + $0x30] sm:$0x3] %vm272, %v264
  // Predicated region
  $region14: #{squeeze_forward.29} parent=0 // pred_check
    _
  $region15: #{squeeze_forward.29} parent=0 // pred_check_branch
    %275 = sbr.rel (0) target = $region17
  $region16: #{squeeze_forward.29} parent=0 // pred_region
    _
  $region17: #{squeeze_forward.29} parent=0 // pred_fallthru
    _
  // Predicated region
  $region18: #{squeeze_forward.29} parent=0 // pred_check
    _
  $region19: #{squeeze_forward.29} parent=0 // pred_check_branch
    %277 = sbr.rel (0) target = $region21
  $region20: #{squeeze_forward.29} parent=0 // pred_region
    _
  $region21: #{squeeze_forward.29} parent=0 // pred_fallthru
    _

// kernel: squeeze_forward.31
$region0: #{squeeze_forward.31}
  #allocation0 [shape = 'u32[]', space=smem, size = 0x4, offset = 0x4, fixed_abs, tag = 'smem constant byte address 0x4 - core index']
  #allocation1 [shape = 'u32[144,128]{1,0:T(1,128)}', space=vmem, size = 0x12000, scoped, tag = 'internal scratch']
  %s0 = inlined_call_operand.vmem [shape: bf16[50,384], index: 0, kind: input, shape index: {}]
  %s1 = inlined_call_operand.vmem [shape: bf16[384,48], index: 1, kind: input, shape index: {}]
  %s2 = inlined_call_operand.vmem [shape: f32[1,48], index: 2, kind: input, shape index: {}]
  %s3 = inlined_call_operand.vmem [shape: f32[50,48], index: 3, kind: output, shape index: {}]
  %s4 = sld [smem:[#allocation0]]
  $region22: #{squeeze_forward.31} parent=0
    _
  %s6 = ssub.s32 1, %s4
  %s7 = scalar_select 0, %s6, %s4
  // Predicated region
  $region2: #{squeeze_forward.31} parent=0 // pred_check
    _
  $region3: #{squeeze_forward.31} parent=0 // pred_check_branch
    %9 = sbr.rel (0) target = $region5
  $region4: #{squeeze_forward.31} parent=0 // pred_region
    _
  $region5: #{squeeze_forward.31} parent=0 // pred_fallthru
    _
  // Predicated region
  $region6: #{squeeze_forward.31} parent=0 // pred_check
    _
  $region7: #{squeeze_forward.31} parent=0 // pred_check_branch
    %11 = sbr.rel (0) target = $region9
  $region8: #{squeeze_forward.31} parent=0 // pred_region
    _
  $region9: #{squeeze_forward.31} parent=0 // pred_fallthru
    _
  // Predicated region
  $region10: #{squeeze_forward.31} parent=0 // pred_check
    _
  $region11: #{squeeze_forward.31} parent=0 // pred_check_branch
    %13 = sbr.rel (0) target = $region13
  $region12: #{squeeze_forward.31} parent=0 // pred_region
    _
  $region13: #{squeeze_forward.31} parent=0 // pred_fallthru
    _
  %v15 = vld [vmem:[%s0] sm:$0xff]
  %v16 = vld [vmem:[%s0 + $0x8] sm:$0xf]
  %v17 = vld [vmem:[%s0 + $0xc] sm:$0xff]
  %v18 = vld [vmem:[%s0 + $0x14] sm:$0xf]
  %v19 = vld [vmem:[%s0 + $0x18] sm:$0xff]
  %v20 = vld [vmem:[%s0 + $0x20] sm:$0xf]
  %v21 = vld [vmem:[%s0 + $0x24] sm:$0xff]
  %v22 = vld [vmem:[%s0 + $0x2c] sm:$0xf]
  %v23 = vld [vmem:[%s0 + $0x30] sm:$0xff]
  %v24 = vld [vmem:[%s0 + $0x38] sm:$0xf]
  %v25 = vld [vmem:[%s0 + $0x3c] sm:$0xff]
  %v26 = vld [vmem:[%s0 + $0x44] sm:$0xf]
  %v27 = vld [vmem:[%s0 + $0x48] sm:$0x11]
  %v28 = vld [vmem:[%s0 + $0x50] sm:$0x1]
  %v29 = vld [vmem:[%s1] sm:$0xf]
  %v30 = vld [vmem:[%s1 + $0x4] sm:$0xf]
  %v31 = vld [vmem:[%s1 + $0x8] sm:$0xf]
  %v32 = vld [vmem:[%s1 + $0xc] sm:$0xf]
  %v33 = vld [vmem:[%s1 + $0x10] sm:$0xf]
  %v34 = vld [vmem:[%s1 + $0x14] sm:$0xf]
  %v35 = vld [vmem:[%s1 + $0x18] sm:$0xf]
  %v36 = vld [vmem:[%s1 + $0x1c] sm:$0xf]
  %v37 = vld [vmem:[%s1 + $0x20] sm:$0xf]
  %v38 = vld [vmem:[%s1 + $0x24] sm:$0xf]
  %v39 = vld [vmem:[%s1 + $0x28] sm:$0xf]
  %v40 = vld [vmem:[%s1 + $0x2c] sm:$0xf]
  %v41 = vld [vmem:[%s1 + $0x30] sm:$0xf]
  %v42 = vld [vmem:[%s1 + $0x34] sm:$0xf]
  %v43 = vld [vmem:[%s1 + $0x38] sm:$0xf]
  %v44 = vld [vmem:[%s1 + $0x3c] sm:$0xf]
  %v45 = vld [vmem:[%s1 + $0x40] sm:$0xf]
  %v46 = vld [vmem:[%s1 + $0x44] sm:$0xf]
  %v47 = vld [vmem:[%s1 + $0x48] sm:$0xf]
  %v48 = vld [vmem:[%s1 + $0x4c] sm:$0xf]
  %v49 = vld [vmem:[%s1 + $0x50] sm:$0xf]
  %v50 = vld [vmem:[%s1 + $0x54] sm:$0xf]
  %v51 = vld [vmem:[%s1 + $0x58] sm:$0xf]
  %v52 = vld [vmem:[%s1 + $0x5c] sm:$0xf]
  %v53 = vld [vmem:[%s1 + $0x60] sm:$0xf]
  %v54 = vld [vmem:[%s1 + $0x64] sm:$0xf]
  %v55 = vld [vmem:[%s1 + $0x68] sm:$0xf]
  %v56 = vld [vmem:[%s1 + $0x6c] sm:$0xf]
  %v57 = vld [vmem:[%s1 + $0x70] sm:$0xf]
  %v58 = vld [vmem:[%s1 + $0x74] sm:$0xf]
  %v59 = vld [vmem:[%s1 + $0x78] sm:$0xf]
  %v60 = vld [vmem:[%s1 + $0x7c] sm:$0xf]
  %v61 = vld [vmem:[%s1 + $0x80] sm:$0xf]
  %v62 = vld [vmem:[%s1 + $0x84] sm:$0xf]
  %v63 = vld [vmem:[%s1 + $0x88] sm:$0xf]
  %v64 = vld [vmem:[%s1 + $0x8c] sm:$0xf]
  %v65 = vld [vmem:[%s1 + $0x90] sm:$0xf]
  %v66 = vld [vmem:[%s1 + $0x94] sm:$0xf]
  %v67 = vld [vmem:[%s1 + $0x98] sm:$0xf]
  %v68 = vld [vmem:[%s1 + $0x9c] sm:$0xf]
  %v69 = vld [vmem:[%s1 + $0xa0] sm:$0xf]
  %v70 = vld [vmem:[%s1 + $0xa4] sm:$0xf]
  %v71 = vld [vmem:[%s1 + $0xa8] sm:$0xf]
  %v72 = vld [vmem:[%s1 + $0xac] sm:$0xf]
  %v73 = vld [vmem:[%s1 + $0xb0] sm:$0xf]
  %v74 = vld [vmem:[%s1 + $0xb4] sm:$0xf]
  %v75 = vld [vmem:[%s1 + $0xb8] sm:$0xf]
  %v76 = vld [vmem:[%s1 + $0xbc] sm:$0xf]
  %v77 = vld [vmem:[%s2] sm:$0x1]
  %v79 = vlaneseq
  %v80 = vshrl.u32 %v79, 7
  %v81 = vsub.s32 0, %v80
  %v82 = vrot.slane %v77, %v81
  %v98 = vunpack.c.l.b16 %v15
  %v99 = vunpack.c.h.b16 %v15
  %v100 = vunpack.c.l.b16 %v16
  %v101 = vunpack.c.l.b16 %v17
  %v102 = vunpack.c.h.b16 %v17
  %v103 = vunpack.c.l.b16 %v18
  %v104 = vunpack.c.l.b16 %v19
  %v105 = vunpack.c.h.b16 %v19
  %v106 = vunpack.c.l.b16 %v20
  %v107 = vunpack.c.l.b16 %v21
  %v108 = vunpack.c.h.b16 %v21
  %v109 = vunpack.c.l.b16 %v22
  %v110 = vunpack.c.l.b16 %v23
  %v111 = vunpack.c.h.b16 %v23
  %v112 = vunpack.c.l.b16 %v24
  %v113 = vunpack.c.l.b16 %v25
  %v114 = vunpack.c.h.b16 %v25
  %v115 = vunpack.c.l.b16 %v26
  %v116 = vunpack.c.l.b16 %v27
  %v117 = vunpack.c.h.b16 %v27
  %v118 = vunpack.c.l.b16 %v28
  %v119 = vpack.c.b16 %v101, %v98
  %v120 = vpack.c.b16 %v102, %v99
  %v121 = vpack.c.b16 %v103, %v100
  %v122 = vpack.c.b16 %v107, %v104
  %v123 = vpack.c.b16 %v108, %v105
  %v124 = vpack.c.b16 %v109, %v106
  %v125 = vpack.c.b16 %v113, %v110
  %v126 = vpack.c.b16 %v114, %v111
  %v127 = vpack.c.b16 %v115, %v112
  %v128 = vpack.c.b16 %v116, %v116
  %v129 = vpack.c.b16 %v117, %v117
  %v130 = vpack.c.b16 %v118, %v118
  %v191 = vunpack.c.l.b16 %v29
  %v192 = vunpack.c.l.b16 %v30
  %v193 = vunpack.c.l.b16 %v31
  %v194 = vunpack.c.l.b16 %v32
  %v195 = vunpack.c.l.b16 %v33
  %v196 = vunpack.c.l.b16 %v34
  %v197 = vunpack.c.l.b16 %v35
  %v198 = vunpack.c.l.b16 %v36
  %v199 = vunpack.c.l.b16 %v37
  %v200 = vunpack.c.l.b16 %v38
  %v201 = vunpack.c.l.b16 %v39
  %v202 = vunpack.c.l.b16 %v40
  %v203 = vunpack.c.l.b16 %v41
  %v204 = vunpack.c.l.b16 %v42
  %v205 = vunpack.c.l.b16 %v43
  %v206 = vunpack.c.l.b16 %v44
  %v207 = vunpack.c.l.b16 %v45
  %v208 = vunpack.c.l.b16 %v46
  %v209 = vunpack.c.l.b16 %v47
  %v210 = vunpack.c.l.b16 %v48
  %v211 = vunpack.c.l.b16 %v49
  %v212 = vunpack.c.l.b16 %v50
  %v213 = vunpack.c.l.b16 %v51
  %v214 = vunpack.c.l.b16 %v52
  %v215 = vunpack.c.l.b16 %v53
  %v216 = vunpack.c.l.b16 %v54
  %v217 = vunpack.c.l.b16 %v55
  %v218 = vunpack.c.l.b16 %v56
  %v219 = vunpack.c.l.b16 %v57
  %v220 = vunpack.c.l.b16 %v58
  %v221 = vunpack.c.l.b16 %v59
  %v222 = vunpack.c.l.b16 %v60
  %v223 = vunpack.c.l.b16 %v61
  %v224 = vunpack.c.l.b16 %v62
  %v225 = vunpack.c.l.b16 %v63
  %v226 = vunpack.c.l.b16 %v64
  %v227 = vunpack.c.l.b16 %v65
  %v228 = vunpack.c.l.b16 %v66
  %v229 = vunpack.c.l.b16 %v67
  %v230 = vunpack.c.l.b16 %v68
  %v231 = vunpack.c.l.b16 %v69
  %v232 = vunpack.c.l.b16 %v70
  %v233 = vunpack.c.l.b16 %v71
  %v234 = vunpack.c.l.b16 %v72
  %v235 = vunpack.c.l.b16 %v73
  %v236 = vunpack.c.l.b16 %v74
  %v237 = vunpack.c.l.b16 %v75
  %v238 = vunpack.c.l.b16 %v76
  %v239 = vpack.c.b16 %v192, %v191
  %v240 = vpack.c.b16 %v194, %v193
  %v241 = vpack.c.b16 %v196, %v195
  %v242 = vpack.c.b16 %v198, %v197
  %v243 = vpack.c.b16 %v200, %v199
  %v244 = vpack.c.b16 %v202, %v201
  %v245 = vpack.c.b16 %v204, %v203
  %v246 = vpack.c.b16 %v206, %v205
  %v247 = vpack.c.b16 %v208, %v207
  %v248 = vpack.c.b16 %v210, %v209
  %v249 = vpack.c.b16 %v212, %v211
  %v250 = vpack.c.b16 %v214, %v213
  %v251 = vpack.c.b16 %v216, %v215
  %v252 = vpack.c.b16 %v218, %v217
  %v253 = vpack.c.b16 %v220, %v219
  %v254 = vpack.c.b16 %v222, %v221
  %v255 = vpack.c.b16 %v224, %v223
  %v256 = vpack.c.b16 %v226, %v225
  %v257 = vpack.c.b16 %v228, %v227
  %v258 = vpack.c.b16 %v230, %v229
  %v259 = vpack.c.b16 %v232, %v231
  %v260 = vpack.c.b16 %v234, %v233
  %v261 = vpack.c.b16 %v236, %v235
  %v262 = vpack.c.b16 %v238, %v237
  %287 = vmatprep.subr.bf16.mxu0 0
  %288 = vmatpush1.bf16.msra.mxu0 %v239
  %289 = vmatprep.subr.bf16.mxu0 0
  %290 = vmatpush1.bf16.msra.mxu0 %v240
  %291 = vmatprep.subr.bf16.mxu0 0
  %292 = vmatpush1.bf16.msra.mxu0 %v241
  %293 = vmatprep.subr.bf16.mxu0 0
  %294 = vmatpush1.bf16.msra.mxu0 %v242
  %295 = vmatprep.subr.bf16.mxu0 0
  %296 = vmatpush1.bf16.msra.mxu0 %v243
  %297 = vmatprep.subr.bf16.mxu0 0
  %298 = vmatpush1.bf16.msra.mxu0 %v244
  %299 = vmatprep.subr.bf16.mxu0 0
  %300 = vmatpush1.bf16.msra.mxu0 %v245
  %301 = vmatprep.subr.bf16.mxu0 0
  %302 = vmatpush1.bf16.msra.mxu0 %v246
  %303 = vmatprep.subr.bf16.mxu0 0
  %304 = vmatpush1.bf16.msra.mxu0 %v247
  %305 = vmatprep.subr.bf16.mxu0 0
  %306 = vmatpush1.bf16.msra.mxu0 %v248
  %307 = vmatprep.subr.bf16.mxu0 0
  %308 = vmatpush1.bf16.msra.mxu0 %v249
  %309 = vmatprep.subr.bf16.mxu0 0
  %310 = vmatpush1.bf16.msra.mxu0 %v250
  %311 = vmatprep.subr.bf16.mxu0 0
  %312 = vmatpush1.bf16.msra.mxu0 %v251
  %313 = vmatprep.subr.bf16.mxu0 0
  %314 = vmatpush1.bf16.msra.mxu0 %v252
  %315 = vmatprep.subr.bf16.mxu0 0
  %316 = vmatpush1.bf16.msra.mxu0 %v253
  %317 = vmatprep.subr.bf16.mxu0 0
  %318 = vmatpush1.bf16.msra.mxu0 %v254
  %319 = vmatprep.mubr.bf16.mxu0 %v120
  %320 = vmatmul.mubr.bf16.gmra.mrb[0].mxu0 %v119
  %v321 = vpop.f32.mrb[0].mxu0
  %v322 = vadd.f32 %v82, %v321
  %v323 = vpop.f32.mrb[0].mxu0
  %v324 = vpop.f32.mrb[0].mxu0
  %v325 = vadd.f32 %v82, %v324
  %v326 = vpop.f32.mrb[0].mxu0
  %327 = vmatprep.mubr.bf16.mxu0 %v123
  %328 = vmatmul.mubr.bf16.gmra.mrb[0].mxu0 %v122
  %v329 = vpop.f32.mrb[0].mxu0
  %v330 = vadd.f32 %v82, %v329
  %v331 = vpop.f32.mrb[0].mxu0
  %v332 = vpop.f32.mrb[0].mxu0
  %v333 = vadd.f32 %v82, %v332
  %v334 = vpop.f32.mrb[0].mxu0
  %335 = vmatprep.mubr.bf16.mxu0 %v126
  %336 = vmatmul.mubr.bf16.gmra.mrb[0].mxu0 %v125
  %v337 = vpop.f32.mrb[0].mxu0
  %v338 = vadd.f32 %v82, %v337
  %v339 = vpop.f32.mrb[0].mxu0
  %v340 = vpop.f32.mrb[0].mxu0
  %v341 = vadd.f32 %v82, %v340
  %v342 = vpop.f32.mrb[0].mxu0
  %343 = vmatprep.mubr.bf16.mxu0 %v129
  %344 = vmatmul.mubr.bf16.gmra.mrb[0].mxu0 %v128
  %v345 = vpop.f32.mrb[0].mxu0
  %v346 = vadd.f32 %v82, %v345
  %v347 = vpop.f32.mrb[0].mxu0
  %v348 = vpop.f32.mrb[0].mxu0
  %v349 = vpop.f32.mrb[0].mxu0
  %350 = vdwg.mxu0
  %351 = vmatprep.subr.bf16.mxu0 0
  %352 = vmatpush1.bf16.msra.mxu0 %v255
  %353 = vmatprep.subr.bf16.mxu0 0
  %354 = vmatpush1.bf16.msra.mxu0 %v256
  %355 = vmatprep.subr.bf16.mxu0 0
  %356 = vmatpush1.bf16.msra.mxu0 %v257
  %357 = vmatprep.subr.bf16.mxu0 0
  %358 = vmatpush1.bf16.msra.mxu0 %v258
  %359 = vmatprep.subr.bf16.mxu0 0
  %360 = vmatpush1.bf16.msra.mxu0 %v259
  %361 = vmatprep.subr.bf16.mxu0 0
  %362 = vmatpush1.bf16.msra.mxu0 %v260
  %363 = vmatprep.subr.bf16.mxu0 0
  %364 = vmatpush1.bf16.msra.mxu0 %v261
  %365 = vmatprep.subr.bf16.mxu0 0
  %366 = vmatpush1.bf16.msra.mxu0 %v262
  %367 = vmatprep.subr.bf16.mxu0 0
  %368 = vmatpush1.bf16.msra.mxu0 0
  %369 = vmatprep.subr.bf16.mxu0 0
  %370 = vmatpush1.bf16.msra.mxu0 0
  %371 = vmatprep.subr.bf16.mxu0 0
  %372 = vmatpush1.bf16.msra.mxu0 0
  %373 = vmatprep.subr.bf16.mxu0 0
  %374 = vmatpush1.bf16.msra.mxu0 0
  %375 = vmatprep.subr.bf16.mxu0 0
  %376 = vmatpush1.bf16.msra.mxu0 0
  %377 = vmatprep.subr.bf16.mxu0 0
  %378 = vmatpush1.bf16.msra.mxu0 0
  %379 = vmatprep.subr.bf16.mxu0 0
  %380 = vmatpush1.bf16.msra.mxu0 0
  %381 = vmatprep.subr.bf16.mxu0 0
  %382 = vmatpush1.bf16.msra.mxu0 0
  %383 = vmatprep.mubr.bf16.mxu0 0
  %384 = vmatmul.mubr.bf16.gmra.mrb[0].mxu0 %v121
  %v385 = vpop.f32.mrb[0].mxu0
  %v386 = vadd.f32 %v322, %v385
  %v387 = vpop.f32.mrb[0].mxu0
  %v388 = vpop.f32.mrb[0].mxu0
  %v389 = vadd.f32 %v325, %v388
  %v390 = vpop.f32.mrb[0].mxu0
  %391 = vmatprep.mubr.bf16.mxu0 0
  %392 = vmatmul.mubr.bf16.gmra.mrb[0].mxu0 %v124
  %v393 = vpop.f32.mrb[0].mxu0
  %v394 = vadd.f32 %v330, %v393
  %v395 = vpop.f32.mrb[0].mxu0
  %v396 = vpop.f32.mrb[0].mxu0
  %v397 = vadd.f32 %v333, %v396
  %v398 = vpop.f32.mrb[0].mxu0
  %399 = vmatprep.mubr.bf16.mxu0 0
  %400 = vmatmul.mubr.bf16.gmra.mrb[0].mxu0 %v127
  %v401 = vpop.f32.mrb[0].mxu0
  %v402 = vadd.f32 %v338, %v401
  %v403 = vpop.f32.mrb[0].mxu0
  %v404 = vpop.f32.mrb[0].mxu0
  %v405 = vadd.f32 %v341, %v404
  %v406 = vpop.f32.mrb[0].mxu0
  %407 = vmatprep.mubr.bf16.mxu0 0
  %408 = vmatmul.mubr.bf16.gmra.mrb[0].mxu0 %v130
  %v409 = vpop.f32.mrb[0].mxu0
  %v410 = vadd.f32 %v346, %v409
  %v411 = vpop.f32.mrb[0].mxu0
  %v412 = vpop.f32.mrb[0].mxu0
  %v413 = vpop.f32.mrb[0].mxu0
  %414 = vdwg.mxu0
  %v415 = vmax.f32 %v386, 0.0
  %v416 = vmax.f32 %v389, 0.0
  %v417 = vmax.f32 %v394, 0.0
  %v418 = vmax.f32 %v397, 0.0
  %v419 = vmax.f32 %v402, 0.0
  %v420 = vmax.f32 %v405, 0.0
  %v421 = vmax.f32 %v410, 0.0
  %vm422 = vcmask 392192
  %423 = vst.msk [vmem:[%s3] sm:$0xff] %vm422, %v415
  %424 = vst.msk [vmem:[%s3 + $0x8] sm:$0xff] %vm422, %v416
  %425 = vst.msk [vmem:[%s3 + $0x10] sm:$0xff] %vm422, %v417
  %426 = vst.msk [vmem:[%s3 + $0x18] sm:$0xff] %vm422, %v418
  %427 = vst.msk [vmem:[%s3 + $0x20] sm:$0xff] %vm422, %v419
  %428 = vst.msk [vmem:[%s3 + $0x28] sm:$0xff] %vm422, %v420
  %vm429 = vcmask 386048
  %430 = vst.msk [vmem:[%s3 + $0x30] sm:$0x3] %vm429, %v421
  // Predicated region
  $region14: #{squeeze_forward.31} parent=0 // pred_check
    _
  $region15: #{squeeze_forward.31} parent=0 // pred_check_branch
    %432 = sbr.rel (0) target = $region17
  $region16: #{squeeze_forward.31} parent=0 // pred_region
    _
  $region17: #{squeeze_forward.31} parent=0 // pred_fallthru
    _
  // Predicated region
  $region18: #{squeeze_forward.31} parent=0 // pred_check
    _
  $region19: #{squeeze_forward.31} parent=0 // pred_check_branch
    %434 = sbr.rel (0) target = $region21
  $region20: #{squeeze_forward.31} parent=0 // pred_region
    _
  $region21: #{squeeze_forward.31} parent=0 // pred_fallthru
    _

// kernel: squeeze_forward.30
$region0: #{squeeze_forward.30}
  #allocation0 [shape = 'u32[]', space=smem, size = 0x4, offset = 0x4, fixed_abs, tag = 'smem constant byte address 0x4 - core index']
  #allocation1 [shape = 'u32[144,128]{1,0:T(1,128)}', space=vmem, size = 0x12000, scoped, tag = 'internal scratch']
  %s0 = inlined_call_operand.vmem [shape: bf16[50,432], index: 0, kind: input, shape index: {}]
  %s1 = inlined_call_operand.vmem [shape: bf16[432,384], index: 1, kind: input, shape index: {}]
  %s2 = inlined_call_operand.vmem [shape: f32[1,384], index: 2, kind: input, shape index: {}]
  %s3 = inlined_call_operand.vmem [shape: f32[50,384], index: 3, kind: output, shape index: {}]
  %s4 = sld [smem:[#allocation0]]
  $region120: #{squeeze_forward.30} parent=0
    _
  %s6 = ssub.s32 1, %s4
  %s7 = scalar_select 0, %s6, %s4
  $region1: #{squeeze_forward.30} parent=0
    #allocation2 [shape = 'u8[221184]{0}', space=vmem, size = 0x36000, scoped, tag = 'input window, operand 1']
    #allocation3 [shape = 'u8[57344]{0}', space=vmem, size = 0xe000, scoped, tag = 'output window, operand 0']
    loop: start=0, step=1, limit=5
    $region2: #{squeeze_forward.30} parent=1 // loop_pre_header
      _
    $region3: #{squeeze_forward.30} parent=1 // loop_header
      %s9 = sphi 0, %s13
      %p10 = scmp.ge.s32.totalorder %s9, 5
      %s16 = sphi 0, %s28
      %s17 = sphi 0, %s24
      %s18 = sphi 0, %s16
      %s19 = sphi 0, %s17
      %s20 = sphi 0, %s18
      %s21 = sphi 0, %s19
      %s31 = sphi 0, %s33
      %s34 = sphi 0, %s31
      %s35 = sphi 0, %s34
      %s51 = sphi 0, %s35
      %s57 = sphi 0, %s59
      %s60 = sphi 0, %s57
      %s61 = sphi 0, %s60
      %s77 = sphi 0, %s61
      %s83 = sphi 0, %s85
      %s86 = sphi 0, %s83
      %s87 = sphi 0, %s86
      %s103 = sphi 0, %s87
      %s111 = sphi 0, %s113
      %s114 = sphi 0, %s111
      %s115 = sphi 0, %s114
      %s131 = sphi 0, %s115
    $region4: #{squeeze_forward.30} parent=1 // loop_header_branch
      %12 = sbr.rel (%p10) target = $region8
    $region5: #{squeeze_forward.30} parent=1 // loop_body
      %s14 = ssub.s32 %s9, 1
      %s15 = ssub.s32 %s9, 2
      %s22 = sadd.s32 1, %s17
      %p23 = scmp.ge.s32.totalorder %s22, 3
      %s24 = scalar_select %p23, 0, %s22
      %s25 = sadd.s32 1, %s16
      %s26 = scalar_select %p23, %s25, %s16
      %p27 = scmp.ge.s32.totalorder %s26, 1
      %s28 = scalar_select %p27, 0, %s26
      %s29 = ssub.s32 %s16, %s28
      %p30 = scmp.eq.s32.totalorder %s29, 0
      %s32 = sadd.s32 %s31, 1
      %s33 = scalar_select %p30, %s31, %s32
      %p36 = pneg %p30
      %p37 = scmp.eq.s32.totalorder %s9, 2
      %p38 = por %p36, %p37
      %p39 = scmp.ne.s32.totalorder %s31, %s34
      %p40 = scmp.eq.s32.totalorder %s9, 0
      %p41 = por %p39, %p40
      %p42 = scmp.ne.s32.totalorder %s31, %s34
      %p43 = scmp.eq.s32.totalorder %s14, 2
      %p44 = por %p42, %p43
      %p45 = scmp.ne.s32.totalorder %s34, %s35
      %p46 = scmp.eq.s32.totalorder %s14, 0
      %p47 = por %p45, %p46
      %p48 = scmp.ne.s32.totalorder %s34, %s35
      %p49 = scmp.eq.s32.totalorder %s15, 2
      %p50 = por %p48, %p49
      %p52 = scmp.ne.s32.totalorder %s35, %s51
      %p53 = scmp.eq.s32.totalorder %s15, 0
      %p54 = por %p52, %p53
      %s55 = ssub.s32 %s17, %s24
      %p56 = scmp.eq.s32.totalorder %s55, 0
      %s58 = sadd.s32 %s57, 1
      %s59 = scalar_select %p56, %s57, %s58
      %p62 = pneg %p56
      %p63 = scmp.eq.s32.totalorder %s9, 2
      %p64 = por %p62, %p63
      %p65 = scmp.ne.s32.totalorder %s57, %s60
      %p66 = scmp.eq.s32.totalorder %s9, 0
      %p67 = por %p65, %p66
      %p68 = scmp.ne.s32.totalorder %s57, %s60
      %p69 = scmp.eq.s32.totalorder %s14, 2
      %p70 = por %p68, %p69
      %p71 = scmp.ne.s32.totalorder %s60, %s61
      %p72 = scmp.eq.s32.totalorder %s14, 0
      %p73 = por %p71, %p72
      %p74 = scmp.ne.s32.totalorder %s60, %s61
      %p75 = scmp.eq.s32.totalorder %s15, 2
      %p76 = por %p74, %p75
      %p78 = scmp.ne.s32.totalorder %s61, %s77
      %p79 = scmp.eq.s32.totalorder %s15, 0
      %p80 = por %p78, %p79
      %s81 = ssub.s32 %s17, %s24
      %p82 = scmp.eq.s32.totalorder %s81, 0
      %s84 = sadd.s32 %s83, 1
      %s85 = scalar_select %p82, %s83, %s84
      %p88 = pneg %p82
      %p89 = scmp.eq.s32.totalorder %s9, 2
      %p90 = por %p88, %p89
      %p91 = scmp.ne.s32.totalorder %s83, %s86
      %p92 = scmp.eq.s32.totalorder %s9, 0
      %p93 = por %p91, %p92
      %p94 = scmp.ne.s32.totalorder %s83, %s86
      %p95 = scmp.eq.s32.totalorder %s14, 2
      %p96 = por %p94, %p95
      %p97 = scmp.ne.s32.totalorder %s86, %s87
      %p98 = scmp.eq.s32.totalorder %s14, 0
      %p99 = por %p97, %p98
      %p100 = scmp.ne.s32.totalorder %s86, %s87
      %p101 = scmp.eq.s32.totalorder %s15, 2
      %p102 = por %p100, %p101
      %p104 = scmp.ne.s32.totalorder %s87, %s103
      %p105 = scmp.eq.s32.totalorder %s15, 0
      %p106 = por %p104, %p105
      %s107 = ssub.s32 %s16, %s28
      %s108 = ssub.s32 %s17, %s24
      %s109 = sor.u32 %s107, %s108
      %p110 = scmp.eq.s32.totalorder %s109, 0
      %s112 = sadd.s32 %s111, 1
      %s113 = scalar_select %p110, %s111, %s112
      %p116 = pneg %p110
      %p117 = scmp.eq.s32.totalorder %s9, 2
      %p118 = por %p116, %p117
      %p119 = scmp.ne.s32.totalorder %s111, %s114
      %p120 = scmp.eq.s32.totalorder %s9, 0
      %p121 = por %p119, %p120
      %p122 = scmp.ne.s32.totalorder %s111, %s114
      %p123 = scmp.eq.s32.totalorder %s14, 2
      %p124 = por %p122, %p123
      %p125 = scmp.ne.s32.totalorder %s114, %s115
      %p126 = scmp.eq.s32.totalorder %s14, 0
      %p127 = por %p125, %p126
      %p128 = scmp.ne.s32.totalorder %s114, %s115
      %p129 = scmp.eq.s32.totalorder %s15, 2
      %p130 = por %p128, %p129
      %p132 = scmp.ne.s32.totalorder %s115, %s131
      %p133 = scmp.eq.s32.totalorder %s15, 0
      %p134 = por %p132, %p133
      %p135 = scmp.le.s32.totalorder 1, %s9
      %p136 = scmp.lt.s32.totalorder %s9, 4
      %p137 = pnand %p135, %p136
      %p138 = pneg %p137
      // Predicated region
      $region9: #{squeeze_forward.30} parent=5 // pred_check
        _
      $region10: #{squeeze_forward.30} parent=5 // pred_check_branch
        %140 = sbr.rel (%p137) target = $region12
      $region11: #{squeeze_forward.30} parent=5 // pred_region
        %s141 = ssub.s32 %s9, 1
        // Predicated region
        $region13: #{squeeze_forward.30} parent=11 // pred_check
          %p142 = pneg %p47
        $region14: #{squeeze_forward.30} parent=11 // pred_check_branch
          %144 = sbr.rel (%p142) target = $region16
        $region15: #{squeeze_forward.30} parent=11 // pred_region
          %s145 = smul.u32 7, %s18
          %p146 = scmp.lt.s32.totalorder %s145, 6
          %s147 = scalar_select %p146, %s145, 6
          %s148 = smul.addr %s147, 4
          %s149 = smul.addr %s148, 4
          %s150 = scalar_lea.vmem %s0, %s149
          %s151 = smul.u32 7, %s18
        $region16: #{squeeze_forward.30} parent=11 // pred_fallthru
          _
      $region12: #{squeeze_forward.30} parent=5 // pred_fallthru
        _
      %p152 = scmp.lt.s32.totalorder %s9, 3
      // Predicated region
      $region17: #{squeeze_forward.30} parent=5 // pred_check
        %p153 = pneg %p152
      $region18: #{squeeze_forward.30} parent=5 // pred_check_branch
        %155 = sbr.rel (%p153) target = $region20
      $region19: #{squeeze_forward.30} parent=5 // pred_region
        // Predicated region
        $region21: #{squeeze_forward.30} parent=19 // pred_check
          %p156 = pneg %p67
        $region22: #{squeeze_forward.30} parent=19 // pred_check_branch
          %158 = sbr.rel (%p156) target = $region24
        $region23: #{squeeze_forward.30} parent=19 // pred_region
          %s159 = sand.u32 %s57, 1
          %s160 = sand.u32 %s57, 1
          %s161 = smul.addr %s160, 216
          %s162 = scalar_lea.vmem [#allocation2], %s161
          %s163 = smul.addr %s17, 4
          %s164 = scalar_lea.vmem %s1, %s163
          // Predicated region
          $region25: #{squeeze_forward.30} parent=23 // pred_check
            _
          $region26: #{squeeze_forward.30} parent=23 // pred_check_branch
            %166 = sbr.rel (0) target = $region28
          $region27: #{squeeze_forward.30} parent=23 // pred_region
            // Predicated region
            $region29: #{squeeze_forward.30} parent=27 // pred_check
              _
            $region30: #{squeeze_forward.30} parent=27 // pred_check_branch
              %168 = sbr.rel target = $region32
            $region31: #{squeeze_forward.30} parent=27 // pred_region
              // Predicated region
              $region44: #{squeeze_forward.30} parent=31 // pred_check
                _
              $region45: #{squeeze_forward.30} parent=31 // pred_check_branch
                %289 = sbr.rel (0) target = $region47
              $region46: #{squeeze_forward.30} parent=31 // pred_region
                loop: start=0, step=1, limit=1
                $region48: #{squeeze_forward.30} parent=46 // loop_pre_header
                  _
                $region49: #{squeeze_forward.30} parent=46 // loop_header
                  %s291 = sphi 0, %s295
                  %p292 = scmp.ge.s32.totalorder %s291, 1
                  %s296 = sphi %s164, %s164
                  %s297 = sphi %s162, %s162
                $region50: #{squeeze_forward.30} parent=46 // loop_header_branch
                  %294 = sbr.rel (%p292) target = $region54
                $region51: #{squeeze_forward.30} parent=46 // loop_body
                  _
                $region52: #{squeeze_forward.30} parent=46 // loop_footer
                  %s295 = sadd.s32 1, %s291
                $region53: #{squeeze_forward.30} parent=46 // loop_footer_branch
                  %290 = sbr.rel target = $region49
                $region54: #{squeeze_forward.30} parent=46 // loop_exit
                  _
                loop: start=0, step=1, limit=1
                $region55: #{squeeze_forward.30} parent=46 // loop_pre_header
                  _
                $region56: #{squeeze_forward.30} parent=46 // loop_header
                  %s300 = sphi 0, %s304
                  %p301 = scmp.ge.s32.totalorder %s300, 1
                  %s305 = sphi %s164, %s164
                  %s306 = sphi %s162, %s162
                $region57: #{squeeze_forward.30} parent=46 // loop_header_branch
                  %303 = sbr.rel (%p301) target = $region61
                $region58: #{squeeze_forward.30} parent=46 // loop_body
                  %v307 = vld [vmem:[%s305] sm:$0xf]
                  %308 = vst [vmem:[%s306] sm:$0xf] %v307
                  %v309 = vld [vmem:[%s305 + $0xc] sm:$0xf]
                  %310 = vst [vmem:[%s306 + $0x4] sm:$0xf] %v309
                  %v311 = vld [vmem:[%s305 + $0x18] sm:$0xf]
                  %312 = vst [vmem:[%s306 + $0x8] sm:$0xf] %v311
                  %v313 = vld [vmem:[%s305 + $0x24] sm:$0xf]
                  %314 = vst [vmem:[%s306 + $0xc] sm:$0xf] %v313
                  %v315 = vld [vmem:[%s305 + $0x30] sm:$0xf]
                  %316 = vst [vmem:[%s306 + $0x10] sm:$0xf] %v315
                  %v317 = vld [vmem:[%s305 + $0x3c] sm:$0xf]
                  %318 = vst [vmem:[%s306 + $0x14] sm:$0xf] %v317
                  %v319 = vld [vmem:[%s305 + $0x48] sm:$0xf]
                  %320 = vst [vmem:[%s306 + $0x18] sm:$0xf] %v319
                  %v321 = vld [vmem:[%s305 + $0x54] sm:$0xf]
                  %322 = vst [vmem:[%s306 + $0x1c] sm:$0xf] %v321
                  %v323 = vld [vmem:[%s305 + $0x60] sm:$0xf]
                  %324 = vst [vmem:[%s306 + $0x20] sm:$0xf] %v323
                  %v325 = vld [vmem:[%s305 + $0x6c] sm:$0xf]
                  %326 = vst [vmem:[%s306 + $0x24] sm:$0xf] %v325
                  %v327 = vld [vmem:[%s305 + $0x78] sm:$0xf]
                  %328 = vst [vmem:[%s306 + $0x28] sm:$0xf] %v327
                  %v329 = vld [vmem:[%s305 + $0x84] sm:$0xf]
                  %330 = vst [vmem:[%s306 + $0x2c] sm:$0xf] %v329
                  %v331 = vld [vmem:[%s305 + $0x90] sm:$0xf]
                  %332 = vst [vmem:[%s306 + $0x30] sm:$0xf] %v331
                  %v333 = vld [vmem:[%s305 + $0x9c] sm:$0xf]
                  %334 = vst [vmem:[%s306 + $0x34] sm:$0xf] %v333
                  %v335 = vld [vmem:[%s305 + $0xa8] sm:$0xf]
                  %336 = vst [vmem:[%s306 + $0x38] sm:$0xf] %v335
                  %v337 = vld [vmem:[%s305 + $0xb4] sm:$0xf]
                  %338 = vst [vmem:[%s306 + $0x3c] sm:$0xf] %v337
                  %v339 = vld [vmem:[%s305 + $0xc0] sm:$0xf]
                  %340 = vst [vmem:[%s306 + $0x40] sm:$0xf] %v339
                  %v341 = vld [vmem:[%s305 + $0xcc] sm:$0xf]
                  %342 = vst [vmem:[%s306 + $0x44] sm:$0xf] %v341
                  %v343 = vld [vmem:[%s305 + $0xd8] sm:$0xf]
                  %344 = vst [vmem:[%s306 + $0x48] sm:$0xf] %v343
                  %v345 = vld [vmem:[%s305 + $0xe4] sm:$0xf]
                  %346 = vst [vmem:[%s306 + $0x4c] sm:$0xf] %v345
                  %v347 = vld [vmem:[%s305 + $0xf0] sm:$0xf]
                  %348 = vst [vmem:[%s306 + $0x50] sm:$0xf] %v347
                  %v349 = vld [vmem:[%s305 + $0xfc] sm:$0xf]
                  %350 = vst [vmem:[%s306 + $0x54] sm:$0xf] %v349
                  %v351 = vld [vmem:[%s305 + $0x108] sm:$0xf]
                  %352 = vst [vmem:[%s306 + $0x58] sm:$0xf] %v351
                  %v353 = vld [vmem:[%s305 + $0x114] sm:$0xf]
                  %354 = vst [vmem:[%s306 + $0x5c] sm:$0xf] %v353
                  %v355 = vld [vmem:[%s305 + $0x120] sm:$0xf]
                  %356 = vst [vmem:[%s306 + $0x60] sm:$0xf] %v355
                  %v357 = vld [vmem:[%s305 + $0x12c] sm:$0xf]
                  %358 = vst [vmem:[%s306 + $0x64] sm:$0xf] %v357
                  %v359 = vld [vmem:[%s305 + $0x138] sm:$0xf]
                  %360 = vst [vmem:[%s306 + $0x68] sm:$0xf] %v359
                  %v361 = vld [vmem:[%s305 + $0x144] sm:$0xf]
                  %362 = vst [vmem:[%s306 + $0x6c] sm:$0xf] %v361
                  %v363 = vld [vmem:[%s305 + $0x150] sm:$0xf]
                  %364 = vst [vmem:[%s306 + $0x70] sm:$0xf] %v363
                  %v365 = vld [vmem:[%s305 + $0x15c] sm:$0xf]
                  %366 = vst [vmem:[%s306 + $0x74] sm:$0xf] %v365
                  %v367 = vld [vmem:[%s305 + $0x168] sm:$0xf]
                  %368 = vst [vmem:[%s306 + $0x78] sm:$0xf] %v367
                  %v369 = vld [vmem:[%s305 + $0x174] sm:$0xf]
                  %370 = vst [vmem:[%s306 + $0x7c] sm:$0xf] %v369
                  %v371 = vld [vmem:[%s305 + $0x180] sm:$0xf]
                  %372 = vst [vmem:[%s306 + $0x80] sm:$0xf] %v371
                  %v373 = vld [vmem:[%s305 + $0x18c] sm:$0xf]
                  %374 = vst [vmem:[%s306 + $0x84] sm:$0xf] %v373
                  %v375 = vld [vmem:[%s305 + $0x198] sm:$0xf]
                  %376 = vst [vmem:[%s306 + $0x88] sm:$0xf] %v375
                  %v377 = vld [vmem:[%s305 + $0x1a4] sm:$0xf]
                  %378 = vst [vmem:[%s306 + $0x8c] sm:$0xf] %v377
                  %v379 = vld [vmem:[%s305 + $0x1b0] sm:$0xf]
                  %380 = vst [vmem:[%s306 + $0x90] sm:$0xf] %v379
                  %v381 = vld [vmem:[%s305 + $0x1bc] sm:$0xf]
                  %382 = vst [vmem:[%s306 + $0x94] sm:$0xf] %v381
                  %v383 = vld [vmem:[%s305 + $0x1c8] sm:$0xf]
                  %384 = vst [vmem:[%s306 + $0x98] sm:$0xf] %v383
                  %v385 = vld [vmem:[%s305 + $0x1d4] sm:$0xf]
                  %386 = vst [vmem:[%s306 + $0x9c] sm:$0xf] %v385
                  %v387 = vld [vmem:[%s305 + $0x1e0] sm:$0xf]
                  %388 = vst [vmem:[%s306 + $0xa0] sm:$0xf] %v387
                  %v389 = vld [vmem:[%s305 + $0x1ec] sm:$0xf]
                  %390 = vst [vmem:[%s306 + $0xa4] sm:$0xf] %v389
                  %v391 = vld [vmem:[%s305 + $0x1f8] sm:$0xf]
                  %392 = vst [vmem:[%s306 + $0xa8] sm:$0xf] %v391
                  %v393 = vld [vmem:[%s305 + $0x204] sm:$0xf]
                  %394 = vst [vmem:[%s306 + $0xac] sm:$0xf] %v393
                  %v395 = vld [vmem:[%s305 + $0x210] sm:$0xf]
                  %396 = vst [vmem:[%s306 + $0xb0] sm:$0xf] %v395
                  %v397 = vld [vmem:[%s305 + $0x21c] sm:$0xf]
                  %398 = vst [vmem:[%s306 + $0xb4] sm:$0xf] %v397
                  %v399 = vld [vmem:[%s305 + $0x228] sm:$0xf]
                  %400 = vst [vmem:[%s306 + $0xb8] sm:$0xf] %v399
                  %v401 = vld [vmem:[%s305 + $0x234] sm:$0xf]
                  %402 = vst [vmem:[%s306 + $0xbc] sm:$0xf] %v401
                  %v403 = vld [vmem:[%s305 + $0x240] sm:$0xf]
                  %404 = vst [vmem:[%s306 + $0xc0] sm:$0xf] %v403
                  %v405 = vld [vmem:[%s305 + $0x24c] sm:$0xf]
                  %406 = vst [vmem:[%s306 + $0xc4] sm:$0xf] %v405
                  %v407 = vld [vmem:[%s305 + $0x258] sm:$0xf]
                  %408 = vst [vmem:[%s306 + $0xc8] sm:$0xf] %v407
                  %v409 = vld [vmem:[%s305 + $0x264] sm:$0xf]
                  %410 = vst [vmem:[%s306 + $0xcc] sm:$0xf] %v409
                  %v411 = vld [vmem:[%s305 + $0x270] sm:$0xf]
                  %412 = vst [vmem:[%s306 + $0xd0] sm:$0xf] %v411
                  %v413 = vld [vmem:[%s305 + $0x27c] sm:$0xf]
                  %414 = vst [vmem:[%s306 + $0xd4] sm:$0xf] %v413
                $region59: #{squeeze_forward.30} parent=46 // loop_footer
                  %s304 = sadd.s32 1, %s300
                $region60: #{squeeze_forward.30} parent=46 // loop_footer_branch
                  %299 = sbr.rel target = $region56
                $region61: #{squeeze_forward.30} parent=46 // loop_exit
                  _
              $region47: #{squeeze_forward.30} parent=31 // pred_fallthru
                _
            $region32: #{squeeze_forward.30} parent=27 // pred_fallthru
              _
            // Predicated region
            $region33: #{squeeze_forward.30} parent=27 // pred_check
              _
            $region34: #{squeeze_forward.30} parent=27 // pred_check_branch
              %170 = sbr.rel (0) target = $region36
            $region35: #{squeeze_forward.30} parent=27 // pred_region
              loop: start=0, step=1, limit=1
              $region37: #{squeeze_forward.30} parent=35 // loop_pre_header
                _
              $region38: #{squeeze_forward.30} parent=35 // loop_header
                %s173 = sphi 0, %s177
                %p174 = scmp.ge.s32.totalorder %s173, 1
                %s178 = sphi %s164, %s164
                %s179 = sphi %s162, %s162
              $region39: #{squeeze_forward.30} parent=35 // loop_header_branch
                %176 = sbr.rel (%p174) target = $region43
              $region40: #{squeeze_forward.30} parent=35 // loop_body
                %v180 = vld [vmem:[%s178] sm:$0xf]
                %181 = vst [vmem:[%s179] sm:$0xf] %v180
                %v182 = vld [vmem:[%s178 + $0xc] sm:$0xf]
                %183 = vst [vmem:[%s179 + $0x4] sm:$0xf] %v182
                %v184 = vld [vmem:[%s178 + $0x18] sm:$0xf]
                %185 = vst [vmem:[%s179 + $0x8] sm:$0xf] %v184
                %v186 = vld [vmem:[%s178 + $0x24] sm:$0xf]
                %187 = vst [vmem:[%s179 + $0xc] sm:$0xf] %v186
                %v188 = vld [vmem:[%s178 + $0x30] sm:$0xf]
                %189 = vst [vmem:[%s179 + $0x10] sm:$0xf] %v188
                %v190 = vld [vmem:[%s178 + $0x3c] sm:$0xf]
                %191 = vst [vmem:[%s179 + $0x14] sm:$0xf] %v190
                %v192 = vld [vmem:[%s178 + $0x48] sm:$0xf]
                %193 = vst [vmem:[%s179 + $0x18] sm:$0xf] %v192
                %v194 = vld [vmem:[%s178 + $0x54] sm:$0xf]
                %195 = vst [vmem:[%s179 + $0x1c] sm:$0xf] %v194
                %v196 = vld [vmem:[%s178 + $0x60] sm:$0xf]
                %197 = vst [vmem:[%s179 + $0x20] sm:$0xf] %v196
                %v198 = vld [vmem:[%s178 + $0x6c] sm:$0xf]
                %199 = vst [vmem:[%s179 + $0x24] sm:$0xf] %v198
                %v200 = vld [vmem:[%s178 + $0x78] sm:$0xf]
                %201 = vst [vmem:[%s179 + $0x28] sm:$0xf] %v200
                %v202 = vld [vmem:[%s178 + $0x84] sm:$0xf]
                %203 = vst [vmem:[%s179 + $0x2c] sm:$0xf] %v202
                %v204 = vld [vmem:[%s178 + $0x90] sm:$0xf]
                %205 = vst [vmem:[%s179 + $0x30] sm:$0xf] %v204
                %v206 = vld [vmem:[%s178 + $0x9c] sm:$0xf]
                %207 = vst [vmem:[%s179 + $0x34] sm:$0xf] %v206
                %v208 = vld [vmem:[%s178 + $0xa8] sm:$0xf]
                %209 = vst [vmem:[%s179 + $0x38] sm:$0xf] %v208
                %v210 = vld [vmem:[%s178 + $0xb4] sm:$0xf]
                %211 = vst [vmem:[%s179 + $0x3c] sm:$0xf] %v210
                %v212 = vld [vmem:[%s178 + $0xc0] sm:$0xf]
                %213 = vst [vmem:[%s179 + $0x40] sm:$0xf] %v212
                %v214 = vld [vmem:[%s178 + $0xcc] sm:$0xf]
                %215 = vst [vmem:[%s179 + $0x44] sm:$0xf] %v214
                %v216 = vld [vmem:[%s178 + $0xd8] sm:$0xf]
                %217 = vst [vmem:[%s179 + $0x48] sm:$0xf] %v216
                %v218 = vld [vmem:[%s178 + $0xe4] sm:$0xf]
                %219 = vst [vmem:[%s179 + $0x4c] sm:$0xf] %v218
                %v220 = vld [vmem:[%s178 + $0xf0] sm:$0xf]
                %221 = vst [vmem:[%s179 + $0x50] sm:$0xf] %v220
                %v222 = vld [vmem:[%s178 + $0xfc] sm:$0xf]
                %223 = vst [vmem:[%s179 + $0x54] sm:$0xf] %v222
                %v224 = vld [vmem:[%s178 + $0x108] sm:$0xf]
                %225 = vst [vmem:[%s179 + $0x58] sm:$0xf] %v224
                %v226 = vld [vmem:[%s178 + $0x114] sm:$0xf]
                %227 = vst [vmem:[%s179 + $0x5c] sm:$0xf] %v226
                %v228 = vld [vmem:[%s178 + $0x120] sm:$0xf]
                %229 = vst [vmem:[%s179 + $0x60] sm:$0xf] %v228
                %v230 = vld [vmem:[%s178 + $0x12c] sm:$0xf]
                %231 = vst [vmem:[%s179 + $0x64] sm:$0xf] %v230
                %v232 = vld [vmem:[%s178 + $0x138] sm:$0xf]
                %233 = vst [vmem:[%s179 + $0x68] sm:$0xf] %v232
                %v234 = vld [vmem:[%s178 + $0x144] sm:$0xf]
                %235 = vst [vmem:[%s179 + $0x6c] sm:$0xf] %v234
                %v236 = vld [vmem:[%s178 + $0x150] sm:$0xf]
                %237 = vst [vmem:[%s179 + $0x70] sm:$0xf] %v236
                %v238 = vld [vmem:[%s178 + $0x15c] sm:$0xf]
                %239 = vst [vmem:[%s179 + $0x74] sm:$0xf] %v238
                %v240 = vld [vmem:[%s178 + $0x168] sm:$0xf]
                %241 = vst [vmem:[%s179 + $0x78] sm:$0xf] %v240
                %v242 = vld [vmem:[%s178 + $0x174] sm:$0xf]
                %243 = vst [vmem:[%s179 + $0x7c] sm:$0xf] %v242
                %v244 = vld [vmem:[%s178 + $0x180] sm:$0xf]
                %245 = vst [vmem:[%s179 + $0x80] sm:$0xf] %v244
                %v246 = vld [vmem:[%s178 + $0x18c] sm:$0xf]
                %247 = vst [vmem:[%s179 + $0x84] sm:$0xf] %v246
                %v248 = vld [vmem:[%s178 + $0x198] sm:$0xf]
                %249 = vst [vmem:[%s179 + $0x88] sm:$0xf] %v248
                %v250 = vld [vmem:[%s178 + $0x1a4] sm:$0xf]
                %251 = vst [vmem:[%s179 + $0x8c] sm:$0xf] %v250
                %v252 = vld [vmem:[%s178 + $0x1b0] sm:$0xf]
                %253 = vst [vmem:[%s179 + $0x90] sm:$0xf] %v252
                %v254 = vld [vmem:[%s178 + $0x1bc] sm:$0xf]
                %255 = vst [vmem:[%s179 + $0x94] sm:$0xf] %v254
                %v256 = vld [vmem:[%s178 + $0x1c8] sm:$0xf]
                %257 = vst [vmem:[%s179 + $0x98] sm:$0xf] %v256
                %v258 = vld [vmem:[%s178 + $0x1d4] sm:$0xf]
                %259 = vst [vmem:[%s179 + $0x9c] sm:$0xf] %v258
                %v260 = vld [vmem:[%s178 + $0x1e0] sm:$0xf]
                %261 = vst [vmem:[%s179 + $0xa0] sm:$0xf] %v260
                %v262 = vld [vmem:[%s178 + $0x1ec] sm:$0xf]
                %263 = vst [vmem:[%s179 + $0xa4] sm:$0xf] %v262
                %v264 = vld [vmem:[%s178 + $0x1f8] sm:$0xf]
                %265 = vst [vmem:[%s179 + $0xa8] sm:$0xf] %v264
                %v266 = vld [vmem:[%s178 + $0x204] sm:$0xf]
                %267 = vst [vmem:[%s179 + $0xac] sm:$0xf] %v266
                %v268 = vld [vmem:[%s178 + $0x210] sm:$0xf]
                %269 = vst [vmem:[%s179 + $0xb0] sm:$0xf] %v268
                %v270 = vld [vmem:[%s178 + $0x21c] sm:$0xf]
                %271 = vst [vmem:[%s179 + $0xb4] sm:$0xf] %v270
                %v272 = vld [vmem:[%s178 + $0x228] sm:$0xf]
                %273 = vst [vmem:[%s179 + $0xb8] sm:$0xf] %v272
                %v274 = vld [vmem:[%s178 + $0x234] sm:$0xf]
                %275 = vst [vmem:[%s179 + $0xbc] sm:$0xf] %v274
                %v276 = vld [vmem:[%s178 + $0x240] sm:$0xf]
                %277 = vst [vmem:[%s179 + $0xc0] sm:$0xf] %v276
                %v278 = vld [vmem:[%s178 + $0x24c] sm:$0xf]
                %279 = vst [vmem:[%s179 + $0xc4] sm:$0xf] %v278
                %v280 = vld [vmem:[%s178 + $0x258] sm:$0xf]
                %281 = vst [vmem:[%s179 + $0xc8] sm:$0xf] %v280
                %v282 = vld [vmem:[%s178 + $0x264] sm:$0xf]
                %283 = vst [vmem:[%s179 + $0xcc] sm:$0xf] %v282
                %v284 = vld [vmem:[%s178 + $0x270] sm:$0xf]
                %285 = vst [vmem:[%s179 + $0xd0] sm:$0xf] %v284
                %v286 = vld [vmem:[%s178 + $0x27c] sm:$0xf]
                %287 = vst [vmem:[%s179 + $0xd4] sm:$0xf] %v286
              $region41: #{squeeze_forward.30} parent=35 // loop_footer
                %s177 = sadd.s32 1, %s173
              $region42: #{squeeze_forward.30} parent=35 // loop_footer_branch
                %172 = sbr.rel target = $region38
              $region43: #{squeeze_forward.30} parent=35 // loop_exit
                _
            $region36: #{squeeze_forward.30} parent=27 // pred_fallthru
              _
          $region28: #{squeeze_forward.30} parent=23 // pred_fallthru
            _
          %415 = vnop
        $region24: #{squeeze_forward.30} parent=19 // pred_fallthru
          _
        // Predicated region
        $region62: #{squeeze_forward.30} parent=19 // pred_check
          %p416 = pneg %p93
        $region63: #{squeeze_forward.30} parent=19 // pred_check_branch
          %418 = sbr.rel (%p416) target = $region65
        $region64: #{squeeze_forward.30} parent=19 // pred_region
          %p419 = scmp.lt.s32.totalorder %s17, 2
          %s420 = scalar_select %p419, %s17, 2
          %s421 = scalar_lea.vmem %s2, %s420
        $region65: #{squeeze_forward.30} parent=19 // pred_fallthru
          _
      $region20: #{squeeze_forward.30} parent=5 // pred_fallthru
        _
      %p422 = scmp.le.s32.totalorder 1, %s9
      %p423 = scmp.lt.s32.totalorder %s9, 4
      %p424 = pnand %p422, %p423
      %p425 = pneg %p424
      // Predicated region
      $region66: #{squeeze_forward.30} parent=5 // pred_check
        _
      $region67: #{squeeze_forward.30} parent=5 // pred_check_branch
        %427 = sbr.rel (%p424) target = $region69
      $region68: #{squeeze_forward.30} parent=5 // pred_region
        %s428 = ssub.s32 %s9, 1
        %s429 = sand.u32 %s60, 1
        %s430 = sand.u32 %s60, 1
        %s431 = smul.addr %s430, 216
        %s432 = scalar_lea.vmem [#allocation2], %s431
        // Predicated region
        $region70: #{squeeze_forward.30} parent=68 // pred_check
          %p433 = pneg %p73
        $region71: #{squeeze_forward.30} parent=68 // pred_check_branch
          %435 = sbr.rel (%p433) target = $region73
        $region72: #{squeeze_forward.30} parent=68 // pred_region
          _
        $region73: #{squeeze_forward.30} parent=68 // pred_fallthru
          _
        %s436 = smul.u32 7, %s18
        %p437 = scmp.lt.s32.totalorder %s436, 6
        %s438 = scalar_select %p437, %s436, 6
        %s439 = smul.addr %s438, 4
        %s440 = smul.addr %s439, 4
        %s441 = scalar_lea.vmem %s0, %s440
        %p442 = pneg %p47
        %p443 = pneg %p44
        %s444 = sand.u32 %s60, 1
        %s445 = sand.u32 %s60, 1
        %s446 = smul.addr %s445, 216
        %s447 = scalar_lea.vmem [#allocation2], %s446
        %p448 = pneg %p73
        %p449 = pneg %p70
        %p450 = scmp.lt.s32.totalorder %s19, 2
        %s451 = scalar_select %p450, %s19, 2
        %s452 = scalar_lea.vmem %s2, %s451
        %p453 = pneg %p99
        %p454 = pneg %p96
        %p455 = pneg %p127
        %p456 = pneg %p124
        %s457 = sand.u32 %s114, 1
        %s458 = sand.u32 %s114, 1
        %s459 = smul.addr %s458, 56
        %s460 = scalar_lea.vmem [#allocation3], %s459
        %s461 = smul.u32 7, %s18
        %p462 = scmp.lt.s32.totalorder %s461, 6
        %s463 = scalar_select %p462, %s461, 6
        %s464 = smul.addr %s463, 4
        %s465 = smul.addr %s464, 4
        %s466 = scalar_lea.vmem %s0, %s465
        %s467 = smul.u32 7, %s18
        %p468 = scmp.lt.s32.totalorder %s19, 2
        %s469 = scalar_select %p468, %s19, 2
        %s470 = scalar_lea.vmem %s2, %s469
        %s471 = smul.u32 7, %s18
        %v473 = vld [vmem:[%s466] sm:$0xff]
        %v474 = vld [vmem:[%s466 + $0x8] sm:$0xff]
        %v475 = vld [vmem:[%s466 + $0x10] sm:$0xff]
        %v476 = vld [vmem:[%s466 + $0x18] sm:$0xff]
        %v477 = vld [vmem:[%s466 + $0x20] sm:$0xff]
        %v478 = vld [vmem:[%s466 + $0x28] sm:$0xff]
        %v479 = vld [vmem:[%s466 + $0x30] sm:$0xff]
        %v480 = vld [vmem:[%s466 + $0x38] sm:$0xff]
        %v481 = vld [vmem:[%s466 + $0x40] sm:$0xff]
        %v482 = vld [vmem:[%s466 + $0x48] sm:$0xff]
        %v483 = vld [vmem:[%s466 + $0x50] sm:$0xff]
        %v484 = vld [vmem:[%s466 + $0x58] sm:$0xff]
        %v485 = vld [vmem:[%s466 + $0x60] sm:$0x11]
        %v486 = vld [vmem:[%s466 + $0x68] sm:$0x11]
        %v487 = vld [vmem:[%s432] sm:$0xf]
        %v488 = vld [vmem:[%s432 + $0x4] sm:$0xf]
        %v489 = vld [vmem:[%s432 + $0x8] sm:$0xf]
        %v490 = vld [vmem:[%s432 + $0xc] sm:$0xf]
        %v491 = vld [vmem:[%s432 + $0x10] sm:$0xf]
        %v492 = vld [vmem:[%s432 + $0x14] sm:$0xf]
        %v493 = vld [vmem:[%s432 + $0x18] sm:$0xf]
        %v494 = vld [vmem:[%s432 + $0x1c] sm:$0xf]
        %v495 = vld [vmem:[%s432 + $0x20] sm:$0xf]
        %v496 = vld [vmem:[%s432 + $0x24] sm:$0xf]
        %v497 = vld [vmem:[%s432 + $0x28] sm:$0xf]
        %v498 = vld [vmem:[%s432 + $0x2c] sm:$0xf]
        %v499 = vld [vmem:[%s432 + $0x30] sm:$0xf]
        %v500 = vld [vmem:[%s432 + $0x34] sm:$0xf]
        %v501 = vld [vmem:[%s432 + $0x38] sm:$0xf]
        %v502 = vld [vmem:[%s432 + $0x3c] sm:$0xf]
        %v503 = vld [vmem:[%s432 + $0x40] sm:$0xf]
        %v504 = vld [vmem:[%s432 + $0x44] sm:$0xf]
        %v505 = vld [vmem:[%s432 + $0x48] sm:$0xf]
        %v506 = vld [vmem:[%s432 + $0x4c] sm:$0xf]
        %v507 = vld [vmem:[%s432 + $0x50] sm:$0xf]
        %v508 = vld [vmem:[%s432 + $0x54] sm:$0xf]
        %v509 = vld [vmem:[%s432 + $0x58] sm:$0xf]
        %v510 = vld [vmem:[%s432 + $0x5c] sm:$0xf]
        %v511 = vld [vmem:[%s432 + $0x60] sm:$0xf]
        %v512 = vld [vmem:[%s432 + $0x64] sm:$0xf]
        %v513 = vld [vmem:[%s432 + $0x68] sm:$0xf]
        %v514 = vld [vmem:[%s432 + $0x6c] sm:$0xf]
        %v515 = vld [vmem:[%s432 + $0x70] sm:$0xf]
        %v516 = vld [vmem:[%s432 + $0x74] sm:$0xf]
        %v517 = vld [vmem:[%s432 + $0x78] sm:$0xf]
        %v518 = vld [vmem:[%s432 + $0x7c] sm:$0xf]
        %v519 = vld [vmem:[%s432 + $0x80] sm:$0xf]
        %v520 = vld [vmem:[%s432 + $0x84] sm:$0xf]
        %v521 = vld [vmem:[%s432 + $0x88] sm:$0xf]
        %v522 = vld [vmem:[%s432 + $0x8c] sm:$0xf]
        %v523 = vld [vmem:[%s432 + $0x90] sm:$0xf]
        %v524 = vld [vmem:[%s432 + $0x94] sm:$0xf]
        %v525 = vld [vmem:[%s432 + $0x98] sm:$0xf]
        %v526 = vld [vmem:[%s432 + $0x9c] sm:$0xf]
        %v527 = vld [vmem:[%s432 + $0xa0] sm:$0xf]
        %v528 = vld [vmem:[%s432 + $0xa4] sm:$0xf]
        %v529 = vld [vmem:[%s432 + $0xa8] sm:$0xf]
        %v530 = vld [vmem:[%s432 + $0xac] sm:$0xf]
        %v531 = vld [vmem:[%s432 + $0xb0] sm:$0xf]
        %v532 = vld [vmem:[%s432 + $0xb4] sm:$0xf]
        %v533 = vld [vmem:[%s432 + $0xb8] sm:$0xf]
        %v534 = vld [vmem:[%s432 + $0xbc] sm:$0xf]
        %v535 = vld [vmem:[%s432 + $0xc0] sm:$0xf]
        %v536 = vld [vmem:[%s432 + $0xc4] sm:$0xf]
        %v537 = vld [vmem:[%s432 + $0xc8] sm:$0xf]
        %v538 = vld [vmem:[%s432 + $0xcc] sm:$0xf]
        %v539 = vld [vmem:[%s432 + $0xd0] sm:$0xf]
        %v540 = vld [vmem:[%s432 + $0xd4] sm:$0xf]
        %v541 = vld [vmem:[%s470] sm:$0x1]
        %v543 = vlaneseq
        %v544 = vshrl.u32 %v543, 7
        %v545 = vsub.s32 0, %v544
        %v546 = vrot.slane %v541, %v545
        %v562 = vunpack.c.l.b16 %v473
        %v563 = vunpack.c.h.b16 %v473
        %v564 = vunpack.c.l.b16 %v474
        %v565 = vunpack.c.h.b16 %v474
        %v566 = vunpack.c.l.b16 %v475
        %v567 = vunpack.c.h.b16 %v475
        %v568 = vunpack.c.l.b16 %v476
        %v569 = vunpack.c.h.b16 %v476
        %v570 = vunpack.c.l.b16 %v477
        %v571 = vunpack.c.h.b16 %v477
        %v572 = vunpack.c.l.b16 %v478
        %v573 = vunpack.c.h.b16 %v478
        %v574 = vunpack.c.l.b16 %v479
        %v575 = vunpack.c.h.b16 %v479
        %v576 = vunpack.c.l.b16 %v480
        %v577 = vunpack.c.h.b16 %v480
        %v578 = vunpack.c.l.b16 %v481
        %v579 = vunpack.c.h.b16 %v481
        %v580 = vunpack.c.l.b16 %v482
        %v581 = vunpack.c.h.b16 %v482
        %v582 = vunpack.c.l.b16 %v483
        %v583 = vunpack.c.h.b16 %v483
        %v584 = vunpack.c.l.b16 %v484
        %v585 = vunpack.c.h.b16 %v484
        %v586 = vunpack.c.l.b16 %v485
        %v587 = vunpack.c.h.b16 %v485
        %v588 = vunpack.c.l.b16 %v486
        %v589 = vunpack.c.h.b16 %v486
        %v590 = vpack.c.b16 %v566, %v562
        %v591 = vpack.c.b16 %v567, %v563
        %v592 = vpack.c.b16 %v568, %v564
        %v593 = vpack.c.b16 %v569, %v565
        %v594 = vpack.c.b16 %v574, %v570
        %v595 = vpack.c.b16 %v575, %v571
        %v596 = vpack.c.b16 %v576, %v572
        %v597 = vpack.c.b16 %v577, %v573
        %v598 = vpack.c.b16 %v582, %v578
        %v599 = vpack.c.b16 %v583, %v579
        %v600 = vpack.c.b16 %v584, %v580
        %v601 = vpack.c.b16 %v585, %v581
        %v602 = vpack.c.b16 %v586, %v586
        %v603 = vpack.c.b16 %v587, %v587
        %v604 = vpack.c.b16 %v588, %v588
        %v605 = vpack.c.b16 %v589, %v589
        %v672 = vunpack.c.l.b16 %v487
        %v673 = vunpack.c.l.b16 %v488
        %v674 = vunpack.c.l.b16 %v489
        %v675 = vunpack.c.l.b16 %v490
        %v676 = vunpack.c.l.b16 %v491
        %v677 = vunpack.c.l.b16 %v492
        %v678 = vunpack.c.l.b16 %v493
        %v679 = vunpack.c.l.b16 %v494
        %v680 = vunpack.c.l.b16 %v495
        %v681 = vunpack.c.l.b16 %v496
        %v682 = vunpack.c.l.b16 %v497
        %v683 = vunpack.c.l.b16 %v498
        %v684 = vunpack.c.l.b16 %v499
        %v685 = vunpack.c.l.b16 %v500
        %v686 = vunpack.c.l.b16 %v501
        %v687 = vunpack.c.l.b16 %v502
        %v688 = vunpack.c.l.b16 %v503
        %v689 = vunpack.c.l.b16 %v504
        %v690 = vunpack.c.l.b16 %v505
        %v691 = vunpack.c.l.b16 %v506
        %v692 = vunpack.c.l.b16 %v507
        %v693 = vunpack.c.l.b16 %v508
        %v694 = vunpack.c.l.b16 %v509
        %v695 = vunpack.c.l.b16 %v510
        %v696 = vunpack.c.l.b16 %v511
        %v697 = vunpack.c.l.b16 %v512
        %v698 = vunpack.c.l.b16 %v513
        %v699 = vunpack.c.l.b16 %v514
        %v700 = vunpack.c.l.b16 %v515
        %v701 = vunpack.c.l.b16 %v516
        %v702 = vunpack.c.l.b16 %v517
        %v703 = vunpack.c.l.b16 %v518
        %v704 = vunpack.c.l.b16 %v519
        %v705 = vunpack.c.l.b16 %v520
        %v706 = vunpack.c.l.b16 %v521
        %v707 = vunpack.c.l.b16 %v522
        %v708 = vunpack.c.l.b16 %v523
        %v709 = vunpack.c.l.b16 %v524
        %v710 = vunpack.c.l.b16 %v525
        %v711 = vunpack.c.l.b16 %v526
        %v712 = vunpack.c.l.b16 %v527
        %v713 = vunpack.c.l.b16 %v528
        %v714 = vunpack.c.l.b16 %v529
        %v715 = vunpack.c.l.b16 %v530
        %v716 = vunpack.c.l.b16 %v531
        %v717 = vunpack.c.l.b16 %v532
        %v718 = vunpack.c.l.b16 %v533
        %v719 = vunpack.c.l.b16 %v534
        %v720 = vunpack.c.l.b16 %v535
        %v721 = vunpack.c.l.b16 %v536
        %v722 = vunpack.c.l.b16 %v537
        %v723 = vunpack.c.l.b16 %v538
        %v724 = vunpack.c.l.b16 %v539
        %v725 = vunpack.c.l.b16 %v540
        %v726 = vpack.c.b16 %v673, %v672
        %v727 = vpack.c.b16 %v675, %v674
        %v728 = vpack.c.b16 %v677, %v676
        %v729 = vpack.c.b16 %v679, %v678
        %v730 = vpack.c.b16 %v681, %v680
        %v731 = vpack.c.b16 %v683, %v682
        %v732 = vpack.c.b16 %v685, %v684
        %v733 = vpack.c.b16 %v687, %v686
        %v734 = vpack.c.b16 %v689, %v688
        %v735 = vpack.c.b16 %v691, %v690
        %v736 = vpack.c.b16 %v693, %v692
        %v737 = vpack.c.b16 %v695, %v694
        %v738 = vpack.c.b16 %v697, %v696
        %v739 = vpack.c.b16 %v699, %v698
        %v740 = vpack.c.b16 %v701, %v700
        %v741 = vpack.c.b16 %v703, %v702
        %v742 = vpack.c.b16 %v705, %v704
        %v743 = vpack.c.b16 %v707, %v706
        %v744 = vpack.c.b16 %v709, %v708
        %v745 = vpack.c.b16 %v711, %v710
        %v746 = vpack.c.b16 %v713, %v712
        %v747 = vpack.c.b16 %v715, %v714
        %v748 = vpack.c.b16 %v717, %v716
        %v749 = vpack.c.b16 %v719, %v718
        %v750 = vpack.c.b16 %v721, %v720
        %v751 = vpack.c.b16 %v723, %v722
        %v752 = vpack.c.b16 %v725, %v724
        %vm780 = vcmask 392192
        %v782 = vsel %vm780, %v593, 0
        %v785 = vsel %vm780, %v597, 0
        %v788 = vsel %vm780, %v601, 0
        %v791 = vsel %vm780, %v605, 0
        %793 = vmatprep.subr.bf16.mxu0 0
        %794 = vmatpush1.bf16.msra.mxu0 %v726
        %795 = vmatprep.subr.bf16.mxu0 0
        %796 = vmatpush1.bf16.msra.mxu0 %v727
        %797 = vmatprep.subr.bf16.mxu0 0
        %798 = vmatpush1.bf16.msra.mxu0 %v728
        %799 = vmatprep.subr.bf16.mxu0 0
        %800 = vmatpush1.bf16.msra.mxu0 %v729
        %801 = vmatprep.subr.bf16.mxu0 0
        %802 = vmatpush1.bf16.msra.mxu0 %v730
        %803 = vmatprep.subr.bf16.mxu0 0
        %804 = vmatpush1.bf16.msra.mxu0 %v731
        %805 = vmatprep.subr.bf16.mxu0 0
        %806 = vmatpush1.bf16.msra.mxu0 %v732
        %807 = vmatprep.subr.bf16.mxu0 0
        %808 = vmatpush1.bf16.msra.mxu0 %v733
        %809 = vmatprep.subr.bf16.mxu0 0
        %810 = vmatpush1.bf16.msra.mxu0 %v734
        %811 = vmatprep.subr.bf16.mxu0 0
        %812 = vmatpush1.bf16.msra.mxu0 %v735
        %813 = vmatprep.subr.bf16.mxu0 0
        %814 = vmatpush1.bf16.msra.mxu0 %v736
        %815 = vmatprep.subr.bf16.mxu0 0
        %816 = vmatpush1.bf16.msra.mxu0 %v737
        %817 = vmatprep.subr.bf16.mxu0 0
        %818 = vmatpush1.bf16.msra.mxu0 %v738
        %819 = vmatprep.subr.bf16.mxu0 0
        %820 = vmatpush1.bf16.msra.mxu0 %v739
        %821 = vmatprep.subr.bf16.mxu0 0
        %822 = vmatpush1.bf16.msra.mxu0 %v740
        %823 = vmatprep.subr.bf16.mxu0 0
        %824 = vmatpush1.bf16.msra.mxu0 %v741
        %825 = vmatprep.mubr.bf16.mxu0 %v591
        %826 = vmatmul.mubr.bf16.gmra.mrb[0].mxu0 %v590
        %v827 = vpop.f32.mrb[0].mxu0
        %v828 = vadd.f32 %v546, %v827
        %v829 = vpop.f32.mrb[0].mxu0
        %v830 = vpop.f32.mrb[0].mxu0
        %v831 = vadd.f32 %v546, %v830
        %v832 = vpop.f32.mrb[0].mxu0
        %833 = vmatprep.mubr.bf16.mxu0 %v595
        %834 = vmatmul.mubr.bf16.gmra.mrb[0].mxu0 %v594
        %v835 = vpop.f32.mrb[0].mxu0
        %v836 = vadd.f32 %v546, %v835
        %v837 = vpop.f32.mrb[0].mxu0
        %v838 = vpop.f32.mrb[0].mxu0
        %v839 = vadd.f32 %v546, %v838
        %v840 = vpop.f32.mrb[0].mxu0
        %841 = vmatprep.mubr.bf16.mxu0 %v599
        %842 = vmatmul.mubr.bf16.gmra.mrb[0].mxu0 %v598
        %v843 = vpop.f32.mrb[0].mxu0
        %v844 = vadd.f32 %v546, %v843
        %v845 = vpop.f32.mrb[0].mxu0
        %v846 = vpop.f32.mrb[0].mxu0
        %v847 = vadd.f32 %v546, %v846
        %v848 = vpop.f32.mrb[0].mxu0
        %849 = vmatprep.mubr.bf16.mxu0 %v603
        %850 = vmatmul.mubr.bf16.gmra.mrb[0].mxu0 %v602
        %v851 = vpop.f32.mrb[0].mxu0
        %v852 = vadd.f32 %v546, %v851
        %v853 = vpop.f32.mrb[0].mxu0
        %v854 = vpop.f32.mrb[0].mxu0
        %v855 = vpop.f32.mrb[0].mxu0
        %856 = vdwg.mxu0
        %857 = vmatprep.subr.bf16.mxu0 0
        %858 = vmatpush1.bf16.msra.mxu0 %v742
        %859 = vmatprep.subr.bf16.mxu0 0
        %860 = vmatpush1.bf16.msra.mxu0 %v743
        %861 = vmatprep.subr.bf16.mxu0 0
        %862 = vmatpush1.bf16.msra.mxu0 %v744
        %863 = vmatprep.subr.bf16.mxu0 0
        %864 = vmatpush1.bf16.msra.mxu0 %v745
        %865 = vmatprep.subr.bf16.mxu0 0
        %866 = vmatpush1.bf16.msra.mxu0 %v746
        %867 = vmatprep.subr.bf16.mxu0 0
        %868 = vmatpush1.bf16.msra.mxu0 %v747
        %869 = vmatprep.subr.bf16.mxu0 0
        %870 = vmatpush1.bf16.msra.mxu0 %v748
        %871 = vmatprep.subr.bf16.mxu0 0
        %872 = vmatpush1.bf16.msra.mxu0 %v749
        %873 = vmatprep.subr.bf16.mxu0 0
        %874 = vmatpush1.bf16.msra.mxu0 %v750
        %875 = vmatprep.subr.bf16.mxu0 0
        %876 = vmatpush1.bf16.msra.mxu0 %v751
        %877 = vmatprep.subr.bf16.mxu0 0
        %878 = vmatpush1.bf16.msra.mxu0 %v752
        %879 = vmatprep.subr.bf16.mxu0 0
        %880 = vmatpush1.bf16.msra.mxu0 0
        %881 = vmatprep.subr.bf16.mxu0 0
        %882 = vmatpush1.bf16.msra.mxu0 0
        %883 = vmatprep.subr.bf16.mxu0 0
        %884 = vmatpush1.bf16.msra.mxu0 0
        %885 = vmatprep.subr.bf16.mxu0 0
        %886 = vmatpush1.bf16.msra.mxu0 0
        %887 = vmatprep.subr.bf16.mxu0 0
        %888 = vmatpush1.bf16.msra.mxu0 0
        %889 = vmatprep.mubr.bf16.mxu0 %v782
        %890 = vmatmul.mubr.bf16.gmra.mrb[0].mxu0 %v592
        %v891 = vpop.f32.mrb[0].mxu0
        %v892 = vadd.f32 %v828, %v891
        %v893 = vpop.f32.mrb[0].mxu0
        %v894 = vpop.f32.mrb[0].mxu0
        %v895 = vadd.f32 %v831, %v894
        %v896 = vpop.f32.mrb[0].mxu0
        %897 = vmatprep.mubr.bf16.mxu0 %v785
        %898 = vmatmul.mubr.bf16.gmra.mrb[0].mxu0 %v596
        %v899 = vpop.f32.mrb[0].mxu0
        %v900 = vadd.f32 %v836, %v899
        %v901 = vpop.f32.mrb[0].mxu0
        %v902 = vpop.f32.mrb[0].mxu0
        %v903 = vadd.f32 %v839, %v902
        %v904 = vpop.f32.mrb[0].mxu0
        %905 = vmatprep.mubr.bf16.mxu0 %v788
        %906 = vmatmul.mubr.bf16.gmra.mrb[0].mxu0 %v600
        %v907 = vpop.f32.mrb[0].mxu0
        %v908 = vadd.f32 %v844, %v907
        %v909 = vpop.f32.mrb[0].mxu0
        %v910 = vpop.f32.mrb[0].mxu0
        %v911 = vadd.f32 %v847, %v910
        %v912 = vpop.f32.mrb[0].mxu0
        %913 = vmatprep.mubr.bf16.mxu0 %v791
        %914 = vmatmul.mubr.bf16.gmra.mrb[0].mxu0 %v604
        %v915 = vpop.f32.mrb[0].mxu0
        %v916 = vadd.f32 %v852, %v915
        %v917 = vpop.f32.mrb[0].mxu0
        %v918 = vpop.f32.mrb[0].mxu0
        %v919 = vpop.f32.mrb[0].mxu0
        %920 = vdwg.mxu0
        %v921 = vmax.f32 %v892, 0.0
        %v922 = vmax.f32 %v895, 0.0
        %v923 = vmax.f32 %v900, 0.0
        %v924 = vmax.f32 %v903, 0.0
        %v925 = vmax.f32 %v908, 0.0
        %v926 = vmax.f32 %v911, 0.0
        %v927 = vmax.f32 %v916, 0.0
        %928 = vst [vmem:[%s460] sm:$0xff] %v921
        %929 = vst [vmem:[%s460 + $0x8] sm:$0xff] %v922
        %930 = vst [vmem:[%s460 + $0x10] sm:$0xff] %v923
        %931 = vst [vmem:[%s460 + $0x18] sm:$0xff] %v924
        %932 = vst [vmem:[%s460 + $0x20] sm:$0xff] %v925
        %933 = vst [vmem:[%s460 + $0x28] sm:$0xff] %v926
        %934 = vst [vmem:[%s460 + $0x30] sm:$0x3] %v927
        %s935 = sand.u32 %s114, 1
        %s936 = sand.u32 %s114, 1
        %s937 = smul.addr %s936, 56
        %s938 = scalar_lea.vmem [#allocation3], %s937
        // Predicated region
        $region74: #{squeeze_forward.30} parent=68 // pred_check
          %p939 = pneg %p124
        $region75: #{squeeze_forward.30} parent=68 // pred_check_branch
          %941 = sbr.rel (%p939) target = $region77
        $region76: #{squeeze_forward.30} parent=68 // pred_region
          %s942 = smul.u32 7, %s18
          %s943 = smul.addr %s942, 3
          %s944 = sadd.s32 %s19, %s943
          %s945 = smul.addr %s944, 8
          %s946 = scalar_lea.vmem %s3, %s945
          // Predicated region
          $region78: #{squeeze_forward.30} parent=76 // pred_check
            _
          $region79: #{squeeze_forward.30} parent=76 // pred_check_branch
            %948 = sbr.rel (0) target = $region81
          $region80: #{squeeze_forward.30} parent=76 // pred_region
            // Predicated region
            $region82: #{squeeze_forward.30} parent=80 // pred_check
              _
            $region83: #{squeeze_forward.30} parent=80 // pred_check_branch
              %950 = sbr.rel (0) target = $region85
            $region84: #{squeeze_forward.30} parent=80 // pred_region
              // Predicated region
              $region97: #{squeeze_forward.30} parent=84 // pred_check
                _
              $region98: #{squeeze_forward.30} parent=84 // pred_check_branch
                %977 = sbr.rel (0) target = $region100
              $region99: #{squeeze_forward.30} parent=84 // pred_region
                loop: start=0, step=1, limit=1
                $region101: #{squeeze_forward.30} parent=99 // loop_pre_header
                  _
                $region102: #{squeeze_forward.30} parent=99 // loop_header
                  %s979 = sphi 0, %s983
                  %p980 = scmp.ge.s32.totalorder %s979, 1
                  %s984 = sphi %s938, %s938
                  %s985 = sphi %s946, %s946
                $region103: #{squeeze_forward.30} parent=99 // loop_header_branch
                  %982 = sbr.rel (%p980) target = $region107
                $region104: #{squeeze_forward.30} parent=99 // loop_body
                  %v986 = vld [vmem:[%s984] sm:$0xff]
                  %987 = vst [vmem:[%s985] sm:$0xff] %v986
                  %v988 = vld [vmem:[%s984 + $0x8] sm:$0xff]
                  %989 = vst [vmem:[%s985 + $0x18] sm:$0xff] %v988
                  %v990 = vld [vmem:[%s984 + $0x10] sm:$0xff]
                  %991 = vst [vmem:[%s985 + $0x30] sm:$0xff] %v990
                  %v992 = vld [vmem:[%s984 + $0x18] sm:$0xff]
                  %993 = vst [vmem:[%s985 + $0x48] sm:$0xff] %v992
                  %v994 = vld [vmem:[%s984 + $0x20] sm:$0xff]
                  %995 = vst [vmem:[%s985 + $0x60] sm:$0xff] %v994
                  %v996 = vld [vmem:[%s984 + $0x28] sm:$0xff]
                  %997 = vst [vmem:[%s985 + $0x78] sm:$0xff] %v996
                  %v998 = vld [vmem:[%s984 + $0x30] sm:$0xff]
                  %999 = vst [vmem:[%s985 + $0x90] sm:$0xff] %v998
                $region105: #{squeeze_forward.30} parent=99 // loop_footer
                  %s983 = sadd.s32 1, %s979
                $region106: #{squeeze_forward.30} parent=99 // loop_footer_branch
                  %978 = sbr.rel target = $region102
                $region107: #{squeeze_forward.30} parent=99 // loop_exit
                  _
              $region100: #{squeeze_forward.30} parent=84 // pred_fallthru
                _
              // Predicated region
              $region108: #{squeeze_forward.30} parent=84 // pred_check
                _
              $region109: #{squeeze_forward.30} parent=84 // pred_check_branch
                %1001 = sbr.rel target = $region111
              $region110: #{squeeze_forward.30} parent=84 // pred_region
                _
              $region111: #{squeeze_forward.30} parent=84 // pred_fallthru
                _
            $region85: #{squeeze_forward.30} parent=80 // pred_fallthru
              _
            // Predicated region
            $region86: #{squeeze_forward.30} parent=80 // pred_check
              _
            $region87: #{squeeze_forward.30} parent=80 // pred_check_branch
              %952 = sbr.rel target = $region89
            $region88: #{squeeze_forward.30} parent=80 // pred_region
              loop: start=0, step=1, limit=1
              $region90: #{squeeze_forward.30} parent=88 // loop_pre_header
                _
              $region91: #{squeeze_forward.30} parent=88 // loop_header
                %s955 = sphi 0, %s959
                %p956 = scmp.ge.s32.totalorder %s955, 1
                %s960 = sphi %s938, %s938
                %s961 = sphi %s946, %s946
              $region92: #{squeeze_forward.30} parent=88 // loop_header_branch
                %958 = sbr.rel (%p956) target = $region96
              $region93: #{squeeze_forward.30} parent=88 // loop_body
                %v962 = vld [vmem:[%s960] sm:$0xff]
                %963 = vst [vmem:[%s961] sm:$0xff] %v962
                %v964 = vld [vmem:[%s960 + $0x8] sm:$0xff]
                %965 = vst [vmem:[%s961 + $0x18] sm:$0xff] %v964
                %v966 = vld [vmem:[%s960 + $0x10] sm:$0xff]
                %967 = vst [vmem:[%s961 + $0x30] sm:$0xff] %v966
                %v968 = vld [vmem:[%s960 + $0x18] sm:$0xff]
                %969 = vst [vmem:[%s961 + $0x48] sm:$0xff] %v968
                %v970 = vld [vmem:[%s960 + $0x20] sm:$0xff]
                %971 = vst [vmem:[%s961 + $0x60] sm:$0xff] %v970
                %v972 = vld [vmem:[%s960 + $0x28] sm:$0xff]
                %973 = vst [vmem:[%s961 + $0x78] sm:$0xff] %v972
                %v974 = vld [vmem:[%s960 + $0x30] sm:$0xff]
                %975 = vst [vmem:[%s961 + $0x90] sm:$0xff] %v974
              $region94: #{squeeze_forward.30} parent=88 // loop_footer
                %s959 = sadd.s32 1, %s955
              $region95: #{squeeze_forward.30} parent=88 // loop_footer_branch
                %954 = sbr.rel target = $region91
              $region96: #{squeeze_forward.30} parent=88 // loop_exit
                _
            $region89: #{squeeze_forward.30} parent=80 // pred_fallthru
              _
          $region81: #{squeeze_forward.30} parent=76 // pred_fallthru
            _
          %1002 = vnop
        $region77: #{squeeze_forward.30} parent=68 // pred_fallthru
          _
      $region69: #{squeeze_forward.30} parent=5 // pred_fallthru
        _
      %p1003 = scmp.le.s32.totalorder 2, %s9
      // Predicated region
      $region112: #{squeeze_forward.30} parent=5 // pred_check
        %p1004 = pneg %p1003
      $region113: #{squeeze_forward.30} parent=5 // pred_check_branch
        %1006 = sbr.rel (%p1004) target = $region115
      $region114: #{squeeze_forward.30} parent=5 // pred_region
        %s1007 = ssub.s32 %s9, 2
        // Predicated region
        $region116: #{squeeze_forward.30} parent=114 // pred_check
          %p1008 = pneg %p130
        $region117: #{squeeze_forward.30} parent=114 // pred_check_branch
          %1010 = sbr.rel (%p1008) target = $region119
        $region118: #{squeeze_forward.30} parent=114 // pred_region
          %s1011 = sand.u32 %s115, 1
          %s1012 = sand.u32 %s115, 1
          %s1013 = smul.addr %s1012, 56
          %s1014 = scalar_lea.vmem [#allocation3], %s1013
        $region119: #{squeeze_forward.30} parent=114 // pred_fallthru
          _
      $region115: #{squeeze_forward.30} parent=5 // pred_fallthru
        _
    $region6: #{squeeze_forward.30} parent=1 // loop_footer
      %s13 = sadd.s32 1, %s9
    $region7: #{squeeze_forward.30} parent=1 // loop_footer_branch
      %8 = sbr.rel target = $region3
    $region8: #{squeeze_forward.30} parent=1 // loop_exit
      _

// kernel: squeeze_forward.33
$region0: #{squeeze_forward.33}
  #allocation0 [shape = 'u32[]', space=smem, size = 0x4, offset = 0x4, fixed_abs, tag = 'smem constant byte address 0x4 - core index']
  #allocation1 [shape = 'u32[144,128]{1,0:T(1,128)}', space=vmem, size = 0x12000, scoped, tag = 'internal scratch']
  %s0 = inlined_call_operand.vmem [shape: bf16[50,384], index: 0, kind: input, shape index: {}]
  %s1 = inlined_call_operand.vmem [shape: bf16[384,64], index: 1, kind: input, shape index: {}]
  %s2 = inlined_call_operand.vmem [shape: f32[1,64], index: 2, kind: input, shape index: {}]
  %s3 = inlined_call_operand.vmem [shape: f32[50,64], index: 3, kind: output, shape index: {}]
  %s4 = sld [smem:[#allocation0]]
  $region22: #{squeeze_forward.33} parent=0
    _
  %s6 = ssub.s32 1, %s4
  %s7 = scalar_select 0, %s6, %s4
  // Predicated region
  $region2: #{squeeze_forward.33} parent=0 // pred_check
    _
  $region3: #{squeeze_forward.33} parent=0 // pred_check_branch
    %9 = sbr.rel (0) target = $region5
  $region4: #{squeeze_forward.33} parent=0 // pred_region
    _
  $region5: #{squeeze_forward.33} parent=0 // pred_fallthru
    _
  // Predicated region
  $region6: #{squeeze_forward.33} parent=0 // pred_check
    _
  $region7: #{squeeze_forward.33} parent=0 // pred_check_branch
    %11 = sbr.rel (0) target = $region9
  $region8: #{squeeze_forward.33} parent=0 // pred_region
    _
  $region9: #{squeeze_forward.33} parent=0 // pred_fallthru
    _
  // Predicated region
  $region10: #{squeeze_forward.33} parent=0 // pred_check
    _
  $region11: #{squeeze_forward.33} parent=0 // pred_check_branch
    %13 = sbr.rel (0) target = $region13
  $region12: #{squeeze_forward.33} parent=0 // pred_region
    _
  $region13: #{squeeze_forward.33} parent=0 // pred_fallthru
    _
  %v15 = vld [vmem:[%s0] sm:$0xff]
  %v16 = vld [vmem:[%s0 + $0x8] sm:$0xf]
  %v17 = vld [vmem:[%s0 + $0xc] sm:$0xff]
  %v18 = vld [vmem:[%s0 + $0x14] sm:$0xf]
  %v19 = vld [vmem:[%s0 + $0x18] sm:$0xff]
  %v20 = vld [vmem:[%s0 + $0x20] sm:$0xf]
  %v21 = vld [vmem:[%s0 + $0x24] sm:$0xff]
  %v22 = vld [vmem:[%s0 + $0x2c] sm:$0xf]
  %v23 = vld [vmem:[%s0 + $0x30] sm:$0xff]
  %v24 = vld [vmem:[%s0 + $0x38] sm:$0xf]
  %v25 = vld [vmem:[%s0 + $0x3c] sm:$0xff]
  %v26 = vld [vmem:[%s0 + $0x44] sm:$0xf]
  %v27 = vld [vmem:[%s0 + $0x48] sm:$0x11]
  %v28 = vld [vmem:[%s0 + $0x50] sm:$0x1]
  %v29 = vld [vmem:[%s1] sm:$0xf]
  %v30 = vld [vmem:[%s1 + $0x4] sm:$0xf]
  %v31 = vld [vmem:[%s1 + $0x8] sm:$0xf]
  %v32 = vld [vmem:[%s1 + $0xc] sm:$0xf]
  %v33 = vld [vmem:[%s1 + $0x10] sm:$0xf]
  %v34 = vld [vmem:[%s1 + $0x14] sm:$0xf]
  %v35 = vld [vmem:[%s1 + $0x18] sm:$0xf]
  %v36 = vld [vmem:[%s1 + $0x1c] sm:$0xf]
  %v37 = vld [vmem:[%s1 + $0x20] sm:$0xf]
  %v38 = vld [vmem:[%s1 + $0x24] sm:$0xf]
  %v39 = vld [vmem:[%s1 + $0x28] sm:$0xf]
  %v40 = vld [vmem:[%s1 + $0x2c] sm:$0xf]
  %v41 = vld [vmem:[%s1 + $0x30] sm:$0xf]
  %v42 = vld [vmem:[%s1 + $0x34] sm:$0xf]
  %v43 = vld [vmem:[%s1 + $0x38] sm:$0xf]
  %v44 = vld [vmem:[%s1 + $0x3c] sm:$0xf]
  %v45 = vld [vmem:[%s1 + $0x40] sm:$0xf]
  %v46 = vld [vmem:[%s1 + $0x44] sm:$0xf]
  %v47 = vld [vmem:[%s1 + $0x48] sm:$0xf]
  %v48 = vld [vmem:[%s1 + $0x4c] sm:$0xf]
  %v49 = vld [vmem:[%s1 + $0x50] sm:$0xf]
  %v50 = vld [vmem:[%s1 + $0x54] sm:$0xf]
  %v51 = vld [vmem:[%s1 + $0x58] sm:$0xf]
  %v52 = vld [vmem:[%s1 + $0x5c] sm:$0xf]
  %v53 = vld [vmem:[%s1 + $0x60] sm:$0xf]
  %v54 = vld [vmem:[%s1 + $0x64] sm:$0xf]
  %v55 = vld [vmem:[%s1 + $0x68] sm:$0xf]
  %v56 = vld [vmem:[%s1 + $0x6c] sm:$0xf]
  %v57 = vld [vmem:[%s1 + $0x70] sm:$0xf]
  %v58 = vld [vmem:[%s1 + $0x74] sm:$0xf]
  %v59 = vld [vmem:[%s1 + $0x78] sm:$0xf]
  %v60 = vld [vmem:[%s1 + $0x7c] sm:$0xf]
  %v61 = vld [vmem:[%s1 + $0x80] sm:$0xf]
  %v62 = vld [vmem:[%s1 + $0x84] sm:$0xf]
  %v63 = vld [vmem:[%s1 + $0x88] sm:$0xf]
  %v64 = vld [vmem:[%s1 + $0x8c] sm:$0xf]
  %v65 = vld [vmem:[%s1 + $0x90] sm:$0xf]
  %v66 = vld [vmem:[%s1 + $0x94] sm:$0xf]
  %v67 = vld [vmem:[%s1 + $0x98] sm:$0xf]
  %v68 = vld [vmem:[%s1 + $0x9c] sm:$0xf]
  %v69 = vld [vmem:[%s1 + $0xa0] sm:$0xf]
  %v70 = vld [vmem:[%s1 + $0xa4] sm:$0xf]
  %v71 = vld [vmem:[%s1 + $0xa8] sm:$0xf]
  %v72 = vld [vmem:[%s1 + $0xac] sm:$0xf]
  %v73 = vld [vmem:[%s1 + $0xb0] sm:$0xf]
  %v74 = vld [vmem:[%s1 + $0xb4] sm:$0xf]
  %v75 = vld [vmem:[%s1 + $0xb8] sm:$0xf]
  %v76 = vld [vmem:[%s1 + $0xbc] sm:$0xf]
  %v77 = vld [vmem:[%s2] sm:$0x1]
  %v79 = vlaneseq
  %v80 = vshrl.u32 %v79, 7
  %v81 = vsub.s32 0, %v80
  %v82 = vrot.slane %v77, %v81
  %v98 = vunpack.c.l.b16 %v15
  %v99 = vunpack.c.h.b16 %v15
  %v100 = vunpack.c.l.b16 %v16
  %v101 = vunpack.c.l.b16 %v17
  %v102 = vunpack.c.h.b16 %v17
  %v103 = vunpack.c.l.b16 %v18
  %v104 = vunpack.c.l.b16 %v19
  %v105 = vunpack.c.h.b16 %v19
  %v106 = vunpack.c.l.b16 %v20
  %v107 = vunpack.c.l.b16 %v21
  %v108 = vunpack.c.h.b16 %v21
  %v109 = vunpack.c.l.b16 %v22
  %v110 = vunpack.c.l.b16 %v23
  %v111 = vunpack.c.h.b16 %v23
  %v112 = vunpack.c.l.b16 %v24
  %v113 = vunpack.c.l.b16 %v25
  %v114 = vunpack.c.h.b16 %v25
  %v115 = vunpack.c.l.b16 %v26
  %v116 = vunpack.c.l.b16 %v27
  %v117 = vunpack.c.h.b16 %v27
  %v118 = vunpack.c.l.b16 %v28
  %v119 = vpack.c.b16 %v101, %v98
  %v120 = vpack.c.b16 %v102, %v99
  %v121 = vpack.c.b16 %v103, %v100
  %v122 = vpack.c.b16 %v107, %v104
  %v123 = vpack.c.b16 %v108, %v105
  %v124 = vpack.c.b16 %v109, %v106
  %v125 = vpack.c.b16 %v113, %v110
  %v126 = vpack.c.b16 %v114, %v111
  %v127 = vpack.c.b16 %v115, %v112
  %v128 = vpack.c.b16 %v116, %v116
  %v129 = vpack.c.b16 %v117, %v117
  %v130 = vpack.c.b16 %v118, %v118
  %v191 = vunpack.c.l.b16 %v29
  %v192 = vunpack.c.l.b16 %v30
  %v193 = vunpack.c.l.b16 %v31
  %v194 = vunpack.c.l.b16 %v32
  %v195 = vunpack.c.l.b16 %v33
  %v196 = vunpack.c.l.b16 %v34
  %v197 = vunpack.c.l.b16 %v35
  %v198 = vunpack.c.l.b16 %v36
  %v199 = vunpack.c.l.b16 %v37
  %v200 = vunpack.c.l.b16 %v38
  %v201 = vunpack.c.l.b16 %v39
  %v202 = vunpack.c.l.b16 %v40
  %v203 = vunpack.c.l.b16 %v41
  %v204 = vunpack.c.l.b16 %v42
  %v205 = vunpack.c.l.b16 %v43
  %v206 = vunpack.c.l.b16 %v44
  %v207 = vunpack.c.l.b16 %v45
  %v208 = vunpack.c.l.b16 %v46
  %v209 = vunpack.c.l.b16 %v47
  %v210 = vunpack.c.l.b16 %v48
  %v211 = vunpack.c.l.b16 %v49
  %v212 = vunpack.c.l.b16 %v50
  %v213 = vunpack.c.l.b16 %v51
  %v214 = vunpack.c.l.b16 %v52
  %v215 = vunpack.c.l.b16 %v53
  %v216 = vunpack.c.l.b16 %v54
  %v217 = vunpack.c.l.b16 %v55
  %v218 = vunpack.c.l.b16 %v56
  %v219 = vunpack.c.l.b16 %v57
  %v220 = vunpack.c.l.b16 %v58
  %v221 = vunpack.c.l.b16 %v59
  %v222 = vunpack.c.l.b16 %v60
  %v223 = vunpack.c.l.b16 %v61
  %v224 = vunpack.c.l.b16 %v62
  %v225 = vunpack.c.l.b16 %v63
  %v226 = vunpack.c.l.b16 %v64
  %v227 = vunpack.c.l.b16 %v65
  %v228 = vunpack.c.l.b16 %v66
  %v229 = vunpack.c.l.b16 %v67
  %v230 = vunpack.c.l.b16 %v68
  %v231 = vunpack.c.l.b16 %v69
  %v232 = vunpack.c.l.b16 %v70
  %v233 = vunpack.c.l.b16 %v71
  %v234 = vunpack.c.l.b16 %v72
  %v235 = vunpack.c.l.b16 %v73
  %v236 = vunpack.c.l.b16 %v74
  %v237 = vunpack.c.l.b16 %v75
  %v238 = vunpack.c.l.b16 %v76
  %v239 = vpack.c.b16 %v192, %v191
  %v240 = vpack.c.b16 %v194, %v193
  %v241 = vpack.c.b16 %v196, %v195
  %v242 = vpack.c.b16 %v198, %v197
  %v243 = vpack.c.b16 %v200, %v199
  %v244 = vpack.c.b16 %v202, %v201
  %v245 = vpack.c.b16 %v204, %v203
  %v246 = vpack.c.b16 %v206, %v205
  %v247 = vpack.c.b16 %v208, %v207
  %v248 = vpack.c.b16 %v210, %v209
  %v249 = vpack.c.b16 %v212, %v211
  %v250 = vpack.c.b16 %v214, %v213
  %v251 = vpack.c.b16 %v216, %v215
  %v252 = vpack.c.b16 %v218, %v217
  %v253 = vpack.c.b16 %v220, %v219
  %v254 = vpack.c.b16 %v222, %v221
  %v255 = vpack.c.b16 %v224, %v223
  %v256 = vpack.c.b16 %v226, %v225
  %v257 = vpack.c.b16 %v228, %v227
  %v258 = vpack.c.b16 %v230, %v229
  %v259 = vpack.c.b16 %v232, %v231
  %v260 = vpack.c.b16 %v234, %v233
  %v261 = vpack.c.b16 %v236, %v235
  %v262 = vpack.c.b16 %v238, %v237
  %287 = vmatprep.subr.bf16.mxu0 0
  %288 = vmatpush1.bf16.msra.mxu0 %v239
  %289 = vmatprep.subr.bf16.mxu0 0
  %290 = vmatpush1.bf16.msra.mxu0 %v240
  %291 = vmatprep.subr.bf16.mxu0 0
  %292 = vmatpush1.bf16.msra.mxu0 %v241
  %293 = vmatprep.subr.bf16.mxu0 0
  %294 = vmatpush1.bf16.msra.mxu0 %v242
  %295 = vmatprep.subr.bf16.mxu0 0
  %296 = vmatpush1.bf16.msra.mxu0 %v243
  %297 = vmatprep.subr.bf16.mxu0 0
  %298 = vmatpush1.bf16.msra.mxu0 %v244
  %299 = vmatprep.subr.bf16.mxu0 0
  %300 = vmatpush1.bf16.msra.mxu0 %v245
  %301 = vmatprep.subr.bf16.mxu0 0
  %302 = vmatpush1.bf16.msra.mxu0 %v246
  %303 = vmatprep.subr.bf16.mxu0 0
  %304 = vmatpush1.bf16.msra.mxu0 %v247
  %305 = vmatprep.subr.bf16.mxu0 0
  %306 = vmatpush1.bf16.msra.mxu0 %v248
  %307 = vmatprep.subr.bf16.mxu0 0
  %308 = vmatpush1.bf16.msra.mxu0 %v249
  %309 = vmatprep.subr.bf16.mxu0 0
  %310 = vmatpush1.bf16.msra.mxu0 %v250
  %311 = vmatprep.subr.bf16.mxu0 0
  %312 = vmatpush1.bf16.msra.mxu0 %v251
  %313 = vmatprep.subr.bf16.mxu0 0
  %314 = vmatpush1.bf16.msra.mxu0 %v252
  %315 = vmatprep.subr.bf16.mxu0 0
  %316 = vmatpush1.bf16.msra.mxu0 %v253
  %317 = vmatprep.subr.bf16.mxu0 0
  %318 = vmatpush1.bf16.msra.mxu0 %v254
  %319 = vmatprep.mubr.bf16.mxu0 %v120
  %320 = vmatmul.mubr.bf16.gmra.mrb[0].mxu0 %v119
  %v321 = vpop.f32.mrb[0].mxu0
  %v322 = vadd.f32 %v82, %v321
  %v323 = vpop.f32.mrb[0].mxu0
  %v324 = vpop.f32.mrb[0].mxu0
  %v325 = vadd.f32 %v82, %v324
  %v326 = vpop.f32.mrb[0].mxu0
  %327 = vmatprep.mubr.bf16.mxu0 %v123
  %328 = vmatmul.mubr.bf16.gmra.mrb[0].mxu0 %v122
  %v329 = vpop.f32.mrb[0].mxu0
  %v330 = vadd.f32 %v82, %v329
  %v331 = vpop.f32.mrb[0].mxu0
  %v332 = vpop.f32.mrb[0].mxu0
  %v333 = vadd.f32 %v82, %v332
  %v334 = vpop.f32.mrb[0].mxu0
  %335 = vmatprep.mubr.bf16.mxu0 %v126
  %336 = vmatmul.mubr.bf16.gmra.mrb[0].mxu0 %v125
  %v337 = vpop.f32.mrb[0].mxu0
  %v338 = vadd.f32 %v82, %v337
  %v339 = vpop.f32.mrb[0].mxu0
  %v340 = vpop.f32.mrb[0].mxu0
  %v341 = vadd.f32 %v82, %v340
  %v342 = vpop.f32.mrb[0].mxu0
  %343 = vmatprep.mubr.bf16.mxu0 %v129
  %344 = vmatmul.mubr.bf16.gmra.mrb[0].mxu0 %v128
  %v345 = vpop.f32.mrb[0].mxu0
  %v346 = vadd.f32 %v82, %v345
  %v347 = vpop.f32.mrb[0].mxu0
  %v348 = vpop.f32.mrb[0].mxu0
  %v349 = vpop.f32.mrb[0].mxu0
  %350 = vdwg.mxu0
  %351 = vmatprep.subr.bf16.mxu0 0
  %352 = vmatpush1.bf16.msra.mxu0 %v255
  %353 = vmatprep.subr.bf16.mxu0 0
  %354 = vmatpush1.bf16.msra.mxu0 %v256
  %355 = vmatprep.subr.bf16.mxu0 0
  %356 = vmatpush1.bf16.msra.mxu0 %v257
  %357 = vmatprep.subr.bf16.mxu0 0
  %358 = vmatpush1.bf16.msra.mxu0 %v258
  %359 = vmatprep.subr.bf16.mxu0 0
  %360 = vmatpush1.bf16.msra.mxu0 %v259
  %361 = vmatprep.subr.bf16.mxu0 0
  %362 = vmatpush1.bf16.msra.mxu0 %v260
  %363 = vmatprep.subr.bf16.mxu0 0
  %364 = vmatpush1.bf16.msra.mxu0 %v261
  %365 = vmatprep.subr.bf16.mxu0 0
  %366 = vmatpush1.bf16.msra.mxu0 %v262
  %367 = vmatprep.subr.bf16.mxu0 0
  %368 = vmatpush1.bf16.msra.mxu0 0
  %369 = vmatprep.subr.bf16.mxu0 0
  %370 = vmatpush1.bf16.msra.mxu0 0
  %371 = vmatprep.subr.bf16.mxu0 0
  %372 = vmatpush1.bf16.msra.mxu0 0
  %373 = vmatprep.subr.bf16.mxu0 0
  %374 = vmatpush1.bf16.msra.mxu0 0
  %375 = vmatprep.subr.bf16.mxu0 0
  %376 = vmatpush1.bf16.msra.mxu0 0
  %377 = vmatprep.subr.bf16.mxu0 0
  %378 = vmatpush1.bf16.msra.mxu0 0
  %379 = vmatprep.subr.bf16.mxu0 0
  %380 = vmatpush1.bf16.msra.mxu0 0
  %381 = vmatprep.subr.bf16.mxu0 0
  %382 = vmatpush1.bf16.msra.mxu0 0
  %383 = vmatprep.mubr.bf16.mxu0 0
  %384 = vmatmul.mubr.bf16.gmra.mrb[0].mxu0 %v121
  %v385 = vpop.f32.mrb[0].mxu0
  %v386 = vadd.f32 %v322, %v385
  %v387 = vpop.f32.mrb[0].mxu0
  %v388 = vpop.f32.mrb[0].mxu0
  %v389 = vadd.f32 %v325, %v388
  %v390 = vpop.f32.mrb[0].mxu0
  %391 = vmatprep.mubr.bf16.mxu0 0
  %392 = vmatmul.mubr.bf16.gmra.mrb[0].mxu0 %v124
  %v393 = vpop.f32.mrb[0].mxu0
  %v394 = vadd.f32 %v330, %v393
  %v395 = vpop.f32.mrb[0].mxu0
  %v396 = vpop.f32.mrb[0].mxu0
  %v397 = vadd.f32 %v333, %v396
  %v398 = vpop.f32.mrb[0].mxu0
  %399 = vmatprep.mubr.bf16.mxu0 0
  %400 = vmatmul.mubr.bf16.gmra.mrb[0].mxu0 %v127
  %v401 = vpop.f32.mrb[0].mxu0
  %v402 = vadd.f32 %v338, %v401
  %v403 = vpop.f32.mrb[0].mxu0
  %v404 = vpop.f32.mrb[0].mxu0
  %v405 = vadd.f32 %v341, %v404
  %v406 = vpop.f32.mrb[0].mxu0
  %407 = vmatprep.mubr.bf16.mxu0 0
  %408 = vmatmul.mubr.bf16.gmra.mrb[0].mxu0 %v130
  %v409 = vpop.f32.mrb[0].mxu0
  %v410 = vadd.f32 %v346, %v409
  %v411 = vpop.f32.mrb[0].mxu0
  %v412 = vpop.f32.mrb[0].mxu0
  %v413 = vpop.f32.mrb[0].mxu0
  %414 = vdwg.mxu0
  %v415 = vmax.f32 %v386, 0.0
  %v416 = vmax.f32 %v389, 0.0
  %v417 = vmax.f32 %v394, 0.0
  %v418 = vmax.f32 %v397, 0.0
  %v419 = vmax.f32 %v402, 0.0
  %v420 = vmax.f32 %v405, 0.0
  %v421 = vmax.f32 %v410, 0.0
  %vm422 = vcmask 523264
  %423 = vst.msk [vmem:[%s3] sm:$0xff] %vm422, %v415
  %424 = vst.msk [vmem:[%s3 + $0x8] sm:$0xff] %vm422, %v416
  %425 = vst.msk [vmem:[%s3 + $0x10] sm:$0xff] %vm422, %v417
  %426 = vst.msk [vmem:[%s3 + $0x18] sm:$0xff] %vm422, %v418
  %427 = vst.msk [vmem:[%s3 + $0x20] sm:$0xff] %vm422, %v419
  %428 = vst.msk [vmem:[%s3 + $0x28] sm:$0xff] %vm422, %v420
  %vm429 = vcmask 517120
  %430 = vst.msk [vmem:[%s3 + $0x30] sm:$0x3] %vm429, %v421
  // Predicated region
  $region14: #{squeeze_forward.33} parent=0 // pred_check
    _
  $region15: #{squeeze_forward.33} parent=0 // pred_check_branch
    %432 = sbr.rel (0) target = $region17
  $region16: #{squeeze_forward.33} parent=0 // pred_region
    _
  $region17: #{squeeze_forward.33} parent=0 // pred_fallthru
    _
  // Predicated region
  $region18: #{squeeze_forward.33} parent=0 // pred_check
    _
  $region19: #{squeeze_forward.33} parent=0 // pred_check_branch
    %434 = sbr.rel (0) target = $region21
  $region20: #{squeeze_forward.33} parent=0 // pred_region
    _
  $region21: #{squeeze_forward.33} parent=0 // pred_fallthru
    _

// kernel: squeeze_forward.34
$region0: #{squeeze_forward.34}
  #allocation0 [shape = 'u32[]', space=smem, size = 0x4, offset = 0x4, fixed_abs, tag = 'smem constant byte address 0x4 - core index']
  #allocation1 [shape = 'u32[144,128]{1,0:T(1,128)}', space=vmem, size = 0x12000, scoped, tag = 'internal scratch']
  %s0 = inlined_call_operand.vmem [shape: bf16[50,576], index: 0, kind: input, shape index: {}]
  %s1 = inlined_call_operand.vmem [shape: bf16[576,512], index: 1, kind: input, shape index: {}]
  %s2 = inlined_call_operand.vmem [shape: f32[1,512], index: 2, kind: input, shape index: {}]
  %s3 = inlined_call_operand.vmem [shape: f32[50,512], index: 3, kind: output, shape index: {}]
  %s4 = sld [smem:[#allocation0]]
  $region120: #{squeeze_forward.34} parent=0
    _
  %s6 = ssub.s32 1, %s4
  %s7 = scalar_select 0, %s6, %s4
  $region1: #{squeeze_forward.34} parent=0
    #allocation2 [shape = 'u8[294912]{0}', space=vmem, size = 0x48000, scoped, tag = 'input window, operand 1']
    #allocation3 [shape = 'u8[57344]{0}', space=vmem, size = 0xe000, scoped, tag = 'output window, operand 0']
    loop: start=0, step=1, limit=6
    $region2: #{squeeze_forward.34} parent=1 // loop_pre_header
      _
    $region3: #{squeeze_forward.34} parent=1 // loop_header
      %s9 = sphi 0, %s13
      %p10 = scmp.ge.s32.totalorder %s9, 6
      %s16 = sphi 0, %s28
      %s17 = sphi 0, %s24
      %s18 = sphi 0, %s16
      %s19 = sphi 0, %s17
      %s20 = sphi 0, %s18
      %s21 = sphi 0, %s19
      %s31 = sphi 0, %s33
      %s34 = sphi 0, %s31
      %s35 = sphi 0, %s34
      %s51 = sphi 0, %s35
      %s57 = sphi 0, %s59
      %s60 = sphi 0, %s57
      %s61 = sphi 0, %s60
      %s77 = sphi 0, %s61
      %s83 = sphi 0, %s85
      %s86 = sphi 0, %s83
      %s87 = sphi 0, %s86
      %s103 = sphi 0, %s87
      %s111 = sphi 0, %s113
      %s114 = sphi 0, %s111
      %s115 = sphi 0, %s114
      %s131 = sphi 0, %s115
    $region4: #{squeeze_forward.34} parent=1 // loop_header_branch
      %12 = sbr.rel (%p10) target = $region8
    $region5: #{squeeze_forward.34} parent=1 // loop_body
      %s14 = ssub.s32 %s9, 1
      %s15 = ssub.s32 %s9, 2
      %s22 = sadd.s32 1, %s17
      %p23 = scmp.ge.s32.totalorder %s22, 4
      %s24 = scalar_select %p23, 0, %s22
      %s25 = sadd.s32 1, %s16
      %s26 = scalar_select %p23, %s25, %s16
      %p27 = scmp.ge.s32.totalorder %s26, 1
      %s28 = scalar_select %p27, 0, %s26
      %s29 = ssub.s32 %s16, %s28
      %p30 = scmp.eq.s32.totalorder %s29, 0
      %s32 = sadd.s32 %s31, 1
      %s33 = scalar_select %p30, %s31, %s32
      %p36 = pneg %p30
      %p37 = scmp.eq.s32.totalorder %s9, 3
      %p38 = por %p36, %p37
      %p39 = scmp.ne.s32.totalorder %s31, %s34
      %p40 = scmp.eq.s32.totalorder %s9, 0
      %p41 = por %p39, %p40
      %p42 = scmp.ne.s32.totalorder %s31, %s34
      %p43 = scmp.eq.s32.totalorder %s14, 3
      %p44 = por %p42, %p43
      %p45 = scmp.ne.s32.totalorder %s34, %s35
      %p46 = scmp.eq.s32.totalorder %s14, 0
      %p47 = por %p45, %p46
      %p48 = scmp.ne.s32.totalorder %s34, %s35
      %p49 = scmp.eq.s32.totalorder %s15, 3
      %p50 = por %p48, %p49
      %p52 = scmp.ne.s32.totalorder %s35, %s51
      %p53 = scmp.eq.s32.totalorder %s15, 0
      %p54 = por %p52, %p53
      %s55 = ssub.s32 %s17, %s24
      %p56 = scmp.eq.s32.totalorder %s55, 0
      %s58 = sadd.s32 %s57, 1
      %s59 = scalar_select %p56, %s57, %s58
      %p62 = pneg %p56
      %p63 = scmp.eq.s32.totalorder %s9, 3
      %p64 = por %p62, %p63
      %p65 = scmp.ne.s32.totalorder %s57, %s60
      %p66 = scmp.eq.s32.totalorder %s9, 0
      %p67 = por %p65, %p66
      %p68 = scmp.ne.s32.totalorder %s57, %s60
      %p69 = scmp.eq.s32.totalorder %s14, 3
      %p70 = por %p68, %p69
      %p71 = scmp.ne.s32.totalorder %s60, %s61
      %p72 = scmp.eq.s32.totalorder %s14, 0
      %p73 = por %p71, %p72
      %p74 = scmp.ne.s32.totalorder %s60, %s61
      %p75 = scmp.eq.s32.totalorder %s15, 3
      %p76 = por %p74, %p75
      %p78 = scmp.ne.s32.totalorder %s61, %s77
      %p79 = scmp.eq.s32.totalorder %s15, 0
      %p80 = por %p78, %p79
      %s81 = ssub.s32 %s17, %s24
      %p82 = scmp.eq.s32.totalorder %s81, 0
      %s84 = sadd.s32 %s83, 1
      %s85 = scalar_select %p82, %s83, %s84
      %p88 = pneg %p82
      %p89 = scmp.eq.s32.totalorder %s9, 3
      %p90 = por %p88, %p89
      %p91 = scmp.ne.s32.totalorder %s83, %s86
      %p92 = scmp.eq.s32.totalorder %s9, 0
      %p93 = por %p91, %p92
      %p94 = scmp.ne.s32.totalorder %s83, %s86
      %p95 = scmp.eq.s32.totalorder %s14, 3
      %p96 = por %p94, %p95
      %p97 = scmp.ne.s32.totalorder %s86, %s87
      %p98 = scmp.eq.s32.totalorder %s14, 0
      %p99 = por %p97, %p98
      %p100 = scmp.ne.s32.totalorder %s86, %s87
      %p101 = scmp.eq.s32.totalorder %s15, 3
      %p102 = por %p100, %p101
      %p104 = scmp.ne.s32.totalorder %s87, %s103
      %p105 = scmp.eq.s32.totalorder %s15, 0
      %p106 = por %p104, %p105
      %s107 = ssub.s32 %s16, %s28
      %s108 = ssub.s32 %s17, %s24
      %s109 = sor.u32 %s107, %s108
      %p110 = scmp.eq.s32.totalorder %s109, 0
      %s112 = sadd.s32 %s111, 1
      %s113 = scalar_select %p110, %s111, %s112
      %p116 = pneg %p110
      %p117 = scmp.eq.s32.totalorder %s9, 3
      %p118 = por %p116, %p117
      %p119 = scmp.ne.s32.totalorder %s111, %s114
      %p120 = scmp.eq.s32.totalorder %s9, 0
      %p121 = por %p119, %p120
      %p122 = scmp.ne.s32.totalorder %s111, %s114
      %p123 = scmp.eq.s32.totalorder %s14, 3
      %p124 = por %p122, %p123
      %p125 = scmp.ne.s32.totalorder %s114, %s115
      %p126 = scmp.eq.s32.totalorder %s14, 0
      %p127 = por %p125, %p126
      %p128 = scmp.ne.s32.totalorder %s114, %s115
      %p129 = scmp.eq.s32.totalorder %s15, 3
      %p130 = por %p128, %p129
      %p132 = scmp.ne.s32.totalorder %s115, %s131
      %p133 = scmp.eq.s32.totalorder %s15, 0
      %p134 = por %p132, %p133
      %p135 = scmp.le.s32.totalorder 1, %s9
      %p136 = scmp.lt.s32.totalorder %s9, 5
      %p137 = pnand %p135, %p136
      %p138 = pneg %p137
      // Predicated region
      $region9: #{squeeze_forward.34} parent=5 // pred_check
        _
      $region10: #{squeeze_forward.34} parent=5 // pred_check_branch
        %140 = sbr.rel (%p137) target = $region12
      $region11: #{squeeze_forward.34} parent=5 // pred_region
        %s141 = ssub.s32 %s9, 1
        // Predicated region
        $region13: #{squeeze_forward.34} parent=11 // pred_check
          %p142 = pneg %p47
        $region14: #{squeeze_forward.34} parent=11 // pred_check_branch
          %144 = sbr.rel (%p142) target = $region16
        $region15: #{squeeze_forward.34} parent=11 // pred_region
          %s145 = smul.u32 7, %s18
          %p146 = scmp.lt.s32.totalorder %s145, 6
          %s147 = scalar_select %p146, %s145, 6
          %s148 = smul.addr %s147, 5
          %s149 = smul.addr %s148, 4
          %s150 = scalar_lea.vmem %s0, %s149
          %s151 = smul.u32 7, %s18
        $region16: #{squeeze_forward.34} parent=11 // pred_fallthru
          _
      $region12: #{squeeze_forward.34} parent=5 // pred_fallthru
        _
      %p152 = scmp.lt.s32.totalorder %s9, 4
      // Predicated region
      $region17: #{squeeze_forward.34} parent=5 // pred_check
        %p153 = pneg %p152
      $region18: #{squeeze_forward.34} parent=5 // pred_check_branch
        %155 = sbr.rel (%p153) target = $region20
      $region19: #{squeeze_forward.34} parent=5 // pred_region
        // Predicated region
        $region21: #{squeeze_forward.34} parent=19 // pred_check
          %p156 = pneg %p67
        $region22: #{squeeze_forward.34} parent=19 // pred_check_branch
          %158 = sbr.rel (%p156) target = $region24
        $region23: #{squeeze_forward.34} parent=19 // pred_region
          %s159 = sand.u32 %s57, 1
          %s160 = sand.u32 %s57, 1
          %s161 = smul.addr %s160, 288
          %s162 = scalar_lea.vmem [#allocation2], %s161
          %s163 = smul.addr %s17, 4
          %s164 = scalar_lea.vmem %s1, %s163
          // Predicated region
          $region25: #{squeeze_forward.34} parent=23 // pred_check
            _
          $region26: #{squeeze_forward.34} parent=23 // pred_check_branch
            %166 = sbr.rel (0) target = $region28
          $region27: #{squeeze_forward.34} parent=23 // pred_region
            // Predicated region
            $region29: #{squeeze_forward.34} parent=27 // pred_check
              _
            $region30: #{squeeze_forward.34} parent=27 // pred_check_branch
              %168 = sbr.rel target = $region32
            $region31: #{squeeze_forward.34} parent=27 // pred_region
              // Predicated region
              $region44: #{squeeze_forward.34} parent=31 // pred_check
                _
              $region45: #{squeeze_forward.34} parent=31 // pred_check_branch
                %325 = sbr.rel (0) target = $region47
              $region46: #{squeeze_forward.34} parent=31 // pred_region
                loop: start=0, step=1, limit=1
                $region48: #{squeeze_forward.34} parent=46 // loop_pre_header
                  _
                $region49: #{squeeze_forward.34} parent=46 // loop_header
                  %s327 = sphi 0, %s331
                  %p328 = scmp.ge.s32.totalorder %s327, 1
                  %s332 = sphi %s164, %s164
                  %s333 = sphi %s162, %s162
                $region50: #{squeeze_forward.34} parent=46 // loop_header_branch
                  %330 = sbr.rel (%p328) target = $region54
                $region51: #{squeeze_forward.34} parent=46 // loop_body
                  _
                $region52: #{squeeze_forward.34} parent=46 // loop_footer
                  %s331 = sadd.s32 1, %s327
                $region53: #{squeeze_forward.34} parent=46 // loop_footer_branch
                  %326 = sbr.rel target = $region49
                $region54: #{squeeze_forward.34} parent=46 // loop_exit
                  _
                loop: start=0, step=1, limit=1
                $region55: #{squeeze_forward.34} parent=46 // loop_pre_header
                  _
                $region56: #{squeeze_forward.34} parent=46 // loop_header
                  %s336 = sphi 0, %s340
                  %p337 = scmp.ge.s32.totalorder %s336, 1
                  %s341 = sphi %s164, %s164
                  %s342 = sphi %s162, %s162
                $region57: #{squeeze_forward.34} parent=46 // loop_header_branch
                  %339 = sbr.rel (%p337) target = $region61
                $region58: #{squeeze_forward.34} parent=46 // loop_body
                  %v343 = vld [vmem:[%s341] sm:$0xf]
                  %344 = vst [vmem:[%s342] sm:$0xf] %v343
                  %v345 = vld [vmem:[%s341 + $0x10] sm:$0xf]
                  %346 = vst [vmem:[%s342 + $0x4] sm:$0xf] %v345
                  %v347 = vld [vmem:[%s341 + $0x20] sm:$0xf]
                  %348 = vst [vmem:[%s342 + $0x8] sm:$0xf] %v347
                  %v349 = vld [vmem:[%s341 + $0x30] sm:$0xf]
                  %350 = vst [vmem:[%s342 + $0xc] sm:$0xf] %v349
                  %v351 = vld [vmem:[%s341 + $0x40] sm:$0xf]
                  %352 = vst [vmem:[%s342 + $0x10] sm:$0xf] %v351
                  %v353 = vld [vmem:[%s341 + $0x50] sm:$0xf]
                  %354 = vst [vmem:[%s342 + $0x14] sm:$0xf] %v353
                  %v355 = vld [vmem:[%s341 + $0x60] sm:$0xf]
                  %356 = vst [vmem:[%s342 + $0x18] sm:$0xf] %v355
                  %v357 = vld [vmem:[%s341 + $0x70] sm:$0xf]
                  %358 = vst [vmem:[%s342 + $0x1c] sm:$0xf] %v357
                  %v359 = vld [vmem:[%s341 + $0x80] sm:$0xf]
                  %360 = vst [vmem:[%s342 + $0x20] sm:$0xf] %v359
                  %v361 = vld [vmem:[%s341 + $0x90] sm:$0xf]
                  %362 = vst [vmem:[%s342 + $0x24] sm:$0xf] %v361
                  %v363 = vld [vmem:[%s341 + $0xa0] sm:$0xf]
                  %364 = vst [vmem:[%s342 + $0x28] sm:$0xf] %v363
                  %v365 = vld [vmem:[%s341 + $0xb0] sm:$0xf]
                  %366 = vst [vmem:[%s342 + $0x2c] sm:$0xf] %v365
                  %v367 = vld [vmem:[%s341 + $0xc0] sm:$0xf]
                  %368 = vst [vmem:[%s342 + $0x30] sm:$0xf] %v367
                  %v369 = vld [vmem:[%s341 + $0xd0] sm:$0xf]
                  %370 = vst [vmem:[%s342 + $0x34] sm:$0xf] %v369
                  %v371 = vld [vmem:[%s341 + $0xe0] sm:$0xf]
                  %372 = vst [vmem:[%s342 + $0x38] sm:$0xf] %v371
                  %v373 = vld [vmem:[%s341 + $0xf0] sm:$0xf]
                  %374 = vst [vmem:[%s342 + $0x3c] sm:$0xf] %v373
                  %v375 = vld [vmem:[%s341 + $0x100] sm:$0xf]
                  %376 = vst [vmem:[%s342 + $0x40] sm:$0xf] %v375
                  %v377 = vld [vmem:[%s341 + $0x110] sm:$0xf]
                  %378 = vst [vmem:[%s342 + $0x44] sm:$0xf] %v377
                  %v379 = vld [vmem:[%s341 + $0x120] sm:$0xf]
                  %380 = vst [vmem:[%s342 + $0x48] sm:$0xf] %v379
                  %v381 = vld [vmem:[%s341 + $0x130] sm:$0xf]
                  %382 = vst [vmem:[%s342 + $0x4c] sm:$0xf] %v381
                  %v383 = vld [vmem:[%s341 + $0x140] sm:$0xf]
                  %384 = vst [vmem:[%s342 + $0x50] sm:$0xf] %v383
                  %v385 = vld [vmem:[%s341 + $0x150] sm:$0xf]
                  %386 = vst [vmem:[%s342 + $0x54] sm:$0xf] %v385
                  %v387 = vld [vmem:[%s341 + $0x160] sm:$0xf]
                  %388 = vst [vmem:[%s342 + $0x58] sm:$0xf] %v387
                  %v389 = vld [vmem:[%s341 + $0x170] sm:$0xf]
                  %390 = vst [vmem:[%s342 + $0x5c] sm:$0xf] %v389
                  %v391 = vld [vmem:[%s341 + $0x180] sm:$0xf]
                  %392 = vst [vmem:[%s342 + $0x60] sm:$0xf] %v391
                  %v393 = vld [vmem:[%s341 + $0x190] sm:$0xf]
                  %394 = vst [vmem:[%s342 + $0x64] sm:$0xf] %v393
                  %v395 = vld [vmem:[%s341 + $0x1a0] sm:$0xf]
                  %396 = vst [vmem:[%s342 + $0x68] sm:$0xf] %v395
                  %v397 = vld [vmem:[%s341 + $0x1b0] sm:$0xf]
                  %398 = vst [vmem:[%s342 + $0x6c] sm:$0xf] %v397
                  %v399 = vld [vmem:[%s341 + $0x1c0] sm:$0xf]
                  %400 = vst [vmem:[%s342 + $0x70] sm:$0xf] %v399
                  %v401 = vld [vmem:[%s341 + $0x1d0] sm:$0xf]
                  %402 = vst [vmem:[%s342 + $0x74] sm:$0xf] %v401
                  %v403 = vld [vmem:[%s341 + $0x1e0] sm:$0xf]
                  %404 = vst [vmem:[%s342 + $0x78] sm:$0xf] %v403
                  %v405 = vld [vmem:[%s341 + $0x1f0] sm:$0xf]
                  %406 = vst [vmem:[%s342 + $0x7c] sm:$0xf] %v405
                  %v407 = vld [vmem:[%s341 + $0x200] sm:$0xf]
                  %408 = vst [vmem:[%s342 + $0x80] sm:$0xf] %v407
                  %v409 = vld [vmem:[%s341 + $0x210] sm:$0xf]
                  %410 = vst [vmem:[%s342 + $0x84] sm:$0xf] %v409
                  %v411 = vld [vmem:[%s341 + $0x220] sm:$0xf]
                  %412 = vst [vmem:[%s342 + $0x88] sm:$0xf] %v411
                  %v413 = vld [vmem:[%s341 + $0x230] sm:$0xf]
                  %414 = vst [vmem:[%s342 + $0x8c] sm:$0xf] %v413
                  %v415 = vld [vmem:[%s341 + $0x240] sm:$0xf]
                  %416 = vst [vmem:[%s342 + $0x90] sm:$0xf] %v415
                  %v417 = vld [vmem:[%s341 + $0x250] sm:$0xf]
                  %418 = vst [vmem:[%s342 + $0x94] sm:$0xf] %v417
                  %v419 = vld [vmem:[%s341 + $0x260] sm:$0xf]
                  %420 = vst [vmem:[%s342 + $0x98] sm:$0xf] %v419
                  %v421 = vld [vmem:[%s341 + $0x270] sm:$0xf]
                  %422 = vst [vmem:[%s342 + $0x9c] sm:$0xf] %v421
                  %v423 = vld [vmem:[%s341 + $0x280] sm:$0xf]
                  %424 = vst [vmem:[%s342 + $0xa0] sm:$0xf] %v423
                  %v425 = vld [vmem:[%s341 + $0x290] sm:$0xf]
                  %426 = vst [vmem:[%s342 + $0xa4] sm:$0xf] %v425
                  %v427 = vld [vmem:[%s341 + $0x2a0] sm:$0xf]
                  %428 = vst [vmem:[%s342 + $0xa8] sm:$0xf] %v427
                  %v429 = vld [vmem:[%s341 + $0x2b0] sm:$0xf]
                  %430 = vst [vmem:[%s342 + $0xac] sm:$0xf] %v429
                  %v431 = vld [vmem:[%s341 + $0x2c0] sm:$0xf]
                  %432 = vst [vmem:[%s342 + $0xb0] sm:$0xf] %v431
                  %v433 = vld [vmem:[%s341 + $0x2d0] sm:$0xf]
                  %434 = vst [vmem:[%s342 + $0xb4] sm:$0xf] %v433
                  %v435 = vld [vmem:[%s341 + $0x2e0] sm:$0xf]
                  %436 = vst [vmem:[%s342 + $0xb8] sm:$0xf] %v435
                  %v437 = vld [vmem:[%s341 + $0x2f0] sm:$0xf]
                  %438 = vst [vmem:[%s342 + $0xbc] sm:$0xf] %v437
                  %v439 = vld [vmem:[%s341 + $0x300] sm:$0xf]
                  %440 = vst [vmem:[%s342 + $0xc0] sm:$0xf] %v439
                  %v441 = vld [vmem:[%s341 + $0x310] sm:$0xf]
                  %442 = vst [vmem:[%s342 + $0xc4] sm:$0xf] %v441
                  %v443 = vld [vmem:[%s341 + $0x320] sm:$0xf]
                  %444 = vst [vmem:[%s342 + $0xc8] sm:$0xf] %v443
                  %v445 = vld [vmem:[%s341 + $0x330] sm:$0xf]
                  %446 = vst [vmem:[%s342 + $0xcc] sm:$0xf] %v445
                  %v447 = vld [vmem:[%s341 + $0x340] sm:$0xf]
                  %448 = vst [vmem:[%s342 + $0xd0] sm:$0xf] %v447
                  %v449 = vld [vmem:[%s341 + $0x350] sm:$0xf]
                  %450 = vst [vmem:[%s342 + $0xd4] sm:$0xf] %v449
                  %v451 = vld [vmem:[%s341 + $0x360] sm:$0xf]
                  %452 = vst [vmem:[%s342 + $0xd8] sm:$0xf] %v451
                  %v453 = vld [vmem:[%s341 + $0x370] sm:$0xf]
                  %454 = vst [vmem:[%s342 + $0xdc] sm:$0xf] %v453
                  %v455 = vld [vmem:[%s341 + $0x380] sm:$0xf]
                  %456 = vst [vmem:[%s342 + $0xe0] sm:$0xf] %v455
                  %v457 = vld [vmem:[%s341 + $0x390] sm:$0xf]
                  %458 = vst [vmem:[%s342 + $0xe4] sm:$0xf] %v457
                  %v459 = vld [vmem:[%s341 + $0x3a0] sm:$0xf]
                  %460 = vst [vmem:[%s342 + $0xe8] sm:$0xf] %v459
                  %v461 = vld [vmem:[%s341 + $0x3b0] sm:$0xf]
                  %462 = vst [vmem:[%s342 + $0xec] sm:$0xf] %v461
                  %v463 = vld [vmem:[%s341 + $0x3c0] sm:$0xf]
                  %464 = vst [vmem:[%s342 + $0xf0] sm:$0xf] %v463
                  %v465 = vld [vmem:[%s341 + $0x3d0] sm:$0xf]
                  %466 = vst [vmem:[%s342 + $0xf4] sm:$0xf] %v465
                  %v467 = vld [vmem:[%s341 + $0x3e0] sm:$0xf]
                  %468 = vst [vmem:[%s342 + $0xf8] sm:$0xf] %v467
                  %v469 = vld [vmem:[%s341 + $0x3f0] sm:$0xf]
                  %470 = vst [vmem:[%s342 + $0xfc] sm:$0xf] %v469
                  %v471 = vld [vmem:[%s341 + $0x400] sm:$0xf]
                  %472 = vst [vmem:[%s342 + $0x100] sm:$0xf] %v471
                  %v473 = vld [vmem:[%s341 + $0x410] sm:$0xf]
                  %474 = vst [vmem:[%s342 + $0x104] sm:$0xf] %v473
                  %v475 = vld [vmem:[%s341 + $0x420] sm:$0xf]
                  %476 = vst [vmem:[%s342 + $0x108] sm:$0xf] %v475
                  %v477 = vld [vmem:[%s341 + $0x430] sm:$0xf]
                  %478 = vst [vmem:[%s342 + $0x10c] sm:$0xf] %v477
                  %v479 = vld [vmem:[%s341 + $0x440] sm:$0xf]
                  %480 = vst [vmem:[%s342 + $0x110] sm:$0xf] %v479
                  %v481 = vld [vmem:[%s341 + $0x450] sm:$0xf]
                  %482 = vst [vmem:[%s342 + $0x114] sm:$0xf] %v481
                  %v483 = vld [vmem:[%s341 + $0x460] sm:$0xf]
                  %484 = vst [vmem:[%s342 + $0x118] sm:$0xf] %v483
                  %v485 = vld [vmem:[%s341 + $0x470] sm:$0xf]
                  %486 = vst [vmem:[%s342 + $0x11c] sm:$0xf] %v485
                $region59: #{squeeze_forward.34} parent=46 // loop_footer
                  %s340 = sadd.s32 1, %s336
                $region60: #{squeeze_forward.34} parent=46 // loop_footer_branch
                  %335 = sbr.rel target = $region56
                $region61: #{squeeze_forward.34} parent=46 // loop_exit
                  _
              $region47: #{squeeze_forward.34} parent=31 // pred_fallthru
                _
            $region32: #{squeeze_forward.34} parent=27 // pred_fallthru
              _
            // Predicated region
            $region33: #{squeeze_forward.34} parent=27 // pred_check
              _
            $region34: #{squeeze_forward.34} parent=27 // pred_check_branch
              %170 = sbr.rel (0) target = $region36
            $region35: #{squeeze_forward.34} parent=27 // pred_region
              loop: start=0, step=1, limit=1
              $region37: #{squeeze_forward.34} parent=35 // loop_pre_header
                _
              $region38: #{squeeze_forward.34} parent=35 // loop_header
                %s173 = sphi 0, %s177
                %p174 = scmp.ge.s32.totalorder %s173, 1
                %s178 = sphi %s164, %s164
                %s179 = sphi %s162, %s162
              $region39: #{squeeze_forward.34} parent=35 // loop_header_branch
                %176 = sbr.rel (%p174) target = $region43
              $region40: #{squeeze_forward.34} parent=35 // loop_body
                %v180 = vld [vmem:[%s178] sm:$0xf]
                %181 = vst [vmem:[%s179] sm:$0xf] %v180
                %v182 = vld [vmem:[%s178 + $0x10] sm:$0xf]
                %183 = vst [vmem:[%s179 + $0x4] sm:$0xf] %v182
                %v184 = vld [vmem:[%s178 + $0x20] sm:$0xf]
                %185 = vst [vmem:[%s179 + $0x8] sm:$0xf] %v184
                %v186 = vld [vmem:[%s178 + $0x30] sm:$0xf]
                %187 = vst [vmem:[%s179 + $0xc] sm:$0xf] %v186
                %v188 = vld [vmem:[%s178 + $0x40] sm:$0xf]
                %189 = vst [vmem:[%s179 + $0x10] sm:$0xf] %v188
                %v190 = vld [vmem:[%s178 + $0x50] sm:$0xf]
                %191 = vst [vmem:[%s179 + $0x14] sm:$0xf] %v190
                %v192 = vld [vmem:[%s178 + $0x60] sm:$0xf]
                %193 = vst [vmem:[%s179 + $0x18] sm:$0xf] %v192
                %v194 = vld [vmem:[%s178 + $0x70] sm:$0xf]
                %195 = vst [vmem:[%s179 + $0x1c] sm:$0xf] %v194
                %v196 = vld [vmem:[%s178 + $0x80] sm:$0xf]
                %197 = vst [vmem:[%s179 + $0x20] sm:$0xf] %v196
                %v198 = vld [vmem:[%s178 + $0x90] sm:$0xf]
                %199 = vst [vmem:[%s179 + $0x24] sm:$0xf] %v198
                %v200 = vld [vmem:[%s178 + $0xa0] sm:$0xf]
                %201 = vst [vmem:[%s179 + $0x28] sm:$0xf] %v200
                %v202 = vld [vmem:[%s178 + $0xb0] sm:$0xf]
                %203 = vst [vmem:[%s179 + $0x2c] sm:$0xf] %v202
                %v204 = vld [vmem:[%s178 + $0xc0] sm:$0xf]
                %205 = vst [vmem:[%s179 + $0x30] sm:$0xf] %v204
                %v206 = vld [vmem:[%s178 + $0xd0] sm:$0xf]
                %207 = vst [vmem:[%s179 + $0x34] sm:$0xf] %v206
                %v208 = vld [vmem:[%s178 + $0xe0] sm:$0xf]
                %209 = vst [vmem:[%s179 + $0x38] sm:$0xf] %v208
                %v210 = vld [vmem:[%s178 + $0xf0] sm:$0xf]
                %211 = vst [vmem:[%s179 + $0x3c] sm:$0xf] %v210
                %v212 = vld [vmem:[%s178 + $0x100] sm:$0xf]
                %213 = vst [vmem:[%s179 + $0x40] sm:$0xf] %v212
                %v214 = vld [vmem:[%s178 + $0x110] sm:$0xf]
                %215 = vst [vmem:[%s179 + $0x44] sm:$0xf] %v214
                %v216 = vld [vmem:[%s178 + $0x120] sm:$0xf]
                %217 = vst [vmem:[%s179 + $0x48] sm:$0xf] %v216
                %v218 = vld [vmem:[%s178 + $0x130] sm:$0xf]
                %219 = vst [vmem:[%s179 + $0x4c] sm:$0xf] %v218
                %v220 = vld [vmem:[%s178 + $0x140] sm:$0xf]
                %221 = vst [vmem:[%s179 + $0x50] sm:$0xf] %v220
                %v222 = vld [vmem:[%s178 + $0x150] sm:$0xf]
                %223 = vst [vmem:[%s179 + $0x54] sm:$0xf] %v222
                %v224 = vld [vmem:[%s178 + $0x160] sm:$0xf]
                %225 = vst [vmem:[%s179 + $0x58] sm:$0xf] %v224
                %v226 = vld [vmem:[%s178 + $0x170] sm:$0xf]
                %227 = vst [vmem:[%s179 + $0x5c] sm:$0xf] %v226
                %v228 = vld [vmem:[%s178 + $0x180] sm:$0xf]
                %229 = vst [vmem:[%s179 + $0x60] sm:$0xf] %v228
                %v230 = vld [vmem:[%s178 + $0x190] sm:$0xf]
                %231 = vst [vmem:[%s179 + $0x64] sm:$0xf] %v230
                %v232 = vld [vmem:[%s178 + $0x1a0] sm:$0xf]
                %233 = vst [vmem:[%s179 + $0x68] sm:$0xf] %v232
                %v234 = vld [vmem:[%s178 + $0x1b0] sm:$0xf]
                %235 = vst [vmem:[%s179 + $0x6c] sm:$0xf] %v234
                %v236 = vld [vmem:[%s178 + $0x1c0] sm:$0xf]
                %237 = vst [vmem:[%s179 + $0x70] sm:$0xf] %v236
                %v238 = vld [vmem:[%s178 + $0x1d0] sm:$0xf]
                %239 = vst [vmem:[%s179 + $0x74] sm:$0xf] %v238
                %v240 = vld [vmem:[%s178 + $0x1e0] sm:$0xf]
                %241 = vst [vmem:[%s179 + $0x78] sm:$0xf] %v240
                %v242 = vld [vmem:[%s178 + $0x1f0] sm:$0xf]
                %243 = vst [vmem:[%s179 + $0x7c] sm:$0xf] %v242
                %v244 = vld [vmem:[%s178 + $0x200] sm:$0xf]
                %245 = vst [vmem:[%s179 + $0x80] sm:$0xf] %v244
                %v246 = vld [vmem:[%s178 + $0x210] sm:$0xf]
                %247 = vst [vmem:[%s179 + $0x84] sm:$0xf] %v246
                %v248 = vld [vmem:[%s178 + $0x220] sm:$0xf]
                %249 = vst [vmem:[%s179 + $0x88] sm:$0xf] %v248
                %v250 = vld [vmem:[%s178 + $0x230] sm:$0xf]
                %251 = vst [vmem:[%s179 + $0x8c] sm:$0xf] %v250
                %v252 = vld [vmem:[%s178 + $0x240] sm:$0xf]
                %253 = vst [vmem:[%s179 + $0x90] sm:$0xf] %v252
                %v254 = vld [vmem:[%s178 + $0x250] sm:$0xf]
                %255 = vst [vmem:[%s179 + $0x94] sm:$0xf] %v254
                %v256 = vld [vmem:[%s178 + $0x260] sm:$0xf]
                %257 = vst [vmem:[%s179 + $0x98] sm:$0xf] %v256
                %v258 = vld [vmem:[%s178 + $0x270] sm:$0xf]
                %259 = vst [vmem:[%s179 + $0x9c] sm:$0xf] %v258
                %v260 = vld [vmem:[%s178 + $0x280] sm:$0xf]
                %261 = vst [vmem:[%s179 + $0xa0] sm:$0xf] %v260
                %v262 = vld [vmem:[%s178 + $0x290] sm:$0xf]
                %263 = vst [vmem:[%s179 + $0xa4] sm:$0xf] %v262
                %v264 = vld [vmem:[%s178 + $0x2a0] sm:$0xf]
                %265 = vst [vmem:[%s179 + $0xa8] sm:$0xf] %v264
                %v266 = vld [vmem:[%s178 + $0x2b0] sm:$0xf]
                %267 = vst [vmem:[%s179 + $0xac] sm:$0xf] %v266
                %v268 = vld [vmem:[%s178 + $0x2c0] sm:$0xf]
                %269 = vst [vmem:[%s179 + $0xb0] sm:$0xf] %v268
                %v270 = vld [vmem:[%s178 + $0x2d0] sm:$0xf]
                %271 = vst [vmem:[%s179 + $0xb4] sm:$0xf] %v270
                %v272 = vld [vmem:[%s178 + $0x2e0] sm:$0xf]
                %273 = vst [vmem:[%s179 + $0xb8] sm:$0xf] %v272
                %v274 = vld [vmem:[%s178 + $0x2f0] sm:$0xf]
                %275 = vst [vmem:[%s179 + $0xbc] sm:$0xf] %v274
                %v276 = vld [vmem:[%s178 + $0x300] sm:$0xf]
                %277 = vst [vmem:[%s179 + $0xc0] sm:$0xf] %v276
                %v278 = vld [vmem:[%s178 + $0x310] sm:$0xf]
                %279 = vst [vmem:[%s179 + $0xc4] sm:$0xf] %v278
                %v280 = vld [vmem:[%s178 + $0x320] sm:$0xf]
                %281 = vst [vmem:[%s179 + $0xc8] sm:$0xf] %v280
                %v282 = vld [vmem:[%s178 + $0x330] sm:$0xf]
                %283 = vst [vmem:[%s179 + $0xcc] sm:$0xf] %v282
                %v284 = vld [vmem:[%s178 + $0x340] sm:$0xf]
                %285 = vst [vmem:[%s179 + $0xd0] sm:$0xf] %v284
                %v286 = vld [vmem:[%s178 + $0x350] sm:$0xf]
                %287 = vst [vmem:[%s179 + $0xd4] sm:$0xf] %v286
                %v288 = vld [vmem:[%s178 + $0x360] sm:$0xf]
                %289 = vst [vmem:[%s179 + $0xd8] sm:$0xf] %v288
                %v290 = vld [vmem:[%s178 + $0x370] sm:$0xf]
                %291 = vst [vmem:[%s179 + $0xdc] sm:$0xf] %v290
                %v292 = vld [vmem:[%s178 + $0x380] sm:$0xf]
                %293 = vst [vmem:[%s179 + $0xe0] sm:$0xf] %v292
                %v294 = vld [vmem:[%s178 + $0x390] sm:$0xf]
                %295 = vst [vmem:[%s179 + $0xe4] sm:$0xf] %v294
                %v296 = vld [vmem:[%s178 + $0x3a0] sm:$0xf]
                %297 = vst [vmem:[%s179 + $0xe8] sm:$0xf] %v296
                %v298 = vld [vmem:[%s178 + $0x3b0] sm:$0xf]
                %299 = vst [vmem:[%s179 + $0xec] sm:$0xf] %v298
                %v300 = vld [vmem:[%s178 + $0x3c0] sm:$0xf]
                %301 = vst [vmem:[%s179 + $0xf0] sm:$0xf] %v300
                %v302 = vld [vmem:[%s178 + $0x3d0] sm:$0xf]
                %303 = vst [vmem:[%s179 + $0xf4] sm:$0xf] %v302
                %v304 = vld [vmem:[%s178 + $0x3e0] sm:$0xf]
                %305 = vst [vmem:[%s179 + $0xf8] sm:$0xf] %v304
                %v306 = vld [vmem:[%s178 + $0x3f0] sm:$0xf]
                %307 = vst [vmem:[%s179 + $0xfc] sm:$0xf] %v306
                %v308 = vld [vmem:[%s178 + $0x400] sm:$0xf]
                %309 = vst [vmem:[%s179 + $0x100] sm:$0xf] %v308
                %v310 = vld [vmem:[%s178 + $0x410] sm:$0xf]
                %311 = vst [vmem:[%s179 + $0x104] sm:$0xf] %v310
                %v312 = vld [vmem:[%s178 + $0x420] sm:$0xf]
                %313 = vst [vmem:[%s179 + $0x108] sm:$0xf] %v312
                %v314 = vld [vmem:[%s178 + $0x430] sm:$0xf]
                %315 = vst [vmem:[%s179 + $0x10c] sm:$0xf] %v314
                %v316 = vld [vmem:[%s178 + $0x440] sm:$0xf]
                %317 = vst [vmem:[%s179 + $0x110] sm:$0xf] %v316
                %v318 = vld [vmem:[%s178 + $0x450] sm:$0xf]
                %319 = vst [vmem:[%s179 + $0x114] sm:$0xf] %v318
                %v320 = vld [vmem:[%s178 + $0x460] sm:$0xf]
                %321 = vst [vmem:[%s179 + $0x118] sm:$0xf] %v320
                %v322 = vld [vmem:[%s178 + $0x470] sm:$0xf]
                %323 = vst [vmem:[%s179 + $0x11c] sm:$0xf] %v322
              $region41: #{squeeze_forward.34} parent=35 // loop_footer
                %s177 = sadd.s32 1, %s173
              $region42: #{squeeze_forward.34} parent=35 // loop_footer_branch
                %172 = sbr.rel target = $region38
              $region43: #{squeeze_forward.34} parent=35 // loop_exit
                _
            $region36: #{squeeze_forward.34} parent=27 // pred_fallthru
              _
          $region28: #{squeeze_forward.34} parent=23 // pred_fallthru
            _
          %487 = vnop
        $region24: #{squeeze_forward.34} parent=19 // pred_fallthru
          _
        // Predicated region
        $region62: #{squeeze_forward.34} parent=19 // pred_check
          %p488 = pneg %p93
        $region63: #{squeeze_forward.34} parent=19 // pred_check_branch
          %490 = sbr.rel (%p488) target = $region65
        $region64: #{squeeze_forward.34} parent=19 // pred_region
          %p491 = scmp.lt.s32.totalorder %s17, 3
          %s492 = scalar_select %p491, %s17, 3
          %s493 = scalar_lea.vmem %s2, %s492
        $region65: #{squeeze_forward.34} parent=19 // pred_fallthru
          _
      $region20: #{squeeze_forward.34} parent=5 // pred_fallthru
        _
      %p494 = scmp.le.s32.totalorder 1, %s9
      %p495 = scmp.lt.s32.totalorder %s9, 5
      %p496 = pnand %p494, %p495
      %p497 = pneg %p496
      // Predicated region
      $region66: #{squeeze_forward.34} parent=5 // pred_check
        _
      $region67: #{squeeze_forward.34} parent=5 // pred_check_branch
        %499 = sbr.rel (%p496) target = $region69
      $region68: #{squeeze_forward.34} parent=5 // pred_region
        %s500 = ssub.s32 %s9, 1
        %s501 = sand.u32 %s60, 1
        %s502 = sand.u32 %s60, 1
        %s503 = smul.addr %s502, 288
        %s504 = scalar_lea.vmem [#allocation2], %s503
        // Predicated region
        $region70: #{squeeze_forward.34} parent=68 // pred_check
          %p505 = pneg %p73
        $region71: #{squeeze_forward.34} parent=68 // pred_check_branch
          %507 = sbr.rel (%p505) target = $region73
        $region72: #{squeeze_forward.34} parent=68 // pred_region
          _
        $region73: #{squeeze_forward.34} parent=68 // pred_fallthru
          _
        %s508 = smul.u32 7, %s18
        %p509 = scmp.lt.s32.totalorder %s508, 6
        %s510 = scalar_select %p509, %s508, 6
        %s511 = smul.addr %s510, 5
        %s512 = smul.addr %s511, 4
        %s513 = scalar_lea.vmem %s0, %s512
        %p514 = pneg %p47
        %p515 = pneg %p44
        %s516 = sand.u32 %s60, 1
        %s517 = sand.u32 %s60, 1
        %s518 = smul.addr %s517, 288
        %s519 = scalar_lea.vmem [#allocation2], %s518
        %p520 = pneg %p73
        %p521 = pneg %p70
        %p522 = scmp.lt.s32.totalorder %s19, 3
        %s523 = scalar_select %p522, %s19, 3
        %s524 = scalar_lea.vmem %s2, %s523
        %p525 = pneg %p99
        %p526 = pneg %p96
        %p527 = pneg %p127
        %p528 = pneg %p124
        %s529 = sand.u32 %s114, 1
        %s530 = sand.u32 %s114, 1
        %s531 = smul.addr %s530, 56
        %s532 = scalar_lea.vmem [#allocation3], %s531
        %s533 = smul.u32 7, %s18
        %p534 = scmp.lt.s32.totalorder %s533, 6
        %s535 = scalar_select %p534, %s533, 6
        %s536 = smul.addr %s535, 5
        %s537 = smul.addr %s536, 4
        %s538 = scalar_lea.vmem %s0, %s537
        %s539 = smul.u32 7, %s18
        %p540 = scmp.lt.s32.totalorder %s19, 3
        %s541 = scalar_select %p540, %s19, 3
        %s542 = scalar_lea.vmem %s2, %s541
        %s543 = smul.u32 7, %s18
        %v545 = vld [vmem:[%s538] sm:$0xff]
        %v546 = vld [vmem:[%s538 + $0x8] sm:$0xff]
        %v547 = vld [vmem:[%s538 + $0x10] sm:$0xf]
        %v548 = vld [vmem:[%s538 + $0x14] sm:$0xff]
        %v549 = vld [vmem:[%s538 + $0x1c] sm:$0xff]
        %v550 = vld [vmem:[%s538 + $0x24] sm:$0xf]
        %v551 = vld [vmem:[%s538 + $0x28] sm:$0xff]
        %v552 = vld [vmem:[%s538 + $0x30] sm:$0xff]
        %v553 = vld [vmem:[%s538 + $0x38] sm:$0xf]
        %v554 = vld [vmem:[%s538 + $0x3c] sm:$0xff]
        %v555 = vld [vmem:[%s538 + $0x44] sm:$0xff]
        %v556 = vld [vmem:[%s538 + $0x4c] sm:$0xf]
        %v557 = vld [vmem:[%s538 + $0x50] sm:$0xff]
        %v558 = vld [vmem:[%s538 + $0x58] sm:$0xff]
        %v559 = vld [vmem:[%s538 + $0x60] sm:$0xf]
        %v560 = vld [vmem:[%s538 + $0x64] sm:$0xff]
        %v561 = vld [vmem:[%s538 + $0x6c] sm:$0xff]
        %v562 = vld [vmem:[%s538 + $0x74] sm:$0xf]
        %v563 = vld [vmem:[%s538 + $0x78] sm:$0x11]
        %v564 = vld [vmem:[%s538 + $0x80] sm:$0x11]
        %v565 = vld [vmem:[%s538 + $0x88] sm:$0x1]
        %v566 = vld [vmem:[%s504] sm:$0xf]
        %v567 = vld [vmem:[%s504 + $0x4] sm:$0xf]
        %v568 = vld [vmem:[%s504 + $0x8] sm:$0xf]
        %v569 = vld [vmem:[%s504 + $0xc] sm:$0xf]
        %v570 = vld [vmem:[%s504 + $0x10] sm:$0xf]
        %v571 = vld [vmem:[%s504 + $0x14] sm:$0xf]
        %v572 = vld [vmem:[%s504 + $0x18] sm:$0xf]
        %v573 = vld [vmem:[%s504 + $0x1c] sm:$0xf]
        %v574 = vld [vmem:[%s504 + $0x20] sm:$0xf]
        %v575 = vld [vmem:[%s504 + $0x24] sm:$0xf]
        %v576 = vld [vmem:[%s504 + $0x28] sm:$0xf]
        %v577 = vld [vmem:[%s504 + $0x2c] sm:$0xf]
        %v578 = vld [vmem:[%s504 + $0x30] sm:$0xf]
        %v579 = vld [vmem:[%s504 + $0x34] sm:$0xf]
        %v580 = vld [vmem:[%s504 + $0x38] sm:$0xf]
        %v581 = vld [vmem:[%s504 + $0x3c] sm:$0xf]
        %v582 = vld [vmem:[%s504 + $0x40] sm:$0xf]
        %v583 = vld [vmem:[%s504 + $0x44] sm:$0xf]
        %v584 = vld [vmem:[%s504 + $0x48] sm:$0xf]
        %v585 = vld [vmem:[%s504 + $0x4c] sm:$0xf]
        %v586 = vld [vmem:[%s504 + $0x50] sm:$0xf]
        %v587 = vld [vmem:[%s504 + $0x54] sm:$0xf]
        %v588 = vld [vmem:[%s504 + $0x58] sm:$0xf]
        %v589 = vld [vmem:[%s504 + $0x5c] sm:$0xf]
        %v590 = vld [vmem:[%s504 + $0x60] sm:$0xf]
        %v591 = vld [vmem:[%s504 + $0x64] sm:$0xf]
        %v592 = vld [vmem:[%s504 + $0x68] sm:$0xf]
        %v593 = vld [vmem:[%s504 + $0x6c] sm:$0xf]
        %v594 = vld [vmem:[%s504 + $0x70] sm:$0xf]
        %v595 = vld [vmem:[%s504 + $0x74] sm:$0xf]
        %v596 = vld [vmem:[%s504 + $0x78] sm:$0xf]
        %v597 = vld [vmem:[%s504 + $0x7c] sm:$0xf]
        %v598 = vld [vmem:[%s504 + $0x80] sm:$0xf]
        %v599 = vld [vmem:[%s504 + $0x84] sm:$0xf]
        %v600 = vld [vmem:[%s504 + $0x88] sm:$0xf]
        %v601 = vld [vmem:[%s504 + $0x8c] sm:$0xf]
        %v602 = vld [vmem:[%s504 + $0x90] sm:$0xf]
        %v603 = vld [vmem:[%s504 + $0x94] sm:$0xf]
        %v604 = vld [vmem:[%s504 + $0x98] sm:$0xf]
        %v605 = vld [vmem:[%s504 + $0x9c] sm:$0xf]
        %v606 = vld [vmem:[%s504 + $0xa0] sm:$0xf]
        %v607 = vld [vmem:[%s504 + $0xa4] sm:$0xf]
        %v608 = vld [vmem:[%s504 + $0xa8] sm:$0xf]
        %v609 = vld [vmem:[%s504 + $0xac] sm:$0xf]
        %v610 = vld [vmem:[%s504 + $0xb0] sm:$0xf]
        %v611 = vld [vmem:[%s504 + $0xb4] sm:$0xf]
        %v612 = vld [vmem:[%s504 + $0xb8] sm:$0xf]
        %v613 = vld [vmem:[%s504 + $0xbc] sm:$0xf]
        %v614 = vld [vmem:[%s504 + $0xc0] sm:$0xf]
        %v615 = vld [vmem:[%s504 + $0xc4] sm:$0xf]
        %v616 = vld [vmem:[%s504 + $0xc8] sm:$0xf]
        %v617 = vld [vmem:[%s504 + $0xcc] sm:$0xf]
        %v618 = vld [vmem:[%s504 + $0xd0] sm:$0xf]
        %v619 = vld [vmem:[%s504 + $0xd4] sm:$0xf]
        %v620 = vld [vmem:[%s504 + $0xd8] sm:$0xf]
        %v621 = vld [vmem:[%s504 + $0xdc] sm:$0xf]
        %v622 = vld [vmem:[%s504 + $0xe0] sm:$0xf]
        %v623 = vld [vmem:[%s504 + $0xe4] sm:$0xf]
        %v624 = vld [vmem:[%s504 + $0xe8] sm:$0xf]
        %v625 = vld [vmem:[%s504 + $0xec] sm:$0xf]
        %v626 = vld [vmem:[%s504 + $0xf0] sm:$0xf]
        %v627 = vld [vmem:[%s504 + $0xf4] sm:$0xf]
        %v628 = vld [vmem:[%s504 + $0xf8] sm:$0xf]
        %v629 = vld [vmem:[%s504 + $0xfc] sm:$0xf]
        %v630 = vld [vmem:[%s504 + $0x100] sm:$0xf]
        %v631 = vld [vmem:[%s504 + $0x104] sm:$0xf]
        %v632 = vld [vmem:[%s504 + $0x108] sm:$0xf]
        %v633 = vld [vmem:[%s504 + $0x10c] sm:$0xf]
        %v634 = vld [vmem:[%s504 + $0x110] sm:$0xf]
        %v635 = vld [vmem:[%s504 + $0x114] sm:$0xf]
        %v636 = vld [vmem:[%s504 + $0x118] sm:$0xf]
        %v637 = vld [vmem:[%s504 + $0x11c] sm:$0xf]
        %v638 = vld [vmem:[%s542] sm:$0x1]
        %v640 = vlaneseq
        %v641 = vshrl.u32 %v640, 7
        %v642 = vsub.s32 0, %v641
        %v643 = vrot.slane %v638, %v642
        %v666 = vunpack.c.l.b16 %v545
        %v667 = vunpack.c.h.b16 %v545
        %v668 = vunpack.c.l.b16 %v546
        %v669 = vunpack.c.h.b16 %v546
        %v670 = vunpack.c.l.b16 %v547
        %v671 = vunpack.c.l.b16 %v548
        %v672 = vunpack.c.h.b16 %v548
        %v673 = vunpack.c.l.b16 %v549
        %v674 = vunpack.c.h.b16 %v549
        %v675 = vunpack.c.l.b16 %v550
        %v676 = vunpack.c.l.b16 %v551
        %v677 = vunpack.c.h.b16 %v551
        %v678 = vunpack.c.l.b16 %v552
        %v679 = vunpack.c.h.b16 %v552
        %v680 = vunpack.c.l.b16 %v553
        %v681 = vunpack.c.l.b16 %v554
        %v682 = vunpack.c.h.b16 %v554
        %v683 = vunpack.c.l.b16 %v555
        %v684 = vunpack.c.h.b16 %v555
        %v685 = vunpack.c.l.b16 %v556
        %v686 = vunpack.c.l.b16 %v557
        %v687 = vunpack.c.h.b16 %v557
        %v688 = vunpack.c.l.b16 %v558
        %v689 = vunpack.c.h.b16 %v558
        %v690 = vunpack.c.l.b16 %v559
        %v691 = vunpack.c.l.b16 %v560
        %v692 = vunpack.c.h.b16 %v560
        %v693 = vunpack.c.l.b16 %v561
        %v694 = vunpack.c.h.b16 %v561
        %v695 = vunpack.c.l.b16 %v562
        %v696 = vunpack.c.l.b16 %v563
        %v697 = vunpack.c.h.b16 %v563
        %v698 = vunpack.c.l.b16 %v564
        %v699 = vunpack.c.h.b16 %v564
        %v700 = vunpack.c.l.b16 %v565
        %v701 = vpack.c.b16 %v671, %v666
        %v702 = vpack.c.b16 %v672, %v667
        %v703 = vpack.c.b16 %v673, %v668
        %v704 = vpack.c.b16 %v674, %v669
        %v705 = vpack.c.b16 %v675, %v670
        %v706 = vpack.c.b16 %v681, %v676
        %v707 = vpack.c.b16 %v682, %v677
        %v708 = vpack.c.b16 %v683, %v678
        %v709 = vpack.c.b16 %v684, %v679
        %v710 = vpack.c.b16 %v685, %v680
        %v711 = vpack.c.b16 %v691, %v686
        %v712 = vpack.c.b16 %v692, %v687
        %v713 = vpack.c.b16 %v693, %v688
        %v714 = vpack.c.b16 %v694, %v689
        %v715 = vpack.c.b16 %v695, %v690
        %v716 = vpack.c.b16 %v696, %v696
        %v717 = vpack.c.b16 %v697, %v697
        %v718 = vpack.c.b16 %v698, %v698
        %v719 = vpack.c.b16 %v699, %v699
        %v720 = vpack.c.b16 %v700, %v700
        %v809 = vunpack.c.l.b16 %v566
        %v810 = vunpack.c.l.b16 %v567
        %v811 = vunpack.c.l.b16 %v568
        %v812 = vunpack.c.l.b16 %v569
        %v813 = vunpack.c.l.b16 %v570
        %v814 = vunpack.c.l.b16 %v571
        %v815 = vunpack.c.l.b16 %v572
        %v816 = vunpack.c.l.b16 %v573
        %v817 = vunpack.c.l.b16 %v574
        %v818 = vunpack.c.l.b16 %v575
        %v819 = vunpack.c.l.b16 %v576
        %v820 = vunpack.c.l.b16 %v577
        %v821 = vunpack.c.l.b16 %v578
        %v822 = vunpack.c.l.b16 %v579
        %v823 = vunpack.c.l.b16 %v580
        %v824 = vunpack.c.l.b16 %v581
        %v825 = vunpack.c.l.b16 %v582
        %v826 = vunpack.c.l.b16 %v583
        %v827 = vunpack.c.l.b16 %v584
        %v828 = vunpack.c.l.b16 %v585
        %v829 = vunpack.c.l.b16 %v586
        %v830 = vunpack.c.l.b16 %v587
        %v831 = vunpack.c.l.b16 %v588
        %v832 = vunpack.c.l.b16 %v589
        %v833 = vunpack.c.l.b16 %v590
        %v834 = vunpack.c.l.b16 %v591
        %v835 = vunpack.c.l.b16 %v592
        %v836 = vunpack.c.l.b16 %v593
        %v837 = vunpack.c.l.b16 %v594
        %v838 = vunpack.c.l.b16 %v595
        %v839 = vunpack.c.l.b16 %v596
        %v840 = vunpack.c.l.b16 %v597
        %v841 = vunpack.c.l.b16 %v598
        %v842 = vunpack.c.l.b16 %v599
        %v843 = vunpack.c.l.b16 %v600
        %v844 = vunpack.c.l.b16 %v601
        %v845 = vunpack.c.l.b16 %v602
        %v846 = vunpack.c.l.b16 %v603
        %v847 = vunpack.c.l.b16 %v604
        %v848 = vunpack.c.l.b16 %v605
        %v849 = vunpack.c.l.b16 %v606
        %v850 = vunpack.c.l.b16 %v607
        %v851 = vunpack.c.l.b16 %v608
        %v852 = vunpack.c.l.b16 %v609
        %v853 = vunpack.c.l.b16 %v610
        %v854 = vunpack.c.l.b16 %v611
        %v855 = vunpack.c.l.b16 %v612
        %v856 = vunpack.c.l.b16 %v613
        %v857 = vunpack.c.l.b16 %v614
        %v858 = vunpack.c.l.b16 %v615
        %v859 = vunpack.c.l.b16 %v616
        %v860 = vunpack.c.l.b16 %v617
        %v861 = vunpack.c.l.b16 %v618
        %v862 = vunpack.c.l.b16 %v619
        %v863 = vunpack.c.l.b16 %v620
        %v864 = vunpack.c.l.b16 %v621
        %v865 = vunpack.c.l.b16 %v622
        %v866 = vunpack.c.l.b16 %v623
        %v867 = vunpack.c.l.b16 %v624
        %v868 = vunpack.c.l.b16 %v625
        %v869 = vunpack.c.l.b16 %v626
        %v870 = vunpack.c.l.b16 %v627
        %v871 = vunpack.c.l.b16 %v628
        %v872 = vunpack.c.l.b16 %v629
        %v873 = vunpack.c.l.b16 %v630
        %v874 = vunpack.c.l.b16 %v631
        %v875 = vunpack.c.l.b16 %v632
        %v876 = vunpack.c.l.b16 %v633
        %v877 = vunpack.c.l.b16 %v634
        %v878 = vunpack.c.l.b16 %v635
        %v879 = vunpack.c.l.b16 %v636
        %v880 = vunpack.c.l.b16 %v637
        %v881 = vpack.c.b16 %v810, %v809
        %v882 = vpack.c.b16 %v812, %v811
        %v883 = vpack.c.b16 %v814, %v813
        %v884 = vpack.c.b16 %v816, %v815
        %v885 = vpack.c.b16 %v818, %v817
        %v886 = vpack.c.b16 %v820, %v819
        %v887 = vpack.c.b16 %v822, %v821
        %v888 = vpack.c.b16 %v824, %v823
        %v889 = vpack.c.b16 %v826, %v825
        %v890 = vpack.c.b16 %v828, %v827
        %v891 = vpack.c.b16 %v830, %v829
        %v892 = vpack.c.b16 %v832, %v831
        %v893 = vpack.c.b16 %v834, %v833
        %v894 = vpack.c.b16 %v836, %v835
        %v895 = vpack.c.b16 %v838, %v837
        %v896 = vpack.c.b16 %v840, %v839
        %v897 = vpack.c.b16 %v842, %v841
        %v898 = vpack.c.b16 %v844, %v843
        %v899 = vpack.c.b16 %v846, %v845
        %v900 = vpack.c.b16 %v848, %v847
        %v901 = vpack.c.b16 %v850, %v849
        %v902 = vpack.c.b16 %v852, %v851
        %v903 = vpack.c.b16 %v854, %v853
        %v904 = vpack.c.b16 %v856, %v855
        %v905 = vpack.c.b16 %v858, %v857
        %v906 = vpack.c.b16 %v860, %v859
        %v907 = vpack.c.b16 %v862, %v861
        %v908 = vpack.c.b16 %v864, %v863
        %v909 = vpack.c.b16 %v866, %v865
        %v910 = vpack.c.b16 %v868, %v867
        %v911 = vpack.c.b16 %v870, %v869
        %v912 = vpack.c.b16 %v872, %v871
        %v913 = vpack.c.b16 %v874, %v873
        %v914 = vpack.c.b16 %v876, %v875
        %v915 = vpack.c.b16 %v878, %v877
        %v916 = vpack.c.b16 %v880, %v879
        %vm953 = vcmask 523264
        %v955 = vsel %vm953, %v705, 0
        %v958 = vsel %vm953, %v710, 0
        %v961 = vsel %vm953, %v715, 0
        %v964 = vsel %vm953, %v720, 0
        %966 = vmatprep.subr.bf16.mxu0 0
        %967 = vmatpush1.bf16.msra.mxu0 %v881
        %968 = vmatprep.subr.bf16.mxu0 0
        %969 = vmatpush1.bf16.msra.mxu0 %v882
        %970 = vmatprep.subr.bf16.mxu0 0
        %971 = vmatpush1.bf16.msra.mxu0 %v883
        %972 = vmatprep.subr.bf16.mxu0 0
        %973 = vmatpush1.bf16.msra.mxu0 %v884
        %974 = vmatprep.subr.bf16.mxu0 0
        %975 = vmatpush1.bf16.msra.mxu0 %v885
        %976 = vmatprep.subr.bf16.mxu0 0
        %977 = vmatpush1.bf16.msra.mxu0 %v886
        %978 = vmatprep.subr.bf16.mxu0 0
        %979 = vmatpush1.bf16.msra.mxu0 %v887
        %980 = vmatprep.subr.bf16.mxu0 0
        %981 = vmatpush1.bf16.msra.mxu0 %v888
        %982 = vmatprep.subr.bf16.mxu0 0
        %983 = vmatpush1.bf16.msra.mxu0 %v889
        %984 = vmatprep.subr.bf16.mxu0 0
        %985 = vmatpush1.bf16.msra.mxu0 %v890
        %986 = vmatprep.subr.bf16.mxu0 0
        %987 = vmatpush1.bf16.msra.mxu0 %v891
        %988 = vmatprep.subr.bf16.mxu0 0
        %989 = vmatpush1.bf16.msra.mxu0 %v892
        %990 = vmatprep.subr.bf16.mxu0 0
        %991 = vmatpush1.bf16.msra.mxu0 %v893
        %992 = vmatprep.subr.bf16.mxu0 0
        %993 = vmatpush1.bf16.msra.mxu0 %v894
        %994 = vmatprep.subr.bf16.mxu0 0
        %995 = vmatpush1.bf16.msra.mxu0 %v895
        %996 = vmatprep.subr.bf16.mxu0 0
        %997 = vmatpush1.bf16.msra.mxu0 %v896
        %998 = vmatprep.mubr.bf16.mxu0 %v702
        %999 = vmatmul.mubr.bf16.gmra.mrb[0].mxu0 %v701
        %v1000 = vpop.f32.mrb[0].mxu0
        %v1001 = vadd.f32 %v643, %v1000
        %v1002 = vpop.f32.mrb[0].mxu0
        %v1003 = vpop.f32.mrb[0].mxu0
        %v1004 = vadd.f32 %v643, %v1003
        %v1005 = vpop.f32.mrb[0].mxu0
        %1006 = vmatprep.mubr.bf16.mxu0 %v707
        %1007 = vmatmul.mubr.bf16.gmra.mrb[0].mxu0 %v706
        %v1008 = vpop.f32.mrb[0].mxu0
        %v1009 = vadd.f32 %v643, %v1008
        %v1010 = vpop.f32.mrb[0].mxu0
        %v1011 = vpop.f32.mrb[0].mxu0
        %v1012 = vadd.f32 %v643, %v1011
        %v1013 = vpop.f32.mrb[0].mxu0
        %1014 = vmatprep.mubr.bf16.mxu0 %v712
        %1015 = vmatmul.mubr.bf16.gmra.mrb[0].mxu0 %v711
        %v1016 = vpop.f32.mrb[0].mxu0
        %v1017 = vadd.f32 %v643, %v1016
        %v1018 = vpop.f32.mrb[0].mxu0
        %v1019 = vpop.f32.mrb[0].mxu0
        %v1020 = vadd.f32 %v643, %v1019
        %v1021 = vpop.f32.mrb[0].mxu0
        %1022 = vmatprep.mubr.bf16.mxu0 %v717
        %1023 = vmatmul.mubr.bf16.gmra.mrb[0].mxu0 %v716
        %v1024 = vpop.f32.mrb[0].mxu0
        %v1025 = vadd.f32 %v643, %v1024
        %v1026 = vpop.f32.mrb[0].mxu0
        %v1027 = vpop.f32.mrb[0].mxu0
        %v1028 = vpop.f32.mrb[0].mxu0
        %1029 = vdwg.mxu0
        %1030 = vmatprep.subr.bf16.mxu0 0
        %1031 = vmatpush1.bf16.msra.mxu0 %v897
        %1032 = vmatprep.subr.bf16.mxu0 0
        %1033 = vmatpush1.bf16.msra.mxu0 %v898
        %1034 = vmatprep.subr.bf16.mxu0 0
        %1035 = vmatpush1.bf16.msra.mxu0 %v899
        %1036 = vmatprep.subr.bf16.mxu0 0
        %1037 = vmatpush1.bf16.msra.mxu0 %v900
        %1038 = vmatprep.subr.bf16.mxu0 0
        %1039 = vmatpush1.bf16.msra.mxu0 %v901
        %1040 = vmatprep.subr.bf16.mxu0 0
        %1041 = vmatpush1.bf16.msra.mxu0 %v902
        %1042 = vmatprep.subr.bf16.mxu0 0
        %1043 = vmatpush1.bf16.msra.mxu0 %v903
        %1044 = vmatprep.subr.bf16.mxu0 0
        %1045 = vmatpush1.bf16.msra.mxu0 %v904
        %1046 = vmatprep.subr.bf16.mxu0 0
        %1047 = vmatpush1.bf16.msra.mxu0 %v905
        %1048 = vmatprep.subr.bf16.mxu0 0
        %1049 = vmatpush1.bf16.msra.mxu0 %v906
        %1050 = vmatprep.subr.bf16.mxu0 0
        %1051 = vmatpush1.bf16.msra.mxu0 %v907
        %1052 = vmatprep.subr.bf16.mxu0 0
        %1053 = vmatpush1.bf16.msra.mxu0 %v908
        %1054 = vmatprep.subr.bf16.mxu0 0
        %1055 = vmatpush1.bf16.msra.mxu0 %v909
        %1056 = vmatprep.subr.bf16.mxu0 0
        %1057 = vmatpush1.bf16.msra.mxu0 %v910
        %1058 = vmatprep.subr.bf16.mxu0 0
        %1059 = vmatpush1.bf16.msra.mxu0 %v911
        %1060 = vmatprep.subr.bf16.mxu0 0
        %1061 = vmatpush1.bf16.msra.mxu0 %v912
        %1062 = vmatprep.mubr.bf16.mxu0 %v704
        %1063 = vmatmul.mubr.bf16.gmra.mrb[0].mxu0 %v703
        %v1064 = vpop.f32.mrb[0].mxu0
        %v1065 = vadd.f32 %v1001, %v1064
        %v1066 = vpop.f32.mrb[0].mxu0
        %v1067 = vpop.f32.mrb[0].mxu0
        %v1068 = vadd.f32 %v1004, %v1067
        %v1069 = vpop.f32.mrb[0].mxu0
        %1070 = vmatprep.mubr.bf16.mxu0 %v709
        %1071 = vmatmul.mubr.bf16.gmra.mrb[0].mxu0 %v708
        %v1072 = vpop.f32.mrb[0].mxu0
        %v1073 = vadd.f32 %v1009, %v1072
        %v1074 = vpop.f32.mrb[0].mxu0
        %v1075 = vpop.f32.mrb[0].mxu0
        %v1076 = vadd.f32 %v1012, %v1075
        %v1077 = vpop.f32.mrb[0].mxu0
        %1078 = vmatprep.mubr.bf16.mxu0 %v714
        %1079 = vmatmul.mubr.bf16.gmra.mrb[0].mxu0 %v713
        %v1080 = vpop.f32.mrb[0].mxu0
        %v1081 = vadd.f32 %v1017, %v1080
        %v1082 = vpop.f32.mrb[0].mxu0
        %v1083 = vpop.f32.mrb[0].mxu0
        %v1084 = vadd.f32 %v1020, %v1083
        %v1085 = vpop.f32.mrb[0].mxu0
        %1086 = vmatprep.mubr.bf16.mxu0 %v719
        %1087 = vmatmul.mubr.bf16.gmra.mrb[0].mxu0 %v718
        %v1088 = vpop.f32.mrb[0].mxu0
        %v1089 = vadd.f32 %v1025, %v1088
        %v1090 = vpop.f32.mrb[0].mxu0
        %v1091 = vpop.f32.mrb[0].mxu0
        %v1092 = vpop.f32.mrb[0].mxu0
        %1093 = vdwg.mxu0
        %1094 = vmatprep.subr.bf16.mxu0 0
        %1095 = vmatpush1.bf16.msra.mxu0 %v913
        %1096 = vmatprep.subr.bf16.mxu0 0
        %1097 = vmatpush1.bf16.msra.mxu0 %v914
        %1098 = vmatprep.subr.bf16.mxu0 0
        %1099 = vmatpush1.bf16.msra.mxu0 %v915
        %1100 = vmatprep.subr.bf16.mxu0 0
        %1101 = vmatpush1.bf16.msra.mxu0 %v916
        %1102 = vmatprep.subr.bf16.mxu0 0
        %1103 = vmatpush1.bf16.msra.mxu0 0
        %1104 = vmatprep.subr.bf16.mxu0 0
        %1105 = vmatpush1.bf16.msra.mxu0 0
        %1106 = vmatprep.subr.bf16.mxu0 0
        %1107 = vmatpush1.bf16.msra.mxu0 0
        %1108 = vmatprep.subr.bf16.mxu0 0
        %1109 = vmatpush1.bf16.msra.mxu0 0
        %1110 = vmatprep.subr.bf16.mxu0 0
        %1111 = vmatpush1.bf16.msra.mxu0 0
        %1112 = vmatprep.subr.bf16.mxu0 0
        %1113 = vmatpush1.bf16.msra.mxu0 0
        %1114 = vmatprep.subr.bf16.mxu0 0
        %1115 = vmatpush1.bf16.msra.mxu0 0
        %1116 = vmatprep.subr.bf16.mxu0 0
        %1117 = vmatpush1.bf16.msra.mxu0 0
        %1118 = vmatprep.subr.bf16.mxu0 0
        %1119 = vmatpush1.bf16.msra.mxu0 0
        %1120 = vmatprep.subr.bf16.mxu0 0
        %1121 = vmatpush1.bf16.msra.mxu0 0
        %1122 = vmatprep.subr.bf16.mxu0 0
        %1123 = vmatpush1.bf16.msra.mxu0 0
        %1124 = vmatprep.subr.bf16.mxu0 0
        %1125 = vmatpush1.bf16.msra.mxu0 0
        %1126 = vmatprep.mubr.bf16.mxu0 0
        %1127 = vmatmul.mubr.bf16.gmra.mrb[0].mxu0 %v955
        %v1128 = vpop.f32.mrb[0].mxu0
        %v1129 = vadd.f32 %v1065, %v1128
        %v1130 = vpop.f32.mrb[0].mxu0
        %v1131 = vpop.f32.mrb[0].mxu0
        %v1132 = vadd.f32 %v1068, %v1131
        %v1133 = vpop.f32.mrb[0].mxu0
        %1134 = vmatprep.mubr.bf16.mxu0 0
        %1135 = vmatmul.mubr.bf16.gmra.mrb[0].mxu0 %v958
        %v1136 = vpop.f32.mrb[0].mxu0
        %v1137 = vadd.f32 %v1073, %v1136
        %v1138 = vpop.f32.mrb[0].mxu0
        %v1139 = vpop.f32.mrb[0].mxu0
        %v1140 = vadd.f32 %v1076, %v1139
        %v1141 = vpop.f32.mrb[0].mxu0
        %1142 = vmatprep.mubr.bf16.mxu0 0
        %1143 = vmatmul.mubr.bf16.gmra.mrb[0].mxu0 %v961
        %v1144 = vpop.f32.mrb[0].mxu0
        %v1145 = vadd.f32 %v1081, %v1144
        %v1146 = vpop.f32.mrb[0].mxu0
        %v1147 = vpop.f32.mrb[0].mxu0
        %v1148 = vadd.f32 %v1084, %v1147
        %v1149 = vpop.f32.mrb[0].mxu0
        %1150 = vmatprep.mubr.bf16.mxu0 0
        %1151 = vmatmul.mubr.bf16.gmra.mrb[0].mxu0 %v964
        %v1152 = vpop.f32.mrb[0].mxu0
        %v1153 = vadd.f32 %v1089, %v1152
        %v1154 = vpop.f32.mrb[0].mxu0
        %v1155 = vpop.f32.mrb[0].mxu0
        %v1156 = vpop.f32.mrb[0].mxu0
        %1157 = vdwg.mxu0
        %v1158 = vmax.f32 %v1129, 0.0
        %v1159 = vmax.f32 %v1132, 0.0
        %v1160 = vmax.f32 %v1137, 0.0
        %v1161 = vmax.f32 %v1140, 0.0
        %v1162 = vmax.f32 %v1145, 0.0
        %v1163 = vmax.f32 %v1148, 0.0
        %v1164 = vmax.f32 %v1153, 0.0
        %1165 = vst [vmem:[%s532] sm:$0xff] %v1158
        %1166 = vst [vmem:[%s532 + $0x8] sm:$0xff] %v1159
        %1167 = vst [vmem:[%s532 + $0x10] sm:$0xff] %v1160
        %1168 = vst [vmem:[%s532 + $0x18] sm:$0xff] %v1161
        %1169 = vst [vmem:[%s532 + $0x20] sm:$0xff] %v1162
        %1170 = vst [vmem:[%s532 + $0x28] sm:$0xff] %v1163
        %1171 = vst [vmem:[%s532 + $0x30] sm:$0x3] %v1164
        %s1172 = sand.u32 %s114, 1
        %s1173 = sand.u32 %s114, 1
        %s1174 = smul.addr %s1173, 56
        %s1175 = scalar_lea.vmem [#allocation3], %s1174
        // Predicated region
        $region74: #{squeeze_forward.34} parent=68 // pred_check
          %p1176 = pneg %p124
        $region75: #{squeeze_forward.34} parent=68 // pred_check_branch
          %1178 = sbr.rel (%p1176) target = $region77
        $region76: #{squeeze_forward.34} parent=68 // pred_region
          %s1179 = smul.u32 7, %s18
          %s1180 = smul.addr %s1179, 4
          %s1181 = sadd.s32 %s19, %s1180
          %s1182 = smul.addr %s1181, 8
          %s1183 = scalar_lea.vmem %s3, %s1182
          // Predicated region
          $region78: #{squeeze_forward.34} parent=76 // pred_check
            _
          $region79: #{squeeze_forward.34} parent=76 // pred_check_branch
            %1185 = sbr.rel (0) target = $region81
          $region80: #{squeeze_forward.34} parent=76 // pred_region
            // Predicated region
            $region82: #{squeeze_forward.34} parent=80 // pred_check
              _
            $region83: #{squeeze_forward.34} parent=80 // pred_check_branch
              %1187 = sbr.rel (0) target = $region85
            $region84: #{squeeze_forward.34} parent=80 // pred_region
              // Predicated region
              $region97: #{squeeze_forward.34} parent=84 // pred_check
                _
              $region98: #{squeeze_forward.34} parent=84 // pred_check_branch
                %1214 = sbr.rel (0) target = $region100
              $region99: #{squeeze_forward.34} parent=84 // pred_region
                loop: start=0, step=1, limit=1
                $region101: #{squeeze_forward.34} parent=99 // loop_pre_header
                  _
                $region102: #{squeeze_forward.34} parent=99 // loop_header
                  %s1216 = sphi 0, %s1220
                  %p1217 = scmp.ge.s32.totalorder %s1216, 1
                  %s1221 = sphi %s1175, %s1175
                  %s1222 = sphi %s1183, %s1183
                $region103: #{squeeze_forward.34} parent=99 // loop_header_branch
                  %1219 = sbr.rel (%p1217) target = $region107
                $region104: #{squeeze_forward.34} parent=99 // loop_body
                  %v1223 = vld [vmem:[%s1221] sm:$0xff]
                  %1224 = vst [vmem:[%s1222] sm:$0xff] %v1223
                  %v1225 = vld [vmem:[%s1221 + $0x8] sm:$0xff]
                  %1226 = vst [vmem:[%s1222 + $0x20] sm:$0xff] %v1225
                  %v1227 = vld [vmem:[%s1221 + $0x10] sm:$0xff]
                  %1228 = vst [vmem:[%s1222 + $0x40] sm:$0xff] %v1227
                  %v1229 = vld [vmem:[%s1221 + $0x18] sm:$0xff]
                  %1230 = vst [vmem:[%s1222 + $0x60] sm:$0xff] %v1229
                  %v1231 = vld [vmem:[%s1221 + $0x20] sm:$0xff]
                  %1232 = vst [vmem:[%s1222 + $0x80] sm:$0xff] %v1231
                  %v1233 = vld [vmem:[%s1221 + $0x28] sm:$0xff]
                  %1234 = vst [vmem:[%s1222 + $0xa0] sm:$0xff] %v1233
                  %v1235 = vld [vmem:[%s1221 + $0x30] sm:$0xff]
                  %1236 = vst [vmem:[%s1222 + $0xc0] sm:$0xff] %v1235
                $region105: #{squeeze_forward.34} parent=99 // loop_footer
                  %s1220 = sadd.s32 1, %s1216
                $region106: #{squeeze_forward.34} parent=99 // loop_footer_branch
                  %1215 = sbr.rel target = $region102
                $region107: #{squeeze_forward.34} parent=99 // loop_exit
                  _
              $region100: #{squeeze_forward.34} parent=84 // pred_fallthru
                _
              // Predicated region
              $region108: #{squeeze_forward.34} parent=84 // pred_check
                _
              $region109: #{squeeze_forward.34} parent=84 // pred_check_branch
                %1238 = sbr.rel target = $region111
              $region110: #{squeeze_forward.34} parent=84 // pred_region
                _
              $region111: #{squeeze_forward.34} parent=84 // pred_fallthru
                _
            $region85: #{squeeze_forward.34} parent=80 // pred_fallthru
              _
            // Predicated region
            $region86: #{squeeze_forward.34} parent=80 // pred_check
              _
            $region87: #{squeeze_forward.34} parent=80 // pred_check_branch
              %1189 = sbr.rel target = $region89
            $region88: #{squeeze_forward.34} parent=80 // pred_region
              loop: start=0, step=1, limit=1
              $region90: #{squeeze_forward.34} parent=88 // loop_pre_header
                _
              $region91: #{squeeze_forward.34} parent=88 // loop_header
                %s1192 = sphi 0, %s1196
                %p1193 = scmp.ge.s32.totalorder %s1192, 1
                %s1197 = sphi %s1175, %s1175
                %s1198 = sphi %s1183, %s1183
              $region92: #{squeeze_forward.34} parent=88 // loop_header_branch
                %1195 = sbr.rel (%p1193) target = $region96
              $region93: #{squeeze_forward.34} parent=88 // loop_body
                %v1199 = vld [vmem:[%s1197] sm:$0xff]
                %1200 = vst [vmem:[%s1198] sm:$0xff] %v1199
                %v1201 = vld [vmem:[%s1197 + $0x8] sm:$0xff]
                %1202 = vst [vmem:[%s1198 + $0x20] sm:$0xff] %v1201
                %v1203 = vld [vmem:[%s1197 + $0x10] sm:$0xff]
                %1204 = vst [vmem:[%s1198 + $0x40] sm:$0xff] %v1203
                %v1205 = vld [vmem:[%s1197 + $0x18] sm:$0xff]
                %1206 = vst [vmem:[%s1198 + $0x60] sm:$0xff] %v1205
                %v1207 = vld [vmem:[%s1197 + $0x20] sm:$0xff]
                %1208 = vst [vmem:[%s1198 + $0x80] sm:$0xff] %v1207
                %v1209 = vld [vmem:[%s1197 + $0x28] sm:$0xff]
                %1210 = vst [vmem:[%s1198 + $0xa0] sm:$0xff] %v1209
                %v1211 = vld [vmem:[%s1197 + $0x30] sm:$0xff]
                %1212 = vst [vmem:[%s1198 + $0xc0] sm:$0xff] %v1211
              $region94: #{squeeze_forward.34} parent=88 // loop_footer
                %s1196 = sadd.s32 1, %s1192
              $region95: #{squeeze_forward.34} parent=88 // loop_footer_branch
                %1191 = sbr.rel target = $region91
              $region96: #{squeeze_forward.34} parent=88 // loop_exit
                _
            $region89: #{squeeze_forward.34} parent=80 // pred_fallthru
              _
          $region81: #{squeeze_forward.34} parent=76 // pred_fallthru
            _
          %1239 = vnop
        $region77: #{squeeze_forward.34} parent=68 // pred_fallthru
          _
      $region69: #{squeeze_forward.34} parent=5 // pred_fallthru
        _
      %p1240 = scmp.le.s32.totalorder 2, %s9
      // Predicated region
      $region112: #{squeeze_forward.34} parent=5 // pred_check
        %p1241 = pneg %p1240
      $region113: #{squeeze_forward.34} parent=5 // pred_check_branch
        %1243 = sbr.rel (%p1241) target = $region115
      $region114: #{squeeze_forward.34} parent=5 // pred_region
        %s1244 = ssub.s32 %s9, 2
        // Predicated region
        $region116: #{squeeze_forward.34} parent=114 // pred_check
          %p1245 = pneg %p130
        $region117: #{squeeze_forward.34} parent=114 // pred_check_branch
          %1247 = sbr.rel (%p1245) target = $region119
        $region118: #{squeeze_forward.34} parent=114 // pred_region
          %s1248 = sand.u32 %s115, 1
          %s1249 = sand.u32 %s115, 1
          %s1250 = smul.addr %s1249, 56
          %s1251 = scalar_lea.vmem [#allocation3], %s1250
        $region119: #{squeeze_forward.34} parent=114 // pred_fallthru
          _
      $region115: #{squeeze_forward.34} parent=5 // pred_fallthru
        _
    $region6: #{squeeze_forward.34} parent=1 // loop_footer
      %s13 = sadd.s32 1, %s9
    $region7: #{squeeze_forward.34} parent=1 // loop_footer_branch
      %8 = sbr.rel target = $region3
    $region8: #{squeeze_forward.34} parent=1 // loop_exit
      _

// kernel: squeeze_forward.35
$region0: #{squeeze_forward.35}
  #allocation0 [shape = 'u32[]', space=smem, size = 0x4, offset = 0x4, fixed_abs, tag = 'smem constant byte address 0x4 - core index']
  #allocation1 [shape = 'u32[144,128]{1,0:T(1,128)}', space=vmem, size = 0x12000, scoped, tag = 'internal scratch']
  %s0 = inlined_call_operand.vmem [shape: f32[2,6,3,1024], index: 0, kind: input, shape index: {}]
  %s1 = inlined_call_operand.hbm [shape: f32[2,2,2,512], index: 1, kind: output, shape index: {}]
  %s2 = sld [smem:[#allocation0]]
  $region37: #{squeeze_forward.35} parent=0
    _
  %s4 = ssub.s32 1, %s2
  %s5 = scalar_select 0, %s4, %s2
  $region1: #{squeeze_forward.35} parent=0
    #allocation2 [shape = 'u8[16384]{0}', space=vmem, size = 0x4000, scoped, tag = 'output window, operand 0']
    #allocation3 [shape = 's32[2]{0}', space=sflag, size = 0x8, scoped, tag = 'scoped memory for squeeze_forward.35']
    %6 = vsyncpa [#allocation3], 0
    %s7 = scalar_lea.sflag [#allocation3], 1
    %8 = vsyncpa %s7, 0
    loop: start=0, step=1, limit=4
    $region2: #{squeeze_forward.35} parent=1 // loop_pre_header
      _
    $region3: #{squeeze_forward.35} parent=1 // loop_header
      %s10 = sphi 0, %s14
      %p11 = scmp.ge.s32.totalorder %s10, 4
      %s20 = sphi 0, %s22
      %s23 = sphi 0, %s20
      %s24 = sphi 0, %s23
      %s40 = sphi 0, %s24
      %s46 = sphi 0, %s48
      %s49 = sphi 0, %s46
      %s50 = sphi 0, %s49
      %s66 = sphi 0, %s50
    $region4: #{squeeze_forward.35} parent=1 // loop_header_branch
      %13 = sbr.rel (%p11) target = $region8
    $region5: #{squeeze_forward.35} parent=1 // loop_body
      %s15 = ssub.s32 %s10, 1
      %s16 = ssub.s32 %s10, 2
      %s17 = sadd.s32 %s10, 1
      %s18 = ssub.s32 %s10, %s17
      %p19 = scmp.eq.s32.totalorder %s18, 0
      %s21 = sadd.s32 %s20, 1
      %s22 = scalar_select %p19, %s20, %s21
      %p25 = pneg %p19
      %p26 = scmp.eq.s32.totalorder %s10, 1
      %p27 = por %p25, %p26
      %p28 = scmp.ne.s32.totalorder %s20, %s23
      %p29 = scmp.eq.s32.totalorder %s10, 0
      %p30 = por %p28, %p29
      %p31 = scmp.ne.s32.totalorder %s20, %s23
      %p32 = scmp.eq.s32.totalorder %s15, 1
      %p33 = por %p31, %p32
      %p34 = scmp.ne.s32.totalorder %s23, %s24
      %p35 = scmp.eq.s32.totalorder %s15, 0
      %p36 = por %p34, %p35
      %p37 = scmp.ne.s32.totalorder %s23, %s24
      %p38 = scmp.eq.s32.totalorder %s16, 1
      %p39 = por %p37, %p38
      %p41 = scmp.ne.s32.totalorder %s24, %s40
      %p42 = scmp.eq.s32.totalorder %s16, 0
      %p43 = por %p41, %p42
      %s44 = ssub.s32 %s10, %s17
      %p45 = scmp.eq.s32.totalorder %s44, 0
      %s47 = sadd.s32 %s46, 1
      %s48 = scalar_select %p45, %s46, %s47
      %p51 = pneg %p45
      %p52 = scmp.eq.s32.totalorder %s10, 1
      %p53 = por %p51, %p52
      %p54 = scmp.ne.s32.totalorder %s46, %s49
      %p55 = scmp.eq.s32.totalorder %s10, 0
      %p56 = por %p54, %p55
      %p57 = scmp.ne.s32.totalorder %s46, %s49
      %p58 = scmp.eq.s32.totalorder %s15, 1
      %p59 = por %p57, %p58
      %p60 = scmp.ne.s32.totalorder %s49, %s50
      %p61 = scmp.eq.s32.totalorder %s15, 0
      %p62 = por %p60, %p61
      %p63 = scmp.ne.s32.totalorder %s49, %s50
      %p64 = scmp.eq.s32.totalorder %s16, 1
      %p65 = por %p63, %p64
      %p67 = scmp.ne.s32.totalorder %s50, %s66
      %p68 = scmp.eq.s32.totalorder %s16, 0
      %p69 = por %p67, %p68
      %p70 = scmp.le.s32.totalorder 1, %s10
      %p71 = scmp.lt.s32.totalorder %s10, 3
      %p72 = pnand %p70, %p71
      %p73 = pneg %p72
      // Predicated region
      $region9: #{squeeze_forward.35} parent=5 // pred_check
        _
      $region10: #{squeeze_forward.35} parent=5 // pred_check_branch
        %75 = sbr.rel (%p72) target = $region12
      $region11: #{squeeze_forward.35} parent=5 // pred_region
        %s76 = ssub.s32 %s10, 1
      $region12: #{squeeze_forward.35} parent=5 // pred_fallthru
        _
      %p77 = scmp.lt.s32.totalorder %s10, 2
      // Predicated region
      $region13: #{squeeze_forward.35} parent=5 // pred_check
        %p78 = pneg %p77
      $region14: #{squeeze_forward.35} parent=5 // pred_check_branch
        %80 = sbr.rel (%p78) target = $region16
      $region15: #{squeeze_forward.35} parent=5 // pred_region
        // Predicated region
        $region17: #{squeeze_forward.35} parent=15 // pred_check
          %p81 = pneg %p30
        $region18: #{squeeze_forward.35} parent=15 // pred_check_branch
          %83 = sbr.rel (%p81) target = $region20
        $region19: #{squeeze_forward.35} parent=15 // pred_region
          %p84 = scmp.lt.s32.totalorder %s10, 1
          %s85 = scalar_select %p84, %s10, 1
          %s86 = smul.addr %s85, 48
          %s87 = smul.addr %s86, 4
          %s88 = scalar_lea.vmem %s0, %s87
        $region20: #{squeeze_forward.35} parent=15 // pred_fallthru
          _
      $region16: #{squeeze_forward.35} parent=5 // pred_fallthru
        _
      %p89 = scmp.le.s32.totalorder 1, %s10
      %p90 = scmp.lt.s32.totalorder %s10, 3
      %p91 = pnand %p89, %p90
      %p92 = pneg %p91
      // Predicated region
      $region21: #{squeeze_forward.35} parent=5 // pred_check
        _
      $region22: #{squeeze_forward.35} parent=5 // pred_check_branch
        %94 = sbr.rel (%p91) target = $region24
      $region23: #{squeeze_forward.35} parent=5 // pred_region
        %s95 = ssub.s32 %s10, 1
        %p96 = scmp.lt.s32.totalorder %s15, 1
        %s97 = scalar_select %p96, %s15, 1
        %s98 = smul.addr %s97, 48
        %s99 = smul.addr %s98, 4
        %s100 = scalar_lea.vmem %s0, %s99
        %p101 = pneg %p36
        %p102 = pneg %p33
        %p103 = pneg %p62
        %p104 = pneg %p59
        %s105 = sand.u32 %s49, 1
        %s106 = scalar_lea.sflag [#allocation3], %s105
        %s107 = sand.u32 %s49, 1
        %s108 = smul.addr %s107, 16
        %s109 = scalar_lea.vmem [#allocation2], %s108
        %p110 = scmp.lt.s32.totalorder %s15, 1
        %s111 = scalar_select %p110, %s15, 1
        %s112 = smul.addr %s111, 48
        %s113 = smul.addr %s112, 4
        %s114 = scalar_lea.vmem %s0, %s113
        %v115 = vld [vmem:[%s114] sm:$0x77]
        %v116 = vld [vmem:[%s114 + $0x8] sm:$0x77]
        %v117 = vld [vmem:[%s114 + $0x10] sm:$0x77]
        %v118 = vld [vmem:[%s114 + $0x18] sm:$0x77]
        %v119 = vld [vmem:[%s114 + $0x20] sm:$0x77]
        %v120 = vld [vmem:[%s114 + $0x28] sm:$0x77]
        %v121 = vld [vmem:[%s114 + $0x30] sm:$0x77]
        %v122 = vld [vmem:[%s114 + $0x38] sm:$0x77]
        %v123 = vld [vmem:[%s114 + $0x40] sm:$0x77]
        %v124 = vld [vmem:[%s114 + $0x48] sm:$0x77]
        %v125 = vld [vmem:[%s114 + $0x50] sm:$0x77]
        %v126 = vld [vmem:[%s114 + $0x58] sm:$0x77]
        %v127 = vld [vmem:[%s114 + $0x60] sm:$0x77]
        %v128 = vld [vmem:[%s114 + $0x68] sm:$0x77]
        %v129 = vld [vmem:[%s114 + $0x70] sm:$0x77]
        %v130 = vld [vmem:[%s114 + $0x78] sm:$0x77]
        %v131 = vld [vmem:[%s114 + $0x80] sm:$0x77]
        %v132 = vld [vmem:[%s114 + $0x88] sm:$0x77]
        %v133 = vld [vmem:[%s114 + $0x90] sm:$0x77]
        %v134 = vld [vmem:[%s114 + $0x98] sm:$0x77]
        %v135 = vmax.f32 %v115, %v117
        %v136 = vmax.f32 %v116, %v118
        %v137 = vmax.f32 %v119, %v121
        %v138 = vmax.f32 %v120, %v122
        %v139 = vmax.f32 %v123, %v125
        %v140 = vmax.f32 %v124, %v126
        %v141 = vmax.f32 %v127, %v129
        %v142 = vmax.f32 %v128, %v130
        %v143 = vmax.f32 %v131, %v133
        %v144 = vmax.f32 %v132, %v134
        %v155 = vrot.slane %v115, 5
        %v156 = vrot.slane %v155, 4
        %v157 = vrot.slane %v116, 5
        %v158 = vrot.slane %v157, 4
        %v159 = vrot.slane %v119, 5
        %v160 = vrot.slane %v159, 4
        %v161 = vrot.slane %v120, 5
        %v162 = vrot.slane %v161, 4
        %v163 = vrot.slane %v123, 5
        %v164 = vrot.slane %v163, 4
        %v165 = vrot.slane %v124, 5
        %v166 = vrot.slane %v165, 4
        %v167 = vrot.slane %v127, 5
        %v168 = vrot.slane %v167, 4
        %v169 = vrot.slane %v128, 5
        %v170 = vrot.slane %v169, 4
        %v171 = vrot.slane %v131, 5
        %v172 = vrot.slane %v171, 4
        %v173 = vrot.slane %v132, 5
        %v174 = vrot.slane %v173, 4
        %v185 = vmax.f32 %v135, %v156
        %v186 = vmax.f32 %v136, %v158
        %v187 = vmax.f32 %v137, %v160
        %v188 = vmax.f32 %v138, %v162
        %v189 = vmax.f32 %v139, %v164
        %v190 = vmax.f32 %v140, %v166
        %v191 = vmax.f32 %v141, %v168
        %v192 = vmax.f32 %v142, %v170
        %v193 = vmax.f32 %v143, %v172
        %v194 = vmax.f32 %v144, %v174
        %v195 = vmax.f32 %v185, %v187
        %v196 = vmax.f32 %v186, %v188
        %v197 = vmax.f32 %v189, %v191
        %v198 = vmax.f32 %v190, %v192
        %v199 = vmax.f32 %v195, %v189
        %v200 = vmax.f32 %v196, %v190
        %v201 = vmax.f32 %v197, %v193
        %v202 = vmax.f32 %v198, %v194
        %v208 = vunpack.c.l.s4 1983009808
        %v209 = vunpack.c.0.s8 %v208
        %v210 = vlaneseq
        %v211 = vshrl.u32 %v210, 7
        %v212 = vsub.s32 %v209, %v211
        %v213 = vrot.slane %v199, %v212
        %v215 = vunpack.c.l.s4 1983009808
        %v216 = vunpack.c.0.s8 %v215
        %v217 = vlaneseq
        %v218 = vshrl.u32 %v217, 7
        %v219 = vsub.s32 %v216, %v218
        %v220 = vrot.slane %v200, %v219
        %v221 = vcombine.low %v213, %v220
        %v223 = vunpack.c.l.s4 1983009808
        %v224 = vunpack.c.0.s8 %v223
        %v225 = vlaneseq
        %v226 = vshrl.u32 %v225, 7
        %v227 = vsub.s32 %v224, %v226
        %v228 = vrot.slane %v201, %v227
        %v230 = vunpack.c.l.s4 1983009808
        %v231 = vunpack.c.0.s8 %v230
        %v232 = vlaneseq
        %v233 = vshrl.u32 %v232, 7
        %v234 = vsub.s32 %v231, %v233
        %v235 = vrot.slane %v202, %v234
        %v236 = vcombine.low %v228, %v235
        %239 = vst [vmem:[%s109] sm:$0xff] %v221
        %240 = vst [vmem:[%s109 + $0x8] sm:$0xff] %v236
        %s241 = sand.u32 %s49, 1
        %s242 = scalar_lea.sflag [#allocation3], %s241
        %s243 = sand.u32 %s49, 1
        %s244 = smul.addr %s243, 16
        %s245 = scalar_lea.vmem [#allocation2], %s244
        // Predicated region
        $region25: #{squeeze_forward.35} parent=23 // pred_check
          %p246 = pneg %p59
        $region26: #{squeeze_forward.35} parent=23 // pred_check_branch
          %248 = sbr.rel (%p246) target = $region28
        $region27: #{squeeze_forward.35} parent=23 // pred_region
          %s250 = ssub.s32 256, 256
          %251 = vsyncadd %s242, %s250
          %s252 = smul.addr %s15, 8
          %s253 = smul.addr %s252, 32
          %s254 = scalar_lea.hbm %s1, %s253
          %s255 = sshll.u32 %s245, 4
          %s256 = int_to_ptr.vmem [resolvable:$true] %s255
          %261 = dma.vmem_to_hbm [thread:$0]  %s256, 256, %s254, %s242, 128, 128, 8
        $region28: #{squeeze_forward.35} parent=23 // pred_fallthru
          _
      $region24: #{squeeze_forward.35} parent=5 // pred_fallthru
        _
      %p262 = scmp.le.s32.totalorder 2, %s10
      // Predicated region
      $region29: #{squeeze_forward.35} parent=5 // pred_check
        %p263 = pneg %p262
      $region30: #{squeeze_forward.35} parent=5 // pred_check_branch
        %265 = sbr.rel (%p263) target = $region32
      $region31: #{squeeze_forward.35} parent=5 // pred_region
        %s266 = ssub.s32 %s10, 2
        // Predicated region
        $region33: #{squeeze_forward.35} parent=31 // pred_check
          %p267 = pneg %p65
        $region34: #{squeeze_forward.35} parent=31 // pred_check_branch
          %269 = sbr.rel (%p267) target = $region36
        $region35: #{squeeze_forward.35} parent=31 // pred_region
          %s270 = sand.u32 %s50, 1
          %s271 = scalar_lea.sflag [#allocation3], %s270
          %s272 = sand.u32 %s50, 1
          %s273 = smul.addr %s272, 16
          %s274 = scalar_lea.vmem [#allocation2], %s273
          %275 = dma.done %s271, 256
        $region36: #{squeeze_forward.35} parent=31 // pred_fallthru
          _
      $region32: #{squeeze_forward.35} parent=5 // pred_fallthru
        _
    $region6: #{squeeze_forward.35} parent=1 // loop_footer
      %s14 = sadd.s32 1, %s10
    $region7: #{squeeze_forward.35} parent=1 // loop_footer_branch
      %9 = sbr.rel target = $region3
    $region8: #{squeeze_forward.35} parent=1 // loop_exit
      _
    %276 = vsyncpa [#allocation3], 1
    %s277 = scalar_lea.sflag [#allocation3], 1
    %278 = vsyncpa %s277, 1

</llo_original>
